<compile_context>
chip_gen: v5e
topology: v5e:2x2
jax: 0.10.0
libtpu: 0.0.40
codegen_flags: <defaults>
</compile_context>

<pallas_src>
import jax
import jax.numpy as jnp
from jax.experimental import pallas as pl
from jax.experimental.pallas import tpu as pltpu


def _sigmoid(v):
    return 1.0 / (1.0 + jnp.exp(-v))


def cbam_kernel(x_ref, fv_ref, w1_ref, b1_ref, w2_ref, b2_ref, cw_ref, cb_ref,
                out_ref, pad_ref):
    """One batch element per grid step.  All tensors are channels-last."""
    _, H, W, _ = x_ref.shape

    x_b = x_ref[0]            # [H, W, C]
    fv_b = fv_ref[0]          # [H, W, A]

    # ---- channel attention: spatial mean & max pooling of x -> [1, C] each --
    s = jnp.sum(x_b, axis=0)                                         # [W, C]
    red_mean = jnp.sum(s, axis=0, keepdims=True) * (1.0 / (H * W))   # [1, C]
    m = jnp.max(x_b, axis=0)                                         # [W, C]
    red_max = jnp.max(m, axis=0, keepdims=True)                      # [1, C]

    # Shared MLP applied to both pooled vectors in one MXU pass (rows stacked).
    pooled = jnp.concatenate([red_mean, red_max], axis=0)            # [2, C]
    h = jnp.maximum(
        jnp.dot(pooled, w1_ref[...], preferred_element_type=jnp.float32)
        + b1_ref[...], 0.0)                                          # [2, C]
    e = (jnp.dot(h, w2_ref[...], preferred_element_type=jnp.float32)
         + b2_ref[...])                                              # [2, A]
    exc = _sigmoid(e[0:1, :] + e[1:2, :])                            # [1, A]

    # ---- channel-gated features --------------------------------------------
    att1 = fv_b * exc                                                # [H, W, A]

    # ---- spatial attention input: 4 channel-pooled maps packed on 4 lanes ---
    f1 = jnp.mean(att1, axis=2, keepdims=True)                       # [H, W, 1]
    f2 = jnp.max(att1, axis=2, keepdims=True)
    f3 = jnp.mean(x_b, axis=2, keepdims=True)
    f4 = jnp.max(x_b, axis=2, keepdims=True)
    lane = jax.lax.broadcasted_iota(jnp.int32, (H, W, 4), 2)
    feat = (jnp.where(lane == 0, f1, 0.0) + jnp.where(lane == 1, f2, 0.0)
            + jnp.where(lane == 2, f3, 0.0) + jnp.where(lane == 3, f4, 0.0))

    # Zero-pad spatially (3 each side) into a VMEM scratch for the 7x7 conv.
    pad_ref[...] = jnp.zeros_like(pad_ref)
    pad_ref[3:3 + H, 3:3 + W, :] = feat

    # Unrolled 7x7 shift-and-accumulate; channels stay on lanes, one final
    # lane-reduction performs the sum over the 4 input channels.
    acc = jnp.zeros((H, W, 4), jnp.float32)
    for kh in range(7):
        for kw in range(7):
            t = kh * 7 + kw
            wv = cw_ref[t:t + 1, :]                                  # [1, 4]
            acc = acc + pad_ref[kh:kh + H, kw:kw + W, :] * wv
    conv = jnp.sum(acc, axis=2, keepdims=True) + cb_ref[...]         # [H, W, 1]
    att_chan = _sigmoid(conv)

    out_ref[0] = att1 * att_chan                                     # [H, W, A]


@jax.jit
def cbam_pyr_attention(x, fvecs, params):
    """x: [B, C, H, W], fvecs: [B, A, H, W] -> [B, A, H, W] (NCHW, like PyTorch)."""
    w1, b1, w2, b2, cw, cb = params
    B, C, H, W = x.shape
    A = fvecs.shape[1]

    x_t = jnp.transpose(x, (0, 2, 3, 1))        # [B, H, W, C]  channels-last
    fv_t = jnp.transpose(fvecs, (0, 2, 3, 1))   # [B, H, W, A]

    out_t = pl.pallas_call(
        cbam_kernel,
        out_shape=jax.ShapeDtypeStruct((B, H, W, A), jnp.float32),
        grid=(B,),
        in_specs=[
            pl.BlockSpec((1, H, W, C), lambda b: (b, 0, 0, 0)),   # x   (NHWC)
            pl.BlockSpec((1, H, W, A), lambda b: (b, 0, 0, 0)),   # fvecs (NHWC)
            pl.BlockSpec((C, C), lambda b: (0, 0)),               # W1 [in, out]
            pl.BlockSpec((1, C), lambda b: (0, 0)),               # b1
            pl.BlockSpec((C, A), lambda b: (0, 0)),               # W2 [in, out]
            pl.BlockSpec((1, A), lambda b: (0, 0)),               # b2
            pl.BlockSpec((49, 4), lambda b: (0, 0)),              # conv w [tap, cin]
            pl.BlockSpec((1, 1), lambda b: (0, 0)),               # conv bias
        ],
        out_specs=pl.BlockSpec((1, H, W, A), lambda b: (b, 0, 0, 0)),
        scratch_shapes=[pltpu.VMEM((H + 6, W + 6, 4), jnp.float32)],
        compiler_params=pltpu.CompilerParams(
            dimension_semantics=("parallel",),
            vmem_limit_bytes=48 * 1024 * 1024,
        ),
    )(x_t, fv_t, w1, b1, w2, b2, cw, cb)

    return jnp.transpose(out_t, (0, 3, 1, 2))   # back to NCHW


def make_params(key, channels_in, attention_channels):
    """PyTorch-default-style init; Linear weights stored as [in, out]."""
    ks = jax.random.split(key, 6)
    bl = 1.0 / float(channels_in) ** 0.5
    w1 = jax.random.uniform(ks[0], (channels_in, channels_in), jnp.float32, -bl, bl)
    b1 = jax.random.uniform(ks[1], (1, channels_in), jnp.float32, -bl, bl)
    w2 = jax.random.uniform(ks[2], (channels_in, attention_channels), jnp.float32, -bl, bl)
    b2 = jax.random.uniform(ks[3], (1, attention_channels), jnp.float32, -bl, bl)
    bc = 1.0 / float(4 * 7 * 7) ** 0.5
    cw_oihw = jax.random.uniform(ks[4], (1, 4, 7, 7), jnp.float32, -bc, bc)
    cb = jax.random.uniform(ks[5], (1,), jnp.float32, -bc, bc)
    # Kernel layout for the conv: [tap, cin] with tap = kh*7 + kw; bias [1, 1].
    cw_k = jnp.transpose(cw_oihw[0], (1, 2, 0)).reshape(49, 4)
    kernel_params = (w1, b1, w2, b2, cw_k, cb.reshape(1, 1))
    return kernel_params, cw_oihw, cb


def cbam_reference(x, fvecs, w1, b1, w2, b2, cw_oihw, cb):
    """Pure-JAX (XLA) reference mirroring the PyTorch forward, NCHW."""
    hi = jax.lax.Precision.HIGHEST
    red_mean = jnp.mean(x, axis=(2, 3))
    red_max = jnp.max(x, axis=(2, 3))

    def mlp(v):
        h = jnp.maximum(jnp.dot(v, w1, precision=hi) + b1, 0.0)
        return jnp.dot(h, w2, precision=hi) + b2

    exc = jax.nn.sigmoid(mlp(red_mean) + mlp(red_max))
    att1 = exc[:, :, None, None] * fvecs
    feat = jnp.concatenate([
        jnp.mean(att1, axis=1, keepdims=True),
        jnp.max(att1, axis=1, keepdims=True),
        jnp.mean(x, axis=1, keepdims=True),
        jnp.max(x, axis=1, keepdims=True)], axis=1)
    conv = jax.lax.conv_general_dilated(
        feat, cw_oihw, window_strides=(1, 1), padding=((3, 3), (3, 3)),
        dimension_numbers=("NCHW", "OIHW", "NCHW"), precision=hi)
    att_chan = jax.nn.sigmoid(conv + cb.reshape(1, 1, 1, 1))
    return att1 * att_chan


if __name__ == "__main__":
    # Small shapes consistent with the module (real defaults: C=256, A=1024).
    B, C_IN, A, H, W = 2, 16, 32, 16, 16

    key = jax.random.PRNGKey(0)
    kx, kf, kp = jax.random.split(key, 3)
    x = jax.random.normal(kx, (B, C_IN, H, W), jnp.float32)
    fvecs = jax.random.normal(kf, (B, A, H, W), jnp.float32)
    params, cw_oihw, cb = make_params(kp, C_IN, A)

    out = cbam_pyr_attention(x, fvecs, params)
    out = jax.block_until_ready(out)

    assert out.shape == (B, A, H, W)
    assert bool(jnp.all(jnp.isfinite(out)))

    ref = cbam_reference(x, fvecs, params[0], params[1], params[2], params[3],
                         cw_oihw, cb)
    max_err = float(jnp.max(jnp.abs(out - ref)))
    # Loose-ish tolerance: TPU MXU default precision for f32 matmuls may use
    # bf16 passes; structural bugs produce O(1) errors, rounding stays << 5e-2.
    assert max_err < 5e-2, f"mismatch vs reference: max abs err = {max_err}"

    print("KERNEL_OK")
</pallas_src>

<mosaic_0001>
module attributes {stable_mosaic.version = 11 : i64} {
  func.func @cbam_kernel(%arg0: i32, %arg1: memref<1x16x16x16xf32, #tpu.memory_space<vmem>>, %arg2: memref<1x16x16x32xf32, #tpu.memory_space<vmem>>, %arg3: memref<16x16xf32, #tpu.memory_space<vmem>>, %arg4: memref<1x16xf32, #tpu.memory_space<vmem>>, %arg5: memref<16x32xf32, #tpu.memory_space<vmem>>, %arg6: memref<1x32xf32, #tpu.memory_space<vmem>>, %arg7: memref<49x4xf32, #tpu.memory_space<vmem>>, %arg8: memref<1x1xf32, #tpu.memory_space<vmem>>, %arg9: memref<1x16x16x32xf32, #tpu.memory_space<vmem>>, %arg10: memref<22x22x4xf32, #tpu.memory_space<vmem>>) attributes {dimension_semantics = [#tpu.dimension_semantics<parallel>], iteration_bounds = array<i64: 2>, scalar_prefetch = 0 : i64, scratch_operands = 1 : i64, tpu.core_type = #tpu.core_type<tc>, window_params = [{transform_indices = @transform_0, window_bounds = array<i64: 1, 16, 16, 16>}, {transform_indices = @transform_1, window_bounds = array<i64: 1, 16, 16, 32>}, {pipeline_mode = #tpu.pipeline_mode<synchronous>, transform_indices = @transform_2, window_bounds = array<i64: 16, 16>}, {pipeline_mode = #tpu.pipeline_mode<synchronous>, transform_indices = @transform_3, window_bounds = array<i64: 1, 16>}, {pipeline_mode = #tpu.pipeline_mode<synchronous>, transform_indices = @transform_4, window_bounds = array<i64: 16, 32>}, {pipeline_mode = #tpu.pipeline_mode<synchronous>, transform_indices = @transform_5, window_bounds = array<i64: 1, 32>}, {pipeline_mode = #tpu.pipeline_mode<synchronous>, transform_indices = @transform_6, window_bounds = array<i64: 49, 4>}, {pipeline_mode = #tpu.pipeline_mode<synchronous>, transform_indices = @transform_7, window_bounds = array<i64: 1, 1>}, {transform_indices = @transform_8, window_bounds = array<i64: 1, 16, 16, 32>}]} {
    %c0 = arith.constant 0 : index
    %c0_0 = arith.constant 0 : index
    %c0_1 = arith.constant 0 : index
    %c0_2 = arith.constant 0 : index
    %0 = vector.load %arg1[%c0, %c0_0, %c0_1, %c0_2] : memref<1x16x16x16xf32, #tpu.memory_space<vmem>>, vector<1x16x16x16xf32>
    %1 = vector.shape_cast %0 : vector<1x16x16x16xf32> to vector<16x16x16xf32>
    %c0_3 = arith.constant 0 : index
    %c0_4 = arith.constant 0 : index
    %c0_5 = arith.constant 0 : index
    %c0_6 = arith.constant 0 : index
    %2 = vector.load %arg2[%c0_3, %c0_4, %c0_5, %c0_6] : memref<1x16x16x32xf32, #tpu.memory_space<vmem>>, vector<1x16x16x32xf32>
    %3 = vector.shape_cast %2 : vector<1x16x16x32xf32> to vector<16x16x32xf32>
    %cst = arith.constant dense<0.000000e+00> : vector<16x16xf32>
    %4 = vector.multi_reduction <add>, %1, %cst [0] : vector<16x16x16xf32> to vector<16x16xf32>
    %cst_7 = arith.constant dense<0.000000e+00> : vector<16xf32>
    %5 = vector.multi_reduction <add>, %4, %cst_7 [0] : vector<16x16xf32> to vector<16xf32>
    %6 = vector.shape_cast %5 : vector<16xf32> to vector<1x16xf32>
    %cst_8 = arith.constant 3.906250e-03 : f32
    %7 = vector.broadcast %cst_8 : f32 to vector<1x16xf32>
    %8 = arith.mulf %6, %7 : vector<1x16xf32>
    %cst_9 = arith.constant dense<0xFF800000> : vector<16x16xf32>
    %9 = vector.multi_reduction <maximumf>, %1, %cst_9 [0] : vector<16x16x16xf32> to vector<16x16xf32>
    %cst_10 = arith.constant dense<0xFF800000> : vector<16xf32>
    %10 = vector.multi_reduction <maximumf>, %9, %cst_10 [0] : vector<16x16xf32> to vector<16xf32>
    %11 = vector.shape_cast %10 : vector<16xf32> to vector<1x16xf32>
    %12 = tpu.concatenate %8, %11 in 0 : vector<1x16xf32>, vector<1x16xf32> -> vector<2x16xf32>
    %c0_11 = arith.constant 0 : index
    %c0_12 = arith.constant 0 : index
    %13 = vector.load %arg3[%c0_11, %c0_12] : memref<16x16xf32, #tpu.memory_space<vmem>>, vector<16x16xf32>
    %cst_13 = arith.constant dense<0.000000e+00> : vector<2x16xf32>
    %14 = tpu.matmul %12, %13, %cst_13 {dimension_numbers = #tpu.dot_dimension_numbers<[1], [0], [0], [1], [0, 0, 1, 1], [], []>} : vector<2x16xf32>, vector<16x16xf32>, vector<2x16xf32> -> vector<2x16xf32>
    %c0_14 = arith.constant 0 : index
    %c0_15 = arith.constant 0 : index
    %15 = vector.load %arg4[%c0_14, %c0_15] : memref<1x16xf32, #tpu.memory_space<vmem>>, vector<1x16xf32>
    %16 = vector.broadcast %15 : vector<1x16xf32> to vector<2x16xf32>
    %17 = arith.addf %14, %16 : vector<2x16xf32>
    %cst_16 = arith.constant 0.000000e+00 : f32
    %18 = vector.broadcast %cst_16 : f32 to vector<2x16xf32>
    %19 = arith.maximumf %17, %18 : vector<2x16xf32>
    %c0_17 = arith.constant 0 : index
    %c0_18 = arith.constant 0 : index
    %20 = vector.load %arg5[%c0_17, %c0_18] : memref<16x32xf32, #tpu.memory_space<vmem>>, vector<16x32xf32>
    %cst_19 = arith.constant dense<0.000000e+00> : vector<2x32xf32>
    %21 = tpu.matmul %19, %20, %cst_19 {dimension_numbers = #tpu.dot_dimension_numbers<[1], [0], [0], [1], [0, 0, 1, 1], [], []>} : vector<2x16xf32>, vector<16x32xf32>, vector<2x32xf32> -> vector<2x32xf32>
    %c0_20 = arith.constant 0 : index
    %c0_21 = arith.constant 0 : index
    %22 = vector.load %arg6[%c0_20, %c0_21] : memref<1x32xf32, #tpu.memory_space<vmem>>, vector<1x32xf32>
    %23 = vector.broadcast %22 : vector<1x32xf32> to vector<2x32xf32>
    %24 = arith.addf %21, %23 : vector<2x32xf32>
    %25 = vector.extract_strided_slice %24 {offsets = [0, 0], sizes = [1, 32], strides = [1, 1]} : vector<2x32xf32> to vector<1x32xf32>
    %26 = vector.extract_strided_slice %24 {offsets = [1, 0], sizes = [1, 32], strides = [1, 1]} : vector<2x32xf32> to vector<1x32xf32>
    %27 = arith.addf %25, %26 : vector<1x32xf32>
    %cst_22 = arith.constant 0.000000e+00 : f32
    %28 = vector.broadcast %cst_22 : f32 to vector<1x32xf32>
    %29 = arith.subf %28, %27 : vector<1x32xf32>
    %30 = math.exp %29 : vector<1x32xf32>
    %cst_23 = arith.constant 1.000000e+00 : f32
    %31 = vector.broadcast %cst_23 : f32 to vector<1x32xf32>
    %32 = arith.addf %31, %30 : vector<1x32xf32>
    %cst_24 = arith.constant 1.000000e+00 : f32
    %33 = vector.broadcast %cst_24 : f32 to vector<1x32xf32>
    %34 = arith.divf %33, %32 : vector<1x32xf32>
    %35 = vector.shape_cast %34 : vector<1x32xf32> to vector<1x1x32xf32>
    %36 = vector.broadcast %35 : vector<1x1x32xf32> to vector<16x16x32xf32>
    %37 = arith.mulf %3, %36 : vector<16x16x32xf32>
    %cst_25 = arith.constant dense<0.000000e+00> : vector<16x16xf32>
    %38 = vector.multi_reduction <add>, %37, %cst_25 [2] : vector<16x16x32xf32> to vector<16x16xf32>
    %39 = vector.shape_cast %38 : vector<16x16xf32> to vector<16x16x1xf32>
    %cst_26 = arith.constant 3.200000e+01 : f32
    %40 = vector.broadcast %cst_26 : f32 to vector<16x16x1xf32>
    %41 = arith.divf %39, %40 : vector<16x16x1xf32>
    %cst_27 = arith.constant dense<0xFF800000> : vector<16x16xf32>
    %42 = vector.multi_reduction <maximumf>, %37, %cst_27 [2] : vector<16x16x32xf32> to vector<16x16xf32>
    %43 = vector.shape_cast %42 : vector<16x16xf32> to vector<16x16x1xf32>
    %cst_28 = arith.constant dense<0.000000e+00> : vector<16x16xf32>
    %44 = vector.multi_reduction <add>, %1, %cst_28 [2] : vector<16x16x16xf32> to vector<16x16xf32>
    %45 = vector.shape_cast %44 : vector<16x16xf32> to vector<16x16x1xf32>
    %cst_29 = arith.constant 1.600000e+01 : f32
    %46 = vector.broadcast %cst_29 : f32 to vector<16x16x1xf32>
    %47 = arith.divf %45, %46 : vector<16x16x1xf32>
    %cst_30 = arith.constant dense<0xFF800000> : vector<16x16xf32>
    %48 = vector.multi_reduction <maximumf>, %1, %cst_30 [2] : vector<16x16x16xf32> to vector<16x16xf32>
    %49 = vector.shape_cast %48 : vector<16x16xf32> to vector<16x16x1xf32>
    %50 = tpu.iota {dimensions = array<i32: 2>} : vector<16x16x4xi32>
    %c0_i32 = arith.constant 0 : i32
    %51 = vector.broadcast %c0_i32 : i32 to vector<16x16x4xi32>
    %52 = arith.cmpi eq, %50, %51 : vector<16x16x4xi32>
    %cst_31 = arith.constant 0.000000e+00 : f32
    %53 = vector.shape_cast %41 : vector<16x16x1xf32> to vector<16x16x1xf32>
    %54 = vector.broadcast %53 : vector<16x16x1xf32> to vector<16x16x4xf32>
    %55 = vector.broadcast %cst_31 : f32 to vector<16x16x4xf32>
    %56 = arith.select %52, %54, %55 : vector<16x16x4xi1>, vector<16x16x4xf32>
    %c1_i32 = arith.constant 1 : i32
    %57 = vector.broadcast %c1_i32 : i32 to vector<16x16x4xi32>
    %58 = arith.cmpi eq, %50, %57 : vector<16x16x4xi32>
    %cst_32 = arith.constant 0.000000e+00 : f32
    %59 = vector.shape_cast %43 : vector<16x16x1xf32> to vector<16x16x1xf32>
    %60 = vector.broadcast %59 : vector<16x16x1xf32> to vector<16x16x4xf32>
    %61 = vector.broadcast %cst_32 : f32 to vector<16x16x4xf32>
    %62 = arith.select %58, %60, %61 : vector<16x16x4xi1>, vector<16x16x4xf32>
    %63 = arith.addf %56, %62 : vector<16x16x4xf32>
    %c2_i32 = arith.constant 2 : i32
    %64 = vector.broadcast %c2_i32 : i32 to vector<16x16x4xi32>
    %65 = arith.cmpi eq, %50, %64 : vector<16x16x4xi32>
    %cst_33 = arith.constant 0.000000e+00 : f32
    %66 = vector.shape_cast %47 : vector<16x16x1xf32> to vector<16x16x1xf32>
    %67 = vector.broadcast %66 : vector<16x16x1xf32> to vector<16x16x4xf32>
    %68 = vector.broadcast %cst_33 : f32 to vector<16x16x4xf32>
    %69 = arith.select %65, %67, %68 : vector<16x16x4xi1>, vector<16x16x4xf32>
    %70 = arith.addf %63, %69 : vector<16x16x4xf32>
    %c3_i32 = arith.constant 3 : i32
    %71 = vector.broadcast %c3_i32 : i32 to vector<16x16x4xi32>
    %72 = arith.cmpi eq, %50, %71 : vector<16x16x4xi32>
    %cst_34 = arith.constant 0.000000e+00 : f32
    %73 = vector.shape_cast %49 : vector<16x16x1xf32> to vector<16x16x1xf32>
    %74 = vector.broadcast %73 : vector<16x16x1xf32> to vector<16x16x4xf32>
    %75 = vector.broadcast %cst_34 : f32 to vector<16x16x4xf32>
    %76 = arith.select %72, %74, %75 : vector<16x16x4xi1>, vector<16x16x4xf32>
    %77 = arith.addf %70, %76 : vector<16x16x4xf32>
    %cst_35 = arith.constant 0.000000e+00 : f32
    %78 = vector.broadcast %cst_35 : f32 to vector<22x22x4xf32>
    %c0_36 = arith.constant 0 : index
    %c0_37 = arith.constant 0 : index
    %c0_38 = arith.constant 0 : index
    %79 = vector.load %arg10[%c0_36, %c0_37, %c0_38] : memref<22x22x4xf32, #tpu.memory_space<vmem>>, vector<22x22x4xf32>
    tpu.vector_store %arg10[%c0_36, %c0_37, %c0_38], %78 {strides = array<i32>} : memref<22x22x4xf32, #tpu.memory_space<vmem>>, vector<22x22x4xf32>,
    %c3 = arith.constant 3 : index
    %c3_39 = arith.constant 3 : index
    %c0_40 = arith.constant 0 : index
    %80 = vector.load %arg10[%c3, %c3_39, %c0_40] : memref<22x22x4xf32, #tpu.memory_space<vmem>>, vector<16x16x4xf32>
    tpu.vector_store %arg10[%c3, %c3_39, %c0_40], %77 {strides = array<i32>} : memref<22x22x4xf32, #tpu.memory_space<vmem>>, vector<16x16x4xf32>,
    %cst_41 = arith.constant 0.000000e+00 : f32
    %81 = vector.broadcast %cst_41 : f32 to vector<16x16x4xf32>
    %c0_42 = arith.constant 0 : index
    %c0_43 = arith.constant 0 : index
    %82 = vector.load %arg7[%c0_42, %c0_43] : memref<49x4xf32, #tpu.memory_space<vmem>>, vector<1x4xf32>
    %c0_44 = arith.constant 0 : index
    %c0_45 = arith.constant 0 : index
    %c0_46 = arith.constant 0 : index
    %83 = vector.load %arg10[%c0_44, %c0_45, %c0_46] : memref<22x22x4xf32, #tpu.memory_space<vmem>>, vector<16x16x4xf32>
    %84 = vector.shape_cast %82 : vector<1x4xf32> to vector<1x1x4xf32>
    %85 = vector.broadcast %84 : vector<1x1x4xf32> to vector<16x16x4xf32>
    %86 = arith.mulf %83, %85 : vector<16x16x4xf32>
    %87 = arith.addf %81, %86 : vector<16x16x4xf32>
    %c1 = arith.constant 1 : index
    %c0_47 = arith.constant 0 : index
    %88 = vector.load %arg7[%c1, %c0_47] : memref<49x4xf32, #tpu.memory_space<vmem>>, vector<1x4xf32>
    %c0_48 = arith.constant 0 : index
    %c1_49 = arith.constant 1 : index
    %c0_50 = arith.constant 0 : index
    %89 = vector.load %arg10[%c0_48, %c1_49, %c0_50] : memref<22x22x4xf32, #tpu.memory_space<vmem>>, vector<16x16x4xf32>
    %90 = vector.shape_cast %88 : vector<1x4xf32> to vector<1x1x4xf32>
    %91 = vector.broadcast %90 : vector<1x1x4xf32> to vector<16x16x4xf32>
    %92 = arith.mulf %89, %91 : vector<16x16x4xf32>
    %93 = arith.addf %87, %92 : vector<16x16x4xf32>
    %c2 = arith.constant 2 : index
    %c0_51 = arith.constant 0 : index
    %94 = vector.load %arg7[%c2, %c0_51] : memref<49x4xf32, #tpu.memory_space<vmem>>, vector<1x4xf32>
    %c0_52 = arith.constant 0 : index
    %c2_53 = arith.constant 2 : index
    %c0_54 = arith.constant 0 : index
    %95 = vector.load %arg10[%c0_52, %c2_53, %c0_54] : memref<22x22x4xf32, #tpu.memory_space<vmem>>, vector<16x16x4xf32>
    %96 = vector.shape_cast %94 : vector<1x4xf32> to vector<1x1x4xf32>
    %97 = vector.broadcast %96 : vector<1x1x4xf32> to vector<16x16x4xf32>
    %98 = arith.mulf %95, %97 : vector<16x16x4xf32>
    %99 = arith.addf %93, %98 : vector<16x16x4xf32>
    %c3_55 = arith.constant 3 : index
    %c0_56 = arith.constant 0 : index
    %100 = vector.load %arg7[%c3_55, %c0_56] : memref<49x4xf32, #tpu.memory_space<vmem>>, vector<1x4xf32>
    %c0_57 = arith.constant 0 : index
    %c3_58 = arith.constant 3 : index
    %c0_59 = arith.constant 0 : index
    %101 = vector.load %arg10[%c0_57, %c3_58, %c0_59] : memref<22x22x4xf32, #tpu.memory_space<vmem>>, vector<16x16x4xf32>
    %102 = vector.shape_cast %100 : vector<1x4xf32> to vector<1x1x4xf32>
    %103 = vector.broadcast %102 : vector<1x1x4xf32> to vector<16x16x4xf32>
    %104 = arith.mulf %101, %103 : vector<16x16x4xf32>
    %105 = arith.addf %99, %104 : vector<16x16x4xf32>
    %c4 = arith.constant 4 : index
    %c0_60 = arith.constant 0 : index
    %106 = vector.load %arg7[%c4, %c0_60] : memref<49x4xf32, #tpu.memory_space<vmem>>, vector<1x4xf32>
    %c0_61 = arith.constant 0 : index
    %c4_62 = arith.constant 4 : index
    %c0_63 = arith.constant 0 : index
    %107 = vector.load %arg10[%c0_61, %c4_62, %c0_63] : memref<22x22x4xf32, #tpu.memory_space<vmem>>, vector<16x16x4xf32>
    %108 = vector.shape_cast %106 : vector<1x4xf32> to vector<1x1x4xf32>
    %109 = vector.broadcast %108 : vector<1x1x4xf32> to vector<16x16x4xf32>
    %110 = arith.mulf %107, %109 : vector<16x16x4xf32>
    %111 = arith.addf %105, %110 : vector<16x16x4xf32>
    %c5 = arith.constant 5 : index
    %c0_64 = arith.constant 0 : index
    %112 = vector.load %arg7[%c5, %c0_64] : memref<49x4xf32, #tpu.memory_space<vmem>>, vector<1x4xf32>
    %c0_65 = arith.constant 0 : index
    %c5_66 = arith.constant 5 : index
    %c0_67 = arith.constant 0 : index
    %113 = vector.load %arg10[%c0_65, %c5_66, %c0_67] : memref<22x22x4xf32, #tpu.memory_space<vmem>>, vector<16x16x4xf32>
    %114 = vector.shape_cast %112 : vector<1x4xf32> to vector<1x1x4xf32>
    %115 = vector.broadcast %114 : vector<1x1x4xf32> to vector<16x16x4xf32>
    %116 = arith.mulf %113, %115 : vector<16x16x4xf32>
    %117 = arith.addf %111, %116 : vector<16x16x4xf32>
    %c6 = arith.constant 6 : index
    %c0_68 = arith.constant 0 : index
    %118 = vector.load %arg7[%c6, %c0_68] : memref<49x4xf32, #tpu.memory_space<vmem>>, vector<1x4xf32>
    %c0_69 = arith.constant 0 : index
    %c6_70 = arith.constant 6 : index
    %c0_71 = arith.constant 0 : index
    %119 = vector.load %arg10[%c0_69, %c6_70, %c0_71] : memref<22x22x4xf32, #tpu.memory_space<vmem>>, vector<16x16x4xf32>
    %120 = vector.shape_cast %118 : vector<1x4xf32> to vector<1x1x4xf32>
    %121 = vector.broadcast %120 : vector<1x1x4xf32> to vector<16x16x4xf32>
    %122 = arith.mulf %119, %121 : vector<16x16x4xf32>
    %123 = arith.addf %117, %122 : vector<16x16x4xf32>
    %c7 = arith.constant 7 : index
    %c0_72 = arith.constant 0 : index
    %124 = vector.load %arg7[%c7, %c0_72] : memref<49x4xf32, #tpu.memory_space<vmem>>, vector<1x4xf32>
    %c1_73 = arith.constant 1 : index
    %c0_74 = arith.constant 0 : index
    %c0_75 = arith.constant 0 : index
    %125 = vector.load %arg10[%c1_73, %c0_74, %c0_75] : memref<22x22x4xf32, #tpu.memory_space<vmem>>, vector<16x16x4xf32>
    %126 = vector.shape_cast %124 : vector<1x4xf32> to vector<1x1x4xf32>
    %127 = vector.broadcast %126 : vector<1x1x4xf32> to vector<16x16x4xf32>
    %128 = arith.mulf %125, %127 : vector<16x16x4xf32>
    %129 = arith.addf %123, %128 : vector<16x16x4xf32>
    %c8 = arith.constant 8 : index
    %c0_76 = arith.constant 0 : index
    %130 = vector.load %arg7[%c8, %c0_76] : memref<49x4xf32, #tpu.memory_space<vmem>>, vector<1x4xf32>
    %c1_77 = arith.constant 1 : index
    %c1_78 = arith.constant 1 : index
    %c0_79 = arith.constant 0 : index
    %131 = vector.load %arg10[%c1_77, %c1_78, %c0_79] : memref<22x22x4xf32, #tpu.memory_space<vmem>>, vector<16x16x4xf32>
    %132 = vector.shape_cast %130 : vector<1x4xf32> to vector<1x1x4xf32>
    %133 = vector.broadcast %132 : vector<1x1x4xf32> to vector<16x16x4xf32>
    %134 = arith.mulf %131, %133 : vector<16x16x4xf32>
    %135 = arith.addf %129, %134 : vector<16x16x4xf32>
    %c9 = arith.constant 9 : index
    %c0_80 = arith.constant 0 : index
    %136 = vector.load %arg7[%c9, %c0_80] : memref<49x4xf32, #tpu.memory_space<vmem>>, vector<1x4xf32>
    %c1_81 = arith.constant 1 : index
    %c2_82 = arith.constant 2 : index
    %c0_83 = arith.constant 0 : index
    %137 = vector.load %arg10[%c1_81, %c2_82, %c0_83] : memref<22x22x4xf32, #tpu.memory_space<vmem>>, vector<16x16x4xf32>
    %138 = vector.shape_cast %136 : vector<1x4xf32> to vector<1x1x4xf32>
    %139 = vector.broadcast %138 : vector<1x1x4xf32> to vector<16x16x4xf32>
    %140 = arith.mulf %137, %139 : vector<16x16x4xf32>
    %141 = arith.addf %135, %140 : vector<16x16x4xf32>
    %c10 = arith.constant 10 : index
    %c0_84 = arith.constant 0 : index
    %142 = vector.load %arg7[%c10, %c0_84] : memref<49x4xf32, #tpu.memory_space<vmem>>, vector<1x4xf32>
    %c1_85 = arith.constant 1 : index
    %c3_86 = arith.constant 3 : index
    %c0_87 = arith.constant 0 : index
    %143 = vector.load %arg10[%c1_85, %c3_86, %c0_87] : memref<22x22x4xf32, #tpu.memory_space<vmem>>, vector<16x16x4xf32>
    %144 = vector.shape_cast %142 : vector<1x4xf32> to vector<1x1x4xf32>
    %145 = vector.broadcast %144 : vector<1x1x4xf32> to vector<16x16x4xf32>
    %146 = arith.mulf %143, %145 : vector<16x16x4xf32>
    %147 = arith.addf %141, %146 : vector<16x16x4xf32>
    %c11 = arith.constant 11 : index
    %c0_88 = arith.constant 0 : index
    %148 = vector.load %arg7[%c11, %c0_88] : memref<49x4xf32, #tpu.memory_space<vmem>>, vector<1x4xf32>
    %c1_89 = arith.constant 1 : index
    %c4_90 = arith.constant 4 : index
    %c0_91 = arith.constant 0 : index
    %149 = vector.load %arg10[%c1_89, %c4_90, %c0_91] : memref<22x22x4xf32, #tpu.memory_space<vmem>>, vector<16x16x4xf32>
    %150 = vector.shape_cast %148 : vector<1x4xf32> to vector<1x1x4xf32>
    %151 = vector.broadcast %150 : vector<1x1x4xf32> to vector<16x16x4xf32>
    %152 = arith.mulf %149, %151 : vector<16x16x4xf32>
    %153 = arith.addf %147, %152 : vector<16x16x4xf32>
    %c12 = arith.constant 12 : index
    %c0_92 = arith.constant 0 : index
    %154 = vector.load %arg7[%c12, %c0_92] : memref<49x4xf32, #tpu.memory_space<vmem>>, vector<1x4xf32>
    %c1_93 = arith.constant 1 : index
    %c5_94 = arith.constant 5 : index
    %c0_95 = arith.constant 0 : index
    %155 = vector.load %arg10[%c1_93, %c5_94, %c0_95] : memref<22x22x4xf32, #tpu.memory_space<vmem>>, vector<16x16x4xf32>
    %156 = vector.shape_cast %154 : vector<1x4xf32> to vector<1x1x4xf32>
    %157 = vector.broadcast %156 : vector<1x1x4xf32> to vector<16x16x4xf32>
    %158 = arith.mulf %155, %157 : vector<16x16x4xf32>
    %159 = arith.addf %153, %158 : vector<16x16x4xf32>
    %c13 = arith.constant 13 : index
    %c0_96 = arith.constant 0 : index
    %160 = vector.load %arg7[%c13, %c0_96] : memref<49x4xf32, #tpu.memory_space<vmem>>, vector<1x4xf32>
    %c1_97 = arith.constant 1 : index
    %c6_98 = arith.constant 6 : index
    %c0_99 = arith.constant 0 : index
    %161 = vector.load %arg10[%c1_97, %c6_98, %c0_99] : memref<22x22x4xf32, #tpu.memory_space<vmem>>, vector<16x16x4xf32>
    %162 = vector.shape_cast %160 : vector<1x4xf32> to vector<1x1x4xf32>
    %163 = vector.broadcast %162 : vector<1x1x4xf32> to vector<16x16x4xf32>
    %164 = arith.mulf %161, %163 : vector<16x16x4xf32>
    %165 = arith.addf %159, %164 : vector<16x16x4xf32>
    %c14 = arith.constant 14 : index
    %c0_100 = arith.constant 0 : index
    %166 = vector.load %arg7[%c14, %c0_100] : memref<49x4xf32, #tpu.memory_space<vmem>>, vector<1x4xf32>
    %c2_101 = arith.constant 2 : index
    %c0_102 = arith.constant 0 : index
    %c0_103 = arith.constant 0 : index
    %167 = vector.load %arg10[%c2_101, %c0_102, %c0_103] : memref<22x22x4xf32, #tpu.memory_space<vmem>>, vector<16x16x4xf32>
    %168 = vector.shape_cast %166 : vector<1x4xf32> to vector<1x1x4xf32>
    %169 = vector.broadcast %168 : vector<1x1x4xf32> to vector<16x16x4xf32>
    %170 = arith.mulf %167, %169 : vector<16x16x4xf32>
    %171 = arith.addf %165, %170 : vector<16x16x4xf32>
    %c15 = arith.constant 15 : index
    %c0_104 = arith.constant 0 : index
    %172 = vector.load %arg7[%c15, %c0_104] : memref<49x4xf32, #tpu.memory_space<vmem>>, vector<1x4xf32>
    %c2_105 = arith.constant 2 : index
    %c1_106 = arith.constant 1 : index
    %c0_107 = arith.constant 0 : index
    %173 = vector.load %arg10[%c2_105, %c1_106, %c0_107] : memref<22x22x4xf32, #tpu.memory_space<vmem>>, vector<16x16x4xf32>
    %174 = vector.shape_cast %172 : vector<1x4xf32> to vector<1x1x4xf32>
    %175 = vector.broadcast %174 : vector<1x1x4xf32> to vector<16x16x4xf32>
    %176 = arith.mulf %173, %175 : vector<16x16x4xf32>
    %177 = arith.addf %171, %176 : vector<16x16x4xf32>
    %c16 = arith.constant 16 : index
    %c0_108 = arith.constant 0 : index
    %178 = vector.load %arg7[%c16, %c0_108] : memref<49x4xf32, #tpu.memory_space<vmem>>, vector<1x4xf32>
    %c2_109 = arith.constant 2 : index
    %c2_110 = arith.constant 2 : index
    %c0_111 = arith.constant 0 : index
    %179 = vector.load %arg10[%c2_109, %c2_110, %c0_111] : memref<22x22x4xf32, #tpu.memory_space<vmem>>, vector<16x16x4xf32>
    %180 = vector.shape_cast %178 : vector<1x4xf32> to vector<1x1x4xf32>
    %181 = vector.broadcast %180 : vector<1x1x4xf32> to vector<16x16x4xf32>
    %182 = arith.mulf %179, %181 : vector<16x16x4xf32>
    %183 = arith.addf %177, %182 : vector<16x16x4xf32>
    %c17 = arith.constant 17 : index
    %c0_112 = arith.constant 0 : index
    %184 = vector.load %arg7[%c17, %c0_112] : memref<49x4xf32, #tpu.memory_space<vmem>>, vector<1x4xf32>
    %c2_113 = arith.constant 2 : index
    %c3_114 = arith.constant 3 : index
    %c0_115 = arith.constant 0 : index
    %185 = vector.load %arg10[%c2_113, %c3_114, %c0_115] : memref<22x22x4xf32, #tpu.memory_space<vmem>>, vector<16x16x4xf32>
    %186 = vector.shape_cast %184 : vector<1x4xf32> to vector<1x1x4xf32>
    %187 = vector.broadcast %186 : vector<1x1x4xf32> to vector<16x16x4xf32>
    %188 = arith.mulf %185, %187 : vector<16x16x4xf32>
    %189 = arith.addf %183, %188 : vector<16x16x4xf32>
    %c18 = arith.constant 18 : index
    %c0_116 = arith.constant 0 : index
    %190 = vector.load %arg7[%c18, %c0_116] : memref<49x4xf32, #tpu.memory_space<vmem>>, vector<1x4xf32>
    %c2_117 = arith.constant 2 : index
    %c4_118 = arith.constant 4 : index
    %c0_119 = arith.constant 0 : index
    %191 = vector.load %arg10[%c2_117, %c4_118, %c0_119] : memref<22x22x4xf32, #tpu.memory_space<vmem>>, vector<16x16x4xf32>
    %192 = vector.shape_cast %190 : vector<1x4xf32> to vector<1x1x4xf32>
    %193 = vector.broadcast %192 : vector<1x1x4xf32> to vector<16x16x4xf32>
    %194 = arith.mulf %191, %193 : vector<16x16x4xf32>
    %195 = arith.addf %189, %194 : vector<16x16x4xf32>
    %c19 = arith.constant 19 : index
    %c0_120 = arith.constant 0 : index
    %196 = vector.load %arg7[%c19, %c0_120] : memref<49x4xf32, #tpu.memory_space<vmem>>, vector<1x4xf32>
    %c2_121 = arith.constant 2 : index
    %c5_122 = arith.constant 5 : index
    %c0_123 = arith.constant 0 : index
    %197 = vector.load %arg10[%c2_121, %c5_122, %c0_123] : memref<22x22x4xf32, #tpu.memory_space<vmem>>, vector<16x16x4xf32>
    %198 = vector.shape_cast %196 : vector<1x4xf32> to vector<1x1x4xf32>
    %199 = vector.broadcast %198 : vector<1x1x4xf32> to vector<16x16x4xf32>
    %200 = arith.mulf %197, %199 : vector<16x16x4xf32>
    %201 = arith.addf %195, %200 : vector<16x16x4xf32>
    %c20 = arith.constant 20 : index
    %c0_124 = arith.constant 0 : index
    %202 = vector.load %arg7[%c20, %c0_124] : memref<49x4xf32, #tpu.memory_space<vmem>>, vector<1x4xf32>
    %c2_125 = arith.constant 2 : index
    %c6_126 = arith.constant 6 : index
    %c0_127 = arith.constant 0 : index
    %203 = vector.load %arg10[%c2_125, %c6_126, %c0_127] : memref<22x22x4xf32, #tpu.memory_space<vmem>>, vector<16x16x4xf32>
    %204 = vector.shape_cast %202 : vector<1x4xf32> to vector<1x1x4xf32>
    %205 = vector.broadcast %204 : vector<1x1x4xf32> to vector<16x16x4xf32>
    %206 = arith.mulf %203, %205 : vector<16x16x4xf32>
    %207 = arith.addf %201, %206 : vector<16x16x4xf32>
    %c21 = arith.constant 21 : index
    %c0_128 = arith.constant 0 : index
    %208 = vector.load %arg7[%c21, %c0_128] : memref<49x4xf32, #tpu.memory_space<vmem>>, vector<1x4xf32>
    %c3_129 = arith.constant 3 : index
    %c0_130 = arith.constant 0 : index
    %c0_131 = arith.constant 0 : index
    %209 = vector.load %arg10[%c3_129, %c0_130, %c0_131] : memref<22x22x4xf32, #tpu.memory_space<vmem>>, vector<16x16x4xf32>
    %210 = vector.shape_cast %208 : vector<1x4xf32> to vector<1x1x4xf32>
    %211 = vector.broadcast %210 : vector<1x1x4xf32> to vector<16x16x4xf32>
    %212 = arith.mulf %209, %211 : vector<16x16x4xf32>
    %213 = arith.addf %207, %212 : vector<16x16x4xf32>
    %c22 = arith.constant 22 : index
    %c0_132 = arith.constant 0 : index
    %214 = vector.load %arg7[%c22, %c0_132] : memref<49x4xf32, #tpu.memory_space<vmem>>, vector<1x4xf32>
    %c3_133 = arith.constant 3 : index
    %c1_134 = arith.constant 1 : index
    %c0_135 = arith.constant 0 : index
    %215 = vector.load %arg10[%c3_133, %c1_134, %c0_135] : memref<22x22x4xf32, #tpu.memory_space<vmem>>, vector<16x16x4xf32>
    %216 = vector.shape_cast %214 : vector<1x4xf32> to vector<1x1x4xf32>
    %217 = vector.broadcast %216 : vector<1x1x4xf32> to vector<16x16x4xf32>
    %218 = arith.mulf %215, %217 : vector<16x16x4xf32>
    %219 = arith.addf %213, %218 : vector<16x16x4xf32>
    %c23 = arith.constant 23 : index
    %c0_136 = arith.constant 0 : index
    %220 = vector.load %arg7[%c23, %c0_136] : memref<49x4xf32, #tpu.memory_space<vmem>>, vector<1x4xf32>
    %c3_137 = arith.constant 3 : index
    %c2_138 = arith.constant 2 : index
    %c0_139 = arith.constant 0 : index
    %221 = vector.load %arg10[%c3_137, %c2_138, %c0_139] : memref<22x22x4xf32, #tpu.memory_space<vmem>>, vector<16x16x4xf32>
    %222 = vector.shape_cast %220 : vector<1x4xf32> to vector<1x1x4xf32>
    %223 = vector.broadcast %222 : vector<1x1x4xf32> to vector<16x16x4xf32>
    %224 = arith.mulf %221, %223 : vector<16x16x4xf32>
    %225 = arith.addf %219, %224 : vector<16x16x4xf32>
    %c24 = arith.constant 24 : index
    %c0_140 = arith.constant 0 : index
    %226 = vector.load %arg7[%c24, %c0_140] : memref<49x4xf32, #tpu.memory_space<vmem>>, vector<1x4xf32>
    %c3_141 = arith.constant 3 : index
    %c3_142 = arith.constant 3 : index
    %c0_143 = arith.constant 0 : index
    %227 = vector.load %arg10[%c3_141, %c3_142, %c0_143] : memref<22x22x4xf32, #tpu.memory_space<vmem>>, vector<16x16x4xf32>
    %228 = vector.shape_cast %226 : vector<1x4xf32> to vector<1x1x4xf32>
    %229 = vector.broadcast %228 : vector<1x1x4xf32> to vector<16x16x4xf32>
    %230 = arith.mulf %227, %229 : vector<16x16x4xf32>
    %231 = arith.addf %225, %230 : vector<16x16x4xf32>
    %c25 = arith.constant 25 : index
    %c0_144 = arith.constant 0 : index
    %232 = vector.load %arg7[%c25, %c0_144] : memref<49x4xf32, #tpu.memory_space<vmem>>, vector<1x4xf32>
    %c3_145 = arith.constant 3 : index
    %c4_146 = arith.constant 4 : index
    %c0_147 = arith.constant 0 : index
    %233 = vector.load %arg10[%c3_145, %c4_146, %c0_147] : memref<22x22x4xf32, #tpu.memory_space<vmem>>, vector<16x16x4xf32>
    %234 = vector.shape_cast %232 : vector<1x4xf32> to vector<1x1x4xf32>
    %235 = vector.broadcast %234 : vector<1x1x4xf32> to vector<16x16x4xf32>
    %236 = arith.mulf %233, %235 : vector<16x16x4xf32>
    %237 = arith.addf %231, %236 : vector<16x16x4xf32>
    %c26 = arith.constant 26 : index
    %c0_148 = arith.constant 0 : index
    %238 = vector.load %arg7[%c26, %c0_148] : memref<49x4xf32, #tpu.memory_space<vmem>>, vector<1x4xf32>
    %c3_149 = arith.constant 3 : index
    %c5_150 = arith.constant 5 : index
    %c0_151 = arith.constant 0 : index
    %239 = vector.load %arg10[%c3_149, %c5_150, %c0_151] : memref<22x22x4xf32, #tpu.memory_space<vmem>>, vector<16x16x4xf32>
    %240 = vector.shape_cast %238 : vector<1x4xf32> to vector<1x1x4xf32>
    %241 = vector.broadcast %240 : vector<1x1x4xf32> to vector<16x16x4xf32>
    %242 = arith.mulf %239, %241 : vector<16x16x4xf32>
    %243 = arith.addf %237, %242 : vector<16x16x4xf32>
    %c27 = arith.constant 27 : index
    %c0_152 = arith.constant 0 : index
    %244 = vector.load %arg7[%c27, %c0_152] : memref<49x4xf32, #tpu.memory_space<vmem>>, vector<1x4xf32>
    %c3_153 = arith.constant 3 : index
    %c6_154 = arith.constant 6 : index
    %c0_155 = arith.constant 0 : index
    %245 = vector.load %arg10[%c3_153, %c6_154, %c0_155] : memref<22x22x4xf32, #tpu.memory_space<vmem>>, vector<16x16x4xf32>
    %246 = vector.shape_cast %244 : vector<1x4xf32> to vector<1x1x4xf32>
    %247 = vector.broadcast %246 : vector<1x1x4xf32> to vector<16x16x4xf32>
    %248 = arith.mulf %245, %247 : vector<16x16x4xf32>
    %249 = arith.addf %243, %248 : vector<16x16x4xf32>
    %c28 = arith.constant 28 : index
    %c0_156 = arith.constant 0 : index
    %250 = vector.load %arg7[%c28, %c0_156] : memref<49x4xf32, #tpu.memory_space<vmem>>, vector<1x4xf32>
    %c4_157 = arith.constant 4 : index
    %c0_158 = arith.constant 0 : index
    %c0_159 = arith.constant 0 : index
    %251 = vector.load %arg10[%c4_157, %c0_158, %c0_159] : memref<22x22x4xf32, #tpu.memory_space<vmem>>, vector<16x16x4xf32>
    %252 = vector.shape_cast %250 : vector<1x4xf32> to vector<1x1x4xf32>
    %253 = vector.broadcast %252 : vector<1x1x4xf32> to vector<16x16x4xf32>
    %254 = arith.mulf %251, %253 : vector<16x16x4xf32>
    %255 = arith.addf %249, %254 : vector<16x16x4xf32>
    %c29 = arith.constant 29 : index
    %c0_160 = arith.constant 0 : index
    %256 = vector.load %arg7[%c29, %c0_160] : memref<49x4xf32, #tpu.memory_space<vmem>>, vector<1x4xf32>
    %c4_161 = arith.constant 4 : index
    %c1_162 = arith.constant 1 : index
    %c0_163 = arith.constant 0 : index
    %257 = vector.load %arg10[%c4_161, %c1_162, %c0_163] : memref<22x22x4xf32, #tpu.memory_space<vmem>>, vector<16x16x4xf32>
    %258 = vector.shape_cast %256 : vector<1x4xf32> to vector<1x1x4xf32>
    %259 = vector.broadcast %258 : vector<1x1x4xf32> to vector<16x16x4xf32>
    %260 = arith.mulf %257, %259 : vector<16x16x4xf32>
    %261 = arith.addf %255, %260 : vector<16x16x4xf32>
    %c30 = arith.constant 30 : index
    %c0_164 = arith.constant 0 : index
    %262 = vector.load %arg7[%c30, %c0_164] : memref<49x4xf32, #tpu.memory_space<vmem>>, vector<1x4xf32>
    %c4_165 = arith.constant 4 : index
    %c2_166 = arith.constant 2 : index
    %c0_167 = arith.constant 0 : index
    %263 = vector.load %arg10[%c4_165, %c2_166, %c0_167] : memref<22x22x4xf32, #tpu.memory_space<vmem>>, vector<16x16x4xf32>
    %264 = vector.shape_cast %262 : vector<1x4xf32> to vector<1x1x4xf32>
    %265 = vector.broadcast %264 : vector<1x1x4xf32> to vector<16x16x4xf32>
    %266 = arith.mulf %263, %265 : vector<16x16x4xf32>
    %267 = arith.addf %261, %266 : vector<16x16x4xf32>
    %c31 = arith.constant 31 : index
    %c0_168 = arith.constant 0 : index
    %268 = vector.load %arg7[%c31, %c0_168] : memref<49x4xf32, #tpu.memory_space<vmem>>, vector<1x4xf32>
    %c4_169 = arith.constant 4 : index
    %c3_170 = arith.constant 3 : index
    %c0_171 = arith.constant 0 : index
    %269 = vector.load %arg10[%c4_169, %c3_170, %c0_171] : memref<22x22x4xf32, #tpu.memory_space<vmem>>, vector<16x16x4xf32>
    %270 = vector.shape_cast %268 : vector<1x4xf32> to vector<1x1x4xf32>
    %271 = vector.broadcast %270 : vector<1x1x4xf32> to vector<16x16x4xf32>
    %272 = arith.mulf %269, %271 : vector<16x16x4xf32>
    %273 = arith.addf %267, %272 : vector<16x16x4xf32>
    %c32 = arith.constant 32 : index
    %c0_172 = arith.constant 0 : index
    %274 = vector.load %arg7[%c32, %c0_172] : memref<49x4xf32, #tpu.memory_space<vmem>>, vector<1x4xf32>
    %c4_173 = arith.constant 4 : index
    %c4_174 = arith.constant 4 : index
    %c0_175 = arith.constant 0 : index
    %275 = vector.load %arg10[%c4_173, %c4_174, %c0_175] : memref<22x22x4xf32, #tpu.memory_space<vmem>>, vector<16x16x4xf32>
    %276 = vector.shape_cast %274 : vector<1x4xf32> to vector<1x1x4xf32>
    %277 = vector.broadcast %276 : vector<1x1x4xf32> to vector<16x16x4xf32>
    %278 = arith.mulf %275, %277 : vector<16x16x4xf32>
    %279 = arith.addf %273, %278 : vector<16x16x4xf32>
    %c33 = arith.constant 33 : index
    %c0_176 = arith.constant 0 : index
    %280 = vector.load %arg7[%c33, %c0_176] : memref<49x4xf32, #tpu.memory_space<vmem>>, vector<1x4xf32>
    %c4_177 = arith.constant 4 : index
    %c5_178 = arith.constant 5 : index
    %c0_179 = arith.constant 0 : index
    %281 = vector.load %arg10[%c4_177, %c5_178, %c0_179] : memref<22x22x4xf32, #tpu.memory_space<vmem>>, vector<16x16x4xf32>
    %282 = vector.shape_cast %280 : vector<1x4xf32> to vector<1x1x4xf32>
    %283 = vector.broadcast %282 : vector<1x1x4xf32> to vector<16x16x4xf32>
    %284 = arith.mulf %281, %283 : vector<16x16x4xf32>
    %285 = arith.addf %279, %284 : vector<16x16x4xf32>
    %c34 = arith.constant 34 : index
    %c0_180 = arith.constant 0 : index
    %286 = vector.load %arg7[%c34, %c0_180] : memref<49x4xf32, #tpu.memory_space<vmem>>, vector<1x4xf32>
    %c4_181 = arith.constant 4 : index
    %c6_182 = arith.constant 6 : index
    %c0_183 = arith.constant 0 : index
    %287 = vector.load %arg10[%c4_181, %c6_182, %c0_183] : memref<22x22x4xf32, #tpu.memory_space<vmem>>, vector<16x16x4xf32>
    %288 = vector.shape_cast %286 : vector<1x4xf32> to vector<1x1x4xf32>
    %289 = vector.broadcast %288 : vector<1x1x4xf32> to vector<16x16x4xf32>
    %290 = arith.mulf %287, %289 : vector<16x16x4xf32>
    %291 = arith.addf %285, %290 : vector<16x16x4xf32>
    %c35 = arith.constant 35 : index
    %c0_184 = arith.constant 0 : index
    %292 = vector.load %arg7[%c35, %c0_184] : memref<49x4xf32, #tpu.memory_space<vmem>>, vector<1x4xf32>
    %c5_185 = arith.constant 5 : index
    %c0_186 = arith.constant 0 : index
    %c0_187 = arith.constant 0 : index
    %293 = vector.load %arg10[%c5_185, %c0_186, %c0_187] : memref<22x22x4xf32, #tpu.memory_space<vmem>>, vector<16x16x4xf32>
    %294 = vector.shape_cast %292 : vector<1x4xf32> to vector<1x1x4xf32>
    %295 = vector.broadcast %294 : vector<1x1x4xf32> to vector<16x16x4xf32>
    %296 = arith.mulf %293, %295 : vector<16x16x4xf32>
    %297 = arith.addf %291, %296 : vector<16x16x4xf32>
    %c36 = arith.constant 36 : index
    %c0_188 = arith.constant 0 : index
    %298 = vector.load %arg7[%c36, %c0_188] : memref<49x4xf32, #tpu.memory_space<vmem>>, vector<1x4xf32>
    %c5_189 = arith.constant 5 : index
    %c1_190 = arith.constant 1 : index
    %c0_191 = arith.constant 0 : index
    %299 = vector.load %arg10[%c5_189, %c1_190, %c0_191] : memref<22x22x4xf32, #tpu.memory_space<vmem>>, vector<16x16x4xf32>
    %300 = vector.shape_cast %298 : vector<1x4xf32> to vector<1x1x4xf32>
    %301 = vector.broadcast %300 : vector<1x1x4xf32> to vector<16x16x4xf32>
    %302 = arith.mulf %299, %301 : vector<16x16x4xf32>
    %303 = arith.addf %297, %302 : vector<16x16x4xf32>
    %c37 = arith.constant 37 : index
    %c0_192 = arith.constant 0 : index
    %304 = vector.load %arg7[%c37, %c0_192] : memref<49x4xf32, #tpu.memory_space<vmem>>, vector<1x4xf32>
    %c5_193 = arith.constant 5 : index
    %c2_194 = arith.constant 2 : index
    %c0_195 = arith.constant 0 : index
    %305 = vector.load %arg10[%c5_193, %c2_194, %c0_195] : memref<22x22x4xf32, #tpu.memory_space<vmem>>, vector<16x16x4xf32>
    %306 = vector.shape_cast %304 : vector<1x4xf32> to vector<1x1x4xf32>
    %307 = vector.broadcast %306 : vector<1x1x4xf32> to vector<16x16x4xf32>
    %308 = arith.mulf %305, %307 : vector<16x16x4xf32>
    %309 = arith.addf %303, %308 : vector<16x16x4xf32>
    %c38 = arith.constant 38 : index
    %c0_196 = arith.constant 0 : index
    %310 = vector.load %arg7[%c38, %c0_196] : memref<49x4xf32, #tpu.memory_space<vmem>>, vector<1x4xf32>
    %c5_197 = arith.constant 5 : index
    %c3_198 = arith.constant 3 : index
    %c0_199 = arith.constant 0 : index
    %311 = vector.load %arg10[%c5_197, %c3_198, %c0_199] : memref<22x22x4xf32, #tpu.memory_space<vmem>>, vector<16x16x4xf32>
    %312 = vector.shape_cast %310 : vector<1x4xf32> to vector<1x1x4xf32>
    %313 = vector.broadcast %312 : vector<1x1x4xf32> to vector<16x16x4xf32>
    %314 = arith.mulf %311, %313 : vector<16x16x4xf32>
    %315 = arith.addf %309, %314 : vector<16x16x4xf32>
    %c39 = arith.constant 39 : index
    %c0_200 = arith.constant 0 : index
    %316 = vector.load %arg7[%c39, %c0_200] : memref<49x4xf32, #tpu.memory_space<vmem>>, vector<1x4xf32>
    %c5_201 = arith.constant 5 : index
    %c4_202 = arith.constant 4 : index
    %c0_203 = arith.constant 0 : index
    %317 = vector.load %arg10[%c5_201, %c4_202, %c0_203] : memref<22x22x4xf32, #tpu.memory_space<vmem>>, vector<16x16x4xf32>
    %318 = vector.shape_cast %316 : vector<1x4xf32> to vector<1x1x4xf32>
    %319 = vector.broadcast %318 : vector<1x1x4xf32> to vector<16x16x4xf32>
    %320 = arith.mulf %317, %319 : vector<16x16x4xf32>
    %321 = arith.addf %315, %320 : vector<16x16x4xf32>
    %c40 = arith.constant 40 : index
    %c0_204 = arith.constant 0 : index
    %322 = vector.load %arg7[%c40, %c0_204] : memref<49x4xf32, #tpu.memory_space<vmem>>, vector<1x4xf32>
    %c5_205 = arith.constant 5 : index
    %c5_206 = arith.constant 5 : index
    %c0_207 = arith.constant 0 : index
    %323 = vector.load %arg10[%c5_205, %c5_206, %c0_207] : memref<22x22x4xf32, #tpu.memory_space<vmem>>, vector<16x16x4xf32>
    %324 = vector.shape_cast %322 : vector<1x4xf32> to vector<1x1x4xf32>
    %325 = vector.broadcast %324 : vector<1x1x4xf32> to vector<16x16x4xf32>
    %326 = arith.mulf %323, %325 : vector<16x16x4xf32>
    %327 = arith.addf %321, %326 : vector<16x16x4xf32>
    %c41 = arith.constant 41 : index
    %c0_208 = arith.constant 0 : index
    %328 = vector.load %arg7[%c41, %c0_208] : memref<49x4xf32, #tpu.memory_space<vmem>>, vector<1x4xf32>
    %c5_209 = arith.constant 5 : index
    %c6_210 = arith.constant 6 : index
    %c0_211 = arith.constant 0 : index
    %329 = vector.load %arg10[%c5_209, %c6_210, %c0_211] : memref<22x22x4xf32, #tpu.memory_space<vmem>>, vector<16x16x4xf32>
    %330 = vector.shape_cast %328 : vector<1x4xf32> to vector<1x1x4xf32>
    %331 = vector.broadcast %330 : vector<1x1x4xf32> to vector<16x16x4xf32>
    %332 = arith.mulf %329, %331 : vector<16x16x4xf32>
    %333 = arith.addf %327, %332 : vector<16x16x4xf32>
    %c42 = arith.constant 42 : index
    %c0_212 = arith.constant 0 : index
    %334 = vector.load %arg7[%c42, %c0_212] : memref<49x4xf32, #tpu.memory_space<vmem>>, vector<1x4xf32>
    %c6_213 = arith.constant 6 : index
    %c0_214 = arith.constant 0 : index
    %c0_215 = arith.constant 0 : index
    %335 = vector.load %arg10[%c6_213, %c0_214, %c0_215] : memref<22x22x4xf32, #tpu.memory_space<vmem>>, vector<16x16x4xf32>
    %336 = vector.shape_cast %334 : vector<1x4xf32> to vector<1x1x4xf32>
    %337 = vector.broadcast %336 : vector<1x1x4xf32> to vector<16x16x4xf32>
    %338 = arith.mulf %335, %337 : vector<16x16x4xf32>
    %339 = arith.addf %333, %338 : vector<16x16x4xf32>
    %c43 = arith.constant 43 : index
    %c0_216 = arith.constant 0 : index
    %340 = vector.load %arg7[%c43, %c0_216] : memref<49x4xf32, #tpu.memory_space<vmem>>, vector<1x4xf32>
    %c6_217 = arith.constant 6 : index
    %c1_218 = arith.constant 1 : index
    %c0_219 = arith.constant 0 : index
    %341 = vector.load %arg10[%c6_217, %c1_218, %c0_219] : memref<22x22x4xf32, #tpu.memory_space<vmem>>, vector<16x16x4xf32>
    %342 = vector.shape_cast %340 : vector<1x4xf32> to vector<1x1x4xf32>
    %343 = vector.broadcast %342 : vector<1x1x4xf32> to vector<16x16x4xf32>
    %344 = arith.mulf %341, %343 : vector<16x16x4xf32>
    %345 = arith.addf %339, %344 : vector<16x16x4xf32>
    %c44 = arith.constant 44 : index
    %c0_220 = arith.constant 0 : index
    %346 = vector.load %arg7[%c44, %c0_220] : memref<49x4xf32, #tpu.memory_space<vmem>>, vector<1x4xf32>
    %c6_221 = arith.constant 6 : index
    %c2_222 = arith.constant 2 : index
    %c0_223 = arith.constant 0 : index
    %347 = vector.load %arg10[%c6_221, %c2_222, %c0_223] : memref<22x22x4xf32, #tpu.memory_space<vmem>>, vector<16x16x4xf32>
    %348 = vector.shape_cast %346 : vector<1x4xf32> to vector<1x1x4xf32>
    %349 = vector.broadcast %348 : vector<1x1x4xf32> to vector<16x16x4xf32>
    %350 = arith.mulf %347, %349 : vector<16x16x4xf32>
    %351 = arith.addf %345, %350 : vector<16x16x4xf32>
    %c45 = arith.constant 45 : index
    %c0_224 = arith.constant 0 : index
    %352 = vector.load %arg7[%c45, %c0_224] : memref<49x4xf32, #tpu.memory_space<vmem>>, vector<1x4xf32>
    %c6_225 = arith.constant 6 : index
    %c3_226 = arith.constant 3 : index
    %c0_227 = arith.constant 0 : index
    %353 = vector.load %arg10[%c6_225, %c3_226, %c0_227] : memref<22x22x4xf32, #tpu.memory_space<vmem>>, vector<16x16x4xf32>
    %354 = vector.shape_cast %352 : vector<1x4xf32> to vector<1x1x4xf32>
    %355 = vector.broadcast %354 : vector<1x1x4xf32> to vector<16x16x4xf32>
    %356 = arith.mulf %353, %355 : vector<16x16x4xf32>
    %357 = arith.addf %351, %356 : vector<16x16x4xf32>
    %c46 = arith.constant 46 : index
    %c0_228 = arith.constant 0 : index
    %358 = vector.load %arg7[%c46, %c0_228] : memref<49x4xf32, #tpu.memory_space<vmem>>, vector<1x4xf32>
    %c6_229 = arith.constant 6 : index
    %c4_230 = arith.constant 4 : index
    %c0_231 = arith.constant 0 : index
    %359 = vector.load %arg10[%c6_229, %c4_230, %c0_231] : memref<22x22x4xf32, #tpu.memory_space<vmem>>, vector<16x16x4xf32>
    %360 = vector.shape_cast %358 : vector<1x4xf32> to vector<1x1x4xf32>
    %361 = vector.broadcast %360 : vector<1x1x4xf32> to vector<16x16x4xf32>
    %362 = arith.mulf %359, %361 : vector<16x16x4xf32>
    %363 = arith.addf %357, %362 : vector<16x16x4xf32>
    %c47 = arith.constant 47 : index
    %c0_232 = arith.constant 0 : index
    %364 = vector.load %arg7[%c47, %c0_232] : memref<49x4xf32, #tpu.memory_space<vmem>>, vector<1x4xf32>
    %c6_233 = arith.constant 6 : index
    %c5_234 = arith.constant 5 : index
    %c0_235 = arith.constant 0 : index
    %365 = vector.load %arg10[%c6_233, %c5_234, %c0_235] : memref<22x22x4xf32, #tpu.memory_space<vmem>>, vector<16x16x4xf32>
    %366 = vector.shape_cast %364 : vector<1x4xf32> to vector<1x1x4xf32>
    %367 = vector.broadcast %366 : vector<1x1x4xf32> to vector<16x16x4xf32>
    %368 = arith.mulf %365, %367 : vector<16x16x4xf32>
    %369 = arith.addf %363, %368 : vector<16x16x4xf32>
    %c48 = arith.constant 48 : index
    %c0_236 = arith.constant 0 : index
    %370 = vector.load %arg7[%c48, %c0_236] : memref<49x4xf32, #tpu.memory_space<vmem>>, vector<1x4xf32>
    %c6_237 = arith.constant 6 : index
    %c6_238 = arith.constant 6 : index
    %c0_239 = arith.constant 0 : index
    %371 = vector.load %arg10[%c6_237, %c6_238, %c0_239] : memref<22x22x4xf32, #tpu.memory_space<vmem>>, vector<16x16x4xf32>
    %372 = vector.shape_cast %370 : vector<1x4xf32> to vector<1x1x4xf32>
    %373 = vector.broadcast %372 : vector<1x1x4xf32> to vector<16x16x4xf32>
    %374 = arith.mulf %371, %373 : vector<16x16x4xf32>
    %375 = arith.addf %369, %374 : vector<16x16x4xf32>
    %cst_240 = arith.constant dense<0.000000e+00> : vector<16x16xf32>
    %376 = vector.multi_reduction <add>, %375, %cst_240 [2] : vector<16x16x4xf32> to vector<16x16xf32>
    %377 = vector.shape_cast %376 : vector<16x16xf32> to vector<16x16x1xf32>
    %c0_241 = arith.constant 0 : index
    %c0_242 = arith.constant 0 : index
    %378 = vector.load %arg8[%c0_241, %c0_242] : memref<1x1xf32, #tpu.memory_space<vmem>>, vector<1x1xf32>
    %379 = vector.shape_cast %378 : vector<1x1xf32> to vector<1x1x1xf32>
    %380 = vector.broadcast %379 : vector<1x1x1xf32> to vector<16x16x1xf32>
    %381 = arith.addf %377, %380 : vector<16x16x1xf32>
    %cst_243 = arith.constant 0.000000e+00 : f32
    %382 = vector.broadcast %cst_243 : f32 to vector<16x16x1xf32>
    %383 = arith.subf %382, %381 : vector<16x16x1xf32>
    %384 = math.exp %383 : vector<16x16x1xf32>
    %cst_244 = arith.constant 1.000000e+00 : f32
    %385 = vector.broadcast %cst_244 : f32 to vector<16x16x1xf32>
    %386 = arith.addf %385, %384 : vector<16x16x1xf32>
    %cst_245 = arith.constant 1.000000e+00 : f32
    %387 = vector.broadcast %cst_245 : f32 to vector<16x16x1xf32>
    %388 = arith.divf %387, %386 : vector<16x16x1xf32>
    %389 = vector.broadcast %388 : vector<16x16x1xf32> to vector<16x16x32xf32>
    %390 = arith.mulf %37, %389 : vector<16x16x32xf32>
    %c0_246 = arith.constant 0 : index
    %c0_247 = arith.constant 0 : index
    %c0_248 = arith.constant 0 : index
    %c0_249 = arith.constant 0 : index
    %391 = vector.load %arg9[%c0_246, %c0_247, %c0_248, %c0_249] : memref<1x16x16x32xf32, #tpu.memory_space<vmem>>, vector<1x16x16x32xf32>
    %392 = vector.shape_cast %391 : vector<1x16x16x32xf32> to vector<16x16x32xf32>
    %393 = vector.shape_cast %390 : vector<16x16x32xf32> to vector<1x16x16x32xf32>
    tpu.vector_store %arg9[%c0_246, %c0_247, %c0_248, %c0_249], %393 {strides = array<i32>} : memref<1x16x16x32xf32, #tpu.memory_space<vmem>>, vector<1x16x16x32xf32>,
    return
  }
  func.func @transform_0(%arg0: i32) -> (i32, i32, i32, i32) {
    %c0_i32 = arith.constant 0 : i32
    %c0_i32_0 = arith.constant 0 : i32
    %c0_i32_1 = arith.constant 0 : i32
    %c0_i32_2 = arith.constant 0 : i32
    return %arg0, %c0_i32, %c0_i32_0, %c0_i32_1 : i32, i32, i32, i32
  }
  func.func @transform_1(%arg0: i32) -> (i32, i32, i32, i32) {
    %c0_i32 = arith.constant 0 : i32
    %c0_i32_0 = arith.constant 0 : i32
    %c0_i32_1 = arith.constant 0 : i32
    %c0_i32_2 = arith.constant 0 : i32
    return %arg0, %c0_i32, %c0_i32_0, %c0_i32_1 : i32, i32, i32, i32
  }
  func.func @transform_2(%arg0: i32) -> (i32, i32) {
    %c0_i32 = arith.constant 0 : i32
    %c0_i32_0 = arith.constant 0 : i32
    %c0_i32_1 = arith.constant 0 : i32
    return %c0_i32, %c0_i32_0 : i32, i32
  }
  func.func @transform_3(%arg0: i32) -> (i32, i32) {
    %c0_i32 = arith.constant 0 : i32
    %c0_i32_0 = arith.constant 0 : i32
    %c0_i32_1 = arith.constant 0 : i32
    return %c0_i32, %c0_i32_0 : i32, i32
  }
  func.func @transform_4(%arg0: i32) -> (i32, i32) {
    %c0_i32 = arith.constant 0 : i32
    %c0_i32_0 = arith.constant 0 : i32
    %c0_i32_1 = arith.constant 0 : i32
    return %c0_i32, %c0_i32_0 : i32, i32
  }
  func.func @transform_5(%arg0: i32) -> (i32, i32) {
    %c0_i32 = arith.constant 0 : i32
    %c0_i32_0 = arith.constant 0 : i32
    %c0_i32_1 = arith.constant 0 : i32
    return %c0_i32, %c0_i32_0 : i32, i32
  }
  func.func @transform_6(%arg0: i32) -> (i32, i32) {
    %c0_i32 = arith.constant 0 : i32
    %c0_i32_0 = arith.constant 0 : i32
    %c0_i32_1 = arith.constant 0 : i32
    return %c0_i32, %c0_i32_0 : i32, i32
  }
  func.func @transform_7(%arg0: i32) -> (i32, i32) {
    %c0_i32 = arith.constant 0 : i32
    %c0_i32_0 = arith.constant 0 : i32
    %c0_i32_1 = arith.constant 0 : i32
    return %c0_i32, %c0_i32_0 : i32, i32
  }
  func.func @transform_8(%arg0: i32) -> (i32, i32, i32, i32) {
    %c0_i32 = arith.constant 0 : i32
    %c0_i32_0 = arith.constant 0 : i32
    %c0_i32_1 = arith.constant 0 : i32
    %c0_i32_2 = arith.constant 0 : i32
    return %arg0, %c0_i32, %c0_i32_0, %c0_i32_1 : i32, i32, i32, i32
  }
}

</mosaic_0001>

<llo_original>
// kernel: cbam_pyr_attention.1
$region0: #{cbam_pyr_attention.1}
  #allocation0 [shape = 'u32[]', space=smem, size = 0x4, offset = 0x4, fixed_abs, tag = 'smem constant byte address 0x4 - core index']
  #allocation1 [shape = 'u32[72,128]{1,0:T(1,128)}', space=vmem, size = 0x9000, scoped, tag = 'internal scratch']
  #allocation2 [shape = 'f32[22,22,4]{2,1,0:T(8,128)}', space=vmem, size = 0x42000, scoped, tag = 'scratch operand']
  #allocation3 [shape = 'f32[1,1]{1,0:T(1,128)S(1)}', space=vmem, size = 0x200, scoped, tag = 'scoped memory for cbam_pyr_attention.1']
  %s0 = inlined_call_operand.vmem [shape: f32[2,16,16,16], index: 0, kind: input, shape index: {}]
  %s1 = inlined_call_operand.vmem [shape: f32[2,16,16,32], index: 1, kind: input, shape index: {}]
  %s2 = inlined_call_operand.vmem [shape: f32[16,16], index: 2, kind: input, shape index: {}]
  %s3 = inlined_call_operand.vmem [shape: f32[1,16], index: 3, kind: input, shape index: {}]
  %s4 = inlined_call_operand.vmem [shape: f32[16,32], index: 4, kind: input, shape index: {}]
  %s5 = inlined_call_operand.vmem [shape: f32[1,32], index: 5, kind: input, shape index: {}]
  %s6 = inlined_call_operand.vmem [shape: f32[49,4], index: 6, kind: input, shape index: {}]
  %s7 = inlined_call_operand.<no memory space> [shape: f32[1,1], index: 7, kind: input, shape index: {}]
  %s8 = inlined_call_operand.hbm [shape: f32[2,16,16,32], index: 8, kind: output, shape index: {}]
  %s9 = sld [smem:[#allocation0]]
  $region65: #{cbam_pyr_attention.1} parent=0
    _
  %s11 = ssub.s32 1, %s9
  %s12 = scalar_select 0, %s11, %s9
  %v13 = vstv %s7
  %14 = vst [vmem:[#allocation3] sm:$0x1] %v13
  $region1: #{cbam_pyr_attention.1} parent=0
    #allocation4 [shape = 'u8[262144]{0}', space=vmem, size = 0x40000, scoped, tag = 'output window, operand 0']
    #allocation5 [shape = 's32[2]{0}', space=sflag, size = 0x8, scoped, tag = 'scoped memory for cbam_pyr_attention.1']
    %15 = vsyncpa [#allocation5], 0
    %s16 = scalar_lea.sflag [#allocation5], 1
    %17 = vsyncpa %s16, 0
    loop: start=0, step=1, limit=4
    $region2: #{cbam_pyr_attention.1} parent=1 // loop_pre_header
      _
    $region3: #{cbam_pyr_attention.1} parent=1 // loop_header
      %s19 = sphi 0, %s23
      %p20 = scmp.ge.s32.totalorder %s19, 4
      %s29 = sphi 0, %s31
      %s32 = sphi 0, %s29
      %s33 = sphi 0, %s32
      %s49 = sphi 0, %s33
      %s55 = sphi 0, %s57
      %s58 = sphi 0, %s55
      %s59 = sphi 0, %s58
      %s75 = sphi 0, %s59
      %s79 = sphi 0, %s79
      %s81 = sphi 0, %s79
      %s82 = sphi 0, %s81
      %s96 = sphi 0, %s82
      %s100 = sphi 0, %s100
      %s102 = sphi 0, %s100
      %s103 = sphi 0, %s102
      %s117 = sphi 0, %s103
      %s121 = sphi 0, %s121
      %s123 = sphi 0, %s121
      %s124 = sphi 0, %s123
      %s138 = sphi 0, %s124
      %s142 = sphi 0, %s142
      %s144 = sphi 0, %s142
      %s145 = sphi 0, %s144
      %s159 = sphi 0, %s145
      %s163 = sphi 0, %s163
      %s165 = sphi 0, %s163
      %s166 = sphi 0, %s165
      %s180 = sphi 0, %s166
      %s184 = sphi 0, %s184
      %s186 = sphi 0, %s184
      %s187 = sphi 0, %s186
      %s201 = sphi 0, %s187
      %s207 = sphi 0, %s209
      %s210 = sphi 0, %s207
      %s211 = sphi 0, %s210
      %s227 = sphi 0, %s211
    $region4: #{cbam_pyr_attention.1} parent=1 // loop_header_branch
      %22 = sbr.rel (%p20) target = $region8
    $region5: #{cbam_pyr_attention.1} parent=1 // loop_body
      %s24 = ssub.s32 %s19, 1
      %s25 = ssub.s32 %s19, 2
      %s26 = sadd.s32 %s19, 1
      %s27 = ssub.s32 %s19, %s26
      %p28 = scmp.eq.s32.totalorder %s27, 0
      %s30 = sadd.s32 %s29, 1
      %s31 = scalar_select %p28, %s29, %s30
      %p34 = pneg %p28
      %p35 = scmp.eq.s32.totalorder %s19, 1
      %p36 = por %p34, %p35
      %p37 = scmp.ne.s32.totalorder %s29, %s32
      %p38 = scmp.eq.s32.totalorder %s19, 0
      %p39 = por %p37, %p38
      %p40 = scmp.ne.s32.totalorder %s29, %s32
      %p41 = scmp.eq.s32.totalorder %s24, 1
      %p42 = por %p40, %p41
      %p43 = scmp.ne.s32.totalorder %s32, %s33
      %p44 = scmp.eq.s32.totalorder %s24, 0
      %p45 = por %p43, %p44
      %p46 = scmp.ne.s32.totalorder %s32, %s33
      %p47 = scmp.eq.s32.totalorder %s25, 1
      %p48 = por %p46, %p47
      %p50 = scmp.ne.s32.totalorder %s33, %s49
      %p51 = scmp.eq.s32.totalorder %s25, 0
      %p52 = por %p50, %p51
      %s53 = ssub.s32 %s19, %s26
      %p54 = scmp.eq.s32.totalorder %s53, 0
      %s56 = sadd.s32 %s55, 1
      %s57 = scalar_select %p54, %s55, %s56
      %p60 = pneg %p54
      %p61 = scmp.eq.s32.totalorder %s19, 1
      %p62 = por %p60, %p61
      %p63 = scmp.ne.s32.totalorder %s55, %s58
      %p64 = scmp.eq.s32.totalorder %s19, 0
      %p65 = por %p63, %p64
      %p66 = scmp.ne.s32.totalorder %s55, %s58
      %p67 = scmp.eq.s32.totalorder %s24, 1
      %p68 = por %p66, %p67
      %p69 = scmp.ne.s32.totalorder %s58, %s59
      %p70 = scmp.eq.s32.totalorder %s24, 0
      %p71 = por %p69, %p70
      %p72 = scmp.ne.s32.totalorder %s58, %s59
      %p73 = scmp.eq.s32.totalorder %s25, 1
      %p74 = por %p72, %p73
      %p76 = scmp.ne.s32.totalorder %s59, %s75
      %p77 = scmp.eq.s32.totalorder %s25, 0
      %p78 = por %p76, %p77
      %s80 = sadd.s32 %s79, 1
      %p83 = scmp.eq.s32.totalorder %s19, 1
      %p84 = scmp.ne.s32.totalorder %s79, %s81
      %p85 = scmp.eq.s32.totalorder %s19, 0
      %p86 = por %p84, %p85
      %p87 = scmp.ne.s32.totalorder %s79, %s81
      %p88 = scmp.eq.s32.totalorder %s24, 1
      %p89 = por %p87, %p88
      %p90 = scmp.ne.s32.totalorder %s81, %s82
      %p91 = scmp.eq.s32.totalorder %s24, 0
      %p92 = por %p90, %p91
      %p93 = scmp.ne.s32.totalorder %s81, %s82
      %p94 = scmp.eq.s32.totalorder %s25, 1
      %p95 = por %p93, %p94
      %p97 = scmp.ne.s32.totalorder %s82, %s96
      %p98 = scmp.eq.s32.totalorder %s25, 0
      %p99 = por %p97, %p98
      %s101 = sadd.s32 %s100, 1
      %p104 = scmp.eq.s32.totalorder %s19, 1
      %p105 = scmp.ne.s32.totalorder %s100, %s102
      %p106 = scmp.eq.s32.totalorder %s19, 0
      %p107 = por %p105, %p106
      %p108 = scmp.ne.s32.totalorder %s100, %s102
      %p109 = scmp.eq.s32.totalorder %s24, 1
      %p110 = por %p108, %p109
      %p111 = scmp.ne.s32.totalorder %s102, %s103
      %p112 = scmp.eq.s32.totalorder %s24, 0
      %p113 = por %p111, %p112
      %p114 = scmp.ne.s32.totalorder %s102, %s103
      %p115 = scmp.eq.s32.totalorder %s25, 1
      %p116 = por %p114, %p115
      %p118 = scmp.ne.s32.totalorder %s103, %s117
      %p119 = scmp.eq.s32.totalorder %s25, 0
      %p120 = por %p118, %p119
      %s122 = sadd.s32 %s121, 1
      %p125 = scmp.eq.s32.totalorder %s19, 1
      %p126 = scmp.ne.s32.totalorder %s121, %s123
      %p127 = scmp.eq.s32.totalorder %s19, 0
      %p128 = por %p126, %p127
      %p129 = scmp.ne.s32.totalorder %s121, %s123
      %p130 = scmp.eq.s32.totalorder %s24, 1
      %p131 = por %p129, %p130
      %p132 = scmp.ne.s32.totalorder %s123, %s124
      %p133 = scmp.eq.s32.totalorder %s24, 0
      %p134 = por %p132, %p133
      %p135 = scmp.ne.s32.totalorder %s123, %s124
      %p136 = scmp.eq.s32.totalorder %s25, 1
      %p137 = por %p135, %p136
      %p139 = scmp.ne.s32.totalorder %s124, %s138
      %p140 = scmp.eq.s32.totalorder %s25, 0
      %p141 = por %p139, %p140
      %s143 = sadd.s32 %s142, 1
      %p146 = scmp.eq.s32.totalorder %s19, 1
      %p147 = scmp.ne.s32.totalorder %s142, %s144
      %p148 = scmp.eq.s32.totalorder %s19, 0
      %p149 = por %p147, %p148
      %p150 = scmp.ne.s32.totalorder %s142, %s144
      %p151 = scmp.eq.s32.totalorder %s24, 1
      %p152 = por %p150, %p151
      %p153 = scmp.ne.s32.totalorder %s144, %s145
      %p154 = scmp.eq.s32.totalorder %s24, 0
      %p155 = por %p153, %p154
      %p156 = scmp.ne.s32.totalorder %s144, %s145
      %p157 = scmp.eq.s32.totalorder %s25, 1
      %p158 = por %p156, %p157
      %p160 = scmp.ne.s32.totalorder %s145, %s159
      %p161 = scmp.eq.s32.totalorder %s25, 0
      %p162 = por %p160, %p161
      %s164 = sadd.s32 %s163, 1
      %p167 = scmp.eq.s32.totalorder %s19, 1
      %p168 = scmp.ne.s32.totalorder %s163, %s165
      %p169 = scmp.eq.s32.totalorder %s19, 0
      %p170 = por %p168, %p169
      %p171 = scmp.ne.s32.totalorder %s163, %s165
      %p172 = scmp.eq.s32.totalorder %s24, 1
      %p173 = por %p171, %p172
      %p174 = scmp.ne.s32.totalorder %s165, %s166
      %p175 = scmp.eq.s32.totalorder %s24, 0
      %p176 = por %p174, %p175
      %p177 = scmp.ne.s32.totalorder %s165, %s166
      %p178 = scmp.eq.s32.totalorder %s25, 1
      %p179 = por %p177, %p178
      %p181 = scmp.ne.s32.totalorder %s166, %s180
      %p182 = scmp.eq.s32.totalorder %s25, 0
      %p183 = por %p181, %p182
      %s185 = sadd.s32 %s184, 1
      %p188 = scmp.eq.s32.totalorder %s19, 1
      %p189 = scmp.ne.s32.totalorder %s184, %s186
      %p190 = scmp.eq.s32.totalorder %s19, 0
      %p191 = por %p189, %p190
      %p192 = scmp.ne.s32.totalorder %s184, %s186
      %p193 = scmp.eq.s32.totalorder %s24, 1
      %p194 = por %p192, %p193
      %p195 = scmp.ne.s32.totalorder %s186, %s187
      %p196 = scmp.eq.s32.totalorder %s24, 0
      %p197 = por %p195, %p196
      %p198 = scmp.ne.s32.totalorder %s186, %s187
      %p199 = scmp.eq.s32.totalorder %s25, 1
      %p200 = por %p198, %p199
      %p202 = scmp.ne.s32.totalorder %s187, %s201
      %p203 = scmp.eq.s32.totalorder %s25, 0
      %p204 = por %p202, %p203
      %s205 = ssub.s32 %s19, %s26
      %p206 = scmp.eq.s32.totalorder %s205, 0
      %s208 = sadd.s32 %s207, 1
      %s209 = scalar_select %p206, %s207, %s208
      %p212 = pneg %p206
      %p213 = scmp.eq.s32.totalorder %s19, 1
      %p214 = por %p212, %p213
      %p215 = scmp.ne.s32.totalorder %s207, %s210
      %p216 = scmp.eq.s32.totalorder %s19, 0
      %p217 = por %p215, %p216
      %p218 = scmp.ne.s32.totalorder %s207, %s210
      %p219 = scmp.eq.s32.totalorder %s24, 1
      %p220 = por %p218, %p219
      %p221 = scmp.ne.s32.totalorder %s210, %s211
      %p222 = scmp.eq.s32.totalorder %s24, 0
      %p223 = por %p221, %p222
      %p224 = scmp.ne.s32.totalorder %s210, %s211
      %p225 = scmp.eq.s32.totalorder %s25, 1
      %p226 = por %p224, %p225
      %p228 = scmp.ne.s32.totalorder %s211, %s227
      %p229 = scmp.eq.s32.totalorder %s25, 0
      %p230 = por %p228, %p229
      %p231 = scmp.le.s32.totalorder 1, %s19
      %p232 = scmp.lt.s32.totalorder %s19, 3
      %p233 = pnand %p231, %p232
      %p234 = pneg %p233
      // Predicated region
      $region9: #{cbam_pyr_attention.1} parent=5 // pred_check
        _
      $region10: #{cbam_pyr_attention.1} parent=5 // pred_check_branch
        %236 = sbr.rel (%p233) target = $region12
      $region11: #{cbam_pyr_attention.1} parent=5 // pred_region
        %s237 = ssub.s32 %s19, 1
        // Predicated region
        $region13: #{cbam_pyr_attention.1} parent=11 // pred_check
          %p238 = pneg %p92
        $region14: #{cbam_pyr_attention.1} parent=11 // pred_check_branch
          %240 = sbr.rel (%p238) target = $region16
        $region15: #{cbam_pyr_attention.1} parent=11 // pred_region
          _
        $region16: #{cbam_pyr_attention.1} parent=11 // pred_fallthru
          _
        // Predicated region
        $region17: #{cbam_pyr_attention.1} parent=11 // pred_check
          %p241 = pneg %p113
        $region18: #{cbam_pyr_attention.1} parent=11 // pred_check_branch
          %243 = sbr.rel (%p241) target = $region20
        $region19: #{cbam_pyr_attention.1} parent=11 // pred_region
          _
        $region20: #{cbam_pyr_attention.1} parent=11 // pred_fallthru
          _
        // Predicated region
        $region21: #{cbam_pyr_attention.1} parent=11 // pred_check
          %p244 = pneg %p134
        $region22: #{cbam_pyr_attention.1} parent=11 // pred_check_branch
          %246 = sbr.rel (%p244) target = $region24
        $region23: #{cbam_pyr_attention.1} parent=11 // pred_region
          _
        $region24: #{cbam_pyr_attention.1} parent=11 // pred_fallthru
          _
        // Predicated region
        $region25: #{cbam_pyr_attention.1} parent=11 // pred_check
          %p247 = pneg %p155
        $region26: #{cbam_pyr_attention.1} parent=11 // pred_check_branch
          %249 = sbr.rel (%p247) target = $region28
        $region27: #{cbam_pyr_attention.1} parent=11 // pred_region
          _
        $region28: #{cbam_pyr_attention.1} parent=11 // pred_fallthru
          _
        // Predicated region
        $region29: #{cbam_pyr_attention.1} parent=11 // pred_check
          %p250 = pneg %p176
        $region30: #{cbam_pyr_attention.1} parent=11 // pred_check_branch
          %252 = sbr.rel (%p250) target = $region32
        $region31: #{cbam_pyr_attention.1} parent=11 // pred_region
          _
        $region32: #{cbam_pyr_attention.1} parent=11 // pred_fallthru
          _
        // Predicated region
        $region33: #{cbam_pyr_attention.1} parent=11 // pred_check
          %p253 = pneg %p197
        $region34: #{cbam_pyr_attention.1} parent=11 // pred_check_branch
          %255 = sbr.rel (%p253) target = $region36
        $region35: #{cbam_pyr_attention.1} parent=11 // pred_region
          _
        $region36: #{cbam_pyr_attention.1} parent=11 // pred_fallthru
          _
      $region12: #{cbam_pyr_attention.1} parent=5 // pred_fallthru
        _
      %p256 = scmp.lt.s32.totalorder %s19, 2
      // Predicated region
      $region37: #{cbam_pyr_attention.1} parent=5 // pred_check
        %p257 = pneg %p256
      $region38: #{cbam_pyr_attention.1} parent=5 // pred_check_branch
        %259 = sbr.rel (%p257) target = $region40
      $region39: #{cbam_pyr_attention.1} parent=5 // pred_region
        // Predicated region
        $region41: #{cbam_pyr_attention.1} parent=39 // pred_check
          %p260 = pneg %p39
        $region42: #{cbam_pyr_attention.1} parent=39 // pred_check_branch
          %262 = sbr.rel (%p260) target = $region44
        $region43: #{cbam_pyr_attention.1} parent=39 // pred_region
          %p263 = scmp.lt.s32.totalorder %s19, 1
          %s264 = scalar_select %p263, %s19, 1
          %s265 = smul.addr %s264, 32
          %s266 = smul.addr %s265, 8
          %s267 = scalar_lea.vmem %s0, %s266
        $region44: #{cbam_pyr_attention.1} parent=39 // pred_fallthru
          _
        // Predicated region
        $region45: #{cbam_pyr_attention.1} parent=39 // pred_check
          %p268 = pneg %p65
        $region46: #{cbam_pyr_attention.1} parent=39 // pred_check_branch
          %270 = sbr.rel (%p268) target = $region48
        $region47: #{cbam_pyr_attention.1} parent=39 // pred_region
          %p271 = scmp.lt.s32.totalorder %s19, 1
          %s272 = scalar_select %p271, %s19, 1
          %s273 = smul.addr %s272, 32
          %s274 = smul.addr %s273, 8
          %s275 = scalar_lea.vmem %s1, %s274
        $region48: #{cbam_pyr_attention.1} parent=39 // pred_fallthru
          _
      $region40: #{cbam_pyr_attention.1} parent=5 // pred_fallthru
        _
      %p276 = scmp.le.s32.totalorder 1, %s19
      %p277 = scmp.lt.s32.totalorder %s19, 3
      %p278 = pnand %p276, %p277
      %p279 = pneg %p278
      // Predicated region
      $region49: #{cbam_pyr_attention.1} parent=5 // pred_check
        _
      $region50: #{cbam_pyr_attention.1} parent=5 // pred_check_branch
        %281 = sbr.rel (%p278) target = $region52
      $region51: #{cbam_pyr_attention.1} parent=5 // pred_region
        %s282 = ssub.s32 %s19, 1
        %p283 = scmp.lt.s32.totalorder %s24, 1
        %s284 = scalar_select %p283, %s24, 1
        %s285 = smul.addr %s284, 32
        %s286 = smul.addr %s285, 8
        %s287 = scalar_lea.vmem %s0, %s286
        %p288 = pneg %p45
        %p289 = pneg %p42
        %p290 = scmp.lt.s32.totalorder %s24, 1
        %s291 = scalar_select %p290, %s24, 1
        %s292 = smul.addr %s291, 32
        %s293 = smul.addr %s292, 8
        %s294 = scalar_lea.vmem %s1, %s293
        %p295 = pneg %p71
        %p296 = pneg %p68
        %p297 = pneg %p92
        %p298 = pneg %p89
        %p299 = pneg %p113
        %p300 = pneg %p110
        %p301 = pneg %p134
        %p302 = pneg %p131
        %p303 = pneg %p155
        %p304 = pneg %p152
        %p305 = pneg %p176
        %p306 = pneg %p173
        %p307 = pneg %p197
        %p308 = pneg %p194
        %p309 = pneg %p223
        %p310 = pneg %p220
        %s311 = sand.u32 %s210, 1
        %s312 = scalar_lea.sflag [#allocation5], %s311
        %s313 = sand.u32 %s210, 1
        %s314 = smul.addr %s313, 256
        %s315 = scalar_lea.vmem [#allocation4], %s314
        %p316 = scmp.lt.s32.totalorder %s24, 1
        %s317 = scalar_select %p316, %s24, 1
        %s318 = smul.addr %s317, 32
        %s319 = smul.addr %s318, 8
        %s320 = scalar_lea.vmem %s0, %s319
        %p321 = scmp.lt.s32.totalorder %s24, 1
        %s322 = scalar_select %p321, %s24, 1
        %s323 = smul.addr %s322, 32
        %s324 = smul.addr %s323, 8
        %s325 = scalar_lea.vmem %s1, %s324
        %v326 = vld [vmem:[%s320] sm:$0xff]
        %v327 = vld [vmem:[%s320 + $0x8] sm:$0xff]
        %v328 = vld [vmem:[%s320 + $0x10] sm:$0xff]
        %v329 = vld [vmem:[%s320 + $0x18] sm:$0xff]
        %v330 = vld [vmem:[%s320 + $0x20] sm:$0xff]
        %v331 = vld [vmem:[%s320 + $0x28] sm:$0xff]
        %v332 = vld [vmem:[%s320 + $0x30] sm:$0xff]
        %v333 = vld [vmem:[%s320 + $0x38] sm:$0xff]
        %v334 = vld [vmem:[%s320 + $0x40] sm:$0xff]
        %v335 = vld [vmem:[%s320 + $0x48] sm:$0xff]
        %v336 = vld [vmem:[%s320 + $0x50] sm:$0xff]
        %v337 = vld [vmem:[%s320 + $0x58] sm:$0xff]
        %v338 = vld [vmem:[%s320 + $0x60] sm:$0xff]
        %v339 = vld [vmem:[%s320 + $0x68] sm:$0xff]
        %v340 = vld [vmem:[%s320 + $0x70] sm:$0xff]
        %v341 = vld [vmem:[%s320 + $0x78] sm:$0xff]
        %v342 = vld [vmem:[%s320 + $0x80] sm:$0xff]
        %v343 = vld [vmem:[%s320 + $0x88] sm:$0xff]
        %v344 = vld [vmem:[%s320 + $0x90] sm:$0xff]
        %v345 = vld [vmem:[%s320 + $0x98] sm:$0xff]
        %v346 = vld [vmem:[%s320 + $0xa0] sm:$0xff]
        %v347 = vld [vmem:[%s320 + $0xa8] sm:$0xff]
        %v348 = vld [vmem:[%s320 + $0xb0] sm:$0xff]
        %v349 = vld [vmem:[%s320 + $0xb8] sm:$0xff]
        %v350 = vld [vmem:[%s320 + $0xc0] sm:$0xff]
        %v351 = vld [vmem:[%s320 + $0xc8] sm:$0xff]
        %v352 = vld [vmem:[%s320 + $0xd0] sm:$0xff]
        %v353 = vld [vmem:[%s320 + $0xd8] sm:$0xff]
        %v354 = vld [vmem:[%s320 + $0xe0] sm:$0xff]
        %v355 = vld [vmem:[%s320 + $0xe8] sm:$0xff]
        %v356 = vld [vmem:[%s320 + $0xf0] sm:$0xff]
        %v357 = vld [vmem:[%s320 + $0xf8] sm:$0xff]
        %v358 = vld [vmem:[%s325] sm:$0xff]
        %v359 = vld [vmem:[%s325 + $0x8] sm:$0xff]
        %v360 = vld [vmem:[%s325 + $0x10] sm:$0xff]
        %v361 = vld [vmem:[%s325 + $0x18] sm:$0xff]
        %v362 = vld [vmem:[%s325 + $0x20] sm:$0xff]
        %v363 = vld [vmem:[%s325 + $0x28] sm:$0xff]
        %v364 = vld [vmem:[%s325 + $0x30] sm:$0xff]
        %v365 = vld [vmem:[%s325 + $0x38] sm:$0xff]
        %v366 = vld [vmem:[%s325 + $0x40] sm:$0xff]
        %v367 = vld [vmem:[%s325 + $0x48] sm:$0xff]
        %v368 = vld [vmem:[%s325 + $0x50] sm:$0xff]
        %v369 = vld [vmem:[%s325 + $0x58] sm:$0xff]
        %v370 = vld [vmem:[%s325 + $0x60] sm:$0xff]
        %v371 = vld [vmem:[%s325 + $0x68] sm:$0xff]
        %v372 = vld [vmem:[%s325 + $0x70] sm:$0xff]
        %v373 = vld [vmem:[%s325 + $0x78] sm:$0xff]
        %v374 = vld [vmem:[%s325 + $0x80] sm:$0xff]
        %v375 = vld [vmem:[%s325 + $0x88] sm:$0xff]
        %v376 = vld [vmem:[%s325 + $0x90] sm:$0xff]
        %v377 = vld [vmem:[%s325 + $0x98] sm:$0xff]
        %v378 = vld [vmem:[%s325 + $0xa0] sm:$0xff]
        %v379 = vld [vmem:[%s325 + $0xa8] sm:$0xff]
        %v380 = vld [vmem:[%s325 + $0xb0] sm:$0xff]
        %v381 = vld [vmem:[%s325 + $0xb8] sm:$0xff]
        %v382 = vld [vmem:[%s325 + $0xc0] sm:$0xff]
        %v383 = vld [vmem:[%s325 + $0xc8] sm:$0xff]
        %v384 = vld [vmem:[%s325 + $0xd0] sm:$0xff]
        %v385 = vld [vmem:[%s325 + $0xd8] sm:$0xff]
        %v386 = vld [vmem:[%s325 + $0xe0] sm:$0xff]
        %v387 = vld [vmem:[%s325 + $0xe8] sm:$0xff]
        %v388 = vld [vmem:[%s325 + $0xf0] sm:$0xff]
        %v389 = vld [vmem:[%s325 + $0xf8] sm:$0xff]
        %vm390 = vcmask 130048
        %v391 = vsel %vm390, %v326, 0.0
        %v392 = vsel %vm390, %v328, 0.0
        %v393 = vadd.f32 %v391, %v392
        %v394 = vsel %vm390, %v330, 0.0
        %v395 = vadd.f32 %v393, %v394
        %v396 = vsel %vm390, %v332, 0.0
        %v397 = vadd.f32 %v395, %v396
        %v398 = vsel %vm390, %v334, 0.0
        %v399 = vadd.f32 %v397, %v398
        %v400 = vsel %vm390, %v336, 0.0
        %v401 = vadd.f32 %v399, %v400
        %v402 = vsel %vm390, %v338, 0.0
        %v403 = vadd.f32 %v401, %v402
        %v404 = vsel %vm390, %v340, 0.0
        %v405 = vadd.f32 %v403, %v404
        %v406 = vsel %vm390, %v342, 0.0
        %v407 = vadd.f32 %v405, %v406
        %v408 = vsel %vm390, %v344, 0.0
        %v409 = vadd.f32 %v407, %v408
        %v410 = vsel %vm390, %v346, 0.0
        %v411 = vadd.f32 %v409, %v410
        %v412 = vsel %vm390, %v348, 0.0
        %v413 = vadd.f32 %v411, %v412
        %v414 = vsel %vm390, %v350, 0.0
        %v415 = vadd.f32 %v413, %v414
        %v416 = vsel %vm390, %v352, 0.0
        %v417 = vadd.f32 %v415, %v416
        %v418 = vsel %vm390, %v354, 0.0
        %v419 = vadd.f32 %v417, %v418
        %v420 = vsel %vm390, %v356, 0.0
        %v421 = vadd.f32 %v419, %v420
        %v422 = vsel %vm390, %v327, 0.0
        %v423 = vsel %vm390, %v329, 0.0
        %v424 = vadd.f32 %v422, %v423
        %v425 = vsel %vm390, %v331, 0.0
        %v426 = vadd.f32 %v424, %v425
        %v427 = vsel %vm390, %v333, 0.0
        %v428 = vadd.f32 %v426, %v427
        %v429 = vsel %vm390, %v335, 0.0
        %v430 = vadd.f32 %v428, %v429
        %v431 = vsel %vm390, %v337, 0.0
        %v432 = vadd.f32 %v430, %v431
        %v433 = vsel %vm390, %v339, 0.0
        %v434 = vadd.f32 %v432, %v433
        %v435 = vsel %vm390, %v341, 0.0
        %v436 = vadd.f32 %v434, %v435
        %v437 = vsel %vm390, %v343, 0.0
        %v438 = vadd.f32 %v436, %v437
        %v439 = vsel %vm390, %v345, 0.0
        %v440 = vadd.f32 %v438, %v439
        %v441 = vsel %vm390, %v347, 0.0
        %v442 = vadd.f32 %v440, %v441
        %v443 = vsel %vm390, %v349, 0.0
        %v444 = vadd.f32 %v442, %v443
        %v445 = vsel %vm390, %v351, 0.0
        %v446 = vadd.f32 %v444, %v445
        %v447 = vsel %vm390, %v353, 0.0
        %v448 = vadd.f32 %v446, %v447
        %v449 = vsel %vm390, %v355, 0.0
        %v450 = vadd.f32 %v448, %v449
        %v451 = vsel %vm390, %v357, 0.0
        %v452 = vadd.f32 %v450, %v451
        %v453 = vsel %vm390, %v421, 0.0
        %v454 = vsel %vm390, %v452, 0.0
        %v455 = vadd.f32 %v453, %v454
        %v456 = vrot.slane %v455, 4
        %v457 = vadd.f32 %v455, %v456
        %v458 = vrot.slane %v457, 2
        %v459 = vadd.f32 %v457, %v458
        %v460 = vrot.slane %v459, 1
        %v461 = vadd.f32 %v459, %v460
        %v462 = vmul.f32 %v461, 0.00390625
        %v463 = vsel %vm390, %v326, -inf
        %v464 = vsel %vm390, %v328, -inf
        %v465 = vsel %vm390, %v330, -inf
        %v466 = vmax.f32 %v463, %v465
        %v467 = vsel %vm390, %v332, -inf
        %v468 = vmax.f32 %v464, %v467
        %v469 = vsel %vm390, %v334, -inf
        %v470 = vmax.f32 %v466, %v469
        %v471 = vsel %vm390, %v336, -inf
        %v472 = vmax.f32 %v468, %v471
        %v473 = vsel %vm390, %v338, -inf
        %v474 = vmax.f32 %v470, %v473
        %v475 = vsel %vm390, %v340, -inf
        %v476 = vmax.f32 %v472, %v475
        %v477 = vsel %vm390, %v342, -inf
        %v478 = vmax.f32 %v474, %v477
        %v479 = vsel %vm390, %v344, -inf
        %v480 = vmax.f32 %v476, %v479
        %v481 = vsel %vm390, %v346, -inf
        %v482 = vmax.f32 %v478, %v481
        %v483 = vsel %vm390, %v348, -inf
        %v484 = vmax.f32 %v480, %v483
        %v485 = vsel %vm390, %v350, -inf
        %v486 = vmax.f32 %v482, %v485
        %v487 = vsel %vm390, %v352, -inf
        %v488 = vmax.f32 %v484, %v487
        %v489 = vsel %vm390, %v354, -inf
        %v490 = vmax.f32 %v486, %v489
        %v491 = vsel %vm390, %v356, -inf
        %v492 = vmax.f32 %v488, %v491
        %v493 = vmax.f32 %v490, %v492
        %v494 = vsel %vm390, %v327, -inf
        %v495 = vsel %vm390, %v329, -inf
        %v496 = vsel %vm390, %v331, -inf
        %v497 = vmax.f32 %v494, %v496
        %v498 = vsel %vm390, %v333, -inf
        %v499 = vmax.f32 %v495, %v498
        %v500 = vsel %vm390, %v335, -inf
        %v501 = vmax.f32 %v497, %v500
        %v502 = vsel %vm390, %v337, -inf
        %v503 = vmax.f32 %v499, %v502
        %v504 = vsel %vm390, %v339, -inf
        %v505 = vmax.f32 %v501, %v504
        %v506 = vsel %vm390, %v341, -inf
        %v507 = vmax.f32 %v503, %v506
        %v508 = vsel %vm390, %v343, -inf
        %v509 = vmax.f32 %v505, %v508
        %v510 = vsel %vm390, %v345, -inf
        %v511 = vmax.f32 %v507, %v510
        %v512 = vsel %vm390, %v347, -inf
        %v513 = vmax.f32 %v509, %v512
        %v514 = vsel %vm390, %v349, -inf
        %v515 = vmax.f32 %v511, %v514
        %v516 = vsel %vm390, %v351, -inf
        %v517 = vmax.f32 %v513, %v516
        %v518 = vsel %vm390, %v353, -inf
        %v519 = vmax.f32 %v515, %v518
        %v520 = vsel %vm390, %v355, -inf
        %v521 = vmax.f32 %v517, %v520
        %v522 = vsel %vm390, %v357, -inf
        %v523 = vmax.f32 %v519, %v522
        %v524 = vmax.f32 %v521, %v523
        %v525 = vsel %vm390, %v493, -inf
        %v526 = vsel %vm390, %v524, -inf
        %v527 = vmax.f32 %v525, %v526
        %v528 = vrot.slane %v527, 4
        %v529 = vmax.f32 %v527, %v528
        %v530 = vrot.slane %v529, 2
        %v531 = vmax.f32 %v529, %v530
        %v532 = vrot.slane %v531, 1
        %v533 = vmax.f32 %v531, %v532
        %vm534 = vcmask 1040384
        %v535 = vsel %vm534, %v462, %v533
        %v536 = vld [vmem:[%s2] sm:$0xff]
        %v537 = vld [vmem:[%s2 + $0x8] sm:$0xff]
        %v538 = vld [vmem:[%s3] sm:$0x1]
        %v540 = vperm.slane %v538, 0
        %v543 = vsel %vm390, %v535, 0
        %545 = vmatpush.msra.mxu0 0.0
        %546 = vmatpush.msra.mxu0 0.0
        %547 = vmatpush.msra.mxu0 0.0
        %548 = vmatpush.msra.mxu0 0.0
        %549 = vmatpush.msra.mxu0 0.0
        %550 = vmatpush.msra.mxu0 0.0
        %551 = vmatpush.msra.mxu0 0.0
        %552 = vmatpush.msra.mxu0 0.0
        %553 = vmatpush.msra.mxu0 0.0
        %554 = vmatpush.msra.mxu0 0.0
        %555 = vmatpush.msra.mxu0 0.0
        %556 = vmatpush.msra.mxu0 0.0
        %557 = vmatpush.msra.mxu0 0.0
        %558 = vmatpush.msra.mxu0 0.0
        %559 = vmatpush.msra.mxu0 %v537
        %560 = vmatpush.msra.mxu0 %v536
        %561 = vmatmul.f32.gmra.mxu0 %v543
        %v562 = vpop.f32.mrf.mxu0
        %v563 = vadd.f32 %v540, %v562
        %564 = vdwg.mxu0
        %v565 = vmax.f32 %v563, 0.0
        %v566 = vld [vmem:[%s4] sm:$0xff]
        %v567 = vld [vmem:[%s4 + $0x8] sm:$0xff]
        %v568 = vld [vmem:[%s5] sm:$0x1]
        %v570 = vperm.slane %v568, 0
        %v573 = vsel %vm390, %v565, 0
        %575 = vmatpush.msra.mxu0 0.0
        %576 = vmatpush.msra.mxu0 0.0
        %577 = vmatpush.msra.mxu0 0.0
        %578 = vmatpush.msra.mxu0 0.0
        %579 = vmatpush.msra.mxu0 0.0
        %580 = vmatpush.msra.mxu0 0.0
        %581 = vmatpush.msra.mxu0 0.0
        %582 = vmatpush.msra.mxu0 0.0
        %583 = vmatpush.msra.mxu0 0.0
        %584 = vmatpush.msra.mxu0 0.0
        %585 = vmatpush.msra.mxu0 0.0
        %586 = vmatpush.msra.mxu0 0.0
        %587 = vmatpush.msra.mxu0 0.0
        %588 = vmatpush.msra.mxu0 0.0
        %589 = vmatpush.msra.mxu0 %v567
        %590 = vmatpush.msra.mxu0 %v566
        %591 = vmatmul.f32.gmra.mxu0 %v573
        %v592 = vpop.f32.mrf.mxu0
        %v593 = vadd.f32 %v570, %v592
        %594 = vdwg.mxu0
        %v596 = vrot.slane %v593, 1
        %v598 = vadd.f32 %v593, %v596
        %v599 = vsub.f32 0.0, %v598
        %v600 = vmul.f32 %v599, 1.442695
        %v601 = vpow.pop %v600
        %v602 = vadd.f32 %v601, 1.0
        %v603 = vrcp.pop %v602
        %v604 = vmul.f32 %v602, %v603
        %v605 = vsub.f32 1.0, %v604
        %v606 = vmul.f32 %v603, %v605
        %v607 = vadd.f32 %v603, %v606
        %vm608 = vweird.f32 %v602
        %vm609 = vweird.f32 %v603
        %vm610 = vmor %vm608, %vm609
        %v611 = vsel %vm610, %v603, %v607
        %v612 = vand.u32 2147483647, %v602
        %vm613 = vcmp.eq.f32.partialorder %v612, 8.507059e+37
        %v614 = vand.u32 %v602, 2147483648
        %v615 = vor.u32 1.1754944e-38, %v614
        %v616 = vsel %vm613, %v615, %v611
        %v617 = vmul.f32 1.0, %v616
        %v618 = vperm.slane %v617, 0
        %v619 = vmul.f32 %v358, %v618
        %v620 = vmul.f32 %v359, %v618
        %v621 = vmul.f32 %v360, %v618
        %v622 = vmul.f32 %v361, %v618
        %v623 = vmul.f32 %v362, %v618
        %v624 = vmul.f32 %v363, %v618
        %v625 = vmul.f32 %v364, %v618
        %v626 = vmul.f32 %v365, %v618
        %v627 = vmul.f32 %v366, %v618
        %v628 = vmul.f32 %v367, %v618
        %v629 = vmul.f32 %v368, %v618
        %v630 = vmul.f32 %v369, %v618
        %v631 = vmul.f32 %v370, %v618
        %v632 = vmul.f32 %v371, %v618
        %v633 = vmul.f32 %v372, %v618
        %v634 = vmul.f32 %v373, %v618
        %v635 = vmul.f32 %v374, %v618
        %v636 = vmul.f32 %v375, %v618
        %v637 = vmul.f32 %v376, %v618
        %v638 = vmul.f32 %v377, %v618
        %v639 = vmul.f32 %v378, %v618
        %v640 = vmul.f32 %v379, %v618
        %v641 = vmul.f32 %v380, %v618
        %v642 = vmul.f32 %v381, %v618
        %v643 = vmul.f32 %v382, %v618
        %v644 = vmul.f32 %v383, %v618
        %v645 = vmul.f32 %v384, %v618
        %v646 = vmul.f32 %v385, %v618
        %v647 = vmul.f32 %v386, %v618
        %v648 = vmul.f32 %v387, %v618
        %v649 = vmul.f32 %v388, %v618
        %v650 = vmul.f32 %v389, %v618
        %vm651 = vcmask 261120
        %v652 = vsel %vm651, %v619, 0.0
        %653 = vadd.xlane.f32.xlu0 %v652
        %v654 = vpop.xlane.xlu0 %653
        %v655 = vsel %vm651, %v620, 0.0
        %656 = vadd.xlane.f32.xlu0 %v655
        %v657 = vpop.xlane.xlu0 %656
        %v658 = vsel %vm651, %v621, 0.0
        %659 = vadd.xlane.f32.xlu0 %v658
        %v660 = vpop.xlane.xlu0 %659
        %v661 = vsel %vm651, %v622, 0.0
        %662 = vadd.xlane.f32.xlu0 %v661
        %v663 = vpop.xlane.xlu0 %662
        %v664 = vsel %vm651, %v623, 0.0
        %665 = vadd.xlane.f32.xlu0 %v664
        %v666 = vpop.xlane.xlu0 %665
        %v667 = vsel %vm651, %v624, 0.0
        %668 = vadd.xlane.f32.xlu0 %v667
        %v669 = vpop.xlane.xlu0 %668
        %v670 = vsel %vm651, %v625, 0.0
        %671 = vadd.xlane.f32.xlu0 %v670
        %v672 = vpop.xlane.xlu0 %671
        %v673 = vsel %vm651, %v626, 0.0
        %674 = vadd.xlane.f32.xlu0 %v673
        %v675 = vpop.xlane.xlu0 %674
        %v676 = vsel %vm651, %v627, 0.0
        %677 = vadd.xlane.f32.xlu0 %v676
        %v678 = vpop.xlane.xlu0 %677
        %v679 = vsel %vm651, %v628, 0.0
        %680 = vadd.xlane.f32.xlu0 %v679
        %v681 = vpop.xlane.xlu0 %680
        %v682 = vsel %vm651, %v629, 0.0
        %683 = vadd.xlane.f32.xlu0 %v682
        %v684 = vpop.xlane.xlu0 %683
        %v685 = vsel %vm651, %v630, 0.0
        %686 = vadd.xlane.f32.xlu0 %v685
        %v687 = vpop.xlane.xlu0 %686
        %v688 = vsel %vm651, %v631, 0.0
        %689 = vadd.xlane.f32.xlu0 %v688
        %v690 = vpop.xlane.xlu0 %689
        %v691 = vsel %vm651, %v632, 0.0
        %692 = vadd.xlane.f32.xlu0 %v691
        %v693 = vpop.xlane.xlu0 %692
        %v694 = vsel %vm651, %v633, 0.0
        %695 = vadd.xlane.f32.xlu0 %v694
        %v696 = vpop.xlane.xlu0 %695
        %v697 = vsel %vm651, %v634, 0.0
        %698 = vadd.xlane.f32.xlu0 %v697
        %v699 = vpop.xlane.xlu0 %698
        %v700 = vsel %vm651, %v635, 0.0
        %701 = vadd.xlane.f32.xlu0 %v700
        %v702 = vpop.xlane.xlu0 %701
        %v703 = vsel %vm651, %v636, 0.0
        %704 = vadd.xlane.f32.xlu0 %v703
        %v705 = vpop.xlane.xlu0 %704
        %v706 = vsel %vm651, %v637, 0.0
        %707 = vadd.xlane.f32.xlu0 %v706
        %v708 = vpop.xlane.xlu0 %707
        %v709 = vsel %vm651, %v638, 0.0
        %710 = vadd.xlane.f32.xlu0 %v709
        %v711 = vpop.xlane.xlu0 %710
        %v712 = vsel %vm651, %v639, 0.0
        %713 = vadd.xlane.f32.xlu0 %v712
        %v714 = vpop.xlane.xlu0 %713
        %v715 = vsel %vm651, %v640, 0.0
        %716 = vadd.xlane.f32.xlu0 %v715
        %v717 = vpop.xlane.xlu0 %716
        %v718 = vsel %vm651, %v641, 0.0
        %719 = vadd.xlane.f32.xlu0 %v718
        %v720 = vpop.xlane.xlu0 %719
        %v721 = vsel %vm651, %v642, 0.0
        %722 = vadd.xlane.f32.xlu0 %v721
        %v723 = vpop.xlane.xlu0 %722
        %v724 = vsel %vm651, %v643, 0.0
        %725 = vadd.xlane.f32.xlu0 %v724
        %v726 = vpop.xlane.xlu0 %725
        %v727 = vsel %vm651, %v644, 0.0
        %728 = vadd.xlane.f32.xlu0 %v727
        %v729 = vpop.xlane.xlu0 %728
        %v730 = vsel %vm651, %v645, 0.0
        %731 = vadd.xlane.f32.xlu0 %v730
        %v732 = vpop.xlane.xlu0 %731
        %v733 = vsel %vm651, %v646, 0.0
        %734 = vadd.xlane.f32.xlu0 %v733
        %v735 = vpop.xlane.xlu0 %734
        %v736 = vsel %vm651, %v647, 0.0
        %737 = vadd.xlane.f32.xlu0 %v736
        %v738 = vpop.xlane.xlu0 %737
        %v739 = vsel %vm651, %v648, 0.0
        %740 = vadd.xlane.f32.xlu0 %v739
        %v741 = vpop.xlane.xlu0 %740
        %v742 = vsel %vm651, %v649, 0.0
        %743 = vadd.xlane.f32.xlu0 %v742
        %v744 = vpop.xlane.xlu0 %743
        %v745 = vsel %vm651, %v650, 0.0
        %746 = vadd.xlane.f32.xlu0 %v745
        %v747 = vpop.xlane.xlu0 %746
        %v748 = vrcp.pop 32.0
        %v749 = vmul.f32 32.0, %v748
        %v750 = vsub.f32 1.0, %v749
        %v751 = vmul.f32 %v748, %v750
        %v752 = vadd.f32 %v748, %v751
        %vm753 = vweird.f32 %v748
        %v754 = vsel %vm753, %v748, %v752
        %v755 = vmul.f32 %v654, %v754
        %v756 = vmul.f32 %v657, %v754
        %v757 = vmul.f32 %v660, %v754
        %v758 = vmul.f32 %v663, %v754
        %v759 = vmul.f32 %v666, %v754
        %v760 = vmul.f32 %v669, %v754
        %v761 = vmul.f32 %v672, %v754
        %v762 = vmul.f32 %v675, %v754
        %v763 = vmul.f32 %v678, %v754
        %v764 = vmul.f32 %v681, %v754
        %v765 = vmul.f32 %v684, %v754
        %v766 = vmul.f32 %v687, %v754
        %v767 = vmul.f32 %v690, %v754
        %v768 = vmul.f32 %v693, %v754
        %v769 = vmul.f32 %v696, %v754
        %v770 = vmul.f32 %v699, %v754
        %v771 = vmul.f32 %v702, %v754
        %v772 = vmul.f32 %v705, %v754
        %v773 = vmul.f32 %v708, %v754
        %v774 = vmul.f32 %v711, %v754
        %v775 = vmul.f32 %v714, %v754
        %v776 = vmul.f32 %v717, %v754
        %v777 = vmul.f32 %v720, %v754
        %v778 = vmul.f32 %v723, %v754
        %v779 = vmul.f32 %v726, %v754
        %v780 = vmul.f32 %v729, %v754
        %v781 = vmul.f32 %v732, %v754
        %v782 = vmul.f32 %v735, %v754
        %v783 = vmul.f32 %v738, %v754
        %v784 = vmul.f32 %v741, %v754
        %v785 = vmul.f32 %v744, %v754
        %v786 = vmul.f32 %v747, %v754
        %v787 = vsel %vm651, %v619, -inf
        %788 = vmax.xlane.f32.xlu0 %v787
        %v789 = vpop.xlane.xlu0 %788
        %v790 = vsel %vm651, %v620, -inf
        %791 = vmax.xlane.f32.xlu0 %v790
        %v792 = vpop.xlane.xlu0 %791
        %v793 = vsel %vm651, %v621, -inf
        %794 = vmax.xlane.f32.xlu0 %v793
        %v795 = vpop.xlane.xlu0 %794
        %v796 = vsel %vm651, %v622, -inf
        %797 = vmax.xlane.f32.xlu0 %v796
        %v798 = vpop.xlane.xlu0 %797
        %v799 = vsel %vm651, %v623, -inf
        %800 = vmax.xlane.f32.xlu0 %v799
        %v801 = vpop.xlane.xlu0 %800
        %v802 = vsel %vm651, %v624, -inf
        %803 = vmax.xlane.f32.xlu0 %v802
        %v804 = vpop.xlane.xlu0 %803
        %v805 = vsel %vm651, %v625, -inf
        %806 = vmax.xlane.f32.xlu0 %v805
        %v807 = vpop.xlane.xlu0 %806
        %v808 = vsel %vm651, %v626, -inf
        %809 = vmax.xlane.f32.xlu0 %v808
        %v810 = vpop.xlane.xlu0 %809
        %v811 = vsel %vm651, %v627, -inf
        %812 = vmax.xlane.f32.xlu0 %v811
        %v813 = vpop.xlane.xlu0 %812
        %v814 = vsel %vm651, %v628, -inf
        %815 = vmax.xlane.f32.xlu0 %v814
        %v816 = vpop.xlane.xlu0 %815
        %v817 = vsel %vm651, %v629, -inf
        %818 = vmax.xlane.f32.xlu0 %v817
        %v819 = vpop.xlane.xlu0 %818
        %v820 = vsel %vm651, %v630, -inf
        %821 = vmax.xlane.f32.xlu0 %v820
        %v822 = vpop.xlane.xlu0 %821
        %v823 = vsel %vm651, %v631, -inf
        %824 = vmax.xlane.f32.xlu0 %v823
        %v825 = vpop.xlane.xlu0 %824
        %v826 = vsel %vm651, %v632, -inf
        %827 = vmax.xlane.f32.xlu0 %v826
        %v828 = vpop.xlane.xlu0 %827
        %v829 = vsel %vm651, %v633, -inf
        %830 = vmax.xlane.f32.xlu0 %v829
        %v831 = vpop.xlane.xlu0 %830
        %v832 = vsel %vm651, %v634, -inf
        %833 = vmax.xlane.f32.xlu0 %v832
        %v834 = vpop.xlane.xlu0 %833
        %v835 = vsel %vm651, %v635, -inf
        %836 = vmax.xlane.f32.xlu0 %v835
        %v837 = vpop.xlane.xlu0 %836
        %v838 = vsel %vm651, %v636, -inf
        %839 = vmax.xlane.f32.xlu0 %v838
        %v840 = vpop.xlane.xlu0 %839
        %v841 = vsel %vm651, %v637, -inf
        %842 = vmax.xlane.f32.xlu0 %v841
        %v843 = vpop.xlane.xlu0 %842
        %v844 = vsel %vm651, %v638, -inf
        %845 = vmax.xlane.f32.xlu0 %v844
        %v846 = vpop.xlane.xlu0 %845
        %v847 = vsel %vm651, %v639, -inf
        %848 = vmax.xlane.f32.xlu0 %v847
        %v849 = vpop.xlane.xlu0 %848
        %v850 = vsel %vm651, %v640, -inf
        %851 = vmax.xlane.f32.xlu0 %v850
        %v852 = vpop.xlane.xlu0 %851
        %v853 = vsel %vm651, %v641, -inf
        %854 = vmax.xlane.f32.xlu0 %v853
        %v855 = vpop.xlane.xlu0 %854
        %v856 = vsel %vm651, %v642, -inf
        %857 = vmax.xlane.f32.xlu0 %v856
        %v858 = vpop.xlane.xlu0 %857
        %v859 = vsel %vm651, %v643, -inf
        %860 = vmax.xlane.f32.xlu0 %v859
        %v861 = vpop.xlane.xlu0 %860
        %v862 = vsel %vm651, %v644, -inf
        %863 = vmax.xlane.f32.xlu0 %v862
        %v864 = vpop.xlane.xlu0 %863
        %v865 = vsel %vm651, %v645, -inf
        %866 = vmax.xlane.f32.xlu0 %v865
        %v867 = vpop.xlane.xlu0 %866
        %v868 = vsel %vm651, %v646, -inf
        %869 = vmax.xlane.f32.xlu0 %v868
        %v870 = vpop.xlane.xlu0 %869
        %v871 = vsel %vm651, %v647, -inf
        %872 = vmax.xlane.f32.xlu0 %v871
        %v873 = vpop.xlane.xlu0 %872
        %v874 = vsel %vm651, %v648, -inf
        %875 = vmax.xlane.f32.xlu0 %v874
        %v876 = vpop.xlane.xlu0 %875
        %v877 = vsel %vm651, %v649, -inf
        %878 = vmax.xlane.f32.xlu0 %v877
        %v879 = vpop.xlane.xlu0 %878
        %v880 = vsel %vm651, %v650, -inf
        %881 = vmax.xlane.f32.xlu0 %v880
        %v882 = vpop.xlane.xlu0 %881
        %883 = vadd.xlane.f32.xlu0 %v391
        %v884 = vpop.xlane.xlu0 %883
        %885 = vadd.xlane.f32.xlu0 %v422
        %v886 = vpop.xlane.xlu0 %885
        %887 = vadd.xlane.f32.xlu0 %v392
        %v888 = vpop.xlane.xlu0 %887
        %889 = vadd.xlane.f32.xlu0 %v423
        %v890 = vpop.xlane.xlu0 %889
        %891 = vadd.xlane.f32.xlu0 %v394
        %v892 = vpop.xlane.xlu0 %891
        %893 = vadd.xlane.f32.xlu0 %v425
        %v894 = vpop.xlane.xlu0 %893
        %895 = vadd.xlane.f32.xlu0 %v396
        %v896 = vpop.xlane.xlu0 %895
        %897 = vadd.xlane.f32.xlu0 %v427
        %v898 = vpop.xlane.xlu0 %897
        %899 = vadd.xlane.f32.xlu0 %v398
        %v900 = vpop.xlane.xlu0 %899
        %901 = vadd.xlane.f32.xlu0 %v429
        %v902 = vpop.xlane.xlu0 %901
        %903 = vadd.xlane.f32.xlu0 %v400
        %v904 = vpop.xlane.xlu0 %903
        %905 = vadd.xlane.f32.xlu0 %v431
        %v906 = vpop.xlane.xlu0 %905
        %907 = vadd.xlane.f32.xlu0 %v402
        %v908 = vpop.xlane.xlu0 %907
        %909 = vadd.xlane.f32.xlu0 %v433
        %v910 = vpop.xlane.xlu0 %909
        %911 = vadd.xlane.f32.xlu0 %v404
        %v912 = vpop.xlane.xlu0 %911
        %913 = vadd.xlane.f32.xlu0 %v435
        %v914 = vpop.xlane.xlu0 %913
        %915 = vadd.xlane.f32.xlu0 %v406
        %v916 = vpop.xlane.xlu0 %915
        %917 = vadd.xlane.f32.xlu0 %v437
        %v918 = vpop.xlane.xlu0 %917
        %919 = vadd.xlane.f32.xlu0 %v408
        %v920 = vpop.xlane.xlu0 %919
        %921 = vadd.xlane.f32.xlu0 %v439
        %v922 = vpop.xlane.xlu0 %921
        %923 = vadd.xlane.f32.xlu0 %v410
        %v924 = vpop.xlane.xlu0 %923
        %925 = vadd.xlane.f32.xlu0 %v441
        %v926 = vpop.xlane.xlu0 %925
        %927 = vadd.xlane.f32.xlu0 %v412
        %v928 = vpop.xlane.xlu0 %927
        %929 = vadd.xlane.f32.xlu0 %v443
        %v930 = vpop.xlane.xlu0 %929
        %931 = vadd.xlane.f32.xlu0 %v414
        %v932 = vpop.xlane.xlu0 %931
        %933 = vadd.xlane.f32.xlu0 %v445
        %v934 = vpop.xlane.xlu0 %933
        %935 = vadd.xlane.f32.xlu0 %v416
        %v936 = vpop.xlane.xlu0 %935
        %937 = vadd.xlane.f32.xlu0 %v447
        %v938 = vpop.xlane.xlu0 %937
        %939 = vadd.xlane.f32.xlu0 %v418
        %v940 = vpop.xlane.xlu0 %939
        %941 = vadd.xlane.f32.xlu0 %v449
        %v942 = vpop.xlane.xlu0 %941
        %943 = vadd.xlane.f32.xlu0 %v420
        %v944 = vpop.xlane.xlu0 %943
        %945 = vadd.xlane.f32.xlu0 %v451
        %v946 = vpop.xlane.xlu0 %945
        %v947 = vrcp.pop 16.0
        %v948 = vmul.f32 16.0, %v947
        %v949 = vsub.f32 1.0, %v948
        %v950 = vmul.f32 %v947, %v949
        %v951 = vadd.f32 %v947, %v950
        %vm952 = vweird.f32 %v947
        %v953 = vsel %vm952, %v947, %v951
        %v954 = vmul.f32 %v884, %v953
        %v955 = vmul.f32 %v886, %v953
        %v956 = vmul.f32 %v888, %v953
        %v957 = vmul.f32 %v890, %v953
        %v958 = vmul.f32 %v892, %v953
        %v959 = vmul.f32 %v894, %v953
        %v960 = vmul.f32 %v896, %v953
        %v961 = vmul.f32 %v898, %v953
        %v962 = vmul.f32 %v900, %v953
        %v963 = vmul.f32 %v902, %v953
        %v964 = vmul.f32 %v904, %v953
        %v965 = vmul.f32 %v906, %v953
        %v966 = vmul.f32 %v908, %v953
        %v967 = vmul.f32 %v910, %v953
        %v968 = vmul.f32 %v912, %v953
        %v969 = vmul.f32 %v914, %v953
        %v970 = vmul.f32 %v916, %v953
        %v971 = vmul.f32 %v918, %v953
        %v972 = vmul.f32 %v920, %v953
        %v973 = vmul.f32 %v922, %v953
        %v974 = vmul.f32 %v924, %v953
        %v975 = vmul.f32 %v926, %v953
        %v976 = vmul.f32 %v928, %v953
        %v977 = vmul.f32 %v930, %v953
        %v978 = vmul.f32 %v932, %v953
        %v979 = vmul.f32 %v934, %v953
        %v980 = vmul.f32 %v936, %v953
        %v981 = vmul.f32 %v938, %v953
        %v982 = vmul.f32 %v940, %v953
        %v983 = vmul.f32 %v942, %v953
        %v984 = vmul.f32 %v944, %v953
        %v985 = vmul.f32 %v946, %v953
        %986 = vmax.xlane.f32.xlu0 %v463
        %v987 = vpop.xlane.xlu0 %986
        %988 = vmax.xlane.f32.xlu0 %v494
        %v989 = vpop.xlane.xlu0 %988
        %990 = vmax.xlane.f32.xlu0 %v464
        %v991 = vpop.xlane.xlu0 %990
        %992 = vmax.xlane.f32.xlu0 %v495
        %v993 = vpop.xlane.xlu0 %992
        %994 = vmax.xlane.f32.xlu0 %v465
        %v995 = vpop.xlane.xlu0 %994
        %996 = vmax.xlane.f32.xlu0 %v496
        %v997 = vpop.xlane.xlu0 %996
        %998 = vmax.xlane.f32.xlu0 %v467
        %v999 = vpop.xlane.xlu0 %998
        %1000 = vmax.xlane.f32.xlu0 %v498
        %v1001 = vpop.xlane.xlu0 %1000
        %1002 = vmax.xlane.f32.xlu0 %v469
        %v1003 = vpop.xlane.xlu0 %1002
        %1004 = vmax.xlane.f32.xlu0 %v500
        %v1005 = vpop.xlane.xlu0 %1004
        %1006 = vmax.xlane.f32.xlu0 %v471
        %v1007 = vpop.xlane.xlu0 %1006
        %1008 = vmax.xlane.f32.xlu0 %v502
        %v1009 = vpop.xlane.xlu0 %1008
        %1010 = vmax.xlane.f32.xlu0 %v473
        %v1011 = vpop.xlane.xlu0 %1010
        %1012 = vmax.xlane.f32.xlu0 %v504
        %v1013 = vpop.xlane.xlu0 %1012
        %1014 = vmax.xlane.f32.xlu0 %v475
        %v1015 = vpop.xlane.xlu0 %1014
        %1016 = vmax.xlane.f32.xlu0 %v506
        %v1017 = vpop.xlane.xlu0 %1016
        %1018 = vmax.xlane.f32.xlu0 %v477
        %v1019 = vpop.xlane.xlu0 %1018
        %1020 = vmax.xlane.f32.xlu0 %v508
        %v1021 = vpop.xlane.xlu0 %1020
        %1022 = vmax.xlane.f32.xlu0 %v479
        %v1023 = vpop.xlane.xlu0 %1022
        %1024 = vmax.xlane.f32.xlu0 %v510
        %v1025 = vpop.xlane.xlu0 %1024
        %1026 = vmax.xlane.f32.xlu0 %v481
        %v1027 = vpop.xlane.xlu0 %1026
        %1028 = vmax.xlane.f32.xlu0 %v512
        %v1029 = vpop.xlane.xlu0 %1028
        %1030 = vmax.xlane.f32.xlu0 %v483
        %v1031 = vpop.xlane.xlu0 %1030
        %1032 = vmax.xlane.f32.xlu0 %v514
        %v1033 = vpop.xlane.xlu0 %1032
        %1034 = vmax.xlane.f32.xlu0 %v485
        %v1035 = vpop.xlane.xlu0 %1034
        %1036 = vmax.xlane.f32.xlu0 %v516
        %v1037 = vpop.xlane.xlu0 %1036
        %1038 = vmax.xlane.f32.xlu0 %v487
        %v1039 = vpop.xlane.xlu0 %1038
        %1040 = vmax.xlane.f32.xlu0 %v518
        %v1041 = vpop.xlane.xlu0 %1040
        %1042 = vmax.xlane.f32.xlu0 %v489
        %v1043 = vpop.xlane.xlu0 %1042
        %1044 = vmax.xlane.f32.xlu0 %v520
        %v1045 = vpop.xlane.xlu0 %1044
        %1046 = vmax.xlane.f32.xlu0 %v491
        %v1047 = vpop.xlane.xlu0 %1046
        %1048 = vmax.xlane.f32.xlu0 %v522
        %v1049 = vpop.xlane.xlu0 %1048
        %v1050 = vlaneseq
        %v1051 = vand.u32 %v1050, 127
        %vm1052 = vcmp.eq.s32.totalorder %v1051, 0
        %v1053 = vsel %vm1052, %v755, 0.0
        %v1054 = vsel %vm1052, %v756, 0.0
        %v1055 = vsel %vm1052, %v757, 0.0
        %v1056 = vsel %vm1052, %v758, 0.0
        %v1057 = vsel %vm1052, %v759, 0.0
        %v1058 = vsel %vm1052, %v760, 0.0
        %v1059 = vsel %vm1052, %v761, 0.0
        %v1060 = vsel %vm1052, %v762, 0.0
        %v1061 = vsel %vm1052, %v763, 0.0
        %v1062 = vsel %vm1052, %v764, 0.0
        %v1063 = vsel %vm1052, %v765, 0.0
        %v1064 = vsel %vm1052, %v766, 0.0
        %v1065 = vsel %vm1052, %v767, 0.0
        %v1066 = vsel %vm1052, %v768, 0.0
        %v1067 = vsel %vm1052, %v769, 0.0
        %v1068 = vsel %vm1052, %v770, 0.0
        %v1069 = vsel %vm1052, %v771, 0.0
        %v1070 = vsel %vm1052, %v772, 0.0
        %v1071 = vsel %vm1052, %v773, 0.0
        %v1072 = vsel %vm1052, %v774, 0.0
        %v1073 = vsel %vm1052, %v775, 0.0
        %v1074 = vsel %vm1052, %v776, 0.0
        %v1075 = vsel %vm1052, %v777, 0.0
        %v1076 = vsel %vm1052, %v778, 0.0
        %v1077 = vsel %vm1052, %v779, 0.0
        %v1078 = vsel %vm1052, %v780, 0.0
        %v1079 = vsel %vm1052, %v781, 0.0
        %v1080 = vsel %vm1052, %v782, 0.0
        %v1081 = vsel %vm1052, %v783, 0.0
        %v1082 = vsel %vm1052, %v784, 0.0
        %v1083 = vsel %vm1052, %v785, 0.0
        %v1084 = vsel %vm1052, %v786, 0.0
        %vm1085 = vcmp.eq.s32.totalorder %v1051, 1
        %v1086 = vsel %vm1085, %v789, 0.0
        %v1087 = vsel %vm1085, %v792, 0.0
        %v1088 = vsel %vm1085, %v795, 0.0
        %v1089 = vsel %vm1085, %v798, 0.0
        %v1090 = vsel %vm1085, %v801, 0.0
        %v1091 = vsel %vm1085, %v804, 0.0
        %v1092 = vsel %vm1085, %v807, 0.0
        %v1093 = vsel %vm1085, %v810, 0.0
        %v1094 = vsel %vm1085, %v813, 0.0
        %v1095 = vsel %vm1085, %v816, 0.0
        %v1096 = vsel %vm1085, %v819, 0.0
        %v1097 = vsel %vm1085, %v822, 0.0
        %v1098 = vsel %vm1085, %v825, 0.0
        %v1099 = vsel %vm1085, %v828, 0.0
        %v1100 = vsel %vm1085, %v831, 0.0
        %v1101 = vsel %vm1085, %v834, 0.0
        %v1102 = vsel %vm1085, %v837, 0.0
        %v1103 = vsel %vm1085, %v840, 0.0
        %v1104 = vsel %vm1085, %v843, 0.0
        %v1105 = vsel %vm1085, %v846, 0.0
        %v1106 = vsel %vm1085, %v849, 0.0
        %v1107 = vsel %vm1085, %v852, 0.0
        %v1108 = vsel %vm1085, %v855, 0.0
        %v1109 = vsel %vm1085, %v858, 0.0
        %v1110 = vsel %vm1085, %v861, 0.0
        %v1111 = vsel %vm1085, %v864, 0.0
        %v1112 = vsel %vm1085, %v867, 0.0
        %v1113 = vsel %vm1085, %v870, 0.0
        %v1114 = vsel %vm1085, %v873, 0.0
        %v1115 = vsel %vm1085, %v876, 0.0
        %v1116 = vsel %vm1085, %v879, 0.0
        %v1117 = vsel %vm1085, %v882, 0.0
        %v1118 = vadd.f32 %v1053, %v1086
        %v1119 = vadd.f32 %v1054, %v1087
        %v1120 = vadd.f32 %v1055, %v1088
        %v1121 = vadd.f32 %v1056, %v1089
        %v1122 = vadd.f32 %v1057, %v1090
        %v1123 = vadd.f32 %v1058, %v1091
        %v1124 = vadd.f32 %v1059, %v1092
        %v1125 = vadd.f32 %v1060, %v1093
        %v1126 = vadd.f32 %v1061, %v1094
        %v1127 = vadd.f32 %v1062, %v1095
        %v1128 = vadd.f32 %v1063, %v1096
        %v1129 = vadd.f32 %v1064, %v1097
        %v1130 = vadd.f32 %v1065, %v1098
        %v1131 = vadd.f32 %v1066, %v1099
        %v1132 = vadd.f32 %v1067, %v1100
        %v1133 = vadd.f32 %v1068, %v1101
        %v1134 = vadd.f32 %v1069, %v1102
        %v1135 = vadd.f32 %v1070, %v1103
        %v1136 = vadd.f32 %v1071, %v1104
        %v1137 = vadd.f32 %v1072, %v1105
        %v1138 = vadd.f32 %v1073, %v1106
        %v1139 = vadd.f32 %v1074, %v1107
        %v1140 = vadd.f32 %v1075, %v1108
        %v1141 = vadd.f32 %v1076, %v1109
        %v1142 = vadd.f32 %v1077, %v1110
        %v1143 = vadd.f32 %v1078, %v1111
        %v1144 = vadd.f32 %v1079, %v1112
        %v1145 = vadd.f32 %v1080, %v1113
        %v1146 = vadd.f32 %v1081, %v1114
        %v1147 = vadd.f32 %v1082, %v1115
        %v1148 = vadd.f32 %v1083, %v1116
        %v1149 = vadd.f32 %v1084, %v1117
        %vm1150 = vcmp.eq.s32.totalorder %v1051, 2
        %v1151 = vsel %vm1150, %v954, 0.0
        %v1152 = vsel %vm1150, %v955, 0.0
        %v1153 = vsel %vm1150, %v956, 0.0
        %v1154 = vsel %vm1150, %v957, 0.0
        %v1155 = vsel %vm1150, %v958, 0.0
        %v1156 = vsel %vm1150, %v959, 0.0
        %v1157 = vsel %vm1150, %v960, 0.0
        %v1158 = vsel %vm1150, %v961, 0.0
        %v1159 = vsel %vm1150, %v962, 0.0
        %v1160 = vsel %vm1150, %v963, 0.0
        %v1161 = vsel %vm1150, %v964, 0.0
        %v1162 = vsel %vm1150, %v965, 0.0
        %v1163 = vsel %vm1150, %v966, 0.0
        %v1164 = vsel %vm1150, %v967, 0.0
        %v1165 = vsel %vm1150, %v968, 0.0
        %v1166 = vsel %vm1150, %v969, 0.0
        %v1167 = vsel %vm1150, %v970, 0.0
        %v1168 = vsel %vm1150, %v971, 0.0
        %v1169 = vsel %vm1150, %v972, 0.0
        %v1170 = vsel %vm1150, %v973, 0.0
        %v1171 = vsel %vm1150, %v974, 0.0
        %v1172 = vsel %vm1150, %v975, 0.0
        %v1173 = vsel %vm1150, %v976, 0.0
        %v1174 = vsel %vm1150, %v977, 0.0
        %v1175 = vsel %vm1150, %v978, 0.0
        %v1176 = vsel %vm1150, %v979, 0.0
        %v1177 = vsel %vm1150, %v980, 0.0
        %v1178 = vsel %vm1150, %v981, 0.0
        %v1179 = vsel %vm1150, %v982, 0.0
        %v1180 = vsel %vm1150, %v983, 0.0
        %v1181 = vsel %vm1150, %v984, 0.0
        %v1182 = vsel %vm1150, %v985, 0.0
        %v1183 = vadd.f32 %v1118, %v1151
        %v1184 = vadd.f32 %v1119, %v1152
        %v1185 = vadd.f32 %v1120, %v1153
        %v1186 = vadd.f32 %v1121, %v1154
        %v1187 = vadd.f32 %v1122, %v1155
        %v1188 = vadd.f32 %v1123, %v1156
        %v1189 = vadd.f32 %v1124, %v1157
        %v1190 = vadd.f32 %v1125, %v1158
        %v1191 = vadd.f32 %v1126, %v1159
        %v1192 = vadd.f32 %v1127, %v1160
        %v1193 = vadd.f32 %v1128, %v1161
        %v1194 = vadd.f32 %v1129, %v1162
        %v1195 = vadd.f32 %v1130, %v1163
        %v1196 = vadd.f32 %v1131, %v1164
        %v1197 = vadd.f32 %v1132, %v1165
        %v1198 = vadd.f32 %v1133, %v1166
        %v1199 = vadd.f32 %v1134, %v1167
        %v1200 = vadd.f32 %v1135, %v1168
        %v1201 = vadd.f32 %v1136, %v1169
        %v1202 = vadd.f32 %v1137, %v1170
        %v1203 = vadd.f32 %v1138, %v1171
        %v1204 = vadd.f32 %v1139, %v1172
        %v1205 = vadd.f32 %v1140, %v1173
        %v1206 = vadd.f32 %v1141, %v1174
        %v1207 = vadd.f32 %v1142, %v1175
        %v1208 = vadd.f32 %v1143, %v1176
        %v1209 = vadd.f32 %v1144, %v1177
        %v1210 = vadd.f32 %v1145, %v1178
        %v1211 = vadd.f32 %v1146, %v1179
        %v1212 = vadd.f32 %v1147, %v1180
        %v1213 = vadd.f32 %v1148, %v1181
        %v1214 = vadd.f32 %v1149, %v1182
        %vm1215 = vcmp.eq.s32.totalorder %v1051, 3
        %v1216 = vsel %vm1215, %v987, 0.0
        %v1217 = vsel %vm1215, %v989, 0.0
        %v1218 = vsel %vm1215, %v991, 0.0
        %v1219 = vsel %vm1215, %v993, 0.0
        %v1220 = vsel %vm1215, %v995, 0.0
        %v1221 = vsel %vm1215, %v997, 0.0
        %v1222 = vsel %vm1215, %v999, 0.0
        %v1223 = vsel %vm1215, %v1001, 0.0
        %v1224 = vsel %vm1215, %v1003, 0.0
        %v1225 = vsel %vm1215, %v1005, 0.0
        %v1226 = vsel %vm1215, %v1007, 0.0
        %v1227 = vsel %vm1215, %v1009, 0.0
        %v1228 = vsel %vm1215, %v1011, 0.0
        %v1229 = vsel %vm1215, %v1013, 0.0
        %v1230 = vsel %vm1215, %v1015, 0.0
        %v1231 = vsel %vm1215, %v1017, 0.0
        %v1232 = vsel %vm1215, %v1019, 0.0
        %v1233 = vsel %vm1215, %v1021, 0.0
        %v1234 = vsel %vm1215, %v1023, 0.0
        %v1235 = vsel %vm1215, %v1025, 0.0
        %v1236 = vsel %vm1215, %v1027, 0.0
        %v1237 = vsel %vm1215, %v1029, 0.0
        %v1238 = vsel %vm1215, %v1031, 0.0
        %v1239 = vsel %vm1215, %v1033, 0.0
        %v1240 = vsel %vm1215, %v1035, 0.0
        %v1241 = vsel %vm1215, %v1037, 0.0
        %v1242 = vsel %vm1215, %v1039, 0.0
        %v1243 = vsel %vm1215, %v1041, 0.0
        %v1244 = vsel %vm1215, %v1043, 0.0
        %v1245 = vsel %vm1215, %v1045, 0.0
        %v1246 = vsel %vm1215, %v1047, 0.0
        %v1247 = vsel %vm1215, %v1049, 0.0
        %v1248 = vadd.f32 %v1183, %v1216
        %v1249 = vadd.f32 %v1184, %v1217
        %v1250 = vadd.f32 %v1185, %v1218
        %v1251 = vadd.f32 %v1186, %v1219
        %v1252 = vadd.f32 %v1187, %v1220
        %v1253 = vadd.f32 %v1188, %v1221
        %v1254 = vadd.f32 %v1189, %v1222
        %v1255 = vadd.f32 %v1190, %v1223
        %v1256 = vadd.f32 %v1191, %v1224
        %v1257 = vadd.f32 %v1192, %v1225
        %v1258 = vadd.f32 %v1193, %v1226
        %v1259 = vadd.f32 %v1194, %v1227
        %v1260 = vadd.f32 %v1195, %v1228
        %v1261 = vadd.f32 %v1196, %v1229
        %v1262 = vadd.f32 %v1197, %v1230
        %v1263 = vadd.f32 %v1198, %v1231
        %v1264 = vadd.f32 %v1199, %v1232
        %v1265 = vadd.f32 %v1200, %v1233
        %v1266 = vadd.f32 %v1201, %v1234
        %v1267 = vadd.f32 %v1202, %v1235
        %v1268 = vadd.f32 %v1203, %v1236
        %v1269 = vadd.f32 %v1204, %v1237
        %v1270 = vadd.f32 %v1205, %v1238
        %v1271 = vadd.f32 %v1206, %v1239
        %v1272 = vadd.f32 %v1207, %v1240
        %v1273 = vadd.f32 %v1208, %v1241
        %v1274 = vadd.f32 %v1209, %v1242
        %v1275 = vadd.f32 %v1210, %v1243
        %v1276 = vadd.f32 %v1211, %v1244
        %v1277 = vadd.f32 %v1212, %v1245
        %v1278 = vadd.f32 %v1213, %v1246
        %v1279 = vadd.f32 %v1214, %v1247
        %vm1280 = vcmask 31744
        %1281 = vst.msk [vmem:[#allocation2] sm:$0xff] %vm1280, 0.0
        %1282 = vst.msk [vmem:[#allocation2 + $0x8] sm:$0xff] %vm1280, 0.0
        %vm1283 = vcmask 29696
        %1284 = vst.msk [vmem:[#allocation2 + $0x10] sm:$0x3f] %vm1283, 0.0
        %1285 = vst.msk [vmem:[#allocation2 + $0x18] sm:$0xff] %vm1280, 0.0
        %1286 = vst.msk [vmem:[#allocation2 + $0x20] sm:$0xff] %vm1280, 0.0
        %1287 = vst.msk [vmem:[#allocation2 + $0x28] sm:$0x3f] %vm1283, 0.0
        %1288 = vst.msk [vmem:[#allocation2 + $0x30] sm:$0xff] %vm1280, 0.0
        %1289 = vst.msk [vmem:[#allocation2 + $0x38] sm:$0xff] %vm1280, 0.0
        %1290 = vst.msk [vmem:[#allocation2 + $0x40] sm:$0x3f] %vm1283, 0.0
        %1291 = vst.msk [vmem:[#allocation2 + $0x48] sm:$0xff] %vm1280, 0.0
        %1292 = vst.msk [vmem:[#allocation2 + $0x50] sm:$0xff] %vm1280, 0.0
        %1293 = vst.msk [vmem:[#allocation2 + $0x58] sm:$0x3f] %vm1283, 0.0
        %1294 = vst.msk [vmem:[#allocation2 + $0x60] sm:$0xff] %vm1280, 0.0
        %1295 = vst.msk [vmem:[#allocation2 + $0x68] sm:$0xff] %vm1280, 0.0
        %1296 = vst.msk [vmem:[#allocation2 + $0x70] sm:$0x3f] %vm1283, 0.0
        %1297 = vst.msk [vmem:[#allocation2 + $0x78] sm:$0xff] %vm1280, 0.0
        %1298 = vst.msk [vmem:[#allocation2 + $0x80] sm:$0xff] %vm1280, 0.0
        %1299 = vst.msk [vmem:[#allocation2 + $0x88] sm:$0x3f] %vm1283, 0.0
        %1300 = vst.msk [vmem:[#allocation2 + $0x90] sm:$0xff] %vm1280, 0.0
        %1301 = vst.msk [vmem:[#allocation2 + $0x98] sm:$0xff] %vm1280, 0.0
        %1302 = vst.msk [vmem:[#allocation2 + $0xa0] sm:$0x3f] %vm1283, 0.0
        %1303 = vst.msk [vmem:[#allocation2 + $0xa8] sm:$0xff] %vm1280, 0.0
        %1304 = vst.msk [vmem:[#allocation2 + $0xb0] sm:$0xff] %vm1280, 0.0
        %1305 = vst.msk [vmem:[#allocation2 + $0xb8] sm:$0x3f] %vm1283, 0.0
        %1306 = vst.msk [vmem:[#allocation2 + $0xc0] sm:$0xff] %vm1280, 0.0
        %1307 = vst.msk [vmem:[#allocation2 + $0xc8] sm:$0xff] %vm1280, 0.0
        %1308 = vst.msk [vmem:[#allocation2 + $0xd0] sm:$0x3f] %vm1283, 0.0
        %1309 = vst.msk [vmem:[#allocation2 + $0xd8] sm:$0xff] %vm1280, 0.0
        %1310 = vst.msk [vmem:[#allocation2 + $0xe0] sm:$0xff] %vm1280, 0.0
        %1311 = vst.msk [vmem:[#allocation2 + $0xe8] sm:$0x3f] %vm1283, 0.0
        %1312 = vst.msk [vmem:[#allocation2 + $0xf0] sm:$0xff] %vm1280, 0.0
        %1313 = vst.msk [vmem:[#allocation2 + $0xf8] sm:$0xff] %vm1280, 0.0
        %1314 = vst.msk [vmem:[#allocation2 + $0x100] sm:$0x3f] %vm1283, 0.0
        %1315 = vst.msk [vmem:[#allocation2 + $0x108] sm:$0xff] %vm1280, 0.0
        %1316 = vst.msk [vmem:[#allocation2 + $0x110] sm:$0xff] %vm1280, 0.0
        %1317 = vst.msk [vmem:[#allocation2 + $0x118] sm:$0x3f] %vm1283, 0.0
        %1318 = vst.msk [vmem:[#allocation2 + $0x120] sm:$0xff] %vm1280, 0.0
        %1319 = vst.msk [vmem:[#allocation2 + $0x128] sm:$0xff] %vm1280, 0.0
        %1320 = vst.msk [vmem:[#allocation2 + $0x130] sm:$0x3f] %vm1283, 0.0
        %1321 = vst.msk [vmem:[#allocation2 + $0x138] sm:$0xff] %vm1280, 0.0
        %1322 = vst.msk [vmem:[#allocation2 + $0x140] sm:$0xff] %vm1280, 0.0
        %1323 = vst.msk [vmem:[#allocation2 + $0x148] sm:$0x3f] %vm1283, 0.0
        %1324 = vst.msk [vmem:[#allocation2 + $0x150] sm:$0xff] %vm1280, 0.0
        %1325 = vst.msk [vmem:[#allocation2 + $0x158] sm:$0xff] %vm1280, 0.0
        %1326 = vst.msk [vmem:[#allocation2 + $0x160] sm:$0x3f] %vm1283, 0.0
        %1327 = vst.msk [vmem:[#allocation2 + $0x168] sm:$0xff] %vm1280, 0.0
        %1328 = vst.msk [vmem:[#allocation2 + $0x170] sm:$0xff] %vm1280, 0.0
        %1329 = vst.msk [vmem:[#allocation2 + $0x178] sm:$0x3f] %vm1283, 0.0
        %1330 = vst.msk [vmem:[#allocation2 + $0x180] sm:$0xff] %vm1280, 0.0
        %1331 = vst.msk [vmem:[#allocation2 + $0x188] sm:$0xff] %vm1280, 0.0
        %1332 = vst.msk [vmem:[#allocation2 + $0x190] sm:$0x3f] %vm1283, 0.0
        %1333 = vst.msk [vmem:[#allocation2 + $0x198] sm:$0xff] %vm1280, 0.0
        %1334 = vst.msk [vmem:[#allocation2 + $0x1a0] sm:$0xff] %vm1280, 0.0
        %1335 = vst.msk [vmem:[#allocation2 + $0x1a8] sm:$0x3f] %vm1283, 0.0
        %1336 = vst.msk [vmem:[#allocation2 + $0x1b0] sm:$0xff] %vm1280, 0.0
        %1337 = vst.msk [vmem:[#allocation2 + $0x1b8] sm:$0xff] %vm1280, 0.0
        %1338 = vst.msk [vmem:[#allocation2 + $0x1c0] sm:$0x3f] %vm1283, 0.0
        %1339 = vst.msk [vmem:[#allocation2 + $0x1c8] sm:$0xff] %vm1280, 0.0
        %1340 = vst.msk [vmem:[#allocation2 + $0x1d0] sm:$0xff] %vm1280, 0.0
        %1341 = vst.msk [vmem:[#allocation2 + $0x1d8] sm:$0x3f] %vm1283, 0.0
        %1342 = vst.msk [vmem:[#allocation2 + $0x1e0] sm:$0xff] %vm1280, 0.0
        %1343 = vst.msk [vmem:[#allocation2 + $0x1e8] sm:$0xff] %vm1280, 0.0
        %1344 = vst.msk [vmem:[#allocation2 + $0x1f0] sm:$0x3f] %vm1283, 0.0
        %1345 = vst.msk [vmem:[#allocation2 + $0x1f8] sm:$0xff] %vm1280, 0.0
        %1346 = vst.msk [vmem:[#allocation2 + $0x200] sm:$0xff] %vm1280, 0.0
        %1347 = vst.msk [vmem:[#allocation2 + $0x208] sm:$0x3f] %vm1283, 0.0
        %s1348 = scalar_lea.vmem [#allocation2], 72
        %1349 = vst.msk [vmem:[%s1348 + $0x3] sm:$0xff] %vm1280, %v1248
        %1350 = vst.msk [vmem:[%s1348 + $0xb] sm:$0xff] %vm1280, %v1249
        %1351 = vst.msk [vmem:[%s1348 + $0x1b] sm:$0xff] %vm1280, %v1250
        %1352 = vst.msk [vmem:[%s1348 + $0x23] sm:$0xff] %vm1280, %v1251
        %1353 = vst.msk [vmem:[%s1348 + $0x33] sm:$0xff] %vm1280, %v1252
        %1354 = vst.msk [vmem:[%s1348 + $0x3b] sm:$0xff] %vm1280, %v1253
        %1355 = vst.msk [vmem:[%s1348 + $0x4b] sm:$0xff] %vm1280, %v1254
        %1356 = vst.msk [vmem:[%s1348 + $0x53] sm:$0xff] %vm1280, %v1255
        %1357 = vst.msk [vmem:[%s1348 + $0x63] sm:$0xff] %vm1280, %v1256
        %1358 = vst.msk [vmem:[%s1348 + $0x6b] sm:$0xff] %vm1280, %v1257
        %1359 = vst.msk [vmem:[%s1348 + $0x7b] sm:$0xff] %vm1280, %v1258
        %1360 = vst.msk [vmem:[%s1348 + $0x83] sm:$0xff] %vm1280, %v1259
        %1361 = vst.msk [vmem:[%s1348 + $0x93] sm:$0xff] %vm1280, %v1260
        %1362 = vst.msk [vmem:[%s1348 + $0x9b] sm:$0xff] %vm1280, %v1261
        %1363 = vst.msk [vmem:[%s1348 + $0xab] sm:$0xff] %vm1280, %v1262
        %1364 = vst.msk [vmem:[%s1348 + $0xb3] sm:$0xff] %vm1280, %v1263
        %1365 = vst.msk [vmem:[%s1348 + $0xc3] sm:$0xff] %vm1280, %v1264
        %1366 = vst.msk [vmem:[%s1348 + $0xcb] sm:$0xff] %vm1280, %v1265
        %1367 = vst.msk [vmem:[%s1348 + $0xdb] sm:$0xff] %vm1280, %v1266
        %1368 = vst.msk [vmem:[%s1348 + $0xe3] sm:$0xff] %vm1280, %v1267
        %1369 = vst.msk [vmem:[%s1348 + $0xf3] sm:$0xff] %vm1280, %v1268
        %1370 = vst.msk [vmem:[%s1348 + $0xfb] sm:$0xff] %vm1280, %v1269
        %1371 = vst.msk [vmem:[%s1348 + $0x10b] sm:$0xff] %vm1280, %v1270
        %1372 = vst.msk [vmem:[%s1348 + $0x113] sm:$0xff] %vm1280, %v1271
        %1373 = vst.msk [vmem:[%s1348 + $0x123] sm:$0xff] %vm1280, %v1272
        %1374 = vst.msk [vmem:[%s1348 + $0x12b] sm:$0xff] %vm1280, %v1273
        %1375 = vst.msk [vmem:[%s1348 + $0x13b] sm:$0xff] %vm1280, %v1274
        %1376 = vst.msk [vmem:[%s1348 + $0x143] sm:$0xff] %vm1280, %v1275
        %1377 = vst.msk [vmem:[%s1348 + $0x153] sm:$0xff] %vm1280, %v1276
        %1378 = vst.msk [vmem:[%s1348 + $0x15b] sm:$0xff] %vm1280, %v1277
        %1379 = vst.msk [vmem:[%s1348 + $0x16b] sm:$0xff] %vm1280, %v1278
        %1380 = vst.msk [vmem:[%s1348 + $0x173] sm:$0xff] %vm1280, %v1279
        %v1381 = vld [vmem:[%s6] sm:$0x1]
        %v1382 = vld [vmem:[#allocation2] sm:$0xff]
        %v1383 = vld [vmem:[#allocation2 + $0x8] sm:$0xff]
        %v1384 = vld [vmem:[#allocation2 + $0x18] sm:$0xff]
        %v1385 = vld [vmem:[#allocation2 + $0x20] sm:$0xff]
        %v1386 = vld [vmem:[#allocation2 + $0x30] sm:$0xff]
        %v1387 = vld [vmem:[#allocation2 + $0x38] sm:$0xff]
        %v1388 = vld [vmem:[#allocation2 + $0x48] sm:$0xff]
        %v1389 = vld [vmem:[#allocation2 + $0x50] sm:$0xff]
        %v1390 = vld [vmem:[#allocation2 + $0x60] sm:$0xff]
        %v1391 = vld [vmem:[#allocation2 + $0x68] sm:$0xff]
        %v1392 = vld [vmem:[#allocation2 + $0x78] sm:$0xff]
        %v1393 = vld [vmem:[#allocation2 + $0x80] sm:$0xff]
        %v1394 = vld [vmem:[#allocation2 + $0x90] sm:$0xff]
        %v1395 = vld [vmem:[#allocation2 + $0x98] sm:$0xff]
        %v1396 = vld [vmem:[#allocation2 + $0xa8] sm:$0xff]
        %v1397 = vld [vmem:[#allocation2 + $0xb0] sm:$0xff]
        %v1398 = vld [vmem:[#allocation2 + $0xc0] sm:$0xff]
        %v1399 = vld [vmem:[#allocation2 + $0xc8] sm:$0xff]
        %v1400 = vld [vmem:[#allocation2 + $0xd8] sm:$0xff]
        %v1401 = vld [vmem:[#allocation2 + $0xe0] sm:$0xff]
        %v1402 = vld [vmem:[#allocation2 + $0xf0] sm:$0xff]
        %v1403 = vld [vmem:[#allocation2 + $0xf8] sm:$0xff]
        %v1404 = vld [vmem:[#allocation2 + $0x108] sm:$0xff]
        %v1405 = vld [vmem:[#allocation2 + $0x110] sm:$0xff]
        %v1406 = vld [vmem:[#allocation2 + $0x120] sm:$0xff]
        %v1407 = vld [vmem:[#allocation2 + $0x128] sm:$0xff]
        %v1408 = vld [vmem:[#allocation2 + $0x138] sm:$0xff]
        %v1409 = vld [vmem:[#allocation2 + $0x140] sm:$0xff]
        %v1410 = vld [vmem:[#allocation2 + $0x150] sm:$0xff]
        %v1411 = vld [vmem:[#allocation2 + $0x158] sm:$0xff]
        %v1412 = vld [vmem:[#allocation2 + $0x168] sm:$0xff]
        %v1413 = vld [vmem:[#allocation2 + $0x170] sm:$0xff]
        %v1414 = vperm.slane %v1381, 0
        %v1415 = vmul.f32 %v1382, %v1414
        %v1416 = vmul.f32 %v1383, %v1414
        %v1417 = vmul.f32 %v1384, %v1414
        %v1418 = vmul.f32 %v1385, %v1414
        %v1419 = vmul.f32 %v1386, %v1414
        %v1420 = vmul.f32 %v1387, %v1414
        %v1421 = vmul.f32 %v1388, %v1414
        %v1422 = vmul.f32 %v1389, %v1414
        %v1423 = vmul.f32 %v1390, %v1414
        %v1424 = vmul.f32 %v1391, %v1414
        %v1425 = vmul.f32 %v1392, %v1414
        %v1426 = vmul.f32 %v1393, %v1414
        %v1427 = vmul.f32 %v1394, %v1414
        %v1428 = vmul.f32 %v1395, %v1414
        %v1429 = vmul.f32 %v1396, %v1414
        %v1430 = vmul.f32 %v1397, %v1414
        %v1431 = vmul.f32 %v1398, %v1414
        %v1432 = vmul.f32 %v1399, %v1414
        %v1433 = vmul.f32 %v1400, %v1414
        %v1434 = vmul.f32 %v1401, %v1414
        %v1435 = vmul.f32 %v1402, %v1414
        %v1436 = vmul.f32 %v1403, %v1414
        %v1437 = vmul.f32 %v1404, %v1414
        %v1438 = vmul.f32 %v1405, %v1414
        %v1439 = vmul.f32 %v1406, %v1414
        %v1440 = vmul.f32 %v1407, %v1414
        %v1441 = vmul.f32 %v1408, %v1414
        %v1442 = vmul.f32 %v1409, %v1414
        %v1443 = vmul.f32 %v1410, %v1414
        %v1444 = vmul.f32 %v1411, %v1414
        %v1445 = vmul.f32 %v1412, %v1414
        %v1446 = vmul.f32 %v1413, %v1414
        %v1447 = vadd.f32 %v1415, 0.0
        %v1448 = vadd.f32 %v1416, 0.0
        %v1449 = vadd.f32 %v1417, 0.0
        %v1450 = vadd.f32 %v1418, 0.0
        %v1451 = vadd.f32 %v1419, 0.0
        %v1452 = vadd.f32 %v1420, 0.0
        %v1453 = vadd.f32 %v1421, 0.0
        %v1454 = vadd.f32 %v1422, 0.0
        %v1455 = vadd.f32 %v1423, 0.0
        %v1456 = vadd.f32 %v1424, 0.0
        %v1457 = vadd.f32 %v1425, 0.0
        %v1458 = vadd.f32 %v1426, 0.0
        %v1459 = vadd.f32 %v1427, 0.0
        %v1460 = vadd.f32 %v1428, 0.0
        %v1461 = vadd.f32 %v1429, 0.0
        %v1462 = vadd.f32 %v1430, 0.0
        %v1463 = vadd.f32 %v1431, 0.0
        %v1464 = vadd.f32 %v1432, 0.0
        %v1465 = vadd.f32 %v1433, 0.0
        %v1466 = vadd.f32 %v1434, 0.0
        %v1467 = vadd.f32 %v1435, 0.0
        %v1468 = vadd.f32 %v1436, 0.0
        %v1469 = vadd.f32 %v1437, 0.0
        %v1470 = vadd.f32 %v1438, 0.0
        %v1471 = vadd.f32 %v1439, 0.0
        %v1472 = vadd.f32 %v1440, 0.0
        %v1473 = vadd.f32 %v1441, 0.0
        %v1474 = vadd.f32 %v1442, 0.0
        %v1475 = vadd.f32 %v1443, 0.0
        %v1476 = vadd.f32 %v1444, 0.0
        %v1477 = vadd.f32 %v1445, 0.0
        %v1478 = vadd.f32 %v1446, 0.0
        %v1479 = vld [vmem:[%s6 + $0x1] sm:$0x1]
        %v1480 = vld [vmem:[#allocation2 + $0x1] sm:$0xff]
        %v1481 = vld [vmem:[#allocation2 + $0x9] sm:$0xff]
        %v1482 = vld [vmem:[#allocation2 + $0x19] sm:$0xff]
        %v1483 = vld [vmem:[#allocation2 + $0x21] sm:$0xff]
        %v1484 = vld [vmem:[#allocation2 + $0x31] sm:$0xff]
        %v1485 = vld [vmem:[#allocation2 + $0x39] sm:$0xff]
        %v1486 = vld [vmem:[#allocation2 + $0x49] sm:$0xff]
        %v1487 = vld [vmem:[#allocation2 + $0x51] sm:$0xff]
        %v1488 = vld [vmem:[#allocation2 + $0x61] sm:$0xff]
        %v1489 = vld [vmem:[#allocation2 + $0x69] sm:$0xff]
        %v1490 = vld [vmem:[#allocation2 + $0x79] sm:$0xff]
        %v1491 = vld [vmem:[#allocation2 + $0x81] sm:$0xff]
        %v1492 = vld [vmem:[#allocation2 + $0x91] sm:$0xff]
        %v1493 = vld [vmem:[#allocation2 + $0x99] sm:$0xff]
        %v1494 = vld [vmem:[#allocation2 + $0xa9] sm:$0xff]
        %v1495 = vld [vmem:[#allocation2 + $0xb1] sm:$0xff]
        %v1496 = vld [vmem:[#allocation2 + $0xc1] sm:$0xff]
        %v1497 = vld [vmem:[#allocation2 + $0xc9] sm:$0xff]
        %v1498 = vld [vmem:[#allocation2 + $0xd9] sm:$0xff]
        %v1499 = vld [vmem:[#allocation2 + $0xe1] sm:$0xff]
        %v1500 = vld [vmem:[#allocation2 + $0xf1] sm:$0xff]
        %v1501 = vld [vmem:[#allocation2 + $0xf9] sm:$0xff]
        %v1502 = vld [vmem:[#allocation2 + $0x109] sm:$0xff]
        %v1503 = vld [vmem:[#allocation2 + $0x111] sm:$0xff]
        %v1504 = vld [vmem:[#allocation2 + $0x121] sm:$0xff]
        %v1505 = vld [vmem:[#allocation2 + $0x129] sm:$0xff]
        %v1506 = vld [vmem:[#allocation2 + $0x139] sm:$0xff]
        %v1507 = vld [vmem:[#allocation2 + $0x141] sm:$0xff]
        %v1508 = vld [vmem:[#allocation2 + $0x151] sm:$0xff]
        %v1509 = vld [vmem:[#allocation2 + $0x159] sm:$0xff]
        %v1510 = vld [vmem:[#allocation2 + $0x169] sm:$0xff]
        %v1511 = vld [vmem:[#allocation2 + $0x171] sm:$0xff]
        %v1512 = vperm.slane %v1479, 0
        %v1513 = vmul.f32 %v1480, %v1512
        %v1514 = vmul.f32 %v1481, %v1512
        %v1515 = vmul.f32 %v1482, %v1512
        %v1516 = vmul.f32 %v1483, %v1512
        %v1517 = vmul.f32 %v1484, %v1512
        %v1518 = vmul.f32 %v1485, %v1512
        %v1519 = vmul.f32 %v1486, %v1512
        %v1520 = vmul.f32 %v1487, %v1512
        %v1521 = vmul.f32 %v1488, %v1512
        %v1522 = vmul.f32 %v1489, %v1512
        %v1523 = vmul.f32 %v1490, %v1512
        %v1524 = vmul.f32 %v1491, %v1512
        %v1525 = vmul.f32 %v1492, %v1512
        %v1526 = vmul.f32 %v1493, %v1512
        %v1527 = vmul.f32 %v1494, %v1512
        %v1528 = vmul.f32 %v1495, %v1512
        %v1529 = vmul.f32 %v1496, %v1512
        %v1530 = vmul.f32 %v1497, %v1512
        %v1531 = vmul.f32 %v1498, %v1512
        %v1532 = vmul.f32 %v1499, %v1512
        %v1533 = vmul.f32 %v1500, %v1512
        %v1534 = vmul.f32 %v1501, %v1512
        %v1535 = vmul.f32 %v1502, %v1512
        %v1536 = vmul.f32 %v1503, %v1512
        %v1537 = vmul.f32 %v1504, %v1512
        %v1538 = vmul.f32 %v1505, %v1512
        %v1539 = vmul.f32 %v1506, %v1512
        %v1540 = vmul.f32 %v1507, %v1512
        %v1541 = vmul.f32 %v1508, %v1512
        %v1542 = vmul.f32 %v1509, %v1512
        %v1543 = vmul.f32 %v1510, %v1512
        %v1544 = vmul.f32 %v1511, %v1512
        %v1545 = vadd.f32 %v1447, %v1513
        %v1546 = vadd.f32 %v1448, %v1514
        %v1547 = vadd.f32 %v1449, %v1515
        %v1548 = vadd.f32 %v1450, %v1516
        %v1549 = vadd.f32 %v1451, %v1517
        %v1550 = vadd.f32 %v1452, %v1518
        %v1551 = vadd.f32 %v1453, %v1519
        %v1552 = vadd.f32 %v1454, %v1520
        %v1553 = vadd.f32 %v1455, %v1521
        %v1554 = vadd.f32 %v1456, %v1522
        %v1555 = vadd.f32 %v1457, %v1523
        %v1556 = vadd.f32 %v1458, %v1524
        %v1557 = vadd.f32 %v1459, %v1525
        %v1558 = vadd.f32 %v1460, %v1526
        %v1559 = vadd.f32 %v1461, %v1527
        %v1560 = vadd.f32 %v1462, %v1528
        %v1561 = vadd.f32 %v1463, %v1529
        %v1562 = vadd.f32 %v1464, %v1530
        %v1563 = vadd.f32 %v1465, %v1531
        %v1564 = vadd.f32 %v1466, %v1532
        %v1565 = vadd.f32 %v1467, %v1533
        %v1566 = vadd.f32 %v1468, %v1534
        %v1567 = vadd.f32 %v1469, %v1535
        %v1568 = vadd.f32 %v1470, %v1536
        %v1569 = vadd.f32 %v1471, %v1537
        %v1570 = vadd.f32 %v1472, %v1538
        %v1571 = vadd.f32 %v1473, %v1539
        %v1572 = vadd.f32 %v1474, %v1540
        %v1573 = vadd.f32 %v1475, %v1541
        %v1574 = vadd.f32 %v1476, %v1542
        %v1575 = vadd.f32 %v1477, %v1543
        %v1576 = vadd.f32 %v1478, %v1544
        %v1577 = vld [vmem:[%s6 + $0x2] sm:$0x1]
        %v1578 = vld [vmem:[#allocation2 + $0x2] sm:$0xff]
        %v1579 = vld [vmem:[#allocation2 + $0xa] sm:$0xff]
        %v1580 = vld [vmem:[#allocation2 + $0x1a] sm:$0xff]
        %v1581 = vld [vmem:[#allocation2 + $0x22] sm:$0xff]
        %v1582 = vld [vmem:[#allocation2 + $0x32] sm:$0xff]
        %v1583 = vld [vmem:[#allocation2 + $0x3a] sm:$0xff]
        %v1584 = vld [vmem:[#allocation2 + $0x4a] sm:$0xff]
        %v1585 = vld [vmem:[#allocation2 + $0x52] sm:$0xff]
        %v1586 = vld [vmem:[#allocation2 + $0x62] sm:$0xff]
        %v1587 = vld [vmem:[#allocation2 + $0x6a] sm:$0xff]
        %v1588 = vld [vmem:[#allocation2 + $0x7a] sm:$0xff]
        %v1589 = vld [vmem:[#allocation2 + $0x82] sm:$0xff]
        %v1590 = vld [vmem:[#allocation2 + $0x92] sm:$0xff]
        %v1591 = vld [vmem:[#allocation2 + $0x9a] sm:$0xff]
        %v1592 = vld [vmem:[#allocation2 + $0xaa] sm:$0xff]
        %v1593 = vld [vmem:[#allocation2 + $0xb2] sm:$0xff]
        %v1594 = vld [vmem:[#allocation2 + $0xc2] sm:$0xff]
        %v1595 = vld [vmem:[#allocation2 + $0xca] sm:$0xff]
        %v1596 = vld [vmem:[#allocation2 + $0xda] sm:$0xff]
        %v1597 = vld [vmem:[#allocation2 + $0xe2] sm:$0xff]
        %v1598 = vld [vmem:[#allocation2 + $0xf2] sm:$0xff]
        %v1599 = vld [vmem:[#allocation2 + $0xfa] sm:$0xff]
        %v1600 = vld [vmem:[#allocation2 + $0x10a] sm:$0xff]
        %v1601 = vld [vmem:[#allocation2 + $0x112] sm:$0xff]
        %v1602 = vld [vmem:[#allocation2 + $0x122] sm:$0xff]
        %v1603 = vld [vmem:[#allocation2 + $0x12a] sm:$0xff]
        %v1604 = vld [vmem:[#allocation2 + $0x13a] sm:$0xff]
        %v1605 = vld [vmem:[#allocation2 + $0x142] sm:$0xff]
        %v1606 = vld [vmem:[#allocation2 + $0x152] sm:$0xff]
        %v1607 = vld [vmem:[#allocation2 + $0x15a] sm:$0xff]
        %v1608 = vld [vmem:[#allocation2 + $0x16a] sm:$0xff]
        %v1609 = vld [vmem:[#allocation2 + $0x172] sm:$0xff]
        %v1610 = vperm.slane %v1577, 0
        %v1611 = vmul.f32 %v1578, %v1610
        %v1612 = vmul.f32 %v1579, %v1610
        %v1613 = vmul.f32 %v1580, %v1610
        %v1614 = vmul.f32 %v1581, %v1610
        %v1615 = vmul.f32 %v1582, %v1610
        %v1616 = vmul.f32 %v1583, %v1610
        %v1617 = vmul.f32 %v1584, %v1610
        %v1618 = vmul.f32 %v1585, %v1610
        %v1619 = vmul.f32 %v1586, %v1610
        %v1620 = vmul.f32 %v1587, %v1610
        %v1621 = vmul.f32 %v1588, %v1610
        %v1622 = vmul.f32 %v1589, %v1610
        %v1623 = vmul.f32 %v1590, %v1610
        %v1624 = vmul.f32 %v1591, %v1610
        %v1625 = vmul.f32 %v1592, %v1610
        %v1626 = vmul.f32 %v1593, %v1610
        %v1627 = vmul.f32 %v1594, %v1610
        %v1628 = vmul.f32 %v1595, %v1610
        %v1629 = vmul.f32 %v1596, %v1610
        %v1630 = vmul.f32 %v1597, %v1610
        %v1631 = vmul.f32 %v1598, %v1610
        %v1632 = vmul.f32 %v1599, %v1610
        %v1633 = vmul.f32 %v1600, %v1610
        %v1634 = vmul.f32 %v1601, %v1610
        %v1635 = vmul.f32 %v1602, %v1610
        %v1636 = vmul.f32 %v1603, %v1610
        %v1637 = vmul.f32 %v1604, %v1610
        %v1638 = vmul.f32 %v1605, %v1610
        %v1639 = vmul.f32 %v1606, %v1610
        %v1640 = vmul.f32 %v1607, %v1610
        %v1641 = vmul.f32 %v1608, %v1610
        %v1642 = vmul.f32 %v1609, %v1610
        %v1643 = vadd.f32 %v1545, %v1611
        %v1644 = vadd.f32 %v1546, %v1612
        %v1645 = vadd.f32 %v1547, %v1613
        %v1646 = vadd.f32 %v1548, %v1614
        %v1647 = vadd.f32 %v1549, %v1615
        %v1648 = vadd.f32 %v1550, %v1616
        %v1649 = vadd.f32 %v1551, %v1617
        %v1650 = vadd.f32 %v1552, %v1618
        %v1651 = vadd.f32 %v1553, %v1619
        %v1652 = vadd.f32 %v1554, %v1620
        %v1653 = vadd.f32 %v1555, %v1621
        %v1654 = vadd.f32 %v1556, %v1622
        %v1655 = vadd.f32 %v1557, %v1623
        %v1656 = vadd.f32 %v1558, %v1624
        %v1657 = vadd.f32 %v1559, %v1625
        %v1658 = vadd.f32 %v1560, %v1626
        %v1659 = vadd.f32 %v1561, %v1627
        %v1660 = vadd.f32 %v1562, %v1628
        %v1661 = vadd.f32 %v1563, %v1629
        %v1662 = vadd.f32 %v1564, %v1630
        %v1663 = vadd.f32 %v1565, %v1631
        %v1664 = vadd.f32 %v1566, %v1632
        %v1665 = vadd.f32 %v1567, %v1633
        %v1666 = vadd.f32 %v1568, %v1634
        %v1667 = vadd.f32 %v1569, %v1635
        %v1668 = vadd.f32 %v1570, %v1636
        %v1669 = vadd.f32 %v1571, %v1637
        %v1670 = vadd.f32 %v1572, %v1638
        %v1671 = vadd.f32 %v1573, %v1639
        %v1672 = vadd.f32 %v1574, %v1640
        %v1673 = vadd.f32 %v1575, %v1641
        %v1674 = vadd.f32 %v1576, %v1642
        %v1675 = vld [vmem:[%s6 + $0x3] sm:$0x1]
        %v1676 = vld [vmem:[#allocation2 + $0x3] sm:$0xff]
        %v1677 = vld [vmem:[#allocation2 + $0xb] sm:$0xff]
        %v1678 = vld [vmem:[#allocation2 + $0x1b] sm:$0xff]
        %v1679 = vld [vmem:[#allocation2 + $0x23] sm:$0xff]
        %v1680 = vld [vmem:[#allocation2 + $0x33] sm:$0xff]
        %v1681 = vld [vmem:[#allocation2 + $0x3b] sm:$0xff]
        %v1682 = vld [vmem:[#allocation2 + $0x4b] sm:$0xff]
        %v1683 = vld [vmem:[#allocation2 + $0x53] sm:$0xff]
        %v1684 = vld [vmem:[#allocation2 + $0x63] sm:$0xff]
        %v1685 = vld [vmem:[#allocation2 + $0x6b] sm:$0xff]
        %v1686 = vld [vmem:[#allocation2 + $0x7b] sm:$0xff]
        %v1687 = vld [vmem:[#allocation2 + $0x83] sm:$0xff]
        %v1688 = vld [vmem:[#allocation2 + $0x93] sm:$0xff]
        %v1689 = vld [vmem:[#allocation2 + $0x9b] sm:$0xff]
        %v1690 = vld [vmem:[#allocation2 + $0xab] sm:$0xff]
        %v1691 = vld [vmem:[#allocation2 + $0xb3] sm:$0xff]
        %v1692 = vld [vmem:[#allocation2 + $0xc3] sm:$0xff]
        %v1693 = vld [vmem:[#allocation2 + $0xcb] sm:$0xff]
        %v1694 = vld [vmem:[#allocation2 + $0xdb] sm:$0xff]
        %v1695 = vld [vmem:[#allocation2 + $0xe3] sm:$0xff]
        %v1696 = vld [vmem:[#allocation2 + $0xf3] sm:$0xff]
        %v1697 = vld [vmem:[#allocation2 + $0xfb] sm:$0xff]
        %v1698 = vld [vmem:[#allocation2 + $0x10b] sm:$0xff]
        %v1699 = vld [vmem:[#allocation2 + $0x113] sm:$0xff]
        %v1700 = vld [vmem:[#allocation2 + $0x123] sm:$0xff]
        %v1701 = vld [vmem:[#allocation2 + $0x12b] sm:$0xff]
        %v1702 = vld [vmem:[#allocation2 + $0x13b] sm:$0xff]
        %v1703 = vld [vmem:[#allocation2 + $0x143] sm:$0xff]
        %v1704 = vld [vmem:[#allocation2 + $0x153] sm:$0xff]
        %v1705 = vld [vmem:[#allocation2 + $0x15b] sm:$0xff]
        %v1706 = vld [vmem:[#allocation2 + $0x16b] sm:$0xff]
        %v1707 = vld [vmem:[#allocation2 + $0x173] sm:$0xff]
        %v1708 = vperm.slane %v1675, 0
        %v1709 = vmul.f32 %v1676, %v1708
        %v1710 = vmul.f32 %v1677, %v1708
        %v1711 = vmul.f32 %v1678, %v1708
        %v1712 = vmul.f32 %v1679, %v1708
        %v1713 = vmul.f32 %v1680, %v1708
        %v1714 = vmul.f32 %v1681, %v1708
        %v1715 = vmul.f32 %v1682, %v1708
        %v1716 = vmul.f32 %v1683, %v1708
        %v1717 = vmul.f32 %v1684, %v1708
        %v1718 = vmul.f32 %v1685, %v1708
        %v1719 = vmul.f32 %v1686, %v1708
        %v1720 = vmul.f32 %v1687, %v1708
        %v1721 = vmul.f32 %v1688, %v1708
        %v1722 = vmul.f32 %v1689, %v1708
        %v1723 = vmul.f32 %v1690, %v1708
        %v1724 = vmul.f32 %v1691, %v1708
        %v1725 = vmul.f32 %v1692, %v1708
        %v1726 = vmul.f32 %v1693, %v1708
        %v1727 = vmul.f32 %v1694, %v1708
        %v1728 = vmul.f32 %v1695, %v1708
        %v1729 = vmul.f32 %v1696, %v1708
        %v1730 = vmul.f32 %v1697, %v1708
        %v1731 = vmul.f32 %v1698, %v1708
        %v1732 = vmul.f32 %v1699, %v1708
        %v1733 = vmul.f32 %v1700, %v1708
        %v1734 = vmul.f32 %v1701, %v1708
        %v1735 = vmul.f32 %v1702, %v1708
        %v1736 = vmul.f32 %v1703, %v1708
        %v1737 = vmul.f32 %v1704, %v1708
        %v1738 = vmul.f32 %v1705, %v1708
        %v1739 = vmul.f32 %v1706, %v1708
        %v1740 = vmul.f32 %v1707, %v1708
        %v1741 = vadd.f32 %v1643, %v1709
        %v1742 = vadd.f32 %v1644, %v1710
        %v1743 = vadd.f32 %v1645, %v1711
        %v1744 = vadd.f32 %v1646, %v1712
        %v1745 = vadd.f32 %v1647, %v1713
        %v1746 = vadd.f32 %v1648, %v1714
        %v1747 = vadd.f32 %v1649, %v1715
        %v1748 = vadd.f32 %v1650, %v1716
        %v1749 = vadd.f32 %v1651, %v1717
        %v1750 = vadd.f32 %v1652, %v1718
        %v1751 = vadd.f32 %v1653, %v1719
        %v1752 = vadd.f32 %v1654, %v1720
        %v1753 = vadd.f32 %v1655, %v1721
        %v1754 = vadd.f32 %v1656, %v1722
        %v1755 = vadd.f32 %v1657, %v1723
        %v1756 = vadd.f32 %v1658, %v1724
        %v1757 = vadd.f32 %v1659, %v1725
        %v1758 = vadd.f32 %v1660, %v1726
        %v1759 = vadd.f32 %v1661, %v1727
        %v1760 = vadd.f32 %v1662, %v1728
        %v1761 = vadd.f32 %v1663, %v1729
        %v1762 = vadd.f32 %v1664, %v1730
        %v1763 = vadd.f32 %v1665, %v1731
        %v1764 = vadd.f32 %v1666, %v1732
        %v1765 = vadd.f32 %v1667, %v1733
        %v1766 = vadd.f32 %v1668, %v1734
        %v1767 = vadd.f32 %v1669, %v1735
        %v1768 = vadd.f32 %v1670, %v1736
        %v1769 = vadd.f32 %v1671, %v1737
        %v1770 = vadd.f32 %v1672, %v1738
        %v1771 = vadd.f32 %v1673, %v1739
        %v1772 = vadd.f32 %v1674, %v1740
        %v1773 = vld [vmem:[%s6 + $0x4] sm:$0x1]
        %v1774 = vld [vmem:[#allocation2 + $0x4] sm:$0xff]
        %v1775 = vld [vmem:[#allocation2 + $0xc] sm:$0xff]
        %v1776 = vld [vmem:[#allocation2 + $0x1c] sm:$0xff]
        %v1777 = vld [vmem:[#allocation2 + $0x24] sm:$0xff]
        %v1778 = vld [vmem:[#allocation2 + $0x34] sm:$0xff]
        %v1779 = vld [vmem:[#allocation2 + $0x3c] sm:$0xff]
        %v1780 = vld [vmem:[#allocation2 + $0x4c] sm:$0xff]
        %v1781 = vld [vmem:[#allocation2 + $0x54] sm:$0xff]
        %v1782 = vld [vmem:[#allocation2 + $0x64] sm:$0xff]
        %v1783 = vld [vmem:[#allocation2 + $0x6c] sm:$0xff]
        %v1784 = vld [vmem:[#allocation2 + $0x7c] sm:$0xff]
        %v1785 = vld [vmem:[#allocation2 + $0x84] sm:$0xff]
        %v1786 = vld [vmem:[#allocation2 + $0x94] sm:$0xff]
        %v1787 = vld [vmem:[#allocation2 + $0x9c] sm:$0xff]
        %v1788 = vld [vmem:[#allocation2 + $0xac] sm:$0xff]
        %v1789 = vld [vmem:[#allocation2 + $0xb4] sm:$0xff]
        %v1790 = vld [vmem:[#allocation2 + $0xc4] sm:$0xff]
        %v1791 = vld [vmem:[#allocation2 + $0xcc] sm:$0xff]
        %v1792 = vld [vmem:[#allocation2 + $0xdc] sm:$0xff]
        %v1793 = vld [vmem:[#allocation2 + $0xe4] sm:$0xff]
        %v1794 = vld [vmem:[#allocation2 + $0xf4] sm:$0xff]
        %v1795 = vld [vmem:[#allocation2 + $0xfc] sm:$0xff]
        %v1796 = vld [vmem:[#allocation2 + $0x10c] sm:$0xff]
        %v1797 = vld [vmem:[#allocation2 + $0x114] sm:$0xff]
        %v1798 = vld [vmem:[#allocation2 + $0x124] sm:$0xff]
        %v1799 = vld [vmem:[#allocation2 + $0x12c] sm:$0xff]
        %v1800 = vld [vmem:[#allocation2 + $0x13c] sm:$0xff]
        %v1801 = vld [vmem:[#allocation2 + $0x144] sm:$0xff]
        %v1802 = vld [vmem:[#allocation2 + $0x154] sm:$0xff]
        %v1803 = vld [vmem:[#allocation2 + $0x15c] sm:$0xff]
        %v1804 = vld [vmem:[#allocation2 + $0x16c] sm:$0xff]
        %v1805 = vld [vmem:[#allocation2 + $0x174] sm:$0xff]
        %v1806 = vperm.slane %v1773, 0
        %v1807 = vmul.f32 %v1774, %v1806
        %v1808 = vmul.f32 %v1775, %v1806
        %v1809 = vmul.f32 %v1776, %v1806
        %v1810 = vmul.f32 %v1777, %v1806
        %v1811 = vmul.f32 %v1778, %v1806
        %v1812 = vmul.f32 %v1779, %v1806
        %v1813 = vmul.f32 %v1780, %v1806
        %v1814 = vmul.f32 %v1781, %v1806
        %v1815 = vmul.f32 %v1782, %v1806
        %v1816 = vmul.f32 %v1783, %v1806
        %v1817 = vmul.f32 %v1784, %v1806
        %v1818 = vmul.f32 %v1785, %v1806
        %v1819 = vmul.f32 %v1786, %v1806
        %v1820 = vmul.f32 %v1787, %v1806
        %v1821 = vmul.f32 %v1788, %v1806
        %v1822 = vmul.f32 %v1789, %v1806
        %v1823 = vmul.f32 %v1790, %v1806
        %v1824 = vmul.f32 %v1791, %v1806
        %v1825 = vmul.f32 %v1792, %v1806
        %v1826 = vmul.f32 %v1793, %v1806
        %v1827 = vmul.f32 %v1794, %v1806
        %v1828 = vmul.f32 %v1795, %v1806
        %v1829 = vmul.f32 %v1796, %v1806
        %v1830 = vmul.f32 %v1797, %v1806
        %v1831 = vmul.f32 %v1798, %v1806
        %v1832 = vmul.f32 %v1799, %v1806
        %v1833 = vmul.f32 %v1800, %v1806
        %v1834 = vmul.f32 %v1801, %v1806
        %v1835 = vmul.f32 %v1802, %v1806
        %v1836 = vmul.f32 %v1803, %v1806
        %v1837 = vmul.f32 %v1804, %v1806
        %v1838 = vmul.f32 %v1805, %v1806
        %v1839 = vadd.f32 %v1741, %v1807
        %v1840 = vadd.f32 %v1742, %v1808
        %v1841 = vadd.f32 %v1743, %v1809
        %v1842 = vadd.f32 %v1744, %v1810
        %v1843 = vadd.f32 %v1745, %v1811
        %v1844 = vadd.f32 %v1746, %v1812
        %v1845 = vadd.f32 %v1747, %v1813
        %v1846 = vadd.f32 %v1748, %v1814
        %v1847 = vadd.f32 %v1749, %v1815
        %v1848 = vadd.f32 %v1750, %v1816
        %v1849 = vadd.f32 %v1751, %v1817
        %v1850 = vadd.f32 %v1752, %v1818
        %v1851 = vadd.f32 %v1753, %v1819
        %v1852 = vadd.f32 %v1754, %v1820
        %v1853 = vadd.f32 %v1755, %v1821
        %v1854 = vadd.f32 %v1756, %v1822
        %v1855 = vadd.f32 %v1757, %v1823
        %v1856 = vadd.f32 %v1758, %v1824
        %v1857 = vadd.f32 %v1759, %v1825
        %v1858 = vadd.f32 %v1760, %v1826
        %v1859 = vadd.f32 %v1761, %v1827
        %v1860 = vadd.f32 %v1762, %v1828
        %v1861 = vadd.f32 %v1763, %v1829
        %v1862 = vadd.f32 %v1764, %v1830
        %v1863 = vadd.f32 %v1765, %v1831
        %v1864 = vadd.f32 %v1766, %v1832
        %v1865 = vadd.f32 %v1767, %v1833
        %v1866 = vadd.f32 %v1768, %v1834
        %v1867 = vadd.f32 %v1769, %v1835
        %v1868 = vadd.f32 %v1770, %v1836
        %v1869 = vadd.f32 %v1771, %v1837
        %v1870 = vadd.f32 %v1772, %v1838
        %v1871 = vld [vmem:[%s6 + $0x5] sm:$0x1]
        %v1872 = vld [vmem:[#allocation2 + $0x5] sm:$0xff]
        %v1873 = vld [vmem:[#allocation2 + $0xd] sm:$0xff]
        %v1874 = vld [vmem:[#allocation2 + $0x1d] sm:$0xff]
        %v1875 = vld [vmem:[#allocation2 + $0x25] sm:$0xff]
        %v1876 = vld [vmem:[#allocation2 + $0x35] sm:$0xff]
        %v1877 = vld [vmem:[#allocation2 + $0x3d] sm:$0xff]
        %v1878 = vld [vmem:[#allocation2 + $0x4d] sm:$0xff]
        %v1879 = vld [vmem:[#allocation2 + $0x55] sm:$0xff]
        %v1880 = vld [vmem:[#allocation2 + $0x65] sm:$0xff]
        %v1881 = vld [vmem:[#allocation2 + $0x6d] sm:$0xff]
        %v1882 = vld [vmem:[#allocation2 + $0x7d] sm:$0xff]
        %v1883 = vld [vmem:[#allocation2 + $0x85] sm:$0xff]
        %v1884 = vld [vmem:[#allocation2 + $0x95] sm:$0xff]
        %v1885 = vld [vmem:[#allocation2 + $0x9d] sm:$0xff]
        %v1886 = vld [vmem:[#allocation2 + $0xad] sm:$0xff]
        %v1887 = vld [vmem:[#allocation2 + $0xb5] sm:$0xff]
        %v1888 = vld [vmem:[#allocation2 + $0xc5] sm:$0xff]
        %v1889 = vld [vmem:[#allocation2 + $0xcd] sm:$0xff]
        %v1890 = vld [vmem:[#allocation2 + $0xdd] sm:$0xff]
        %v1891 = vld [vmem:[#allocation2 + $0xe5] sm:$0xff]
        %v1892 = vld [vmem:[#allocation2 + $0xf5] sm:$0xff]
        %v1893 = vld [vmem:[#allocation2 + $0xfd] sm:$0xff]
        %v1894 = vld [vmem:[#allocation2 + $0x10d] sm:$0xff]
        %v1895 = vld [vmem:[#allocation2 + $0x115] sm:$0xff]
        %v1896 = vld [vmem:[#allocation2 + $0x125] sm:$0xff]
        %v1897 = vld [vmem:[#allocation2 + $0x12d] sm:$0xff]
        %v1898 = vld [vmem:[#allocation2 + $0x13d] sm:$0xff]
        %v1899 = vld [vmem:[#allocation2 + $0x145] sm:$0xff]
        %v1900 = vld [vmem:[#allocation2 + $0x155] sm:$0xff]
        %v1901 = vld [vmem:[#allocation2 + $0x15d] sm:$0xff]
        %v1902 = vld [vmem:[#allocation2 + $0x16d] sm:$0xff]
        %v1903 = vld [vmem:[#allocation2 + $0x175] sm:$0xff]
        %v1904 = vperm.slane %v1871, 0
        %v1905 = vmul.f32 %v1872, %v1904
        %v1906 = vmul.f32 %v1873, %v1904
        %v1907 = vmul.f32 %v1874, %v1904
        %v1908 = vmul.f32 %v1875, %v1904
        %v1909 = vmul.f32 %v1876, %v1904
        %v1910 = vmul.f32 %v1877, %v1904
        %v1911 = vmul.f32 %v1878, %v1904
        %v1912 = vmul.f32 %v1879, %v1904
        %v1913 = vmul.f32 %v1880, %v1904
        %v1914 = vmul.f32 %v1881, %v1904
        %v1915 = vmul.f32 %v1882, %v1904
        %v1916 = vmul.f32 %v1883, %v1904
        %v1917 = vmul.f32 %v1884, %v1904
        %v1918 = vmul.f32 %v1885, %v1904
        %v1919 = vmul.f32 %v1886, %v1904
        %v1920 = vmul.f32 %v1887, %v1904
        %v1921 = vmul.f32 %v1888, %v1904
        %v1922 = vmul.f32 %v1889, %v1904
        %v1923 = vmul.f32 %v1890, %v1904
        %v1924 = vmul.f32 %v1891, %v1904
        %v1925 = vmul.f32 %v1892, %v1904
        %v1926 = vmul.f32 %v1893, %v1904
        %v1927 = vmul.f32 %v1894, %v1904
        %v1928 = vmul.f32 %v1895, %v1904
        %v1929 = vmul.f32 %v1896, %v1904
        %v1930 = vmul.f32 %v1897, %v1904
        %v1931 = vmul.f32 %v1898, %v1904
        %v1932 = vmul.f32 %v1899, %v1904
        %v1933 = vmul.f32 %v1900, %v1904
        %v1934 = vmul.f32 %v1901, %v1904
        %v1935 = vmul.f32 %v1902, %v1904
        %v1936 = vmul.f32 %v1903, %v1904
        %v1937 = vadd.f32 %v1839, %v1905
        %v1938 = vadd.f32 %v1840, %v1906
        %v1939 = vadd.f32 %v1841, %v1907
        %v1940 = vadd.f32 %v1842, %v1908
        %v1941 = vadd.f32 %v1843, %v1909
        %v1942 = vadd.f32 %v1844, %v1910
        %v1943 = vadd.f32 %v1845, %v1911
        %v1944 = vadd.f32 %v1846, %v1912
        %v1945 = vadd.f32 %v1847, %v1913
        %v1946 = vadd.f32 %v1848, %v1914
        %v1947 = vadd.f32 %v1849, %v1915
        %v1948 = vadd.f32 %v1850, %v1916
        %v1949 = vadd.f32 %v1851, %v1917
        %v1950 = vadd.f32 %v1852, %v1918
        %v1951 = vadd.f32 %v1853, %v1919
        %v1952 = vadd.f32 %v1854, %v1920
        %v1953 = vadd.f32 %v1855, %v1921
        %v1954 = vadd.f32 %v1856, %v1922
        %v1955 = vadd.f32 %v1857, %v1923
        %v1956 = vadd.f32 %v1858, %v1924
        %v1957 = vadd.f32 %v1859, %v1925
        %v1958 = vadd.f32 %v1860, %v1926
        %v1959 = vadd.f32 %v1861, %v1927
        %v1960 = vadd.f32 %v1862, %v1928
        %v1961 = vadd.f32 %v1863, %v1929
        %v1962 = vadd.f32 %v1864, %v1930
        %v1963 = vadd.f32 %v1865, %v1931
        %v1964 = vadd.f32 %v1866, %v1932
        %v1965 = vadd.f32 %v1867, %v1933
        %v1966 = vadd.f32 %v1868, %v1934
        %v1967 = vadd.f32 %v1869, %v1935
        %v1968 = vadd.f32 %v1870, %v1936
        %v1969 = vld [vmem:[%s6 + $0x6] sm:$0x1]
        %v1970 = vld [vmem:[#allocation2 + $0x6] sm:$0xff]
        %v1971 = vld [vmem:[#allocation2 + $0xe] sm:$0xff]
        %v1972 = vld [vmem:[#allocation2 + $0x1e] sm:$0xff]
        %v1973 = vld [vmem:[#allocation2 + $0x26] sm:$0xff]
        %v1974 = vld [vmem:[#allocation2 + $0x36] sm:$0xff]
        %v1975 = vld [vmem:[#allocation2 + $0x3e] sm:$0xff]
        %v1976 = vld [vmem:[#allocation2 + $0x4e] sm:$0xff]
        %v1977 = vld [vmem:[#allocation2 + $0x56] sm:$0xff]
        %v1978 = vld [vmem:[#allocation2 + $0x66] sm:$0xff]
        %v1979 = vld [vmem:[#allocation2 + $0x6e] sm:$0xff]
        %v1980 = vld [vmem:[#allocation2 + $0x7e] sm:$0xff]
        %v1981 = vld [vmem:[#allocation2 + $0x86] sm:$0xff]
        %v1982 = vld [vmem:[#allocation2 + $0x96] sm:$0xff]
        %v1983 = vld [vmem:[#allocation2 + $0x9e] sm:$0xff]
        %v1984 = vld [vmem:[#allocation2 + $0xae] sm:$0xff]
        %v1985 = vld [vmem:[#allocation2 + $0xb6] sm:$0xff]
        %v1986 = vld [vmem:[#allocation2 + $0xc6] sm:$0xff]
        %v1987 = vld [vmem:[#allocation2 + $0xce] sm:$0xff]
        %v1988 = vld [vmem:[#allocation2 + $0xde] sm:$0xff]
        %v1989 = vld [vmem:[#allocation2 + $0xe6] sm:$0xff]
        %v1990 = vld [vmem:[#allocation2 + $0xf6] sm:$0xff]
        %v1991 = vld [vmem:[#allocation2 + $0xfe] sm:$0xff]
        %v1992 = vld [vmem:[#allocation2 + $0x10e] sm:$0xff]
        %v1993 = vld [vmem:[#allocation2 + $0x116] sm:$0xff]
        %v1994 = vld [vmem:[#allocation2 + $0x126] sm:$0xff]
        %v1995 = vld [vmem:[#allocation2 + $0x12e] sm:$0xff]
        %v1996 = vld [vmem:[#allocation2 + $0x13e] sm:$0xff]
        %v1997 = vld [vmem:[#allocation2 + $0x146] sm:$0xff]
        %v1998 = vld [vmem:[#allocation2 + $0x156] sm:$0xff]
        %v1999 = vld [vmem:[#allocation2 + $0x15e] sm:$0xff]
        %v2000 = vld [vmem:[#allocation2 + $0x16e] sm:$0xff]
        %v2001 = vld [vmem:[#allocation2 + $0x176] sm:$0xff]
        %v2002 = vperm.slane %v1969, 0
        %v2003 = vmul.f32 %v1970, %v2002
        %v2004 = vmul.f32 %v1971, %v2002
        %v2005 = vmul.f32 %v1972, %v2002
        %v2006 = vmul.f32 %v1973, %v2002
        %v2007 = vmul.f32 %v1974, %v2002
        %v2008 = vmul.f32 %v1975, %v2002
        %v2009 = vmul.f32 %v1976, %v2002
        %v2010 = vmul.f32 %v1977, %v2002
        %v2011 = vmul.f32 %v1978, %v2002
        %v2012 = vmul.f32 %v1979, %v2002
        %v2013 = vmul.f32 %v1980, %v2002
        %v2014 = vmul.f32 %v1981, %v2002
        %v2015 = vmul.f32 %v1982, %v2002
        %v2016 = vmul.f32 %v1983, %v2002
        %v2017 = vmul.f32 %v1984, %v2002
        %v2018 = vmul.f32 %v1985, %v2002
        %v2019 = vmul.f32 %v1986, %v2002
        %v2020 = vmul.f32 %v1987, %v2002
        %v2021 = vmul.f32 %v1988, %v2002
        %v2022 = vmul.f32 %v1989, %v2002
        %v2023 = vmul.f32 %v1990, %v2002
        %v2024 = vmul.f32 %v1991, %v2002
        %v2025 = vmul.f32 %v1992, %v2002
        %v2026 = vmul.f32 %v1993, %v2002
        %v2027 = vmul.f32 %v1994, %v2002
        %v2028 = vmul.f32 %v1995, %v2002
        %v2029 = vmul.f32 %v1996, %v2002
        %v2030 = vmul.f32 %v1997, %v2002
        %v2031 = vmul.f32 %v1998, %v2002
        %v2032 = vmul.f32 %v1999, %v2002
        %v2033 = vmul.f32 %v2000, %v2002
        %v2034 = vmul.f32 %v2001, %v2002
        %v2035 = vadd.f32 %v1937, %v2003
        %v2036 = vadd.f32 %v1938, %v2004
        %v2037 = vadd.f32 %v1939, %v2005
        %v2038 = vadd.f32 %v1940, %v2006
        %v2039 = vadd.f32 %v1941, %v2007
        %v2040 = vadd.f32 %v1942, %v2008
        %v2041 = vadd.f32 %v1943, %v2009
        %v2042 = vadd.f32 %v1944, %v2010
        %v2043 = vadd.f32 %v1945, %v2011
        %v2044 = vadd.f32 %v1946, %v2012
        %v2045 = vadd.f32 %v1947, %v2013
        %v2046 = vadd.f32 %v1948, %v2014
        %v2047 = vadd.f32 %v1949, %v2015
        %v2048 = vadd.f32 %v1950, %v2016
        %v2049 = vadd.f32 %v1951, %v2017
        %v2050 = vadd.f32 %v1952, %v2018
        %v2051 = vadd.f32 %v1953, %v2019
        %v2052 = vadd.f32 %v1954, %v2020
        %v2053 = vadd.f32 %v1955, %v2021
        %v2054 = vadd.f32 %v1956, %v2022
        %v2055 = vadd.f32 %v1957, %v2023
        %v2056 = vadd.f32 %v1958, %v2024
        %v2057 = vadd.f32 %v1959, %v2025
        %v2058 = vadd.f32 %v1960, %v2026
        %v2059 = vadd.f32 %v1961, %v2027
        %v2060 = vadd.f32 %v1962, %v2028
        %v2061 = vadd.f32 %v1963, %v2029
        %v2062 = vadd.f32 %v1964, %v2030
        %v2063 = vadd.f32 %v1965, %v2031
        %v2064 = vadd.f32 %v1966, %v2032
        %v2065 = vadd.f32 %v1967, %v2033
        %v2066 = vadd.f32 %v1968, %v2034
        %v2067 = vld [vmem:[%s6 + $0x7] sm:$0x1]
        %s2068 = scalar_lea.vmem [#allocation2], 24
        %v2069 = vld [vmem:[%s2068] sm:$0xff]
        %v2070 = vld [vmem:[%s2068 + $0x8] sm:$0xff]
        %v2071 = vld [vmem:[%s2068 + $0x18] sm:$0xff]
        %v2072 = vld [vmem:[%s2068 + $0x20] sm:$0xff]
        %v2073 = vld [vmem:[%s2068 + $0x30] sm:$0xff]
        %v2074 = vld [vmem:[%s2068 + $0x38] sm:$0xff]
        %v2075 = vld [vmem:[%s2068 + $0x48] sm:$0xff]
        %v2076 = vld [vmem:[%s2068 + $0x50] sm:$0xff]
        %v2077 = vld [vmem:[%s2068 + $0x60] sm:$0xff]
        %v2078 = vld [vmem:[%s2068 + $0x68] sm:$0xff]
        %v2079 = vld [vmem:[%s2068 + $0x78] sm:$0xff]
        %v2080 = vld [vmem:[%s2068 + $0x80] sm:$0xff]
        %v2081 = vld [vmem:[%s2068 + $0x90] sm:$0xff]
        %v2082 = vld [vmem:[%s2068 + $0x98] sm:$0xff]
        %v2083 = vld [vmem:[%s2068 + $0xa8] sm:$0xff]
        %v2084 = vld [vmem:[%s2068 + $0xb0] sm:$0xff]
        %v2085 = vld [vmem:[%s2068 + $0xc0] sm:$0xff]
        %v2086 = vld [vmem:[%s2068 + $0xc8] sm:$0xff]
        %v2087 = vld [vmem:[%s2068 + $0xd8] sm:$0xff]
        %v2088 = vld [vmem:[%s2068 + $0xe0] sm:$0xff]
        %v2089 = vld [vmem:[%s2068 + $0xf0] sm:$0xff]
        %v2090 = vld [vmem:[%s2068 + $0xf8] sm:$0xff]
        %v2091 = vld [vmem:[%s2068 + $0x108] sm:$0xff]
        %v2092 = vld [vmem:[%s2068 + $0x110] sm:$0xff]
        %v2093 = vld [vmem:[%s2068 + $0x120] sm:$0xff]
        %v2094 = vld [vmem:[%s2068 + $0x128] sm:$0xff]
        %v2095 = vld [vmem:[%s2068 + $0x138] sm:$0xff]
        %v2096 = vld [vmem:[%s2068 + $0x140] sm:$0xff]
        %v2097 = vld [vmem:[%s2068 + $0x150] sm:$0xff]
        %v2098 = vld [vmem:[%s2068 + $0x158] sm:$0xff]
        %v2099 = vld [vmem:[%s2068 + $0x168] sm:$0xff]
        %v2100 = vld [vmem:[%s2068 + $0x170] sm:$0xff]
        %v2101 = vperm.slane %v2067, 0
        %v2102 = vmul.f32 %v2069, %v2101
        %v2103 = vmul.f32 %v2070, %v2101
        %v2104 = vmul.f32 %v2071, %v2101
        %v2105 = vmul.f32 %v2072, %v2101
        %v2106 = vmul.f32 %v2073, %v2101
        %v2107 = vmul.f32 %v2074, %v2101
        %v2108 = vmul.f32 %v2075, %v2101
        %v2109 = vmul.f32 %v2076, %v2101
        %v2110 = vmul.f32 %v2077, %v2101
        %v2111 = vmul.f32 %v2078, %v2101
        %v2112 = vmul.f32 %v2079, %v2101
        %v2113 = vmul.f32 %v2080, %v2101
        %v2114 = vmul.f32 %v2081, %v2101
        %v2115 = vmul.f32 %v2082, %v2101
        %v2116 = vmul.f32 %v2083, %v2101
        %v2117 = vmul.f32 %v2084, %v2101
        %v2118 = vmul.f32 %v2085, %v2101
        %v2119 = vmul.f32 %v2086, %v2101
        %v2120 = vmul.f32 %v2087, %v2101
        %v2121 = vmul.f32 %v2088, %v2101
        %v2122 = vmul.f32 %v2089, %v2101
        %v2123 = vmul.f32 %v2090, %v2101
        %v2124 = vmul.f32 %v2091, %v2101
        %v2125 = vmul.f32 %v2092, %v2101
        %v2126 = vmul.f32 %v2093, %v2101
        %v2127 = vmul.f32 %v2094, %v2101
        %v2128 = vmul.f32 %v2095, %v2101
        %v2129 = vmul.f32 %v2096, %v2101
        %v2130 = vmul.f32 %v2097, %v2101
        %v2131 = vmul.f32 %v2098, %v2101
        %v2132 = vmul.f32 %v2099, %v2101
        %v2133 = vmul.f32 %v2100, %v2101
        %v2134 = vadd.f32 %v2035, %v2102
        %v2135 = vadd.f32 %v2036, %v2103
        %v2136 = vadd.f32 %v2037, %v2104
        %v2137 = vadd.f32 %v2038, %v2105
        %v2138 = vadd.f32 %v2039, %v2106
        %v2139 = vadd.f32 %v2040, %v2107
        %v2140 = vadd.f32 %v2041, %v2108
        %v2141 = vadd.f32 %v2042, %v2109
        %v2142 = vadd.f32 %v2043, %v2110
        %v2143 = vadd.f32 %v2044, %v2111
        %v2144 = vadd.f32 %v2045, %v2112
        %v2145 = vadd.f32 %v2046, %v2113
        %v2146 = vadd.f32 %v2047, %v2114
        %v2147 = vadd.f32 %v2048, %v2115
        %v2148 = vadd.f32 %v2049, %v2116
        %v2149 = vadd.f32 %v2050, %v2117
        %v2150 = vadd.f32 %v2051, %v2118
        %v2151 = vadd.f32 %v2052, %v2119
        %v2152 = vadd.f32 %v2053, %v2120
        %v2153 = vadd.f32 %v2054, %v2121
        %v2154 = vadd.f32 %v2055, %v2122
        %v2155 = vadd.f32 %v2056, %v2123
        %v2156 = vadd.f32 %v2057, %v2124
        %v2157 = vadd.f32 %v2058, %v2125
        %v2158 = vadd.f32 %v2059, %v2126
        %v2159 = vadd.f32 %v2060, %v2127
        %v2160 = vadd.f32 %v2061, %v2128
        %v2161 = vadd.f32 %v2062, %v2129
        %v2162 = vadd.f32 %v2063, %v2130
        %v2163 = vadd.f32 %v2064, %v2131
        %v2164 = vadd.f32 %v2065, %v2132
        %v2165 = vadd.f32 %v2066, %v2133
        %v2166 = vld [vmem:[%s6 + $0x8] sm:$0x1]
        %v2167 = vld [vmem:[%s2068 + $0x1] sm:$0xff]
        %v2168 = vld [vmem:[%s2068 + $0x9] sm:$0xff]
        %v2169 = vld [vmem:[%s2068 + $0x19] sm:$0xff]
        %v2170 = vld [vmem:[%s2068 + $0x21] sm:$0xff]
        %v2171 = vld [vmem:[%s2068 + $0x31] sm:$0xff]
        %v2172 = vld [vmem:[%s2068 + $0x39] sm:$0xff]
        %v2173 = vld [vmem:[%s2068 + $0x49] sm:$0xff]
        %v2174 = vld [vmem:[%s2068 + $0x51] sm:$0xff]
        %v2175 = vld [vmem:[%s2068 + $0x61] sm:$0xff]
        %v2176 = vld [vmem:[%s2068 + $0x69] sm:$0xff]
        %v2177 = vld [vmem:[%s2068 + $0x79] sm:$0xff]
        %v2178 = vld [vmem:[%s2068 + $0x81] sm:$0xff]
        %v2179 = vld [vmem:[%s2068 + $0x91] sm:$0xff]
        %v2180 = vld [vmem:[%s2068 + $0x99] sm:$0xff]
        %v2181 = vld [vmem:[%s2068 + $0xa9] sm:$0xff]
        %v2182 = vld [vmem:[%s2068 + $0xb1] sm:$0xff]
        %v2183 = vld [vmem:[%s2068 + $0xc1] sm:$0xff]
        %v2184 = vld [vmem:[%s2068 + $0xc9] sm:$0xff]
        %v2185 = vld [vmem:[%s2068 + $0xd9] sm:$0xff]
        %v2186 = vld [vmem:[%s2068 + $0xe1] sm:$0xff]
        %v2187 = vld [vmem:[%s2068 + $0xf1] sm:$0xff]
        %v2188 = vld [vmem:[%s2068 + $0xf9] sm:$0xff]
        %v2189 = vld [vmem:[%s2068 + $0x109] sm:$0xff]
        %v2190 = vld [vmem:[%s2068 + $0x111] sm:$0xff]
        %v2191 = vld [vmem:[%s2068 + $0x121] sm:$0xff]
        %v2192 = vld [vmem:[%s2068 + $0x129] sm:$0xff]
        %v2193 = vld [vmem:[%s2068 + $0x139] sm:$0xff]
        %v2194 = vld [vmem:[%s2068 + $0x141] sm:$0xff]
        %v2195 = vld [vmem:[%s2068 + $0x151] sm:$0xff]
        %v2196 = vld [vmem:[%s2068 + $0x159] sm:$0xff]
        %v2197 = vld [vmem:[%s2068 + $0x169] sm:$0xff]
        %v2198 = vld [vmem:[%s2068 + $0x171] sm:$0xff]
        %v2199 = vperm.slane %v2166, 0
        %v2200 = vmul.f32 %v2167, %v2199
        %v2201 = vmul.f32 %v2168, %v2199
        %v2202 = vmul.f32 %v2169, %v2199
        %v2203 = vmul.f32 %v2170, %v2199
        %v2204 = vmul.f32 %v2171, %v2199
        %v2205 = vmul.f32 %v2172, %v2199
        %v2206 = vmul.f32 %v2173, %v2199
        %v2207 = vmul.f32 %v2174, %v2199
        %v2208 = vmul.f32 %v2175, %v2199
        %v2209 = vmul.f32 %v2176, %v2199
        %v2210 = vmul.f32 %v2177, %v2199
        %v2211 = vmul.f32 %v2178, %v2199
        %v2212 = vmul.f32 %v2179, %v2199
        %v2213 = vmul.f32 %v2180, %v2199
        %v2214 = vmul.f32 %v2181, %v2199
        %v2215 = vmul.f32 %v2182, %v2199
        %v2216 = vmul.f32 %v2183, %v2199
        %v2217 = vmul.f32 %v2184, %v2199
        %v2218 = vmul.f32 %v2185, %v2199
        %v2219 = vmul.f32 %v2186, %v2199
        %v2220 = vmul.f32 %v2187, %v2199
        %v2221 = vmul.f32 %v2188, %v2199
        %v2222 = vmul.f32 %v2189, %v2199
        %v2223 = vmul.f32 %v2190, %v2199
        %v2224 = vmul.f32 %v2191, %v2199
        %v2225 = vmul.f32 %v2192, %v2199
        %v2226 = vmul.f32 %v2193, %v2199
        %v2227 = vmul.f32 %v2194, %v2199
        %v2228 = vmul.f32 %v2195, %v2199
        %v2229 = vmul.f32 %v2196, %v2199
        %v2230 = vmul.f32 %v2197, %v2199
        %v2231 = vmul.f32 %v2198, %v2199
        %v2232 = vadd.f32 %v2134, %v2200
        %v2233 = vadd.f32 %v2135, %v2201
        %v2234 = vadd.f32 %v2136, %v2202
        %v2235 = vadd.f32 %v2137, %v2203
        %v2236 = vadd.f32 %v2138, %v2204
        %v2237 = vadd.f32 %v2139, %v2205
        %v2238 = vadd.f32 %v2140, %v2206
        %v2239 = vadd.f32 %v2141, %v2207
        %v2240 = vadd.f32 %v2142, %v2208
        %v2241 = vadd.f32 %v2143, %v2209
        %v2242 = vadd.f32 %v2144, %v2210
        %v2243 = vadd.f32 %v2145, %v2211
        %v2244 = vadd.f32 %v2146, %v2212
        %v2245 = vadd.f32 %v2147, %v2213
        %v2246 = vadd.f32 %v2148, %v2214
        %v2247 = vadd.f32 %v2149, %v2215
        %v2248 = vadd.f32 %v2150, %v2216
        %v2249 = vadd.f32 %v2151, %v2217
        %v2250 = vadd.f32 %v2152, %v2218
        %v2251 = vadd.f32 %v2153, %v2219
        %v2252 = vadd.f32 %v2154, %v2220
        %v2253 = vadd.f32 %v2155, %v2221
        %v2254 = vadd.f32 %v2156, %v2222
        %v2255 = vadd.f32 %v2157, %v2223
        %v2256 = vadd.f32 %v2158, %v2224
        %v2257 = vadd.f32 %v2159, %v2225
        %v2258 = vadd.f32 %v2160, %v2226
        %v2259 = vadd.f32 %v2161, %v2227
        %v2260 = vadd.f32 %v2162, %v2228
        %v2261 = vadd.f32 %v2163, %v2229
        %v2262 = vadd.f32 %v2164, %v2230
        %v2263 = vadd.f32 %v2165, %v2231
        %v2264 = vld [vmem:[%s6 + $0x9] sm:$0x1]
        %v2265 = vld [vmem:[%s2068 + $0x2] sm:$0xff]
        %v2266 = vld [vmem:[%s2068 + $0xa] sm:$0xff]
        %v2267 = vld [vmem:[%s2068 + $0x1a] sm:$0xff]
        %v2268 = vld [vmem:[%s2068 + $0x22] sm:$0xff]
        %v2269 = vld [vmem:[%s2068 + $0x32] sm:$0xff]
        %v2270 = vld [vmem:[%s2068 + $0x3a] sm:$0xff]
        %v2271 = vld [vmem:[%s2068 + $0x4a] sm:$0xff]
        %v2272 = vld [vmem:[%s2068 + $0x52] sm:$0xff]
        %v2273 = vld [vmem:[%s2068 + $0x62] sm:$0xff]
        %v2274 = vld [vmem:[%s2068 + $0x6a] sm:$0xff]
        %v2275 = vld [vmem:[%s2068 + $0x7a] sm:$0xff]
        %v2276 = vld [vmem:[%s2068 + $0x82] sm:$0xff]
        %v2277 = vld [vmem:[%s2068 + $0x92] sm:$0xff]
        %v2278 = vld [vmem:[%s2068 + $0x9a] sm:$0xff]
        %v2279 = vld [vmem:[%s2068 + $0xaa] sm:$0xff]
        %v2280 = vld [vmem:[%s2068 + $0xb2] sm:$0xff]
        %v2281 = vld [vmem:[%s2068 + $0xc2] sm:$0xff]
        %v2282 = vld [vmem:[%s2068 + $0xca] sm:$0xff]
        %v2283 = vld [vmem:[%s2068 + $0xda] sm:$0xff]
        %v2284 = vld [vmem:[%s2068 + $0xe2] sm:$0xff]
        %v2285 = vld [vmem:[%s2068 + $0xf2] sm:$0xff]
        %v2286 = vld [vmem:[%s2068 + $0xfa] sm:$0xff]
        %v2287 = vld [vmem:[%s2068 + $0x10a] sm:$0xff]
        %v2288 = vld [vmem:[%s2068 + $0x112] sm:$0xff]
        %v2289 = vld [vmem:[%s2068 + $0x122] sm:$0xff]
        %v2290 = vld [vmem:[%s2068 + $0x12a] sm:$0xff]
        %v2291 = vld [vmem:[%s2068 + $0x13a] sm:$0xff]
        %v2292 = vld [vmem:[%s2068 + $0x142] sm:$0xff]
        %v2293 = vld [vmem:[%s2068 + $0x152] sm:$0xff]
        %v2294 = vld [vmem:[%s2068 + $0x15a] sm:$0xff]
        %v2295 = vld [vmem:[%s2068 + $0x16a] sm:$0xff]
        %v2296 = vld [vmem:[%s2068 + $0x172] sm:$0xff]
        %v2297 = vperm.slane %v2264, 0
        %v2298 = vmul.f32 %v2265, %v2297
        %v2299 = vmul.f32 %v2266, %v2297
        %v2300 = vmul.f32 %v2267, %v2297
        %v2301 = vmul.f32 %v2268, %v2297
        %v2302 = vmul.f32 %v2269, %v2297
        %v2303 = vmul.f32 %v2270, %v2297
        %v2304 = vmul.f32 %v2271, %v2297
        %v2305 = vmul.f32 %v2272, %v2297
        %v2306 = vmul.f32 %v2273, %v2297
        %v2307 = vmul.f32 %v2274, %v2297
        %v2308 = vmul.f32 %v2275, %v2297
        %v2309 = vmul.f32 %v2276, %v2297
        %v2310 = vmul.f32 %v2277, %v2297
        %v2311 = vmul.f32 %v2278, %v2297
        %v2312 = vmul.f32 %v2279, %v2297
        %v2313 = vmul.f32 %v2280, %v2297
        %v2314 = vmul.f32 %v2281, %v2297
        %v2315 = vmul.f32 %v2282, %v2297
        %v2316 = vmul.f32 %v2283, %v2297
        %v2317 = vmul.f32 %v2284, %v2297
        %v2318 = vmul.f32 %v2285, %v2297
        %v2319 = vmul.f32 %v2286, %v2297
        %v2320 = vmul.f32 %v2287, %v2297
        %v2321 = vmul.f32 %v2288, %v2297
        %v2322 = vmul.f32 %v2289, %v2297
        %v2323 = vmul.f32 %v2290, %v2297
        %v2324 = vmul.f32 %v2291, %v2297
        %v2325 = vmul.f32 %v2292, %v2297
        %v2326 = vmul.f32 %v2293, %v2297
        %v2327 = vmul.f32 %v2294, %v2297
        %v2328 = vmul.f32 %v2295, %v2297
        %v2329 = vmul.f32 %v2296, %v2297
        %v2330 = vadd.f32 %v2232, %v2298
        %v2331 = vadd.f32 %v2233, %v2299
        %v2332 = vadd.f32 %v2234, %v2300
        %v2333 = vadd.f32 %v2235, %v2301
        %v2334 = vadd.f32 %v2236, %v2302
        %v2335 = vadd.f32 %v2237, %v2303
        %v2336 = vadd.f32 %v2238, %v2304
        %v2337 = vadd.f32 %v2239, %v2305
        %v2338 = vadd.f32 %v2240, %v2306
        %v2339 = vadd.f32 %v2241, %v2307
        %v2340 = vadd.f32 %v2242, %v2308
        %v2341 = vadd.f32 %v2243, %v2309
        %v2342 = vadd.f32 %v2244, %v2310
        %v2343 = vadd.f32 %v2245, %v2311
        %v2344 = vadd.f32 %v2246, %v2312
        %v2345 = vadd.f32 %v2247, %v2313
        %v2346 = vadd.f32 %v2248, %v2314
        %v2347 = vadd.f32 %v2249, %v2315
        %v2348 = vadd.f32 %v2250, %v2316
        %v2349 = vadd.f32 %v2251, %v2317
        %v2350 = vadd.f32 %v2252, %v2318
        %v2351 = vadd.f32 %v2253, %v2319
        %v2352 = vadd.f32 %v2254, %v2320
        %v2353 = vadd.f32 %v2255, %v2321
        %v2354 = vadd.f32 %v2256, %v2322
        %v2355 = vadd.f32 %v2257, %v2323
        %v2356 = vadd.f32 %v2258, %v2324
        %v2357 = vadd.f32 %v2259, %v2325
        %v2358 = vadd.f32 %v2260, %v2326
        %v2359 = vadd.f32 %v2261, %v2327
        %v2360 = vadd.f32 %v2262, %v2328
        %v2361 = vadd.f32 %v2263, %v2329
        %v2362 = vld [vmem:[%s6 + $0xa] sm:$0x1]
        %v2363 = vld [vmem:[%s2068 + $0x3] sm:$0xff]
        %v2364 = vld [vmem:[%s2068 + $0xb] sm:$0xff]
        %v2365 = vld [vmem:[%s2068 + $0x1b] sm:$0xff]
        %v2366 = vld [vmem:[%s2068 + $0x23] sm:$0xff]
        %v2367 = vld [vmem:[%s2068 + $0x33] sm:$0xff]
        %v2368 = vld [vmem:[%s2068 + $0x3b] sm:$0xff]
        %v2369 = vld [vmem:[%s2068 + $0x4b] sm:$0xff]
        %v2370 = vld [vmem:[%s2068 + $0x53] sm:$0xff]
        %v2371 = vld [vmem:[%s2068 + $0x63] sm:$0xff]
        %v2372 = vld [vmem:[%s2068 + $0x6b] sm:$0xff]
        %v2373 = vld [vmem:[%s2068 + $0x7b] sm:$0xff]
        %v2374 = vld [vmem:[%s2068 + $0x83] sm:$0xff]
        %v2375 = vld [vmem:[%s2068 + $0x93] sm:$0xff]
        %v2376 = vld [vmem:[%s2068 + $0x9b] sm:$0xff]
        %v2377 = vld [vmem:[%s2068 + $0xab] sm:$0xff]
        %v2378 = vld [vmem:[%s2068 + $0xb3] sm:$0xff]
        %v2379 = vld [vmem:[%s2068 + $0xc3] sm:$0xff]
        %v2380 = vld [vmem:[%s2068 + $0xcb] sm:$0xff]
        %v2381 = vld [vmem:[%s2068 + $0xdb] sm:$0xff]
        %v2382 = vld [vmem:[%s2068 + $0xe3] sm:$0xff]
        %v2383 = vld [vmem:[%s2068 + $0xf3] sm:$0xff]
        %v2384 = vld [vmem:[%s2068 + $0xfb] sm:$0xff]
        %v2385 = vld [vmem:[%s2068 + $0x10b] sm:$0xff]
        %v2386 = vld [vmem:[%s2068 + $0x113] sm:$0xff]
        %v2387 = vld [vmem:[%s2068 + $0x123] sm:$0xff]
        %v2388 = vld [vmem:[%s2068 + $0x12b] sm:$0xff]
        %v2389 = vld [vmem:[%s2068 + $0x13b] sm:$0xff]
        %v2390 = vld [vmem:[%s2068 + $0x143] sm:$0xff]
        %v2391 = vld [vmem:[%s2068 + $0x153] sm:$0xff]
        %v2392 = vld [vmem:[%s2068 + $0x15b] sm:$0xff]
        %v2393 = vld [vmem:[%s2068 + $0x16b] sm:$0xff]
        %v2394 = vld [vmem:[%s2068 + $0x173] sm:$0xff]
        %v2395 = vperm.slane %v2362, 0
        %v2396 = vmul.f32 %v2363, %v2395
        %v2397 = vmul.f32 %v2364, %v2395
        %v2398 = vmul.f32 %v2365, %v2395
        %v2399 = vmul.f32 %v2366, %v2395
        %v2400 = vmul.f32 %v2367, %v2395
        %v2401 = vmul.f32 %v2368, %v2395
        %v2402 = vmul.f32 %v2369, %v2395
        %v2403 = vmul.f32 %v2370, %v2395
        %v2404 = vmul.f32 %v2371, %v2395
        %v2405 = vmul.f32 %v2372, %v2395
        %v2406 = vmul.f32 %v2373, %v2395
        %v2407 = vmul.f32 %v2374, %v2395
        %v2408 = vmul.f32 %v2375, %v2395
        %v2409 = vmul.f32 %v2376, %v2395
        %v2410 = vmul.f32 %v2377, %v2395
        %v2411 = vmul.f32 %v2378, %v2395
        %v2412 = vmul.f32 %v2379, %v2395
        %v2413 = vmul.f32 %v2380, %v2395
        %v2414 = vmul.f32 %v2381, %v2395
        %v2415 = vmul.f32 %v2382, %v2395
        %v2416 = vmul.f32 %v2383, %v2395
        %v2417 = vmul.f32 %v2384, %v2395
        %v2418 = vmul.f32 %v2385, %v2395
        %v2419 = vmul.f32 %v2386, %v2395
        %v2420 = vmul.f32 %v2387, %v2395
        %v2421 = vmul.f32 %v2388, %v2395
        %v2422 = vmul.f32 %v2389, %v2395
        %v2423 = vmul.f32 %v2390, %v2395
        %v2424 = vmul.f32 %v2391, %v2395
        %v2425 = vmul.f32 %v2392, %v2395
        %v2426 = vmul.f32 %v2393, %v2395
        %v2427 = vmul.f32 %v2394, %v2395
        %v2428 = vadd.f32 %v2330, %v2396
        %v2429 = vadd.f32 %v2331, %v2397
        %v2430 = vadd.f32 %v2332, %v2398
        %v2431 = vadd.f32 %v2333, %v2399
        %v2432 = vadd.f32 %v2334, %v2400
        %v2433 = vadd.f32 %v2335, %v2401
        %v2434 = vadd.f32 %v2336, %v2402
        %v2435 = vadd.f32 %v2337, %v2403
        %v2436 = vadd.f32 %v2338, %v2404
        %v2437 = vadd.f32 %v2339, %v2405
        %v2438 = vadd.f32 %v2340, %v2406
        %v2439 = vadd.f32 %v2341, %v2407
        %v2440 = vadd.f32 %v2342, %v2408
        %v2441 = vadd.f32 %v2343, %v2409
        %v2442 = vadd.f32 %v2344, %v2410
        %v2443 = vadd.f32 %v2345, %v2411
        %v2444 = vadd.f32 %v2346, %v2412
        %v2445 = vadd.f32 %v2347, %v2413
        %v2446 = vadd.f32 %v2348, %v2414
        %v2447 = vadd.f32 %v2349, %v2415
        %v2448 = vadd.f32 %v2350, %v2416
        %v2449 = vadd.f32 %v2351, %v2417
        %v2450 = vadd.f32 %v2352, %v2418
        %v2451 = vadd.f32 %v2353, %v2419
        %v2452 = vadd.f32 %v2354, %v2420
        %v2453 = vadd.f32 %v2355, %v2421
        %v2454 = vadd.f32 %v2356, %v2422
        %v2455 = vadd.f32 %v2357, %v2423
        %v2456 = vadd.f32 %v2358, %v2424
        %v2457 = vadd.f32 %v2359, %v2425
        %v2458 = vadd.f32 %v2360, %v2426
        %v2459 = vadd.f32 %v2361, %v2427
        %v2460 = vld [vmem:[%s6 + $0xb] sm:$0x1]
        %v2461 = vld [vmem:[%s2068 + $0x4] sm:$0xff]
        %v2462 = vld [vmem:[%s2068 + $0xc] sm:$0xff]
        %v2463 = vld [vmem:[%s2068 + $0x1c] sm:$0xff]
        %v2464 = vld [vmem:[%s2068 + $0x24] sm:$0xff]
        %v2465 = vld [vmem:[%s2068 + $0x34] sm:$0xff]
        %v2466 = vld [vmem:[%s2068 + $0x3c] sm:$0xff]
        %v2467 = vld [vmem:[%s2068 + $0x4c] sm:$0xff]
        %v2468 = vld [vmem:[%s2068 + $0x54] sm:$0xff]
        %v2469 = vld [vmem:[%s2068 + $0x64] sm:$0xff]
        %v2470 = vld [vmem:[%s2068 + $0x6c] sm:$0xff]
        %v2471 = vld [vmem:[%s2068 + $0x7c] sm:$0xff]
        %v2472 = vld [vmem:[%s2068 + $0x84] sm:$0xff]
        %v2473 = vld [vmem:[%s2068 + $0x94] sm:$0xff]
        %v2474 = vld [vmem:[%s2068 + $0x9c] sm:$0xff]
        %v2475 = vld [vmem:[%s2068 + $0xac] sm:$0xff]
        %v2476 = vld [vmem:[%s2068 + $0xb4] sm:$0xff]
        %v2477 = vld [vmem:[%s2068 + $0xc4] sm:$0xff]
        %v2478 = vld [vmem:[%s2068 + $0xcc] sm:$0xff]
        %v2479 = vld [vmem:[%s2068 + $0xdc] sm:$0xff]
        %v2480 = vld [vmem:[%s2068 + $0xe4] sm:$0xff]
        %v2481 = vld [vmem:[%s2068 + $0xf4] sm:$0xff]
        %v2482 = vld [vmem:[%s2068 + $0xfc] sm:$0xff]
        %v2483 = vld [vmem:[%s2068 + $0x10c] sm:$0xff]
        %v2484 = vld [vmem:[%s2068 + $0x114] sm:$0xff]
        %v2485 = vld [vmem:[%s2068 + $0x124] sm:$0xff]
        %v2486 = vld [vmem:[%s2068 + $0x12c] sm:$0xff]
        %v2487 = vld [vmem:[%s2068 + $0x13c] sm:$0xff]
        %v2488 = vld [vmem:[%s2068 + $0x144] sm:$0xff]
        %v2489 = vld [vmem:[%s2068 + $0x154] sm:$0xff]
        %v2490 = vld [vmem:[%s2068 + $0x15c] sm:$0xff]
        %v2491 = vld [vmem:[%s2068 + $0x16c] sm:$0xff]
        %v2492 = vld [vmem:[%s2068 + $0x174] sm:$0xff]
        %v2493 = vperm.slane %v2460, 0
        %v2494 = vmul.f32 %v2461, %v2493
        %v2495 = vmul.f32 %v2462, %v2493
        %v2496 = vmul.f32 %v2463, %v2493
        %v2497 = vmul.f32 %v2464, %v2493
        %v2498 = vmul.f32 %v2465, %v2493
        %v2499 = vmul.f32 %v2466, %v2493
        %v2500 = vmul.f32 %v2467, %v2493
        %v2501 = vmul.f32 %v2468, %v2493
        %v2502 = vmul.f32 %v2469, %v2493
        %v2503 = vmul.f32 %v2470, %v2493
        %v2504 = vmul.f32 %v2471, %v2493
        %v2505 = vmul.f32 %v2472, %v2493
        %v2506 = vmul.f32 %v2473, %v2493
        %v2507 = vmul.f32 %v2474, %v2493
        %v2508 = vmul.f32 %v2475, %v2493
        %v2509 = vmul.f32 %v2476, %v2493
        %v2510 = vmul.f32 %v2477, %v2493
        %v2511 = vmul.f32 %v2478, %v2493
        %v2512 = vmul.f32 %v2479, %v2493
        %v2513 = vmul.f32 %v2480, %v2493
        %v2514 = vmul.f32 %v2481, %v2493
        %v2515 = vmul.f32 %v2482, %v2493
        %v2516 = vmul.f32 %v2483, %v2493
        %v2517 = vmul.f32 %v2484, %v2493
        %v2518 = vmul.f32 %v2485, %v2493
        %v2519 = vmul.f32 %v2486, %v2493
        %v2520 = vmul.f32 %v2487, %v2493
        %v2521 = vmul.f32 %v2488, %v2493
        %v2522 = vmul.f32 %v2489, %v2493
        %v2523 = vmul.f32 %v2490, %v2493
        %v2524 = vmul.f32 %v2491, %v2493
        %v2525 = vmul.f32 %v2492, %v2493
        %v2526 = vadd.f32 %v2428, %v2494
        %v2527 = vadd.f32 %v2429, %v2495
        %v2528 = vadd.f32 %v2430, %v2496
        %v2529 = vadd.f32 %v2431, %v2497
        %v2530 = vadd.f32 %v2432, %v2498
        %v2531 = vadd.f32 %v2433, %v2499
        %v2532 = vadd.f32 %v2434, %v2500
        %v2533 = vadd.f32 %v2435, %v2501
        %v2534 = vadd.f32 %v2436, %v2502
        %v2535 = vadd.f32 %v2437, %v2503
        %v2536 = vadd.f32 %v2438, %v2504
        %v2537 = vadd.f32 %v2439, %v2505
        %v2538 = vadd.f32 %v2440, %v2506
        %v2539 = vadd.f32 %v2441, %v2507
        %v2540 = vadd.f32 %v2442, %v2508
        %v2541 = vadd.f32 %v2443, %v2509
        %v2542 = vadd.f32 %v2444, %v2510
        %v2543 = vadd.f32 %v2445, %v2511
        %v2544 = vadd.f32 %v2446, %v2512
        %v2545 = vadd.f32 %v2447, %v2513
        %v2546 = vadd.f32 %v2448, %v2514
        %v2547 = vadd.f32 %v2449, %v2515
        %v2548 = vadd.f32 %v2450, %v2516
        %v2549 = vadd.f32 %v2451, %v2517
        %v2550 = vadd.f32 %v2452, %v2518
        %v2551 = vadd.f32 %v2453, %v2519
        %v2552 = vadd.f32 %v2454, %v2520
        %v2553 = vadd.f32 %v2455, %v2521
        %v2554 = vadd.f32 %v2456, %v2522
        %v2555 = vadd.f32 %v2457, %v2523
        %v2556 = vadd.f32 %v2458, %v2524
        %v2557 = vadd.f32 %v2459, %v2525
        %v2558 = vld [vmem:[%s6 + $0xc] sm:$0x1]
        %v2559 = vld [vmem:[%s2068 + $0x5] sm:$0xff]
        %v2560 = vld [vmem:[%s2068 + $0xd] sm:$0xff]
        %v2561 = vld [vmem:[%s2068 + $0x1d] sm:$0xff]
        %v2562 = vld [vmem:[%s2068 + $0x25] sm:$0xff]
        %v2563 = vld [vmem:[%s2068 + $0x35] sm:$0xff]
        %v2564 = vld [vmem:[%s2068 + $0x3d] sm:$0xff]
        %v2565 = vld [vmem:[%s2068 + $0x4d] sm:$0xff]
        %v2566 = vld [vmem:[%s2068 + $0x55] sm:$0xff]
        %v2567 = vld [vmem:[%s2068 + $0x65] sm:$0xff]
        %v2568 = vld [vmem:[%s2068 + $0x6d] sm:$0xff]
        %v2569 = vld [vmem:[%s2068 + $0x7d] sm:$0xff]
        %v2570 = vld [vmem:[%s2068 + $0x85] sm:$0xff]
        %v2571 = vld [vmem:[%s2068 + $0x95] sm:$0xff]
        %v2572 = vld [vmem:[%s2068 + $0x9d] sm:$0xff]
        %v2573 = vld [vmem:[%s2068 + $0xad] sm:$0xff]
        %v2574 = vld [vmem:[%s2068 + $0xb5] sm:$0xff]
        %v2575 = vld [vmem:[%s2068 + $0xc5] sm:$0xff]
        %v2576 = vld [vmem:[%s2068 + $0xcd] sm:$0xff]
        %v2577 = vld [vmem:[%s2068 + $0xdd] sm:$0xff]
        %v2578 = vld [vmem:[%s2068 + $0xe5] sm:$0xff]
        %v2579 = vld [vmem:[%s2068 + $0xf5] sm:$0xff]
        %v2580 = vld [vmem:[%s2068 + $0xfd] sm:$0xff]
        %v2581 = vld [vmem:[%s2068 + $0x10d] sm:$0xff]
        %v2582 = vld [vmem:[%s2068 + $0x115] sm:$0xff]
        %v2583 = vld [vmem:[%s2068 + $0x125] sm:$0xff]
        %v2584 = vld [vmem:[%s2068 + $0x12d] sm:$0xff]
        %v2585 = vld [vmem:[%s2068 + $0x13d] sm:$0xff]
        %v2586 = vld [vmem:[%s2068 + $0x145] sm:$0xff]
        %v2587 = vld [vmem:[%s2068 + $0x155] sm:$0xff]
        %v2588 = vld [vmem:[%s2068 + $0x15d] sm:$0xff]
        %v2589 = vld [vmem:[%s2068 + $0x16d] sm:$0xff]
        %v2590 = vld [vmem:[%s2068 + $0x175] sm:$0xff]
        %v2591 = vperm.slane %v2558, 0
        %v2592 = vmul.f32 %v2559, %v2591
        %v2593 = vmul.f32 %v2560, %v2591
        %v2594 = vmul.f32 %v2561, %v2591
        %v2595 = vmul.f32 %v2562, %v2591
        %v2596 = vmul.f32 %v2563, %v2591
        %v2597 = vmul.f32 %v2564, %v2591
        %v2598 = vmul.f32 %v2565, %v2591
        %v2599 = vmul.f32 %v2566, %v2591
        %v2600 = vmul.f32 %v2567, %v2591
        %v2601 = vmul.f32 %v2568, %v2591
        %v2602 = vmul.f32 %v2569, %v2591
        %v2603 = vmul.f32 %v2570, %v2591
        %v2604 = vmul.f32 %v2571, %v2591
        %v2605 = vmul.f32 %v2572, %v2591
        %v2606 = vmul.f32 %v2573, %v2591
        %v2607 = vmul.f32 %v2574, %v2591
        %v2608 = vmul.f32 %v2575, %v2591
        %v2609 = vmul.f32 %v2576, %v2591
        %v2610 = vmul.f32 %v2577, %v2591
        %v2611 = vmul.f32 %v2578, %v2591
        %v2612 = vmul.f32 %v2579, %v2591
        %v2613 = vmul.f32 %v2580, %v2591
        %v2614 = vmul.f32 %v2581, %v2591
        %v2615 = vmul.f32 %v2582, %v2591
        %v2616 = vmul.f32 %v2583, %v2591
        %v2617 = vmul.f32 %v2584, %v2591
        %v2618 = vmul.f32 %v2585, %v2591
        %v2619 = vmul.f32 %v2586, %v2591
        %v2620 = vmul.f32 %v2587, %v2591
        %v2621 = vmul.f32 %v2588, %v2591
        %v2622 = vmul.f32 %v2589, %v2591
        %v2623 = vmul.f32 %v2590, %v2591
        %v2624 = vadd.f32 %v2526, %v2592
        %v2625 = vadd.f32 %v2527, %v2593
        %v2626 = vadd.f32 %v2528, %v2594
        %v2627 = vadd.f32 %v2529, %v2595
        %v2628 = vadd.f32 %v2530, %v2596
        %v2629 = vadd.f32 %v2531, %v2597
        %v2630 = vadd.f32 %v2532, %v2598
        %v2631 = vadd.f32 %v2533, %v2599
        %v2632 = vadd.f32 %v2534, %v2600
        %v2633 = vadd.f32 %v2535, %v2601
        %v2634 = vadd.f32 %v2536, %v2602
        %v2635 = vadd.f32 %v2537, %v2603
        %v2636 = vadd.f32 %v2538, %v2604
        %v2637 = vadd.f32 %v2539, %v2605
        %v2638 = vadd.f32 %v2540, %v2606
        %v2639 = vadd.f32 %v2541, %v2607
        %v2640 = vadd.f32 %v2542, %v2608
        %v2641 = vadd.f32 %v2543, %v2609
        %v2642 = vadd.f32 %v2544, %v2610
        %v2643 = vadd.f32 %v2545, %v2611
        %v2644 = vadd.f32 %v2546, %v2612
        %v2645 = vadd.f32 %v2547, %v2613
        %v2646 = vadd.f32 %v2548, %v2614
        %v2647 = vadd.f32 %v2549, %v2615
        %v2648 = vadd.f32 %v2550, %v2616
        %v2649 = vadd.f32 %v2551, %v2617
        %v2650 = vadd.f32 %v2552, %v2618
        %v2651 = vadd.f32 %v2553, %v2619
        %v2652 = vadd.f32 %v2554, %v2620
        %v2653 = vadd.f32 %v2555, %v2621
        %v2654 = vadd.f32 %v2556, %v2622
        %v2655 = vadd.f32 %v2557, %v2623
        %v2656 = vld [vmem:[%s6 + $0xd] sm:$0x1]
        %v2657 = vld [vmem:[%s2068 + $0x6] sm:$0xff]
        %v2658 = vld [vmem:[%s2068 + $0xe] sm:$0xff]
        %v2659 = vld [vmem:[%s2068 + $0x1e] sm:$0xff]
        %v2660 = vld [vmem:[%s2068 + $0x26] sm:$0xff]
        %v2661 = vld [vmem:[%s2068 + $0x36] sm:$0xff]
        %v2662 = vld [vmem:[%s2068 + $0x3e] sm:$0xff]
        %v2663 = vld [vmem:[%s2068 + $0x4e] sm:$0xff]
        %v2664 = vld [vmem:[%s2068 + $0x56] sm:$0xff]
        %v2665 = vld [vmem:[%s2068 + $0x66] sm:$0xff]
        %v2666 = vld [vmem:[%s2068 + $0x6e] sm:$0xff]
        %v2667 = vld [vmem:[%s2068 + $0x7e] sm:$0xff]
        %v2668 = vld [vmem:[%s2068 + $0x86] sm:$0xff]
        %v2669 = vld [vmem:[%s2068 + $0x96] sm:$0xff]
        %v2670 = vld [vmem:[%s2068 + $0x9e] sm:$0xff]
        %v2671 = vld [vmem:[%s2068 + $0xae] sm:$0xff]
        %v2672 = vld [vmem:[%s2068 + $0xb6] sm:$0xff]
        %v2673 = vld [vmem:[%s2068 + $0xc6] sm:$0xff]
        %v2674 = vld [vmem:[%s2068 + $0xce] sm:$0xff]
        %v2675 = vld [vmem:[%s2068 + $0xde] sm:$0xff]
        %v2676 = vld [vmem:[%s2068 + $0xe6] sm:$0xff]
        %v2677 = vld [vmem:[%s2068 + $0xf6] sm:$0xff]
        %v2678 = vld [vmem:[%s2068 + $0xfe] sm:$0xff]
        %v2679 = vld [vmem:[%s2068 + $0x10e] sm:$0xff]
        %v2680 = vld [vmem:[%s2068 + $0x116] sm:$0xff]
        %v2681 = vld [vmem:[%s2068 + $0x126] sm:$0xff]
        %v2682 = vld [vmem:[%s2068 + $0x12e] sm:$0xff]
        %v2683 = vld [vmem:[%s2068 + $0x13e] sm:$0xff]
        %v2684 = vld [vmem:[%s2068 + $0x146] sm:$0xff]
        %v2685 = vld [vmem:[%s2068 + $0x156] sm:$0xff]
        %v2686 = vld [vmem:[%s2068 + $0x15e] sm:$0xff]
        %v2687 = vld [vmem:[%s2068 + $0x16e] sm:$0xff]
        %v2688 = vld [vmem:[%s2068 + $0x176] sm:$0xff]
        %v2689 = vperm.slane %v2656, 0
        %v2690 = vmul.f32 %v2657, %v2689
        %v2691 = vmul.f32 %v2658, %v2689
        %v2692 = vmul.f32 %v2659, %v2689
        %v2693 = vmul.f32 %v2660, %v2689
        %v2694 = vmul.f32 %v2661, %v2689
        %v2695 = vmul.f32 %v2662, %v2689
        %v2696 = vmul.f32 %v2663, %v2689
        %v2697 = vmul.f32 %v2664, %v2689
        %v2698 = vmul.f32 %v2665, %v2689
        %v2699 = vmul.f32 %v2666, %v2689
        %v2700 = vmul.f32 %v2667, %v2689
        %v2701 = vmul.f32 %v2668, %v2689
        %v2702 = vmul.f32 %v2669, %v2689
        %v2703 = vmul.f32 %v2670, %v2689
        %v2704 = vmul.f32 %v2671, %v2689
        %v2705 = vmul.f32 %v2672, %v2689
        %v2706 = vmul.f32 %v2673, %v2689
        %v2707 = vmul.f32 %v2674, %v2689
        %v2708 = vmul.f32 %v2675, %v2689
        %v2709 = vmul.f32 %v2676, %v2689
        %v2710 = vmul.f32 %v2677, %v2689
        %v2711 = vmul.f32 %v2678, %v2689
        %v2712 = vmul.f32 %v2679, %v2689
        %v2713 = vmul.f32 %v2680, %v2689
        %v2714 = vmul.f32 %v2681, %v2689
        %v2715 = vmul.f32 %v2682, %v2689
        %v2716 = vmul.f32 %v2683, %v2689
        %v2717 = vmul.f32 %v2684, %v2689
        %v2718 = vmul.f32 %v2685, %v2689
        %v2719 = vmul.f32 %v2686, %v2689
        %v2720 = vmul.f32 %v2687, %v2689
        %v2721 = vmul.f32 %v2688, %v2689
        %v2722 = vadd.f32 %v2624, %v2690
        %v2723 = vadd.f32 %v2625, %v2691
        %v2724 = vadd.f32 %v2626, %v2692
        %v2725 = vadd.f32 %v2627, %v2693
        %v2726 = vadd.f32 %v2628, %v2694
        %v2727 = vadd.f32 %v2629, %v2695
        %v2728 = vadd.f32 %v2630, %v2696
        %v2729 = vadd.f32 %v2631, %v2697
        %v2730 = vadd.f32 %v2632, %v2698
        %v2731 = vadd.f32 %v2633, %v2699
        %v2732 = vadd.f32 %v2634, %v2700
        %v2733 = vadd.f32 %v2635, %v2701
        %v2734 = vadd.f32 %v2636, %v2702
        %v2735 = vadd.f32 %v2637, %v2703
        %v2736 = vadd.f32 %v2638, %v2704
        %v2737 = vadd.f32 %v2639, %v2705
        %v2738 = vadd.f32 %v2640, %v2706
        %v2739 = vadd.f32 %v2641, %v2707
        %v2740 = vadd.f32 %v2642, %v2708
        %v2741 = vadd.f32 %v2643, %v2709
        %v2742 = vadd.f32 %v2644, %v2710
        %v2743 = vadd.f32 %v2645, %v2711
        %v2744 = vadd.f32 %v2646, %v2712
        %v2745 = vadd.f32 %v2647, %v2713
        %v2746 = vadd.f32 %v2648, %v2714
        %v2747 = vadd.f32 %v2649, %v2715
        %v2748 = vadd.f32 %v2650, %v2716
        %v2749 = vadd.f32 %v2651, %v2717
        %v2750 = vadd.f32 %v2652, %v2718
        %v2751 = vadd.f32 %v2653, %v2719
        %v2752 = vadd.f32 %v2654, %v2720
        %v2753 = vadd.f32 %v2655, %v2721
        %v2754 = vld [vmem:[%s6 + $0xe] sm:$0x1]
        %s2755 = scalar_lea.vmem [#allocation2], 48
        %v2756 = vld [vmem:[%s2755] sm:$0xff]
        %v2757 = vld [vmem:[%s2755 + $0x8] sm:$0xff]
        %v2758 = vld [vmem:[%s2755 + $0x18] sm:$0xff]
        %v2759 = vld [vmem:[%s2755 + $0x20] sm:$0xff]
        %v2760 = vld [vmem:[%s2755 + $0x30] sm:$0xff]
        %v2761 = vld [vmem:[%s2755 + $0x38] sm:$0xff]
        %v2762 = vld [vmem:[%s2755 + $0x48] sm:$0xff]
        %v2763 = vld [vmem:[%s2755 + $0x50] sm:$0xff]
        %v2764 = vld [vmem:[%s2755 + $0x60] sm:$0xff]
        %v2765 = vld [vmem:[%s2755 + $0x68] sm:$0xff]
        %v2766 = vld [vmem:[%s2755 + $0x78] sm:$0xff]
        %v2767 = vld [vmem:[%s2755 + $0x80] sm:$0xff]
        %v2768 = vld [vmem:[%s2755 + $0x90] sm:$0xff]
        %v2769 = vld [vmem:[%s2755 + $0x98] sm:$0xff]
        %v2770 = vld [vmem:[%s2755 + $0xa8] sm:$0xff]
        %v2771 = vld [vmem:[%s2755 + $0xb0] sm:$0xff]
        %v2772 = vld [vmem:[%s2755 + $0xc0] sm:$0xff]
        %v2773 = vld [vmem:[%s2755 + $0xc8] sm:$0xff]
        %v2774 = vld [vmem:[%s2755 + $0xd8] sm:$0xff]
        %v2775 = vld [vmem:[%s2755 + $0xe0] sm:$0xff]
        %v2776 = vld [vmem:[%s2755 + $0xf0] sm:$0xff]
        %v2777 = vld [vmem:[%s2755 + $0xf8] sm:$0xff]
        %v2778 = vld [vmem:[%s2755 + $0x108] sm:$0xff]
        %v2779 = vld [vmem:[%s2755 + $0x110] sm:$0xff]
        %v2780 = vld [vmem:[%s2755 + $0x120] sm:$0xff]
        %v2781 = vld [vmem:[%s2755 + $0x128] sm:$0xff]
        %v2782 = vld [vmem:[%s2755 + $0x138] sm:$0xff]
        %v2783 = vld [vmem:[%s2755 + $0x140] sm:$0xff]
        %v2784 = vld [vmem:[%s2755 + $0x150] sm:$0xff]
        %v2785 = vld [vmem:[%s2755 + $0x158] sm:$0xff]
        %v2786 = vld [vmem:[%s2755 + $0x168] sm:$0xff]
        %v2787 = vld [vmem:[%s2755 + $0x170] sm:$0xff]
        %v2788 = vperm.slane %v2754, 0
        %v2789 = vmul.f32 %v2756, %v2788
        %v2790 = vmul.f32 %v2757, %v2788
        %v2791 = vmul.f32 %v2758, %v2788
        %v2792 = vmul.f32 %v2759, %v2788
        %v2793 = vmul.f32 %v2760, %v2788
        %v2794 = vmul.f32 %v2761, %v2788
        %v2795 = vmul.f32 %v2762, %v2788
        %v2796 = vmul.f32 %v2763, %v2788
        %v2797 = vmul.f32 %v2764, %v2788
        %v2798 = vmul.f32 %v2765, %v2788
        %v2799 = vmul.f32 %v2766, %v2788
        %v2800 = vmul.f32 %v2767, %v2788
        %v2801 = vmul.f32 %v2768, %v2788
        %v2802 = vmul.f32 %v2769, %v2788
        %v2803 = vmul.f32 %v2770, %v2788
        %v2804 = vmul.f32 %v2771, %v2788
        %v2805 = vmul.f32 %v2772, %v2788
        %v2806 = vmul.f32 %v2773, %v2788
        %v2807 = vmul.f32 %v2774, %v2788
        %v2808 = vmul.f32 %v2775, %v2788
        %v2809 = vmul.f32 %v2776, %v2788
        %v2810 = vmul.f32 %v2777, %v2788
        %v2811 = vmul.f32 %v2778, %v2788
        %v2812 = vmul.f32 %v2779, %v2788
        %v2813 = vmul.f32 %v2780, %v2788
        %v2814 = vmul.f32 %v2781, %v2788
        %v2815 = vmul.f32 %v2782, %v2788
        %v2816 = vmul.f32 %v2783, %v2788
        %v2817 = vmul.f32 %v2784, %v2788
        %v2818 = vmul.f32 %v2785, %v2788
        %v2819 = vmul.f32 %v2786, %v2788
        %v2820 = vmul.f32 %v2787, %v2788
        %v2821 = vadd.f32 %v2722, %v2789
        %v2822 = vadd.f32 %v2723, %v2790
        %v2823 = vadd.f32 %v2724, %v2791
        %v2824 = vadd.f32 %v2725, %v2792
        %v2825 = vadd.f32 %v2726, %v2793
        %v2826 = vadd.f32 %v2727, %v2794
        %v2827 = vadd.f32 %v2728, %v2795
        %v2828 = vadd.f32 %v2729, %v2796
        %v2829 = vadd.f32 %v2730, %v2797
        %v2830 = vadd.f32 %v2731, %v2798
        %v2831 = vadd.f32 %v2732, %v2799
        %v2832 = vadd.f32 %v2733, %v2800
        %v2833 = vadd.f32 %v2734, %v2801
        %v2834 = vadd.f32 %v2735, %v2802
        %v2835 = vadd.f32 %v2736, %v2803
        %v2836 = vadd.f32 %v2737, %v2804
        %v2837 = vadd.f32 %v2738, %v2805
        %v2838 = vadd.f32 %v2739, %v2806
        %v2839 = vadd.f32 %v2740, %v2807
        %v2840 = vadd.f32 %v2741, %v2808
        %v2841 = vadd.f32 %v2742, %v2809
        %v2842 = vadd.f32 %v2743, %v2810
        %v2843 = vadd.f32 %v2744, %v2811
        %v2844 = vadd.f32 %v2745, %v2812
        %v2845 = vadd.f32 %v2746, %v2813
        %v2846 = vadd.f32 %v2747, %v2814
        %v2847 = vadd.f32 %v2748, %v2815
        %v2848 = vadd.f32 %v2749, %v2816
        %v2849 = vadd.f32 %v2750, %v2817
        %v2850 = vadd.f32 %v2751, %v2818
        %v2851 = vadd.f32 %v2752, %v2819
        %v2852 = vadd.f32 %v2753, %v2820
        %v2853 = vld [vmem:[%s6 + $0xf] sm:$0x1]
        %v2854 = vld [vmem:[%s2755 + $0x1] sm:$0xff]
        %v2855 = vld [vmem:[%s2755 + $0x9] sm:$0xff]
        %v2856 = vld [vmem:[%s2755 + $0x19] sm:$0xff]
        %v2857 = vld [vmem:[%s2755 + $0x21] sm:$0xff]
        %v2858 = vld [vmem:[%s2755 + $0x31] sm:$0xff]
        %v2859 = vld [vmem:[%s2755 + $0x39] sm:$0xff]
        %v2860 = vld [vmem:[%s2755 + $0x49] sm:$0xff]
        %v2861 = vld [vmem:[%s2755 + $0x51] sm:$0xff]
        %v2862 = vld [vmem:[%s2755 + $0x61] sm:$0xff]
        %v2863 = vld [vmem:[%s2755 + $0x69] sm:$0xff]
        %v2864 = vld [vmem:[%s2755 + $0x79] sm:$0xff]
        %v2865 = vld [vmem:[%s2755 + $0x81] sm:$0xff]
        %v2866 = vld [vmem:[%s2755 + $0x91] sm:$0xff]
        %v2867 = vld [vmem:[%s2755 + $0x99] sm:$0xff]
        %v2868 = vld [vmem:[%s2755 + $0xa9] sm:$0xff]
        %v2869 = vld [vmem:[%s2755 + $0xb1] sm:$0xff]
        %v2870 = vld [vmem:[%s2755 + $0xc1] sm:$0xff]
        %v2871 = vld [vmem:[%s2755 + $0xc9] sm:$0xff]
        %v2872 = vld [vmem:[%s2755 + $0xd9] sm:$0xff]
        %v2873 = vld [vmem:[%s2755 + $0xe1] sm:$0xff]
        %v2874 = vld [vmem:[%s2755 + $0xf1] sm:$0xff]
        %v2875 = vld [vmem:[%s2755 + $0xf9] sm:$0xff]
        %v2876 = vld [vmem:[%s2755 + $0x109] sm:$0xff]
        %v2877 = vld [vmem:[%s2755 + $0x111] sm:$0xff]
        %v2878 = vld [vmem:[%s2755 + $0x121] sm:$0xff]
        %v2879 = vld [vmem:[%s2755 + $0x129] sm:$0xff]
        %v2880 = vld [vmem:[%s2755 + $0x139] sm:$0xff]
        %v2881 = vld [vmem:[%s2755 + $0x141] sm:$0xff]
        %v2882 = vld [vmem:[%s2755 + $0x151] sm:$0xff]
        %v2883 = vld [vmem:[%s2755 + $0x159] sm:$0xff]
        %v2884 = vld [vmem:[%s2755 + $0x169] sm:$0xff]
        %v2885 = vld [vmem:[%s2755 + $0x171] sm:$0xff]
        %v2886 = vperm.slane %v2853, 0
        %v2887 = vmul.f32 %v2854, %v2886
        %v2888 = vmul.f32 %v2855, %v2886
        %v2889 = vmul.f32 %v2856, %v2886
        %v2890 = vmul.f32 %v2857, %v2886
        %v2891 = vmul.f32 %v2858, %v2886
        %v2892 = vmul.f32 %v2859, %v2886
        %v2893 = vmul.f32 %v2860, %v2886
        %v2894 = vmul.f32 %v2861, %v2886
        %v2895 = vmul.f32 %v2862, %v2886
        %v2896 = vmul.f32 %v2863, %v2886
        %v2897 = vmul.f32 %v2864, %v2886
        %v2898 = vmul.f32 %v2865, %v2886
        %v2899 = vmul.f32 %v2866, %v2886
        %v2900 = vmul.f32 %v2867, %v2886
        %v2901 = vmul.f32 %v2868, %v2886
        %v2902 = vmul.f32 %v2869, %v2886
        %v2903 = vmul.f32 %v2870, %v2886
        %v2904 = vmul.f32 %v2871, %v2886
        %v2905 = vmul.f32 %v2872, %v2886
        %v2906 = vmul.f32 %v2873, %v2886
        %v2907 = vmul.f32 %v2874, %v2886
        %v2908 = vmul.f32 %v2875, %v2886
        %v2909 = vmul.f32 %v2876, %v2886
        %v2910 = vmul.f32 %v2877, %v2886
        %v2911 = vmul.f32 %v2878, %v2886
        %v2912 = vmul.f32 %v2879, %v2886
        %v2913 = vmul.f32 %v2880, %v2886
        %v2914 = vmul.f32 %v2881, %v2886
        %v2915 = vmul.f32 %v2882, %v2886
        %v2916 = vmul.f32 %v2883, %v2886
        %v2917 = vmul.f32 %v2884, %v2886
        %v2918 = vmul.f32 %v2885, %v2886
        %v2919 = vadd.f32 %v2821, %v2887
        %v2920 = vadd.f32 %v2822, %v2888
        %v2921 = vadd.f32 %v2823, %v2889
        %v2922 = vadd.f32 %v2824, %v2890
        %v2923 = vadd.f32 %v2825, %v2891
        %v2924 = vadd.f32 %v2826, %v2892
        %v2925 = vadd.f32 %v2827, %v2893
        %v2926 = vadd.f32 %v2828, %v2894
        %v2927 = vadd.f32 %v2829, %v2895
        %v2928 = vadd.f32 %v2830, %v2896
        %v2929 = vadd.f32 %v2831, %v2897
        %v2930 = vadd.f32 %v2832, %v2898
        %v2931 = vadd.f32 %v2833, %v2899
        %v2932 = vadd.f32 %v2834, %v2900
        %v2933 = vadd.f32 %v2835, %v2901
        %v2934 = vadd.f32 %v2836, %v2902
        %v2935 = vadd.f32 %v2837, %v2903
        %v2936 = vadd.f32 %v2838, %v2904
        %v2937 = vadd.f32 %v2839, %v2905
        %v2938 = vadd.f32 %v2840, %v2906
        %v2939 = vadd.f32 %v2841, %v2907
        %v2940 = vadd.f32 %v2842, %v2908
        %v2941 = vadd.f32 %v2843, %v2909
        %v2942 = vadd.f32 %v2844, %v2910
        %v2943 = vadd.f32 %v2845, %v2911
        %v2944 = vadd.f32 %v2846, %v2912
        %v2945 = vadd.f32 %v2847, %v2913
        %v2946 = vadd.f32 %v2848, %v2914
        %v2947 = vadd.f32 %v2849, %v2915
        %v2948 = vadd.f32 %v2850, %v2916
        %v2949 = vadd.f32 %v2851, %v2917
        %v2950 = vadd.f32 %v2852, %v2918
        %v2951 = vld [vmem:[%s6 + $0x10] sm:$0x1]
        %v2952 = vld [vmem:[%s2755 + $0x2] sm:$0xff]
        %v2953 = vld [vmem:[%s2755 + $0xa] sm:$0xff]
        %v2954 = vld [vmem:[%s2755 + $0x1a] sm:$0xff]
        %v2955 = vld [vmem:[%s2755 + $0x22] sm:$0xff]
        %v2956 = vld [vmem:[%s2755 + $0x32] sm:$0xff]
        %v2957 = vld [vmem:[%s2755 + $0x3a] sm:$0xff]
        %v2958 = vld [vmem:[%s2755 + $0x4a] sm:$0xff]
        %v2959 = vld [vmem:[%s2755 + $0x52] sm:$0xff]
        %v2960 = vld [vmem:[%s2755 + $0x62] sm:$0xff]
        %v2961 = vld [vmem:[%s2755 + $0x6a] sm:$0xff]
        %v2962 = vld [vmem:[%s2755 + $0x7a] sm:$0xff]
        %v2963 = vld [vmem:[%s2755 + $0x82] sm:$0xff]
        %v2964 = vld [vmem:[%s2755 + $0x92] sm:$0xff]
        %v2965 = vld [vmem:[%s2755 + $0x9a] sm:$0xff]
        %v2966 = vld [vmem:[%s2755 + $0xaa] sm:$0xff]
        %v2967 = vld [vmem:[%s2755 + $0xb2] sm:$0xff]
        %v2968 = vld [vmem:[%s2755 + $0xc2] sm:$0xff]
        %v2969 = vld [vmem:[%s2755 + $0xca] sm:$0xff]
        %v2970 = vld [vmem:[%s2755 + $0xda] sm:$0xff]
        %v2971 = vld [vmem:[%s2755 + $0xe2] sm:$0xff]
        %v2972 = vld [vmem:[%s2755 + $0xf2] sm:$0xff]
        %v2973 = vld [vmem:[%s2755 + $0xfa] sm:$0xff]
        %v2974 = vld [vmem:[%s2755 + $0x10a] sm:$0xff]
        %v2975 = vld [vmem:[%s2755 + $0x112] sm:$0xff]
        %v2976 = vld [vmem:[%s2755 + $0x122] sm:$0xff]
        %v2977 = vld [vmem:[%s2755 + $0x12a] sm:$0xff]
        %v2978 = vld [vmem:[%s2755 + $0x13a] sm:$0xff]
        %v2979 = vld [vmem:[%s2755 + $0x142] sm:$0xff]
        %v2980 = vld [vmem:[%s2755 + $0x152] sm:$0xff]
        %v2981 = vld [vmem:[%s2755 + $0x15a] sm:$0xff]
        %v2982 = vld [vmem:[%s2755 + $0x16a] sm:$0xff]
        %v2983 = vld [vmem:[%s2755 + $0x172] sm:$0xff]
        %v2984 = vperm.slane %v2951, 0
        %v2985 = vmul.f32 %v2952, %v2984
        %v2986 = vmul.f32 %v2953, %v2984
        %v2987 = vmul.f32 %v2954, %v2984
        %v2988 = vmul.f32 %v2955, %v2984
        %v2989 = vmul.f32 %v2956, %v2984
        %v2990 = vmul.f32 %v2957, %v2984
        %v2991 = vmul.f32 %v2958, %v2984
        %v2992 = vmul.f32 %v2959, %v2984
        %v2993 = vmul.f32 %v2960, %v2984
        %v2994 = vmul.f32 %v2961, %v2984
        %v2995 = vmul.f32 %v2962, %v2984
        %v2996 = vmul.f32 %v2963, %v2984
        %v2997 = vmul.f32 %v2964, %v2984
        %v2998 = vmul.f32 %v2965, %v2984
        %v2999 = vmul.f32 %v2966, %v2984
        %v3000 = vmul.f32 %v2967, %v2984
        %v3001 = vmul.f32 %v2968, %v2984
        %v3002 = vmul.f32 %v2969, %v2984
        %v3003 = vmul.f32 %v2970, %v2984
        %v3004 = vmul.f32 %v2971, %v2984
        %v3005 = vmul.f32 %v2972, %v2984
        %v3006 = vmul.f32 %v2973, %v2984
        %v3007 = vmul.f32 %v2974, %v2984
        %v3008 = vmul.f32 %v2975, %v2984
        %v3009 = vmul.f32 %v2976, %v2984
        %v3010 = vmul.f32 %v2977, %v2984
        %v3011 = vmul.f32 %v2978, %v2984
        %v3012 = vmul.f32 %v2979, %v2984
        %v3013 = vmul.f32 %v2980, %v2984
        %v3014 = vmul.f32 %v2981, %v2984
        %v3015 = vmul.f32 %v2982, %v2984
        %v3016 = vmul.f32 %v2983, %v2984
        %v3017 = vadd.f32 %v2919, %v2985
        %v3018 = vadd.f32 %v2920, %v2986
        %v3019 = vadd.f32 %v2921, %v2987
        %v3020 = vadd.f32 %v2922, %v2988
        %v3021 = vadd.f32 %v2923, %v2989
        %v3022 = vadd.f32 %v2924, %v2990
        %v3023 = vadd.f32 %v2925, %v2991
        %v3024 = vadd.f32 %v2926, %v2992
        %v3025 = vadd.f32 %v2927, %v2993
        %v3026 = vadd.f32 %v2928, %v2994
        %v3027 = vadd.f32 %v2929, %v2995
        %v3028 = vadd.f32 %v2930, %v2996
        %v3029 = vadd.f32 %v2931, %v2997
        %v3030 = vadd.f32 %v2932, %v2998
        %v3031 = vadd.f32 %v2933, %v2999
        %v3032 = vadd.f32 %v2934, %v3000
        %v3033 = vadd.f32 %v2935, %v3001
        %v3034 = vadd.f32 %v2936, %v3002
        %v3035 = vadd.f32 %v2937, %v3003
        %v3036 = vadd.f32 %v2938, %v3004
        %v3037 = vadd.f32 %v2939, %v3005
        %v3038 = vadd.f32 %v2940, %v3006
        %v3039 = vadd.f32 %v2941, %v3007
        %v3040 = vadd.f32 %v2942, %v3008
        %v3041 = vadd.f32 %v2943, %v3009
        %v3042 = vadd.f32 %v2944, %v3010
        %v3043 = vadd.f32 %v2945, %v3011
        %v3044 = vadd.f32 %v2946, %v3012
        %v3045 = vadd.f32 %v2947, %v3013
        %v3046 = vadd.f32 %v2948, %v3014
        %v3047 = vadd.f32 %v2949, %v3015
        %v3048 = vadd.f32 %v2950, %v3016
        %v3049 = vld [vmem:[%s6 + $0x11] sm:$0x1]
        %v3050 = vld [vmem:[%s2755 + $0x3] sm:$0xff]
        %v3051 = vld [vmem:[%s2755 + $0xb] sm:$0xff]
        %v3052 = vld [vmem:[%s2755 + $0x1b] sm:$0xff]
        %v3053 = vld [vmem:[%s2755 + $0x23] sm:$0xff]
        %v3054 = vld [vmem:[%s2755 + $0x33] sm:$0xff]
        %v3055 = vld [vmem:[%s2755 + $0x3b] sm:$0xff]
        %v3056 = vld [vmem:[%s2755 + $0x4b] sm:$0xff]
        %v3057 = vld [vmem:[%s2755 + $0x53] sm:$0xff]
        %v3058 = vld [vmem:[%s2755 + $0x63] sm:$0xff]
        %v3059 = vld [vmem:[%s2755 + $0x6b] sm:$0xff]
        %v3060 = vld [vmem:[%s2755 + $0x7b] sm:$0xff]
        %v3061 = vld [vmem:[%s2755 + $0x83] sm:$0xff]
        %v3062 = vld [vmem:[%s2755 + $0x93] sm:$0xff]
        %v3063 = vld [vmem:[%s2755 + $0x9b] sm:$0xff]
        %v3064 = vld [vmem:[%s2755 + $0xab] sm:$0xff]
        %v3065 = vld [vmem:[%s2755 + $0xb3] sm:$0xff]
        %v3066 = vld [vmem:[%s2755 + $0xc3] sm:$0xff]
        %v3067 = vld [vmem:[%s2755 + $0xcb] sm:$0xff]
        %v3068 = vld [vmem:[%s2755 + $0xdb] sm:$0xff]
        %v3069 = vld [vmem:[%s2755 + $0xe3] sm:$0xff]
        %v3070 = vld [vmem:[%s2755 + $0xf3] sm:$0xff]
        %v3071 = vld [vmem:[%s2755 + $0xfb] sm:$0xff]
        %v3072 = vld [vmem:[%s2755 + $0x10b] sm:$0xff]
        %v3073 = vld [vmem:[%s2755 + $0x113] sm:$0xff]
        %v3074 = vld [vmem:[%s2755 + $0x123] sm:$0xff]
        %v3075 = vld [vmem:[%s2755 + $0x12b] sm:$0xff]
        %v3076 = vld [vmem:[%s2755 + $0x13b] sm:$0xff]
        %v3077 = vld [vmem:[%s2755 + $0x143] sm:$0xff]
        %v3078 = vld [vmem:[%s2755 + $0x153] sm:$0xff]
        %v3079 = vld [vmem:[%s2755 + $0x15b] sm:$0xff]
        %v3080 = vld [vmem:[%s2755 + $0x16b] sm:$0xff]
        %v3081 = vld [vmem:[%s2755 + $0x173] sm:$0xff]
        %v3082 = vperm.slane %v3049, 0
        %v3083 = vmul.f32 %v3050, %v3082
        %v3084 = vmul.f32 %v3051, %v3082
        %v3085 = vmul.f32 %v3052, %v3082
        %v3086 = vmul.f32 %v3053, %v3082
        %v3087 = vmul.f32 %v3054, %v3082
        %v3088 = vmul.f32 %v3055, %v3082
        %v3089 = vmul.f32 %v3056, %v3082
        %v3090 = vmul.f32 %v3057, %v3082
        %v3091 = vmul.f32 %v3058, %v3082
        %v3092 = vmul.f32 %v3059, %v3082
        %v3093 = vmul.f32 %v3060, %v3082
        %v3094 = vmul.f32 %v3061, %v3082
        %v3095 = vmul.f32 %v3062, %v3082
        %v3096 = vmul.f32 %v3063, %v3082
        %v3097 = vmul.f32 %v3064, %v3082
        %v3098 = vmul.f32 %v3065, %v3082
        %v3099 = vmul.f32 %v3066, %v3082
        %v3100 = vmul.f32 %v3067, %v3082
        %v3101 = vmul.f32 %v3068, %v3082
        %v3102 = vmul.f32 %v3069, %v3082
        %v3103 = vmul.f32 %v3070, %v3082
        %v3104 = vmul.f32 %v3071, %v3082
        %v3105 = vmul.f32 %v3072, %v3082
        %v3106 = vmul.f32 %v3073, %v3082
        %v3107 = vmul.f32 %v3074, %v3082
        %v3108 = vmul.f32 %v3075, %v3082
        %v3109 = vmul.f32 %v3076, %v3082
        %v3110 = vmul.f32 %v3077, %v3082
        %v3111 = vmul.f32 %v3078, %v3082
        %v3112 = vmul.f32 %v3079, %v3082
        %v3113 = vmul.f32 %v3080, %v3082
        %v3114 = vmul.f32 %v3081, %v3082
        %v3115 = vadd.f32 %v3017, %v3083
        %v3116 = vadd.f32 %v3018, %v3084
        %v3117 = vadd.f32 %v3019, %v3085
        %v3118 = vadd.f32 %v3020, %v3086
        %v3119 = vadd.f32 %v3021, %v3087
        %v3120 = vadd.f32 %v3022, %v3088
        %v3121 = vadd.f32 %v3023, %v3089
        %v3122 = vadd.f32 %v3024, %v3090
        %v3123 = vadd.f32 %v3025, %v3091
        %v3124 = vadd.f32 %v3026, %v3092
        %v3125 = vadd.f32 %v3027, %v3093
        %v3126 = vadd.f32 %v3028, %v3094
        %v3127 = vadd.f32 %v3029, %v3095
        %v3128 = vadd.f32 %v3030, %v3096
        %v3129 = vadd.f32 %v3031, %v3097
        %v3130 = vadd.f32 %v3032, %v3098
        %v3131 = vadd.f32 %v3033, %v3099
        %v3132 = vadd.f32 %v3034, %v3100
        %v3133 = vadd.f32 %v3035, %v3101
        %v3134 = vadd.f32 %v3036, %v3102
        %v3135 = vadd.f32 %v3037, %v3103
        %v3136 = vadd.f32 %v3038, %v3104
        %v3137 = vadd.f32 %v3039, %v3105
        %v3138 = vadd.f32 %v3040, %v3106
        %v3139 = vadd.f32 %v3041, %v3107
        %v3140 = vadd.f32 %v3042, %v3108
        %v3141 = vadd.f32 %v3043, %v3109
        %v3142 = vadd.f32 %v3044, %v3110
        %v3143 = vadd.f32 %v3045, %v3111
        %v3144 = vadd.f32 %v3046, %v3112
        %v3145 = vadd.f32 %v3047, %v3113
        %v3146 = vadd.f32 %v3048, %v3114
        %v3147 = vld [vmem:[%s6 + $0x12] sm:$0x1]
        %v3148 = vld [vmem:[%s2755 + $0x4] sm:$0xff]
        %v3149 = vld [vmem:[%s2755 + $0xc] sm:$0xff]
        %v3150 = vld [vmem:[%s2755 + $0x1c] sm:$0xff]
        %v3151 = vld [vmem:[%s2755 + $0x24] sm:$0xff]
        %v3152 = vld [vmem:[%s2755 + $0x34] sm:$0xff]
        %v3153 = vld [vmem:[%s2755 + $0x3c] sm:$0xff]
        %v3154 = vld [vmem:[%s2755 + $0x4c] sm:$0xff]
        %v3155 = vld [vmem:[%s2755 + $0x54] sm:$0xff]
        %v3156 = vld [vmem:[%s2755 + $0x64] sm:$0xff]
        %v3157 = vld [vmem:[%s2755 + $0x6c] sm:$0xff]
        %v3158 = vld [vmem:[%s2755 + $0x7c] sm:$0xff]
        %v3159 = vld [vmem:[%s2755 + $0x84] sm:$0xff]
        %v3160 = vld [vmem:[%s2755 + $0x94] sm:$0xff]
        %v3161 = vld [vmem:[%s2755 + $0x9c] sm:$0xff]
        %v3162 = vld [vmem:[%s2755 + $0xac] sm:$0xff]
        %v3163 = vld [vmem:[%s2755 + $0xb4] sm:$0xff]
        %v3164 = vld [vmem:[%s2755 + $0xc4] sm:$0xff]
        %v3165 = vld [vmem:[%s2755 + $0xcc] sm:$0xff]
        %v3166 = vld [vmem:[%s2755 + $0xdc] sm:$0xff]
        %v3167 = vld [vmem:[%s2755 + $0xe4] sm:$0xff]
        %v3168 = vld [vmem:[%s2755 + $0xf4] sm:$0xff]
        %v3169 = vld [vmem:[%s2755 + $0xfc] sm:$0xff]
        %v3170 = vld [vmem:[%s2755 + $0x10c] sm:$0xff]
        %v3171 = vld [vmem:[%s2755 + $0x114] sm:$0xff]
        %v3172 = vld [vmem:[%s2755 + $0x124] sm:$0xff]
        %v3173 = vld [vmem:[%s2755 + $0x12c] sm:$0xff]
        %v3174 = vld [vmem:[%s2755 + $0x13c] sm:$0xff]
        %v3175 = vld [vmem:[%s2755 + $0x144] sm:$0xff]
        %v3176 = vld [vmem:[%s2755 + $0x154] sm:$0xff]
        %v3177 = vld [vmem:[%s2755 + $0x15c] sm:$0xff]
        %v3178 = vld [vmem:[%s2755 + $0x16c] sm:$0xff]
        %v3179 = vld [vmem:[%s2755 + $0x174] sm:$0xff]
        %v3180 = vperm.slane %v3147, 0
        %v3181 = vmul.f32 %v3148, %v3180
        %v3182 = vmul.f32 %v3149, %v3180
        %v3183 = vmul.f32 %v3150, %v3180
        %v3184 = vmul.f32 %v3151, %v3180
        %v3185 = vmul.f32 %v3152, %v3180
        %v3186 = vmul.f32 %v3153, %v3180
        %v3187 = vmul.f32 %v3154, %v3180
        %v3188 = vmul.f32 %v3155, %v3180
        %v3189 = vmul.f32 %v3156, %v3180
        %v3190 = vmul.f32 %v3157, %v3180
        %v3191 = vmul.f32 %v3158, %v3180
        %v3192 = vmul.f32 %v3159, %v3180
        %v3193 = vmul.f32 %v3160, %v3180
        %v3194 = vmul.f32 %v3161, %v3180
        %v3195 = vmul.f32 %v3162, %v3180
        %v3196 = vmul.f32 %v3163, %v3180
        %v3197 = vmul.f32 %v3164, %v3180
        %v3198 = vmul.f32 %v3165, %v3180
        %v3199 = vmul.f32 %v3166, %v3180
        %v3200 = vmul.f32 %v3167, %v3180
        %v3201 = vmul.f32 %v3168, %v3180
        %v3202 = vmul.f32 %v3169, %v3180
        %v3203 = vmul.f32 %v3170, %v3180
        %v3204 = vmul.f32 %v3171, %v3180
        %v3205 = vmul.f32 %v3172, %v3180
        %v3206 = vmul.f32 %v3173, %v3180
        %v3207 = vmul.f32 %v3174, %v3180
        %v3208 = vmul.f32 %v3175, %v3180
        %v3209 = vmul.f32 %v3176, %v3180
        %v3210 = vmul.f32 %v3177, %v3180
        %v3211 = vmul.f32 %v3178, %v3180
        %v3212 = vmul.f32 %v3179, %v3180
        %v3213 = vadd.f32 %v3115, %v3181
        %v3214 = vadd.f32 %v3116, %v3182
        %v3215 = vadd.f32 %v3117, %v3183
        %v3216 = vadd.f32 %v3118, %v3184
        %v3217 = vadd.f32 %v3119, %v3185
        %v3218 = vadd.f32 %v3120, %v3186
        %v3219 = vadd.f32 %v3121, %v3187
        %v3220 = vadd.f32 %v3122, %v3188
        %v3221 = vadd.f32 %v3123, %v3189
        %v3222 = vadd.f32 %v3124, %v3190
        %v3223 = vadd.f32 %v3125, %v3191
        %v3224 = vadd.f32 %v3126, %v3192
        %v3225 = vadd.f32 %v3127, %v3193
        %v3226 = vadd.f32 %v3128, %v3194
        %v3227 = vadd.f32 %v3129, %v3195
        %v3228 = vadd.f32 %v3130, %v3196
        %v3229 = vadd.f32 %v3131, %v3197
        %v3230 = vadd.f32 %v3132, %v3198
        %v3231 = vadd.f32 %v3133, %v3199
        %v3232 = vadd.f32 %v3134, %v3200
        %v3233 = vadd.f32 %v3135, %v3201
        %v3234 = vadd.f32 %v3136, %v3202
        %v3235 = vadd.f32 %v3137, %v3203
        %v3236 = vadd.f32 %v3138, %v3204
        %v3237 = vadd.f32 %v3139, %v3205
        %v3238 = vadd.f32 %v3140, %v3206
        %v3239 = vadd.f32 %v3141, %v3207
        %v3240 = vadd.f32 %v3142, %v3208
        %v3241 = vadd.f32 %v3143, %v3209
        %v3242 = vadd.f32 %v3144, %v3210
        %v3243 = vadd.f32 %v3145, %v3211
        %v3244 = vadd.f32 %v3146, %v3212
        %v3245 = vld [vmem:[%s6 + $0x13] sm:$0x1]
        %v3246 = vld [vmem:[%s2755 + $0x5] sm:$0xff]
        %v3247 = vld [vmem:[%s2755 + $0xd] sm:$0xff]
        %v3248 = vld [vmem:[%s2755 + $0x1d] sm:$0xff]
        %v3249 = vld [vmem:[%s2755 + $0x25] sm:$0xff]
        %v3250 = vld [vmem:[%s2755 + $0x35] sm:$0xff]
        %v3251 = vld [vmem:[%s2755 + $0x3d] sm:$0xff]
        %v3252 = vld [vmem:[%s2755 + $0x4d] sm:$0xff]
        %v3253 = vld [vmem:[%s2755 + $0x55] sm:$0xff]
        %v3254 = vld [vmem:[%s2755 + $0x65] sm:$0xff]
        %v3255 = vld [vmem:[%s2755 + $0x6d] sm:$0xff]
        %v3256 = vld [vmem:[%s2755 + $0x7d] sm:$0xff]
        %v3257 = vld [vmem:[%s2755 + $0x85] sm:$0xff]
        %v3258 = vld [vmem:[%s2755 + $0x95] sm:$0xff]
        %v3259 = vld [vmem:[%s2755 + $0x9d] sm:$0xff]
        %v3260 = vld [vmem:[%s2755 + $0xad] sm:$0xff]
        %v3261 = vld [vmem:[%s2755 + $0xb5] sm:$0xff]
        %v3262 = vld [vmem:[%s2755 + $0xc5] sm:$0xff]
        %v3263 = vld [vmem:[%s2755 + $0xcd] sm:$0xff]
        %v3264 = vld [vmem:[%s2755 + $0xdd] sm:$0xff]
        %v3265 = vld [vmem:[%s2755 + $0xe5] sm:$0xff]
        %v3266 = vld [vmem:[%s2755 + $0xf5] sm:$0xff]
        %v3267 = vld [vmem:[%s2755 + $0xfd] sm:$0xff]
        %v3268 = vld [vmem:[%s2755 + $0x10d] sm:$0xff]
        %v3269 = vld [vmem:[%s2755 + $0x115] sm:$0xff]
        %v3270 = vld [vmem:[%s2755 + $0x125] sm:$0xff]
        %v3271 = vld [vmem:[%s2755 + $0x12d] sm:$0xff]
        %v3272 = vld [vmem:[%s2755 + $0x13d] sm:$0xff]
        %v3273 = vld [vmem:[%s2755 + $0x145] sm:$0xff]
        %v3274 = vld [vmem:[%s2755 + $0x155] sm:$0xff]
        %v3275 = vld [vmem:[%s2755 + $0x15d] sm:$0xff]
        %v3276 = vld [vmem:[%s2755 + $0x16d] sm:$0xff]
        %v3277 = vld [vmem:[%s2755 + $0x175] sm:$0xff]
        %v3278 = vperm.slane %v3245, 0
        %v3279 = vmul.f32 %v3246, %v3278
        %v3280 = vmul.f32 %v3247, %v3278
        %v3281 = vmul.f32 %v3248, %v3278
        %v3282 = vmul.f32 %v3249, %v3278
        %v3283 = vmul.f32 %v3250, %v3278
        %v3284 = vmul.f32 %v3251, %v3278
        %v3285 = vmul.f32 %v3252, %v3278
        %v3286 = vmul.f32 %v3253, %v3278
        %v3287 = vmul.f32 %v3254, %v3278
        %v3288 = vmul.f32 %v3255, %v3278
        %v3289 = vmul.f32 %v3256, %v3278
        %v3290 = vmul.f32 %v3257, %v3278
        %v3291 = vmul.f32 %v3258, %v3278
        %v3292 = vmul.f32 %v3259, %v3278
        %v3293 = vmul.f32 %v3260, %v3278
        %v3294 = vmul.f32 %v3261, %v3278
        %v3295 = vmul.f32 %v3262, %v3278
        %v3296 = vmul.f32 %v3263, %v3278
        %v3297 = vmul.f32 %v3264, %v3278
        %v3298 = vmul.f32 %v3265, %v3278
        %v3299 = vmul.f32 %v3266, %v3278
        %v3300 = vmul.f32 %v3267, %v3278
        %v3301 = vmul.f32 %v3268, %v3278
        %v3302 = vmul.f32 %v3269, %v3278
        %v3303 = vmul.f32 %v3270, %v3278
        %v3304 = vmul.f32 %v3271, %v3278
        %v3305 = vmul.f32 %v3272, %v3278
        %v3306 = vmul.f32 %v3273, %v3278
        %v3307 = vmul.f32 %v3274, %v3278
        %v3308 = vmul.f32 %v3275, %v3278
        %v3309 = vmul.f32 %v3276, %v3278
        %v3310 = vmul.f32 %v3277, %v3278
        %v3311 = vadd.f32 %v3213, %v3279
        %v3312 = vadd.f32 %v3214, %v3280
        %v3313 = vadd.f32 %v3215, %v3281
        %v3314 = vadd.f32 %v3216, %v3282
        %v3315 = vadd.f32 %v3217, %v3283
        %v3316 = vadd.f32 %v3218, %v3284
        %v3317 = vadd.f32 %v3219, %v3285
        %v3318 = vadd.f32 %v3220, %v3286
        %v3319 = vadd.f32 %v3221, %v3287
        %v3320 = vadd.f32 %v3222, %v3288
        %v3321 = vadd.f32 %v3223, %v3289
        %v3322 = vadd.f32 %v3224, %v3290
        %v3323 = vadd.f32 %v3225, %v3291
        %v3324 = vadd.f32 %v3226, %v3292
        %v3325 = vadd.f32 %v3227, %v3293
        %v3326 = vadd.f32 %v3228, %v3294
        %v3327 = vadd.f32 %v3229, %v3295
        %v3328 = vadd.f32 %v3230, %v3296
        %v3329 = vadd.f32 %v3231, %v3297
        %v3330 = vadd.f32 %v3232, %v3298
        %v3331 = vadd.f32 %v3233, %v3299
        %v3332 = vadd.f32 %v3234, %v3300
        %v3333 = vadd.f32 %v3235, %v3301
        %v3334 = vadd.f32 %v3236, %v3302
        %v3335 = vadd.f32 %v3237, %v3303
        %v3336 = vadd.f32 %v3238, %v3304
        %v3337 = vadd.f32 %v3239, %v3305
        %v3338 = vadd.f32 %v3240, %v3306
        %v3339 = vadd.f32 %v3241, %v3307
        %v3340 = vadd.f32 %v3242, %v3308
        %v3341 = vadd.f32 %v3243, %v3309
        %v3342 = vadd.f32 %v3244, %v3310
        %v3343 = vld [vmem:[%s6 + $0x14] sm:$0x1]
        %v3344 = vld [vmem:[%s2755 + $0x6] sm:$0xff]
        %v3345 = vld [vmem:[%s2755 + $0xe] sm:$0xff]
        %v3346 = vld [vmem:[%s2755 + $0x1e] sm:$0xff]
        %v3347 = vld [vmem:[%s2755 + $0x26] sm:$0xff]
        %v3348 = vld [vmem:[%s2755 + $0x36] sm:$0xff]
        %v3349 = vld [vmem:[%s2755 + $0x3e] sm:$0xff]
        %v3350 = vld [vmem:[%s2755 + $0x4e] sm:$0xff]
        %v3351 = vld [vmem:[%s2755 + $0x56] sm:$0xff]
        %v3352 = vld [vmem:[%s2755 + $0x66] sm:$0xff]
        %v3353 = vld [vmem:[%s2755 + $0x6e] sm:$0xff]
        %v3354 = vld [vmem:[%s2755 + $0x7e] sm:$0xff]
        %v3355 = vld [vmem:[%s2755 + $0x86] sm:$0xff]
        %v3356 = vld [vmem:[%s2755 + $0x96] sm:$0xff]
        %v3357 = vld [vmem:[%s2755 + $0x9e] sm:$0xff]
        %v3358 = vld [vmem:[%s2755 + $0xae] sm:$0xff]
        %v3359 = vld [vmem:[%s2755 + $0xb6] sm:$0xff]
        %v3360 = vld [vmem:[%s2755 + $0xc6] sm:$0xff]
        %v3361 = vld [vmem:[%s2755 + $0xce] sm:$0xff]
        %v3362 = vld [vmem:[%s2755 + $0xde] sm:$0xff]
        %v3363 = vld [vmem:[%s2755 + $0xe6] sm:$0xff]
        %v3364 = vld [vmem:[%s2755 + $0xf6] sm:$0xff]
        %v3365 = vld [vmem:[%s2755 + $0xfe] sm:$0xff]
        %v3366 = vld [vmem:[%s2755 + $0x10e] sm:$0xff]
        %v3367 = vld [vmem:[%s2755 + $0x116] sm:$0xff]
        %v3368 = vld [vmem:[%s2755 + $0x126] sm:$0xff]
        %v3369 = vld [vmem:[%s2755 + $0x12e] sm:$0xff]
        %v3370 = vld [vmem:[%s2755 + $0x13e] sm:$0xff]
        %v3371 = vld [vmem:[%s2755 + $0x146] sm:$0xff]
        %v3372 = vld [vmem:[%s2755 + $0x156] sm:$0xff]
        %v3373 = vld [vmem:[%s2755 + $0x15e] sm:$0xff]
        %v3374 = vld [vmem:[%s2755 + $0x16e] sm:$0xff]
        %v3375 = vld [vmem:[%s2755 + $0x176] sm:$0xff]
        %v3376 = vperm.slane %v3343, 0
        %v3377 = vmul.f32 %v3344, %v3376
        %v3378 = vmul.f32 %v3345, %v3376
        %v3379 = vmul.f32 %v3346, %v3376
        %v3380 = vmul.f32 %v3347, %v3376
        %v3381 = vmul.f32 %v3348, %v3376
        %v3382 = vmul.f32 %v3349, %v3376
        %v3383 = vmul.f32 %v3350, %v3376
        %v3384 = vmul.f32 %v3351, %v3376
        %v3385 = vmul.f32 %v3352, %v3376
        %v3386 = vmul.f32 %v3353, %v3376
        %v3387 = vmul.f32 %v3354, %v3376
        %v3388 = vmul.f32 %v3355, %v3376
        %v3389 = vmul.f32 %v3356, %v3376
        %v3390 = vmul.f32 %v3357, %v3376
        %v3391 = vmul.f32 %v3358, %v3376
        %v3392 = vmul.f32 %v3359, %v3376
        %v3393 = vmul.f32 %v3360, %v3376
        %v3394 = vmul.f32 %v3361, %v3376
        %v3395 = vmul.f32 %v3362, %v3376
        %v3396 = vmul.f32 %v3363, %v3376
        %v3397 = vmul.f32 %v3364, %v3376
        %v3398 = vmul.f32 %v3365, %v3376
        %v3399 = vmul.f32 %v3366, %v3376
        %v3400 = vmul.f32 %v3367, %v3376
        %v3401 = vmul.f32 %v3368, %v3376
        %v3402 = vmul.f32 %v3369, %v3376
        %v3403 = vmul.f32 %v3370, %v3376
        %v3404 = vmul.f32 %v3371, %v3376
        %v3405 = vmul.f32 %v3372, %v3376
        %v3406 = vmul.f32 %v3373, %v3376
        %v3407 = vmul.f32 %v3374, %v3376
        %v3408 = vmul.f32 %v3375, %v3376
        %v3409 = vadd.f32 %v3311, %v3377
        %v3410 = vadd.f32 %v3312, %v3378
        %v3411 = vadd.f32 %v3313, %v3379
        %v3412 = vadd.f32 %v3314, %v3380
        %v3413 = vadd.f32 %v3315, %v3381
        %v3414 = vadd.f32 %v3316, %v3382
        %v3415 = vadd.f32 %v3317, %v3383
        %v3416 = vadd.f32 %v3318, %v3384
        %v3417 = vadd.f32 %v3319, %v3385
        %v3418 = vadd.f32 %v3320, %v3386
        %v3419 = vadd.f32 %v3321, %v3387
        %v3420 = vadd.f32 %v3322, %v3388
        %v3421 = vadd.f32 %v3323, %v3389
        %v3422 = vadd.f32 %v3324, %v3390
        %v3423 = vadd.f32 %v3325, %v3391
        %v3424 = vadd.f32 %v3326, %v3392
        %v3425 = vadd.f32 %v3327, %v3393
        %v3426 = vadd.f32 %v3328, %v3394
        %v3427 = vadd.f32 %v3329, %v3395
        %v3428 = vadd.f32 %v3330, %v3396
        %v3429 = vadd.f32 %v3331, %v3397
        %v3430 = vadd.f32 %v3332, %v3398
        %v3431 = vadd.f32 %v3333, %v3399
        %v3432 = vadd.f32 %v3334, %v3400
        %v3433 = vadd.f32 %v3335, %v3401
        %v3434 = vadd.f32 %v3336, %v3402
        %v3435 = vadd.f32 %v3337, %v3403
        %v3436 = vadd.f32 %v3338, %v3404
        %v3437 = vadd.f32 %v3339, %v3405
        %v3438 = vadd.f32 %v3340, %v3406
        %v3439 = vadd.f32 %v3341, %v3407
        %v3440 = vadd.f32 %v3342, %v3408
        %v3441 = vld [vmem:[%s6 + $0x15] sm:$0x1]
        %v3442 = vld [vmem:[%s1348] sm:$0xff]
        %v3443 = vld [vmem:[%s1348 + $0x8] sm:$0xff]
        %v3444 = vld [vmem:[%s1348 + $0x18] sm:$0xff]
        %v3445 = vld [vmem:[%s1348 + $0x20] sm:$0xff]
        %v3446 = vld [vmem:[%s1348 + $0x30] sm:$0xff]
        %v3447 = vld [vmem:[%s1348 + $0x38] sm:$0xff]
        %v3448 = vld [vmem:[%s1348 + $0x48] sm:$0xff]
        %v3449 = vld [vmem:[%s1348 + $0x50] sm:$0xff]
        %v3450 = vld [vmem:[%s1348 + $0x60] sm:$0xff]
        %v3451 = vld [vmem:[%s1348 + $0x68] sm:$0xff]
        %v3452 = vld [vmem:[%s1348 + $0x78] sm:$0xff]
        %v3453 = vld [vmem:[%s1348 + $0x80] sm:$0xff]
        %v3454 = vld [vmem:[%s1348 + $0x90] sm:$0xff]
        %v3455 = vld [vmem:[%s1348 + $0x98] sm:$0xff]
        %v3456 = vld [vmem:[%s1348 + $0xa8] sm:$0xff]
        %v3457 = vld [vmem:[%s1348 + $0xb0] sm:$0xff]
        %v3458 = vld [vmem:[%s1348 + $0xc0] sm:$0xff]
        %v3459 = vld [vmem:[%s1348 + $0xc8] sm:$0xff]
        %v3460 = vld [vmem:[%s1348 + $0xd8] sm:$0xff]
        %v3461 = vld [vmem:[%s1348 + $0xe0] sm:$0xff]
        %v3462 = vld [vmem:[%s1348 + $0xf0] sm:$0xff]
        %v3463 = vld [vmem:[%s1348 + $0xf8] sm:$0xff]
        %v3464 = vld [vmem:[%s1348 + $0x108] sm:$0xff]
        %v3465 = vld [vmem:[%s1348 + $0x110] sm:$0xff]
        %v3466 = vld [vmem:[%s1348 + $0x120] sm:$0xff]
        %v3467 = vld [vmem:[%s1348 + $0x128] sm:$0xff]
        %v3468 = vld [vmem:[%s1348 + $0x138] sm:$0xff]
        %v3469 = vld [vmem:[%s1348 + $0x140] sm:$0xff]
        %v3470 = vld [vmem:[%s1348 + $0x150] sm:$0xff]
        %v3471 = vld [vmem:[%s1348 + $0x158] sm:$0xff]
        %v3472 = vld [vmem:[%s1348 + $0x168] sm:$0xff]
        %v3473 = vld [vmem:[%s1348 + $0x170] sm:$0xff]
        %v3474 = vperm.slane %v3441, 0
        %v3475 = vmul.f32 %v3442, %v3474
        %v3476 = vmul.f32 %v3443, %v3474
        %v3477 = vmul.f32 %v3444, %v3474
        %v3478 = vmul.f32 %v3445, %v3474
        %v3479 = vmul.f32 %v3446, %v3474
        %v3480 = vmul.f32 %v3447, %v3474
        %v3481 = vmul.f32 %v3448, %v3474
        %v3482 = vmul.f32 %v3449, %v3474
        %v3483 = vmul.f32 %v3450, %v3474
        %v3484 = vmul.f32 %v3451, %v3474
        %v3485 = vmul.f32 %v3452, %v3474
        %v3486 = vmul.f32 %v3453, %v3474
        %v3487 = vmul.f32 %v3454, %v3474
        %v3488 = vmul.f32 %v3455, %v3474
        %v3489 = vmul.f32 %v3456, %v3474
        %v3490 = vmul.f32 %v3457, %v3474
        %v3491 = vmul.f32 %v3458, %v3474
        %v3492 = vmul.f32 %v3459, %v3474
        %v3493 = vmul.f32 %v3460, %v3474
        %v3494 = vmul.f32 %v3461, %v3474
        %v3495 = vmul.f32 %v3462, %v3474
        %v3496 = vmul.f32 %v3463, %v3474
        %v3497 = vmul.f32 %v3464, %v3474
        %v3498 = vmul.f32 %v3465, %v3474
        %v3499 = vmul.f32 %v3466, %v3474
        %v3500 = vmul.f32 %v3467, %v3474
        %v3501 = vmul.f32 %v3468, %v3474
        %v3502 = vmul.f32 %v3469, %v3474
        %v3503 = vmul.f32 %v3470, %v3474
        %v3504 = vmul.f32 %v3471, %v3474
        %v3505 = vmul.f32 %v3472, %v3474
        %v3506 = vmul.f32 %v3473, %v3474
        %v3507 = vadd.f32 %v3409, %v3475
        %v3508 = vadd.f32 %v3410, %v3476
        %v3509 = vadd.f32 %v3411, %v3477
        %v3510 = vadd.f32 %v3412, %v3478
        %v3511 = vadd.f32 %v3413, %v3479
        %v3512 = vadd.f32 %v3414, %v3480
        %v3513 = vadd.f32 %v3415, %v3481
        %v3514 = vadd.f32 %v3416, %v3482
        %v3515 = vadd.f32 %v3417, %v3483
        %v3516 = vadd.f32 %v3418, %v3484
        %v3517 = vadd.f32 %v3419, %v3485
        %v3518 = vadd.f32 %v3420, %v3486
        %v3519 = vadd.f32 %v3421, %v3487
        %v3520 = vadd.f32 %v3422, %v3488
        %v3521 = vadd.f32 %v3423, %v3489
        %v3522 = vadd.f32 %v3424, %v3490
        %v3523 = vadd.f32 %v3425, %v3491
        %v3524 = vadd.f32 %v3426, %v3492
        %v3525 = vadd.f32 %v3427, %v3493
        %v3526 = vadd.f32 %v3428, %v3494
        %v3527 = vadd.f32 %v3429, %v3495
        %v3528 = vadd.f32 %v3430, %v3496
        %v3529 = vadd.f32 %v3431, %v3497
        %v3530 = vadd.f32 %v3432, %v3498
        %v3531 = vadd.f32 %v3433, %v3499
        %v3532 = vadd.f32 %v3434, %v3500
        %v3533 = vadd.f32 %v3435, %v3501
        %v3534 = vadd.f32 %v3436, %v3502
        %v3535 = vadd.f32 %v3437, %v3503
        %v3536 = vadd.f32 %v3438, %v3504
        %v3537 = vadd.f32 %v3439, %v3505
        %v3538 = vadd.f32 %v3440, %v3506
        %v3539 = vld [vmem:[%s6 + $0x16] sm:$0x1]
        %v3540 = vld [vmem:[%s1348 + $0x1] sm:$0xff]
        %v3541 = vld [vmem:[%s1348 + $0x9] sm:$0xff]
        %v3542 = vld [vmem:[%s1348 + $0x19] sm:$0xff]
        %v3543 = vld [vmem:[%s1348 + $0x21] sm:$0xff]
        %v3544 = vld [vmem:[%s1348 + $0x31] sm:$0xff]
        %v3545 = vld [vmem:[%s1348 + $0x39] sm:$0xff]
        %v3546 = vld [vmem:[%s1348 + $0x49] sm:$0xff]
        %v3547 = vld [vmem:[%s1348 + $0x51] sm:$0xff]
        %v3548 = vld [vmem:[%s1348 + $0x61] sm:$0xff]
        %v3549 = vld [vmem:[%s1348 + $0x69] sm:$0xff]
        %v3550 = vld [vmem:[%s1348 + $0x79] sm:$0xff]
        %v3551 = vld [vmem:[%s1348 + $0x81] sm:$0xff]
        %v3552 = vld [vmem:[%s1348 + $0x91] sm:$0xff]
        %v3553 = vld [vmem:[%s1348 + $0x99] sm:$0xff]
        %v3554 = vld [vmem:[%s1348 + $0xa9] sm:$0xff]
        %v3555 = vld [vmem:[%s1348 + $0xb1] sm:$0xff]
        %v3556 = vld [vmem:[%s1348 + $0xc1] sm:$0xff]
        %v3557 = vld [vmem:[%s1348 + $0xc9] sm:$0xff]
        %v3558 = vld [vmem:[%s1348 + $0xd9] sm:$0xff]
        %v3559 = vld [vmem:[%s1348 + $0xe1] sm:$0xff]
        %v3560 = vld [vmem:[%s1348 + $0xf1] sm:$0xff]
        %v3561 = vld [vmem:[%s1348 + $0xf9] sm:$0xff]
        %v3562 = vld [vmem:[%s1348 + $0x109] sm:$0xff]
        %v3563 = vld [vmem:[%s1348 + $0x111] sm:$0xff]
        %v3564 = vld [vmem:[%s1348 + $0x121] sm:$0xff]
        %v3565 = vld [vmem:[%s1348 + $0x129] sm:$0xff]
        %v3566 = vld [vmem:[%s1348 + $0x139] sm:$0xff]
        %v3567 = vld [vmem:[%s1348 + $0x141] sm:$0xff]
        %v3568 = vld [vmem:[%s1348 + $0x151] sm:$0xff]
        %v3569 = vld [vmem:[%s1348 + $0x159] sm:$0xff]
        %v3570 = vld [vmem:[%s1348 + $0x169] sm:$0xff]
        %v3571 = vld [vmem:[%s1348 + $0x171] sm:$0xff]
        %v3572 = vperm.slane %v3539, 0
        %v3573 = vmul.f32 %v3540, %v3572
        %v3574 = vmul.f32 %v3541, %v3572
        %v3575 = vmul.f32 %v3542, %v3572
        %v3576 = vmul.f32 %v3543, %v3572
        %v3577 = vmul.f32 %v3544, %v3572
        %v3578 = vmul.f32 %v3545, %v3572
        %v3579 = vmul.f32 %v3546, %v3572
        %v3580 = vmul.f32 %v3547, %v3572
        %v3581 = vmul.f32 %v3548, %v3572
        %v3582 = vmul.f32 %v3549, %v3572
        %v3583 = vmul.f32 %v3550, %v3572
        %v3584 = vmul.f32 %v3551, %v3572
        %v3585 = vmul.f32 %v3552, %v3572
        %v3586 = vmul.f32 %v3553, %v3572
        %v3587 = vmul.f32 %v3554, %v3572
        %v3588 = vmul.f32 %v3555, %v3572
        %v3589 = vmul.f32 %v3556, %v3572
        %v3590 = vmul.f32 %v3557, %v3572
        %v3591 = vmul.f32 %v3558, %v3572
        %v3592 = vmul.f32 %v3559, %v3572
        %v3593 = vmul.f32 %v3560, %v3572
        %v3594 = vmul.f32 %v3561, %v3572
        %v3595 = vmul.f32 %v3562, %v3572
        %v3596 = vmul.f32 %v3563, %v3572
        %v3597 = vmul.f32 %v3564, %v3572
        %v3598 = vmul.f32 %v3565, %v3572
        %v3599 = vmul.f32 %v3566, %v3572
        %v3600 = vmul.f32 %v3567, %v3572
        %v3601 = vmul.f32 %v3568, %v3572
        %v3602 = vmul.f32 %v3569, %v3572
        %v3603 = vmul.f32 %v3570, %v3572
        %v3604 = vmul.f32 %v3571, %v3572
        %v3605 = vadd.f32 %v3507, %v3573
        %v3606 = vadd.f32 %v3508, %v3574
        %v3607 = vadd.f32 %v3509, %v3575
        %v3608 = vadd.f32 %v3510, %v3576
        %v3609 = vadd.f32 %v3511, %v3577
        %v3610 = vadd.f32 %v3512, %v3578
        %v3611 = vadd.f32 %v3513, %v3579
        %v3612 = vadd.f32 %v3514, %v3580
        %v3613 = vadd.f32 %v3515, %v3581
        %v3614 = vadd.f32 %v3516, %v3582
        %v3615 = vadd.f32 %v3517, %v3583
        %v3616 = vadd.f32 %v3518, %v3584
        %v3617 = vadd.f32 %v3519, %v3585
        %v3618 = vadd.f32 %v3520, %v3586
        %v3619 = vadd.f32 %v3521, %v3587
        %v3620 = vadd.f32 %v3522, %v3588
        %v3621 = vadd.f32 %v3523, %v3589
        %v3622 = vadd.f32 %v3524, %v3590
        %v3623 = vadd.f32 %v3525, %v3591
        %v3624 = vadd.f32 %v3526, %v3592
        %v3625 = vadd.f32 %v3527, %v3593
        %v3626 = vadd.f32 %v3528, %v3594
        %v3627 = vadd.f32 %v3529, %v3595
        %v3628 = vadd.f32 %v3530, %v3596
        %v3629 = vadd.f32 %v3531, %v3597
        %v3630 = vadd.f32 %v3532, %v3598
        %v3631 = vadd.f32 %v3533, %v3599
        %v3632 = vadd.f32 %v3534, %v3600
        %v3633 = vadd.f32 %v3535, %v3601
        %v3634 = vadd.f32 %v3536, %v3602
        %v3635 = vadd.f32 %v3537, %v3603
        %v3636 = vadd.f32 %v3538, %v3604
        %v3637 = vld [vmem:[%s6 + $0x17] sm:$0x1]
        %v3638 = vld [vmem:[%s1348 + $0x2] sm:$0xff]
        %v3639 = vld [vmem:[%s1348 + $0xa] sm:$0xff]
        %v3640 = vld [vmem:[%s1348 + $0x1a] sm:$0xff]
        %v3641 = vld [vmem:[%s1348 + $0x22] sm:$0xff]
        %v3642 = vld [vmem:[%s1348 + $0x32] sm:$0xff]
        %v3643 = vld [vmem:[%s1348 + $0x3a] sm:$0xff]
        %v3644 = vld [vmem:[%s1348 + $0x4a] sm:$0xff]
        %v3645 = vld [vmem:[%s1348 + $0x52] sm:$0xff]
        %v3646 = vld [vmem:[%s1348 + $0x62] sm:$0xff]
        %v3647 = vld [vmem:[%s1348 + $0x6a] sm:$0xff]
        %v3648 = vld [vmem:[%s1348 + $0x7a] sm:$0xff]
        %v3649 = vld [vmem:[%s1348 + $0x82] sm:$0xff]
        %v3650 = vld [vmem:[%s1348 + $0x92] sm:$0xff]
        %v3651 = vld [vmem:[%s1348 + $0x9a] sm:$0xff]
        %v3652 = vld [vmem:[%s1348 + $0xaa] sm:$0xff]
        %v3653 = vld [vmem:[%s1348 + $0xb2] sm:$0xff]
        %v3654 = vld [vmem:[%s1348 + $0xc2] sm:$0xff]
        %v3655 = vld [vmem:[%s1348 + $0xca] sm:$0xff]
        %v3656 = vld [vmem:[%s1348 + $0xda] sm:$0xff]
        %v3657 = vld [vmem:[%s1348 + $0xe2] sm:$0xff]
        %v3658 = vld [vmem:[%s1348 + $0xf2] sm:$0xff]
        %v3659 = vld [vmem:[%s1348 + $0xfa] sm:$0xff]
        %v3660 = vld [vmem:[%s1348 + $0x10a] sm:$0xff]
        %v3661 = vld [vmem:[%s1348 + $0x112] sm:$0xff]
        %v3662 = vld [vmem:[%s1348 + $0x122] sm:$0xff]
        %v3663 = vld [vmem:[%s1348 + $0x12a] sm:$0xff]
        %v3664 = vld [vmem:[%s1348 + $0x13a] sm:$0xff]
        %v3665 = vld [vmem:[%s1348 + $0x142] sm:$0xff]
        %v3666 = vld [vmem:[%s1348 + $0x152] sm:$0xff]
        %v3667 = vld [vmem:[%s1348 + $0x15a] sm:$0xff]
        %v3668 = vld [vmem:[%s1348 + $0x16a] sm:$0xff]
        %v3669 = vld [vmem:[%s1348 + $0x172] sm:$0xff]
        %v3670 = vperm.slane %v3637, 0
        %v3671 = vmul.f32 %v3638, %v3670
        %v3672 = vmul.f32 %v3639, %v3670
        %v3673 = vmul.f32 %v3640, %v3670
        %v3674 = vmul.f32 %v3641, %v3670
        %v3675 = vmul.f32 %v3642, %v3670
        %v3676 = vmul.f32 %v3643, %v3670
        %v3677 = vmul.f32 %v3644, %v3670
        %v3678 = vmul.f32 %v3645, %v3670
        %v3679 = vmul.f32 %v3646, %v3670
        %v3680 = vmul.f32 %v3647, %v3670
        %v3681 = vmul.f32 %v3648, %v3670
        %v3682 = vmul.f32 %v3649, %v3670
        %v3683 = vmul.f32 %v3650, %v3670
        %v3684 = vmul.f32 %v3651, %v3670
        %v3685 = vmul.f32 %v3652, %v3670
        %v3686 = vmul.f32 %v3653, %v3670
        %v3687 = vmul.f32 %v3654, %v3670
        %v3688 = vmul.f32 %v3655, %v3670
        %v3689 = vmul.f32 %v3656, %v3670
        %v3690 = vmul.f32 %v3657, %v3670
        %v3691 = vmul.f32 %v3658, %v3670
        %v3692 = vmul.f32 %v3659, %v3670
        %v3693 = vmul.f32 %v3660, %v3670
        %v3694 = vmul.f32 %v3661, %v3670
        %v3695 = vmul.f32 %v3662, %v3670
        %v3696 = vmul.f32 %v3663, %v3670
        %v3697 = vmul.f32 %v3664, %v3670
        %v3698 = vmul.f32 %v3665, %v3670
        %v3699 = vmul.f32 %v3666, %v3670
        %v3700 = vmul.f32 %v3667, %v3670
        %v3701 = vmul.f32 %v3668, %v3670
        %v3702 = vmul.f32 %v3669, %v3670
        %v3703 = vadd.f32 %v3605, %v3671
        %v3704 = vadd.f32 %v3606, %v3672
        %v3705 = vadd.f32 %v3607, %v3673
        %v3706 = vadd.f32 %v3608, %v3674
        %v3707 = vadd.f32 %v3609, %v3675
        %v3708 = vadd.f32 %v3610, %v3676
        %v3709 = vadd.f32 %v3611, %v3677
        %v3710 = vadd.f32 %v3612, %v3678
        %v3711 = vadd.f32 %v3613, %v3679
        %v3712 = vadd.f32 %v3614, %v3680
        %v3713 = vadd.f32 %v3615, %v3681
        %v3714 = vadd.f32 %v3616, %v3682
        %v3715 = vadd.f32 %v3617, %v3683
        %v3716 = vadd.f32 %v3618, %v3684
        %v3717 = vadd.f32 %v3619, %v3685
        %v3718 = vadd.f32 %v3620, %v3686
        %v3719 = vadd.f32 %v3621, %v3687
        %v3720 = vadd.f32 %v3622, %v3688
        %v3721 = vadd.f32 %v3623, %v3689
        %v3722 = vadd.f32 %v3624, %v3690
        %v3723 = vadd.f32 %v3625, %v3691
        %v3724 = vadd.f32 %v3626, %v3692
        %v3725 = vadd.f32 %v3627, %v3693
        %v3726 = vadd.f32 %v3628, %v3694
        %v3727 = vadd.f32 %v3629, %v3695
        %v3728 = vadd.f32 %v3630, %v3696
        %v3729 = vadd.f32 %v3631, %v3697
        %v3730 = vadd.f32 %v3632, %v3698
        %v3731 = vadd.f32 %v3633, %v3699
        %v3732 = vadd.f32 %v3634, %v3700
        %v3733 = vadd.f32 %v3635, %v3701
        %v3734 = vadd.f32 %v3636, %v3702
        %v3735 = vld [vmem:[%s6 + $0x18] sm:$0x1]
        %v3736 = vld [vmem:[%s1348 + $0x3] sm:$0xff]
        %v3737 = vld [vmem:[%s1348 + $0xb] sm:$0xff]
        %v3738 = vld [vmem:[%s1348 + $0x1b] sm:$0xff]
        %v3739 = vld [vmem:[%s1348 + $0x23] sm:$0xff]
        %v3740 = vld [vmem:[%s1348 + $0x33] sm:$0xff]
        %v3741 = vld [vmem:[%s1348 + $0x3b] sm:$0xff]
        %v3742 = vld [vmem:[%s1348 + $0x4b] sm:$0xff]
        %v3743 = vld [vmem:[%s1348 + $0x53] sm:$0xff]
        %v3744 = vld [vmem:[%s1348 + $0x63] sm:$0xff]
        %v3745 = vld [vmem:[%s1348 + $0x6b] sm:$0xff]
        %v3746 = vld [vmem:[%s1348 + $0x7b] sm:$0xff]
        %v3747 = vld [vmem:[%s1348 + $0x83] sm:$0xff]
        %v3748 = vld [vmem:[%s1348 + $0x93] sm:$0xff]
        %v3749 = vld [vmem:[%s1348 + $0x9b] sm:$0xff]
        %v3750 = vld [vmem:[%s1348 + $0xab] sm:$0xff]
        %v3751 = vld [vmem:[%s1348 + $0xb3] sm:$0xff]
        %v3752 = vld [vmem:[%s1348 + $0xc3] sm:$0xff]
        %v3753 = vld [vmem:[%s1348 + $0xcb] sm:$0xff]
        %v3754 = vld [vmem:[%s1348 + $0xdb] sm:$0xff]
        %v3755 = vld [vmem:[%s1348 + $0xe3] sm:$0xff]
        %v3756 = vld [vmem:[%s1348 + $0xf3] sm:$0xff]
        %v3757 = vld [vmem:[%s1348 + $0xfb] sm:$0xff]
        %v3758 = vld [vmem:[%s1348 + $0x10b] sm:$0xff]
        %v3759 = vld [vmem:[%s1348 + $0x113] sm:$0xff]
        %v3760 = vld [vmem:[%s1348 + $0x123] sm:$0xff]
        %v3761 = vld [vmem:[%s1348 + $0x12b] sm:$0xff]
        %v3762 = vld [vmem:[%s1348 + $0x13b] sm:$0xff]
        %v3763 = vld [vmem:[%s1348 + $0x143] sm:$0xff]
        %v3764 = vld [vmem:[%s1348 + $0x153] sm:$0xff]
        %v3765 = vld [vmem:[%s1348 + $0x15b] sm:$0xff]
        %v3766 = vld [vmem:[%s1348 + $0x16b] sm:$0xff]
        %v3767 = vld [vmem:[%s1348 + $0x173] sm:$0xff]
        %v3768 = vperm.slane %v3735, 0
        %v3769 = vmul.f32 %v3736, %v3768
        %v3770 = vmul.f32 %v3737, %v3768
        %v3771 = vmul.f32 %v3738, %v3768
        %v3772 = vmul.f32 %v3739, %v3768
        %v3773 = vmul.f32 %v3740, %v3768
        %v3774 = vmul.f32 %v3741, %v3768
        %v3775 = vmul.f32 %v3742, %v3768
        %v3776 = vmul.f32 %v3743, %v3768
        %v3777 = vmul.f32 %v3744, %v3768
        %v3778 = vmul.f32 %v3745, %v3768
        %v3779 = vmul.f32 %v3746, %v3768
        %v3780 = vmul.f32 %v3747, %v3768
        %v3781 = vmul.f32 %v3748, %v3768
        %v3782 = vmul.f32 %v3749, %v3768
        %v3783 = vmul.f32 %v3750, %v3768
        %v3784 = vmul.f32 %v3751, %v3768
        %v3785 = vmul.f32 %v3752, %v3768
        %v3786 = vmul.f32 %v3753, %v3768
        %v3787 = vmul.f32 %v3754, %v3768
        %v3788 = vmul.f32 %v3755, %v3768
        %v3789 = vmul.f32 %v3756, %v3768
        %v3790 = vmul.f32 %v3757, %v3768
        %v3791 = vmul.f32 %v3758, %v3768
        %v3792 = vmul.f32 %v3759, %v3768
        %v3793 = vmul.f32 %v3760, %v3768
        %v3794 = vmul.f32 %v3761, %v3768
        %v3795 = vmul.f32 %v3762, %v3768
        %v3796 = vmul.f32 %v3763, %v3768
        %v3797 = vmul.f32 %v3764, %v3768
        %v3798 = vmul.f32 %v3765, %v3768
        %v3799 = vmul.f32 %v3766, %v3768
        %v3800 = vmul.f32 %v3767, %v3768
        %v3801 = vadd.f32 %v3703, %v3769
        %v3802 = vadd.f32 %v3704, %v3770
        %v3803 = vadd.f32 %v3705, %v3771
        %v3804 = vadd.f32 %v3706, %v3772
        %v3805 = vadd.f32 %v3707, %v3773
        %v3806 = vadd.f32 %v3708, %v3774
        %v3807 = vadd.f32 %v3709, %v3775
        %v3808 = vadd.f32 %v3710, %v3776
        %v3809 = vadd.f32 %v3711, %v3777
        %v3810 = vadd.f32 %v3712, %v3778
        %v3811 = vadd.f32 %v3713, %v3779
        %v3812 = vadd.f32 %v3714, %v3780
        %v3813 = vadd.f32 %v3715, %v3781
        %v3814 = vadd.f32 %v3716, %v3782
        %v3815 = vadd.f32 %v3717, %v3783
        %v3816 = vadd.f32 %v3718, %v3784
        %v3817 = vadd.f32 %v3719, %v3785
        %v3818 = vadd.f32 %v3720, %v3786
        %v3819 = vadd.f32 %v3721, %v3787
        %v3820 = vadd.f32 %v3722, %v3788
        %v3821 = vadd.f32 %v3723, %v3789
        %v3822 = vadd.f32 %v3724, %v3790
        %v3823 = vadd.f32 %v3725, %v3791
        %v3824 = vadd.f32 %v3726, %v3792
        %v3825 = vadd.f32 %v3727, %v3793
        %v3826 = vadd.f32 %v3728, %v3794
        %v3827 = vadd.f32 %v3729, %v3795
        %v3828 = vadd.f32 %v3730, %v3796
        %v3829 = vadd.f32 %v3731, %v3797
        %v3830 = vadd.f32 %v3732, %v3798
        %v3831 = vadd.f32 %v3733, %v3799
        %v3832 = vadd.f32 %v3734, %v3800
        %v3833 = vld [vmem:[%s6 + $0x19] sm:$0x1]
        %v3834 = vld [vmem:[%s1348 + $0x4] sm:$0xff]
        %v3835 = vld [vmem:[%s1348 + $0xc] sm:$0xff]
        %v3836 = vld [vmem:[%s1348 + $0x1c] sm:$0xff]
        %v3837 = vld [vmem:[%s1348 + $0x24] sm:$0xff]
        %v3838 = vld [vmem:[%s1348 + $0x34] sm:$0xff]
        %v3839 = vld [vmem:[%s1348 + $0x3c] sm:$0xff]
        %v3840 = vld [vmem:[%s1348 + $0x4c] sm:$0xff]
        %v3841 = vld [vmem:[%s1348 + $0x54] sm:$0xff]
        %v3842 = vld [vmem:[%s1348 + $0x64] sm:$0xff]
        %v3843 = vld [vmem:[%s1348 + $0x6c] sm:$0xff]
        %v3844 = vld [vmem:[%s1348 + $0x7c] sm:$0xff]
        %v3845 = vld [vmem:[%s1348 + $0x84] sm:$0xff]
        %v3846 = vld [vmem:[%s1348 + $0x94] sm:$0xff]
        %v3847 = vld [vmem:[%s1348 + $0x9c] sm:$0xff]
        %v3848 = vld [vmem:[%s1348 + $0xac] sm:$0xff]
        %v3849 = vld [vmem:[%s1348 + $0xb4] sm:$0xff]
        %v3850 = vld [vmem:[%s1348 + $0xc4] sm:$0xff]
        %v3851 = vld [vmem:[%s1348 + $0xcc] sm:$0xff]
        %v3852 = vld [vmem:[%s1348 + $0xdc] sm:$0xff]
        %v3853 = vld [vmem:[%s1348 + $0xe4] sm:$0xff]
        %v3854 = vld [vmem:[%s1348 + $0xf4] sm:$0xff]
        %v3855 = vld [vmem:[%s1348 + $0xfc] sm:$0xff]
        %v3856 = vld [vmem:[%s1348 + $0x10c] sm:$0xff]
        %v3857 = vld [vmem:[%s1348 + $0x114] sm:$0xff]
        %v3858 = vld [vmem:[%s1348 + $0x124] sm:$0xff]
        %v3859 = vld [vmem:[%s1348 + $0x12c] sm:$0xff]
        %v3860 = vld [vmem:[%s1348 + $0x13c] sm:$0xff]
        %v3861 = vld [vmem:[%s1348 + $0x144] sm:$0xff]
        %v3862 = vld [vmem:[%s1348 + $0x154] sm:$0xff]
        %v3863 = vld [vmem:[%s1348 + $0x15c] sm:$0xff]
        %v3864 = vld [vmem:[%s1348 + $0x16c] sm:$0xff]
        %v3865 = vld [vmem:[%s1348 + $0x174] sm:$0xff]
        %v3866 = vperm.slane %v3833, 0
        %v3867 = vmul.f32 %v3834, %v3866
        %v3868 = vmul.f32 %v3835, %v3866
        %v3869 = vmul.f32 %v3836, %v3866
        %v3870 = vmul.f32 %v3837, %v3866
        %v3871 = vmul.f32 %v3838, %v3866
        %v3872 = vmul.f32 %v3839, %v3866
        %v3873 = vmul.f32 %v3840, %v3866
        %v3874 = vmul.f32 %v3841, %v3866
        %v3875 = vmul.f32 %v3842, %v3866
        %v3876 = vmul.f32 %v3843, %v3866
        %v3877 = vmul.f32 %v3844, %v3866
        %v3878 = vmul.f32 %v3845, %v3866
        %v3879 = vmul.f32 %v3846, %v3866
        %v3880 = vmul.f32 %v3847, %v3866
        %v3881 = vmul.f32 %v3848, %v3866
        %v3882 = vmul.f32 %v3849, %v3866
        %v3883 = vmul.f32 %v3850, %v3866
        %v3884 = vmul.f32 %v3851, %v3866
        %v3885 = vmul.f32 %v3852, %v3866
        %v3886 = vmul.f32 %v3853, %v3866
        %v3887 = vmul.f32 %v3854, %v3866
        %v3888 = vmul.f32 %v3855, %v3866
        %v3889 = vmul.f32 %v3856, %v3866
        %v3890 = vmul.f32 %v3857, %v3866
        %v3891 = vmul.f32 %v3858, %v3866
        %v3892 = vmul.f32 %v3859, %v3866
        %v3893 = vmul.f32 %v3860, %v3866
        %v3894 = vmul.f32 %v3861, %v3866
        %v3895 = vmul.f32 %v3862, %v3866
        %v3896 = vmul.f32 %v3863, %v3866
        %v3897 = vmul.f32 %v3864, %v3866
        %v3898 = vmul.f32 %v3865, %v3866
        %v3899 = vadd.f32 %v3801, %v3867
        %v3900 = vadd.f32 %v3802, %v3868
        %v3901 = vadd.f32 %v3803, %v3869
        %v3902 = vadd.f32 %v3804, %v3870
        %v3903 = vadd.f32 %v3805, %v3871
        %v3904 = vadd.f32 %v3806, %v3872
        %v3905 = vadd.f32 %v3807, %v3873
        %v3906 = vadd.f32 %v3808, %v3874
        %v3907 = vadd.f32 %v3809, %v3875
        %v3908 = vadd.f32 %v3810, %v3876
        %v3909 = vadd.f32 %v3811, %v3877
        %v3910 = vadd.f32 %v3812, %v3878
        %v3911 = vadd.f32 %v3813, %v3879
        %v3912 = vadd.f32 %v3814, %v3880
        %v3913 = vadd.f32 %v3815, %v3881
        %v3914 = vadd.f32 %v3816, %v3882
        %v3915 = vadd.f32 %v3817, %v3883
        %v3916 = vadd.f32 %v3818, %v3884
        %v3917 = vadd.f32 %v3819, %v3885
        %v3918 = vadd.f32 %v3820, %v3886
        %v3919 = vadd.f32 %v3821, %v3887
        %v3920 = vadd.f32 %v3822, %v3888
        %v3921 = vadd.f32 %v3823, %v3889
        %v3922 = vadd.f32 %v3824, %v3890
        %v3923 = vadd.f32 %v3825, %v3891
        %v3924 = vadd.f32 %v3826, %v3892
        %v3925 = vadd.f32 %v3827, %v3893
        %v3926 = vadd.f32 %v3828, %v3894
        %v3927 = vadd.f32 %v3829, %v3895
        %v3928 = vadd.f32 %v3830, %v3896
        %v3929 = vadd.f32 %v3831, %v3897
        %v3930 = vadd.f32 %v3832, %v3898
        %v3931 = vld [vmem:[%s6 + $0x1a] sm:$0x1]
        %v3932 = vld [vmem:[%s1348 + $0x5] sm:$0xff]
        %v3933 = vld [vmem:[%s1348 + $0xd] sm:$0xff]
        %v3934 = vld [vmem:[%s1348 + $0x1d] sm:$0xff]
        %v3935 = vld [vmem:[%s1348 + $0x25] sm:$0xff]
        %v3936 = vld [vmem:[%s1348 + $0x35] sm:$0xff]
        %v3937 = vld [vmem:[%s1348 + $0x3d] sm:$0xff]
        %v3938 = vld [vmem:[%s1348 + $0x4d] sm:$0xff]
        %v3939 = vld [vmem:[%s1348 + $0x55] sm:$0xff]
        %v3940 = vld [vmem:[%s1348 + $0x65] sm:$0xff]
        %v3941 = vld [vmem:[%s1348 + $0x6d] sm:$0xff]
        %v3942 = vld [vmem:[%s1348 + $0x7d] sm:$0xff]
        %v3943 = vld [vmem:[%s1348 + $0x85] sm:$0xff]
        %v3944 = vld [vmem:[%s1348 + $0x95] sm:$0xff]
        %v3945 = vld [vmem:[%s1348 + $0x9d] sm:$0xff]
        %v3946 = vld [vmem:[%s1348 + $0xad] sm:$0xff]
        %v3947 = vld [vmem:[%s1348 + $0xb5] sm:$0xff]
        %v3948 = vld [vmem:[%s1348 + $0xc5] sm:$0xff]
        %v3949 = vld [vmem:[%s1348 + $0xcd] sm:$0xff]
        %v3950 = vld [vmem:[%s1348 + $0xdd] sm:$0xff]
        %v3951 = vld [vmem:[%s1348 + $0xe5] sm:$0xff]
        %v3952 = vld [vmem:[%s1348 + $0xf5] sm:$0xff]
        %v3953 = vld [vmem:[%s1348 + $0xfd] sm:$0xff]
        %v3954 = vld [vmem:[%s1348 + $0x10d] sm:$0xff]
        %v3955 = vld [vmem:[%s1348 + $0x115] sm:$0xff]
        %v3956 = vld [vmem:[%s1348 + $0x125] sm:$0xff]
        %v3957 = vld [vmem:[%s1348 + $0x12d] sm:$0xff]
        %v3958 = vld [vmem:[%s1348 + $0x13d] sm:$0xff]
        %v3959 = vld [vmem:[%s1348 + $0x145] sm:$0xff]
        %v3960 = vld [vmem:[%s1348 + $0x155] sm:$0xff]
        %v3961 = vld [vmem:[%s1348 + $0x15d] sm:$0xff]
        %v3962 = vld [vmem:[%s1348 + $0x16d] sm:$0xff]
        %v3963 = vld [vmem:[%s1348 + $0x175] sm:$0xff]
        %v3964 = vperm.slane %v3931, 0
        %v3965 = vmul.f32 %v3932, %v3964
        %v3966 = vmul.f32 %v3933, %v3964
        %v3967 = vmul.f32 %v3934, %v3964
        %v3968 = vmul.f32 %v3935, %v3964
        %v3969 = vmul.f32 %v3936, %v3964
        %v3970 = vmul.f32 %v3937, %v3964
        %v3971 = vmul.f32 %v3938, %v3964
        %v3972 = vmul.f32 %v3939, %v3964
        %v3973 = vmul.f32 %v3940, %v3964
        %v3974 = vmul.f32 %v3941, %v3964
        %v3975 = vmul.f32 %v3942, %v3964
        %v3976 = vmul.f32 %v3943, %v3964
        %v3977 = vmul.f32 %v3944, %v3964
        %v3978 = vmul.f32 %v3945, %v3964
        %v3979 = vmul.f32 %v3946, %v3964
        %v3980 = vmul.f32 %v3947, %v3964
        %v3981 = vmul.f32 %v3948, %v3964
        %v3982 = vmul.f32 %v3949, %v3964
        %v3983 = vmul.f32 %v3950, %v3964
        %v3984 = vmul.f32 %v3951, %v3964
        %v3985 = vmul.f32 %v3952, %v3964
        %v3986 = vmul.f32 %v3953, %v3964
        %v3987 = vmul.f32 %v3954, %v3964
        %v3988 = vmul.f32 %v3955, %v3964
        %v3989 = vmul.f32 %v3956, %v3964
        %v3990 = vmul.f32 %v3957, %v3964
        %v3991 = vmul.f32 %v3958, %v3964
        %v3992 = vmul.f32 %v3959, %v3964
        %v3993 = vmul.f32 %v3960, %v3964
        %v3994 = vmul.f32 %v3961, %v3964
        %v3995 = vmul.f32 %v3962, %v3964
        %v3996 = vmul.f32 %v3963, %v3964
        %v3997 = vadd.f32 %v3899, %v3965
        %v3998 = vadd.f32 %v3900, %v3966
        %v3999 = vadd.f32 %v3901, %v3967
        %v4000 = vadd.f32 %v3902, %v3968
        %v4001 = vadd.f32 %v3903, %v3969
        %v4002 = vadd.f32 %v3904, %v3970
        %v4003 = vadd.f32 %v3905, %v3971
        %v4004 = vadd.f32 %v3906, %v3972
        %v4005 = vadd.f32 %v3907, %v3973
        %v4006 = vadd.f32 %v3908, %v3974
        %v4007 = vadd.f32 %v3909, %v3975
        %v4008 = vadd.f32 %v3910, %v3976
        %v4009 = vadd.f32 %v3911, %v3977
        %v4010 = vadd.f32 %v3912, %v3978
        %v4011 = vadd.f32 %v3913, %v3979
        %v4012 = vadd.f32 %v3914, %v3980
        %v4013 = vadd.f32 %v3915, %v3981
        %v4014 = vadd.f32 %v3916, %v3982
        %v4015 = vadd.f32 %v3917, %v3983
        %v4016 = vadd.f32 %v3918, %v3984
        %v4017 = vadd.f32 %v3919, %v3985
        %v4018 = vadd.f32 %v3920, %v3986
        %v4019 = vadd.f32 %v3921, %v3987
        %v4020 = vadd.f32 %v3922, %v3988
        %v4021 = vadd.f32 %v3923, %v3989
        %v4022 = vadd.f32 %v3924, %v3990
        %v4023 = vadd.f32 %v3925, %v3991
        %v4024 = vadd.f32 %v3926, %v3992
        %v4025 = vadd.f32 %v3927, %v3993
        %v4026 = vadd.f32 %v3928, %v3994
        %v4027 = vadd.f32 %v3929, %v3995
        %v4028 = vadd.f32 %v3930, %v3996
        %v4029 = vld [vmem:[%s6 + $0x1b] sm:$0x1]
        %v4030 = vld [vmem:[%s1348 + $0x6] sm:$0xff]
        %v4031 = vld [vmem:[%s1348 + $0xe] sm:$0xff]
        %v4032 = vld [vmem:[%s1348 + $0x1e] sm:$0xff]
        %v4033 = vld [vmem:[%s1348 + $0x26] sm:$0xff]
        %v4034 = vld [vmem:[%s1348 + $0x36] sm:$0xff]
        %v4035 = vld [vmem:[%s1348 + $0x3e] sm:$0xff]
        %v4036 = vld [vmem:[%s1348 + $0x4e] sm:$0xff]
        %v4037 = vld [vmem:[%s1348 + $0x56] sm:$0xff]
        %v4038 = vld [vmem:[%s1348 + $0x66] sm:$0xff]
        %v4039 = vld [vmem:[%s1348 + $0x6e] sm:$0xff]
        %v4040 = vld [vmem:[%s1348 + $0x7e] sm:$0xff]
        %v4041 = vld [vmem:[%s1348 + $0x86] sm:$0xff]
        %v4042 = vld [vmem:[%s1348 + $0x96] sm:$0xff]
        %v4043 = vld [vmem:[%s1348 + $0x9e] sm:$0xff]
        %v4044 = vld [vmem:[%s1348 + $0xae] sm:$0xff]
        %v4045 = vld [vmem:[%s1348 + $0xb6] sm:$0xff]
        %v4046 = vld [vmem:[%s1348 + $0xc6] sm:$0xff]
        %v4047 = vld [vmem:[%s1348 + $0xce] sm:$0xff]
        %v4048 = vld [vmem:[%s1348 + $0xde] sm:$0xff]
        %v4049 = vld [vmem:[%s1348 + $0xe6] sm:$0xff]
        %v4050 = vld [vmem:[%s1348 + $0xf6] sm:$0xff]
        %v4051 = vld [vmem:[%s1348 + $0xfe] sm:$0xff]
        %v4052 = vld [vmem:[%s1348 + $0x10e] sm:$0xff]
        %v4053 = vld [vmem:[%s1348 + $0x116] sm:$0xff]
        %v4054 = vld [vmem:[%s1348 + $0x126] sm:$0xff]
        %v4055 = vld [vmem:[%s1348 + $0x12e] sm:$0xff]
        %v4056 = vld [vmem:[%s1348 + $0x13e] sm:$0xff]
        %v4057 = vld [vmem:[%s1348 + $0x146] sm:$0xff]
        %v4058 = vld [vmem:[%s1348 + $0x156] sm:$0xff]
        %v4059 = vld [vmem:[%s1348 + $0x15e] sm:$0xff]
        %v4060 = vld [vmem:[%s1348 + $0x16e] sm:$0xff]
        %v4061 = vld [vmem:[%s1348 + $0x176] sm:$0xff]
        %v4062 = vperm.slane %v4029, 0
        %v4063 = vmul.f32 %v4030, %v4062
        %v4064 = vmul.f32 %v4031, %v4062
        %v4065 = vmul.f32 %v4032, %v4062
        %v4066 = vmul.f32 %v4033, %v4062
        %v4067 = vmul.f32 %v4034, %v4062
        %v4068 = vmul.f32 %v4035, %v4062
        %v4069 = vmul.f32 %v4036, %v4062
        %v4070 = vmul.f32 %v4037, %v4062
        %v4071 = vmul.f32 %v4038, %v4062
        %v4072 = vmul.f32 %v4039, %v4062
        %v4073 = vmul.f32 %v4040, %v4062
        %v4074 = vmul.f32 %v4041, %v4062
        %v4075 = vmul.f32 %v4042, %v4062
        %v4076 = vmul.f32 %v4043, %v4062
        %v4077 = vmul.f32 %v4044, %v4062
        %v4078 = vmul.f32 %v4045, %v4062
        %v4079 = vmul.f32 %v4046, %v4062
        %v4080 = vmul.f32 %v4047, %v4062
        %v4081 = vmul.f32 %v4048, %v4062
        %v4082 = vmul.f32 %v4049, %v4062
        %v4083 = vmul.f32 %v4050, %v4062
        %v4084 = vmul.f32 %v4051, %v4062
        %v4085 = vmul.f32 %v4052, %v4062
        %v4086 = vmul.f32 %v4053, %v4062
        %v4087 = vmul.f32 %v4054, %v4062
        %v4088 = vmul.f32 %v4055, %v4062
        %v4089 = vmul.f32 %v4056, %v4062
        %v4090 = vmul.f32 %v4057, %v4062
        %v4091 = vmul.f32 %v4058, %v4062
        %v4092 = vmul.f32 %v4059, %v4062
        %v4093 = vmul.f32 %v4060, %v4062
        %v4094 = vmul.f32 %v4061, %v4062
        %v4095 = vadd.f32 %v3997, %v4063
        %v4096 = vadd.f32 %v3998, %v4064
        %v4097 = vadd.f32 %v3999, %v4065
        %v4098 = vadd.f32 %v4000, %v4066
        %v4099 = vadd.f32 %v4001, %v4067
        %v4100 = vadd.f32 %v4002, %v4068
        %v4101 = vadd.f32 %v4003, %v4069
        %v4102 = vadd.f32 %v4004, %v4070
        %v4103 = vadd.f32 %v4005, %v4071
        %v4104 = vadd.f32 %v4006, %v4072
        %v4105 = vadd.f32 %v4007, %v4073
        %v4106 = vadd.f32 %v4008, %v4074
        %v4107 = vadd.f32 %v4009, %v4075
        %v4108 = vadd.f32 %v4010, %v4076
        %v4109 = vadd.f32 %v4011, %v4077
        %v4110 = vadd.f32 %v4012, %v4078
        %v4111 = vadd.f32 %v4013, %v4079
        %v4112 = vadd.f32 %v4014, %v4080
        %v4113 = vadd.f32 %v4015, %v4081
        %v4114 = vadd.f32 %v4016, %v4082
        %v4115 = vadd.f32 %v4017, %v4083
        %v4116 = vadd.f32 %v4018, %v4084
        %v4117 = vadd.f32 %v4019, %v4085
        %v4118 = vadd.f32 %v4020, %v4086
        %v4119 = vadd.f32 %v4021, %v4087
        %v4120 = vadd.f32 %v4022, %v4088
        %v4121 = vadd.f32 %v4023, %v4089
        %v4122 = vadd.f32 %v4024, %v4090
        %v4123 = vadd.f32 %v4025, %v4091
        %v4124 = vadd.f32 %v4026, %v4092
        %v4125 = vadd.f32 %v4027, %v4093
        %v4126 = vadd.f32 %v4028, %v4094
        %v4127 = vld [vmem:[%s6 + $0x1c] sm:$0x1]
        %s4128 = scalar_lea.vmem [#allocation2], 96
        %v4129 = vld [vmem:[%s4128] sm:$0xff]
        %v4130 = vld [vmem:[%s4128 + $0x8] sm:$0xff]
        %v4131 = vld [vmem:[%s4128 + $0x18] sm:$0xff]
        %v4132 = vld [vmem:[%s4128 + $0x20] sm:$0xff]
        %v4133 = vld [vmem:[%s4128 + $0x30] sm:$0xff]
        %v4134 = vld [vmem:[%s4128 + $0x38] sm:$0xff]
        %v4135 = vld [vmem:[%s4128 + $0x48] sm:$0xff]
        %v4136 = vld [vmem:[%s4128 + $0x50] sm:$0xff]
        %v4137 = vld [vmem:[%s4128 + $0x60] sm:$0xff]
        %v4138 = vld [vmem:[%s4128 + $0x68] sm:$0xff]
        %v4139 = vld [vmem:[%s4128 + $0x78] sm:$0xff]
        %v4140 = vld [vmem:[%s4128 + $0x80] sm:$0xff]
        %v4141 = vld [vmem:[%s4128 + $0x90] sm:$0xff]
        %v4142 = vld [vmem:[%s4128 + $0x98] sm:$0xff]
        %v4143 = vld [vmem:[%s4128 + $0xa8] sm:$0xff]
        %v4144 = vld [vmem:[%s4128 + $0xb0] sm:$0xff]
        %v4145 = vld [vmem:[%s4128 + $0xc0] sm:$0xff]
        %v4146 = vld [vmem:[%s4128 + $0xc8] sm:$0xff]
        %v4147 = vld [vmem:[%s4128 + $0xd8] sm:$0xff]
        %v4148 = vld [vmem:[%s4128 + $0xe0] sm:$0xff]
        %v4149 = vld [vmem:[%s4128 + $0xf0] sm:$0xff]
        %v4150 = vld [vmem:[%s4128 + $0xf8] sm:$0xff]
        %v4151 = vld [vmem:[%s4128 + $0x108] sm:$0xff]
        %v4152 = vld [vmem:[%s4128 + $0x110] sm:$0xff]
        %v4153 = vld [vmem:[%s4128 + $0x120] sm:$0xff]
        %v4154 = vld [vmem:[%s4128 + $0x128] sm:$0xff]
        %v4155 = vld [vmem:[%s4128 + $0x138] sm:$0xff]
        %v4156 = vld [vmem:[%s4128 + $0x140] sm:$0xff]
        %v4157 = vld [vmem:[%s4128 + $0x150] sm:$0xff]
        %v4158 = vld [vmem:[%s4128 + $0x158] sm:$0xff]
        %v4159 = vld [vmem:[%s4128 + $0x168] sm:$0xff]
        %v4160 = vld [vmem:[%s4128 + $0x170] sm:$0xff]
        %v4161 = vperm.slane %v4127, 0
        %v4162 = vmul.f32 %v4129, %v4161
        %v4163 = vmul.f32 %v4130, %v4161
        %v4164 = vmul.f32 %v4131, %v4161
        %v4165 = vmul.f32 %v4132, %v4161
        %v4166 = vmul.f32 %v4133, %v4161
        %v4167 = vmul.f32 %v4134, %v4161
        %v4168 = vmul.f32 %v4135, %v4161
        %v4169 = vmul.f32 %v4136, %v4161
        %v4170 = vmul.f32 %v4137, %v4161
        %v4171 = vmul.f32 %v4138, %v4161
        %v4172 = vmul.f32 %v4139, %v4161
        %v4173 = vmul.f32 %v4140, %v4161
        %v4174 = vmul.f32 %v4141, %v4161
        %v4175 = vmul.f32 %v4142, %v4161
        %v4176 = vmul.f32 %v4143, %v4161
        %v4177 = vmul.f32 %v4144, %v4161
        %v4178 = vmul.f32 %v4145, %v4161
        %v4179 = vmul.f32 %v4146, %v4161
        %v4180 = vmul.f32 %v4147, %v4161
        %v4181 = vmul.f32 %v4148, %v4161
        %v4182 = vmul.f32 %v4149, %v4161
        %v4183 = vmul.f32 %v4150, %v4161
        %v4184 = vmul.f32 %v4151, %v4161
        %v4185 = vmul.f32 %v4152, %v4161
        %v4186 = vmul.f32 %v4153, %v4161
        %v4187 = vmul.f32 %v4154, %v4161
        %v4188 = vmul.f32 %v4155, %v4161
        %v4189 = vmul.f32 %v4156, %v4161
        %v4190 = vmul.f32 %v4157, %v4161
        %v4191 = vmul.f32 %v4158, %v4161
        %v4192 = vmul.f32 %v4159, %v4161
        %v4193 = vmul.f32 %v4160, %v4161
        %v4194 = vadd.f32 %v4095, %v4162
        %v4195 = vadd.f32 %v4096, %v4163
        %v4196 = vadd.f32 %v4097, %v4164
        %v4197 = vadd.f32 %v4098, %v4165
        %v4198 = vadd.f32 %v4099, %v4166
        %v4199 = vadd.f32 %v4100, %v4167
        %v4200 = vadd.f32 %v4101, %v4168
        %v4201 = vadd.f32 %v4102, %v4169
        %v4202 = vadd.f32 %v4103, %v4170
        %v4203 = vadd.f32 %v4104, %v4171
        %v4204 = vadd.f32 %v4105, %v4172
        %v4205 = vadd.f32 %v4106, %v4173
        %v4206 = vadd.f32 %v4107, %v4174
        %v4207 = vadd.f32 %v4108, %v4175
        %v4208 = vadd.f32 %v4109, %v4176
        %v4209 = vadd.f32 %v4110, %v4177
        %v4210 = vadd.f32 %v4111, %v4178
        %v4211 = vadd.f32 %v4112, %v4179
        %v4212 = vadd.f32 %v4113, %v4180
        %v4213 = vadd.f32 %v4114, %v4181
        %v4214 = vadd.f32 %v4115, %v4182
        %v4215 = vadd.f32 %v4116, %v4183
        %v4216 = vadd.f32 %v4117, %v4184
        %v4217 = vadd.f32 %v4118, %v4185
        %v4218 = vadd.f32 %v4119, %v4186
        %v4219 = vadd.f32 %v4120, %v4187
        %v4220 = vadd.f32 %v4121, %v4188
        %v4221 = vadd.f32 %v4122, %v4189
        %v4222 = vadd.f32 %v4123, %v4190
        %v4223 = vadd.f32 %v4124, %v4191
        %v4224 = vadd.f32 %v4125, %v4192
        %v4225 = vadd.f32 %v4126, %v4193
        %v4226 = vld [vmem:[%s6 + $0x1d] sm:$0x1]
        %v4227 = vld [vmem:[%s4128 + $0x1] sm:$0xff]
        %v4228 = vld [vmem:[%s4128 + $0x9] sm:$0xff]
        %v4229 = vld [vmem:[%s4128 + $0x19] sm:$0xff]
        %v4230 = vld [vmem:[%s4128 + $0x21] sm:$0xff]
        %v4231 = vld [vmem:[%s4128 + $0x31] sm:$0xff]
        %v4232 = vld [vmem:[%s4128 + $0x39] sm:$0xff]
        %v4233 = vld [vmem:[%s4128 + $0x49] sm:$0xff]
        %v4234 = vld [vmem:[%s4128 + $0x51] sm:$0xff]
        %v4235 = vld [vmem:[%s4128 + $0x61] sm:$0xff]
        %v4236 = vld [vmem:[%s4128 + $0x69] sm:$0xff]
        %v4237 = vld [vmem:[%s4128 + $0x79] sm:$0xff]
        %v4238 = vld [vmem:[%s4128 + $0x81] sm:$0xff]
        %v4239 = vld [vmem:[%s4128 + $0x91] sm:$0xff]
        %v4240 = vld [vmem:[%s4128 + $0x99] sm:$0xff]
        %v4241 = vld [vmem:[%s4128 + $0xa9] sm:$0xff]
        %v4242 = vld [vmem:[%s4128 + $0xb1] sm:$0xff]
        %v4243 = vld [vmem:[%s4128 + $0xc1] sm:$0xff]
        %v4244 = vld [vmem:[%s4128 + $0xc9] sm:$0xff]
        %v4245 = vld [vmem:[%s4128 + $0xd9] sm:$0xff]
        %v4246 = vld [vmem:[%s4128 + $0xe1] sm:$0xff]
        %v4247 = vld [vmem:[%s4128 + $0xf1] sm:$0xff]
        %v4248 = vld [vmem:[%s4128 + $0xf9] sm:$0xff]
        %v4249 = vld [vmem:[%s4128 + $0x109] sm:$0xff]
        %v4250 = vld [vmem:[%s4128 + $0x111] sm:$0xff]
        %v4251 = vld [vmem:[%s4128 + $0x121] sm:$0xff]
        %v4252 = vld [vmem:[%s4128 + $0x129] sm:$0xff]
        %v4253 = vld [vmem:[%s4128 + $0x139] sm:$0xff]
        %v4254 = vld [vmem:[%s4128 + $0x141] sm:$0xff]
        %v4255 = vld [vmem:[%s4128 + $0x151] sm:$0xff]
        %v4256 = vld [vmem:[%s4128 + $0x159] sm:$0xff]
        %v4257 = vld [vmem:[%s4128 + $0x169] sm:$0xff]
        %v4258 = vld [vmem:[%s4128 + $0x171] sm:$0xff]
        %v4259 = vperm.slane %v4226, 0
        %v4260 = vmul.f32 %v4227, %v4259
        %v4261 = vmul.f32 %v4228, %v4259
        %v4262 = vmul.f32 %v4229, %v4259
        %v4263 = vmul.f32 %v4230, %v4259
        %v4264 = vmul.f32 %v4231, %v4259
        %v4265 = vmul.f32 %v4232, %v4259
        %v4266 = vmul.f32 %v4233, %v4259
        %v4267 = vmul.f32 %v4234, %v4259
        %v4268 = vmul.f32 %v4235, %v4259
        %v4269 = vmul.f32 %v4236, %v4259
        %v4270 = vmul.f32 %v4237, %v4259
        %v4271 = vmul.f32 %v4238, %v4259
        %v4272 = vmul.f32 %v4239, %v4259
        %v4273 = vmul.f32 %v4240, %v4259
        %v4274 = vmul.f32 %v4241, %v4259
        %v4275 = vmul.f32 %v4242, %v4259
        %v4276 = vmul.f32 %v4243, %v4259
        %v4277 = vmul.f32 %v4244, %v4259
        %v4278 = vmul.f32 %v4245, %v4259
        %v4279 = vmul.f32 %v4246, %v4259
        %v4280 = vmul.f32 %v4247, %v4259
        %v4281 = vmul.f32 %v4248, %v4259
        %v4282 = vmul.f32 %v4249, %v4259
        %v4283 = vmul.f32 %v4250, %v4259
        %v4284 = vmul.f32 %v4251, %v4259
        %v4285 = vmul.f32 %v4252, %v4259
        %v4286 = vmul.f32 %v4253, %v4259
        %v4287 = vmul.f32 %v4254, %v4259
        %v4288 = vmul.f32 %v4255, %v4259
        %v4289 = vmul.f32 %v4256, %v4259
        %v4290 = vmul.f32 %v4257, %v4259
        %v4291 = vmul.f32 %v4258, %v4259
        %v4292 = vadd.f32 %v4194, %v4260
        %v4293 = vadd.f32 %v4195, %v4261
        %v4294 = vadd.f32 %v4196, %v4262
        %v4295 = vadd.f32 %v4197, %v4263
        %v4296 = vadd.f32 %v4198, %v4264
        %v4297 = vadd.f32 %v4199, %v4265
        %v4298 = vadd.f32 %v4200, %v4266
        %v4299 = vadd.f32 %v4201, %v4267
        %v4300 = vadd.f32 %v4202, %v4268
        %v4301 = vadd.f32 %v4203, %v4269
        %v4302 = vadd.f32 %v4204, %v4270
        %v4303 = vadd.f32 %v4205, %v4271
        %v4304 = vadd.f32 %v4206, %v4272
        %v4305 = vadd.f32 %v4207, %v4273
        %v4306 = vadd.f32 %v4208, %v4274
        %v4307 = vadd.f32 %v4209, %v4275
        %v4308 = vadd.f32 %v4210, %v4276
        %v4309 = vadd.f32 %v4211, %v4277
        %v4310 = vadd.f32 %v4212, %v4278
        %v4311 = vadd.f32 %v4213, %v4279
        %v4312 = vadd.f32 %v4214, %v4280
        %v4313 = vadd.f32 %v4215, %v4281
        %v4314 = vadd.f32 %v4216, %v4282
        %v4315 = vadd.f32 %v4217, %v4283
        %v4316 = vadd.f32 %v4218, %v4284
        %v4317 = vadd.f32 %v4219, %v4285
        %v4318 = vadd.f32 %v4220, %v4286
        %v4319 = vadd.f32 %v4221, %v4287
        %v4320 = vadd.f32 %v4222, %v4288
        %v4321 = vadd.f32 %v4223, %v4289
        %v4322 = vadd.f32 %v4224, %v4290
        %v4323 = vadd.f32 %v4225, %v4291
        %v4324 = vld [vmem:[%s6 + $0x1e] sm:$0x1]
        %v4325 = vld [vmem:[%s4128 + $0x2] sm:$0xff]
        %v4326 = vld [vmem:[%s4128 + $0xa] sm:$0xff]
        %v4327 = vld [vmem:[%s4128 + $0x1a] sm:$0xff]
        %v4328 = vld [vmem:[%s4128 + $0x22] sm:$0xff]
        %v4329 = vld [vmem:[%s4128 + $0x32] sm:$0xff]
        %v4330 = vld [vmem:[%s4128 + $0x3a] sm:$0xff]
        %v4331 = vld [vmem:[%s4128 + $0x4a] sm:$0xff]
        %v4332 = vld [vmem:[%s4128 + $0x52] sm:$0xff]
        %v4333 = vld [vmem:[%s4128 + $0x62] sm:$0xff]
        %v4334 = vld [vmem:[%s4128 + $0x6a] sm:$0xff]
        %v4335 = vld [vmem:[%s4128 + $0x7a] sm:$0xff]
        %v4336 = vld [vmem:[%s4128 + $0x82] sm:$0xff]
        %v4337 = vld [vmem:[%s4128 + $0x92] sm:$0xff]
        %v4338 = vld [vmem:[%s4128 + $0x9a] sm:$0xff]
        %v4339 = vld [vmem:[%s4128 + $0xaa] sm:$0xff]
        %v4340 = vld [vmem:[%s4128 + $0xb2] sm:$0xff]
        %v4341 = vld [vmem:[%s4128 + $0xc2] sm:$0xff]
        %v4342 = vld [vmem:[%s4128 + $0xca] sm:$0xff]
        %v4343 = vld [vmem:[%s4128 + $0xda] sm:$0xff]
        %v4344 = vld [vmem:[%s4128 + $0xe2] sm:$0xff]
        %v4345 = vld [vmem:[%s4128 + $0xf2] sm:$0xff]
        %v4346 = vld [vmem:[%s4128 + $0xfa] sm:$0xff]
        %v4347 = vld [vmem:[%s4128 + $0x10a] sm:$0xff]
        %v4348 = vld [vmem:[%s4128 + $0x112] sm:$0xff]
        %v4349 = vld [vmem:[%s4128 + $0x122] sm:$0xff]
        %v4350 = vld [vmem:[%s4128 + $0x12a] sm:$0xff]
        %v4351 = vld [vmem:[%s4128 + $0x13a] sm:$0xff]
        %v4352 = vld [vmem:[%s4128 + $0x142] sm:$0xff]
        %v4353 = vld [vmem:[%s4128 + $0x152] sm:$0xff]
        %v4354 = vld [vmem:[%s4128 + $0x15a] sm:$0xff]
        %v4355 = vld [vmem:[%s4128 + $0x16a] sm:$0xff]
        %v4356 = vld [vmem:[%s4128 + $0x172] sm:$0xff]
        %v4357 = vperm.slane %v4324, 0
        %v4358 = vmul.f32 %v4325, %v4357
        %v4359 = vmul.f32 %v4326, %v4357
        %v4360 = vmul.f32 %v4327, %v4357
        %v4361 = vmul.f32 %v4328, %v4357
        %v4362 = vmul.f32 %v4329, %v4357
        %v4363 = vmul.f32 %v4330, %v4357
        %v4364 = vmul.f32 %v4331, %v4357
        %v4365 = vmul.f32 %v4332, %v4357
        %v4366 = vmul.f32 %v4333, %v4357
        %v4367 = vmul.f32 %v4334, %v4357
        %v4368 = vmul.f32 %v4335, %v4357
        %v4369 = vmul.f32 %v4336, %v4357
        %v4370 = vmul.f32 %v4337, %v4357
        %v4371 = vmul.f32 %v4338, %v4357
        %v4372 = vmul.f32 %v4339, %v4357
        %v4373 = vmul.f32 %v4340, %v4357
        %v4374 = vmul.f32 %v4341, %v4357
        %v4375 = vmul.f32 %v4342, %v4357
        %v4376 = vmul.f32 %v4343, %v4357
        %v4377 = vmul.f32 %v4344, %v4357
        %v4378 = vmul.f32 %v4345, %v4357
        %v4379 = vmul.f32 %v4346, %v4357
        %v4380 = vmul.f32 %v4347, %v4357
        %v4381 = vmul.f32 %v4348, %v4357
        %v4382 = vmul.f32 %v4349, %v4357
        %v4383 = vmul.f32 %v4350, %v4357
        %v4384 = vmul.f32 %v4351, %v4357
        %v4385 = vmul.f32 %v4352, %v4357
        %v4386 = vmul.f32 %v4353, %v4357
        %v4387 = vmul.f32 %v4354, %v4357
        %v4388 = vmul.f32 %v4355, %v4357
        %v4389 = vmul.f32 %v4356, %v4357
        %v4390 = vadd.f32 %v4292, %v4358
        %v4391 = vadd.f32 %v4293, %v4359
        %v4392 = vadd.f32 %v4294, %v4360
        %v4393 = vadd.f32 %v4295, %v4361
        %v4394 = vadd.f32 %v4296, %v4362
        %v4395 = vadd.f32 %v4297, %v4363
        %v4396 = vadd.f32 %v4298, %v4364
        %v4397 = vadd.f32 %v4299, %v4365
        %v4398 = vadd.f32 %v4300, %v4366
        %v4399 = vadd.f32 %v4301, %v4367
        %v4400 = vadd.f32 %v4302, %v4368
        %v4401 = vadd.f32 %v4303, %v4369
        %v4402 = vadd.f32 %v4304, %v4370
        %v4403 = vadd.f32 %v4305, %v4371
        %v4404 = vadd.f32 %v4306, %v4372
        %v4405 = vadd.f32 %v4307, %v4373
        %v4406 = vadd.f32 %v4308, %v4374
        %v4407 = vadd.f32 %v4309, %v4375
        %v4408 = vadd.f32 %v4310, %v4376
        %v4409 = vadd.f32 %v4311, %v4377
        %v4410 = vadd.f32 %v4312, %v4378
        %v4411 = vadd.f32 %v4313, %v4379
        %v4412 = vadd.f32 %v4314, %v4380
        %v4413 = vadd.f32 %v4315, %v4381
        %v4414 = vadd.f32 %v4316, %v4382
        %v4415 = vadd.f32 %v4317, %v4383
        %v4416 = vadd.f32 %v4318, %v4384
        %v4417 = vadd.f32 %v4319, %v4385
        %v4418 = vadd.f32 %v4320, %v4386
        %v4419 = vadd.f32 %v4321, %v4387
        %v4420 = vadd.f32 %v4322, %v4388
        %v4421 = vadd.f32 %v4323, %v4389
        %v4422 = vld [vmem:[%s6 + $0x1f] sm:$0x1]
        %v4423 = vld [vmem:[%s4128 + $0x3] sm:$0xff]
        %v4424 = vld [vmem:[%s4128 + $0xb] sm:$0xff]
        %v4425 = vld [vmem:[%s4128 + $0x1b] sm:$0xff]
        %v4426 = vld [vmem:[%s4128 + $0x23] sm:$0xff]
        %v4427 = vld [vmem:[%s4128 + $0x33] sm:$0xff]
        %v4428 = vld [vmem:[%s4128 + $0x3b] sm:$0xff]
        %v4429 = vld [vmem:[%s4128 + $0x4b] sm:$0xff]
        %v4430 = vld [vmem:[%s4128 + $0x53] sm:$0xff]
        %v4431 = vld [vmem:[%s4128 + $0x63] sm:$0xff]
        %v4432 = vld [vmem:[%s4128 + $0x6b] sm:$0xff]
        %v4433 = vld [vmem:[%s4128 + $0x7b] sm:$0xff]
        %v4434 = vld [vmem:[%s4128 + $0x83] sm:$0xff]
        %v4435 = vld [vmem:[%s4128 + $0x93] sm:$0xff]
        %v4436 = vld [vmem:[%s4128 + $0x9b] sm:$0xff]
        %v4437 = vld [vmem:[%s4128 + $0xab] sm:$0xff]
        %v4438 = vld [vmem:[%s4128 + $0xb3] sm:$0xff]
        %v4439 = vld [vmem:[%s4128 + $0xc3] sm:$0xff]
        %v4440 = vld [vmem:[%s4128 + $0xcb] sm:$0xff]
        %v4441 = vld [vmem:[%s4128 + $0xdb] sm:$0xff]
        %v4442 = vld [vmem:[%s4128 + $0xe3] sm:$0xff]
        %v4443 = vld [vmem:[%s4128 + $0xf3] sm:$0xff]
        %v4444 = vld [vmem:[%s4128 + $0xfb] sm:$0xff]
        %v4445 = vld [vmem:[%s4128 + $0x10b] sm:$0xff]
        %v4446 = vld [vmem:[%s4128 + $0x113] sm:$0xff]
        %v4447 = vld [vmem:[%s4128 + $0x123] sm:$0xff]
        %v4448 = vld [vmem:[%s4128 + $0x12b] sm:$0xff]
        %v4449 = vld [vmem:[%s4128 + $0x13b] sm:$0xff]
        %v4450 = vld [vmem:[%s4128 + $0x143] sm:$0xff]
        %v4451 = vld [vmem:[%s4128 + $0x153] sm:$0xff]
        %v4452 = vld [vmem:[%s4128 + $0x15b] sm:$0xff]
        %v4453 = vld [vmem:[%s4128 + $0x16b] sm:$0xff]
        %v4454 = vld [vmem:[%s4128 + $0x173] sm:$0xff]
        %v4455 = vperm.slane %v4422, 0
        %v4456 = vmul.f32 %v4423, %v4455
        %v4457 = vmul.f32 %v4424, %v4455
        %v4458 = vmul.f32 %v4425, %v4455
        %v4459 = vmul.f32 %v4426, %v4455
        %v4460 = vmul.f32 %v4427, %v4455
        %v4461 = vmul.f32 %v4428, %v4455
        %v4462 = vmul.f32 %v4429, %v4455
        %v4463 = vmul.f32 %v4430, %v4455
        %v4464 = vmul.f32 %v4431, %v4455
        %v4465 = vmul.f32 %v4432, %v4455
        %v4466 = vmul.f32 %v4433, %v4455
        %v4467 = vmul.f32 %v4434, %v4455
        %v4468 = vmul.f32 %v4435, %v4455
        %v4469 = vmul.f32 %v4436, %v4455
        %v4470 = vmul.f32 %v4437, %v4455
        %v4471 = vmul.f32 %v4438, %v4455
        %v4472 = vmul.f32 %v4439, %v4455
        %v4473 = vmul.f32 %v4440, %v4455
        %v4474 = vmul.f32 %v4441, %v4455
        %v4475 = vmul.f32 %v4442, %v4455
        %v4476 = vmul.f32 %v4443, %v4455
        %v4477 = vmul.f32 %v4444, %v4455
        %v4478 = vmul.f32 %v4445, %v4455
        %v4479 = vmul.f32 %v4446, %v4455
        %v4480 = vmul.f32 %v4447, %v4455
        %v4481 = vmul.f32 %v4448, %v4455
        %v4482 = vmul.f32 %v4449, %v4455
        %v4483 = vmul.f32 %v4450, %v4455
        %v4484 = vmul.f32 %v4451, %v4455
        %v4485 = vmul.f32 %v4452, %v4455
        %v4486 = vmul.f32 %v4453, %v4455
        %v4487 = vmul.f32 %v4454, %v4455
        %v4488 = vadd.f32 %v4390, %v4456
        %v4489 = vadd.f32 %v4391, %v4457
        %v4490 = vadd.f32 %v4392, %v4458
        %v4491 = vadd.f32 %v4393, %v4459
        %v4492 = vadd.f32 %v4394, %v4460
        %v4493 = vadd.f32 %v4395, %v4461
        %v4494 = vadd.f32 %v4396, %v4462
        %v4495 = vadd.f32 %v4397, %v4463
        %v4496 = vadd.f32 %v4398, %v4464
        %v4497 = vadd.f32 %v4399, %v4465
        %v4498 = vadd.f32 %v4400, %v4466
        %v4499 = vadd.f32 %v4401, %v4467
        %v4500 = vadd.f32 %v4402, %v4468
        %v4501 = vadd.f32 %v4403, %v4469
        %v4502 = vadd.f32 %v4404, %v4470
        %v4503 = vadd.f32 %v4405, %v4471
        %v4504 = vadd.f32 %v4406, %v4472
        %v4505 = vadd.f32 %v4407, %v4473
        %v4506 = vadd.f32 %v4408, %v4474
        %v4507 = vadd.f32 %v4409, %v4475
        %v4508 = vadd.f32 %v4410, %v4476
        %v4509 = vadd.f32 %v4411, %v4477
        %v4510 = vadd.f32 %v4412, %v4478
        %v4511 = vadd.f32 %v4413, %v4479
        %v4512 = vadd.f32 %v4414, %v4480
        %v4513 = vadd.f32 %v4415, %v4481
        %v4514 = vadd.f32 %v4416, %v4482
        %v4515 = vadd.f32 %v4417, %v4483
        %v4516 = vadd.f32 %v4418, %v4484
        %v4517 = vadd.f32 %v4419, %v4485
        %v4518 = vadd.f32 %v4420, %v4486
        %v4519 = vadd.f32 %v4421, %v4487
        %v4520 = vld [vmem:[%s6 + $0x20] sm:$0x1]
        %v4521 = vld [vmem:[%s4128 + $0x4] sm:$0xff]
        %v4522 = vld [vmem:[%s4128 + $0xc] sm:$0xff]
        %v4523 = vld [vmem:[%s4128 + $0x1c] sm:$0xff]
        %v4524 = vld [vmem:[%s4128 + $0x24] sm:$0xff]
        %v4525 = vld [vmem:[%s4128 + $0x34] sm:$0xff]
        %v4526 = vld [vmem:[%s4128 + $0x3c] sm:$0xff]
        %v4527 = vld [vmem:[%s4128 + $0x4c] sm:$0xff]
        %v4528 = vld [vmem:[%s4128 + $0x54] sm:$0xff]
        %v4529 = vld [vmem:[%s4128 + $0x64] sm:$0xff]
        %v4530 = vld [vmem:[%s4128 + $0x6c] sm:$0xff]
        %v4531 = vld [vmem:[%s4128 + $0x7c] sm:$0xff]
        %v4532 = vld [vmem:[%s4128 + $0x84] sm:$0xff]
        %v4533 = vld [vmem:[%s4128 + $0x94] sm:$0xff]
        %v4534 = vld [vmem:[%s4128 + $0x9c] sm:$0xff]
        %v4535 = vld [vmem:[%s4128 + $0xac] sm:$0xff]
        %v4536 = vld [vmem:[%s4128 + $0xb4] sm:$0xff]
        %v4537 = vld [vmem:[%s4128 + $0xc4] sm:$0xff]
        %v4538 = vld [vmem:[%s4128 + $0xcc] sm:$0xff]
        %v4539 = vld [vmem:[%s4128 + $0xdc] sm:$0xff]
        %v4540 = vld [vmem:[%s4128 + $0xe4] sm:$0xff]
        %v4541 = vld [vmem:[%s4128 + $0xf4] sm:$0xff]
        %v4542 = vld [vmem:[%s4128 + $0xfc] sm:$0xff]
        %v4543 = vld [vmem:[%s4128 + $0x10c] sm:$0xff]
        %v4544 = vld [vmem:[%s4128 + $0x114] sm:$0xff]
        %v4545 = vld [vmem:[%s4128 + $0x124] sm:$0xff]
        %v4546 = vld [vmem:[%s4128 + $0x12c] sm:$0xff]
        %v4547 = vld [vmem:[%s4128 + $0x13c] sm:$0xff]
        %v4548 = vld [vmem:[%s4128 + $0x144] sm:$0xff]
        %v4549 = vld [vmem:[%s4128 + $0x154] sm:$0xff]
        %v4550 = vld [vmem:[%s4128 + $0x15c] sm:$0xff]
        %v4551 = vld [vmem:[%s4128 + $0x16c] sm:$0xff]
        %v4552 = vld [vmem:[%s4128 + $0x174] sm:$0xff]
        %v4553 = vperm.slane %v4520, 0
        %v4554 = vmul.f32 %v4521, %v4553
        %v4555 = vmul.f32 %v4522, %v4553
        %v4556 = vmul.f32 %v4523, %v4553
        %v4557 = vmul.f32 %v4524, %v4553
        %v4558 = vmul.f32 %v4525, %v4553
        %v4559 = vmul.f32 %v4526, %v4553
        %v4560 = vmul.f32 %v4527, %v4553
        %v4561 = vmul.f32 %v4528, %v4553
        %v4562 = vmul.f32 %v4529, %v4553
        %v4563 = vmul.f32 %v4530, %v4553
        %v4564 = vmul.f32 %v4531, %v4553
        %v4565 = vmul.f32 %v4532, %v4553
        %v4566 = vmul.f32 %v4533, %v4553
        %v4567 = vmul.f32 %v4534, %v4553
        %v4568 = vmul.f32 %v4535, %v4553
        %v4569 = vmul.f32 %v4536, %v4553
        %v4570 = vmul.f32 %v4537, %v4553
        %v4571 = vmul.f32 %v4538, %v4553
        %v4572 = vmul.f32 %v4539, %v4553
        %v4573 = vmul.f32 %v4540, %v4553
        %v4574 = vmul.f32 %v4541, %v4553
        %v4575 = vmul.f32 %v4542, %v4553
        %v4576 = vmul.f32 %v4543, %v4553
        %v4577 = vmul.f32 %v4544, %v4553
        %v4578 = vmul.f32 %v4545, %v4553
        %v4579 = vmul.f32 %v4546, %v4553
        %v4580 = vmul.f32 %v4547, %v4553
        %v4581 = vmul.f32 %v4548, %v4553
        %v4582 = vmul.f32 %v4549, %v4553
        %v4583 = vmul.f32 %v4550, %v4553
        %v4584 = vmul.f32 %v4551, %v4553
        %v4585 = vmul.f32 %v4552, %v4553
        %v4586 = vadd.f32 %v4488, %v4554
        %v4587 = vadd.f32 %v4489, %v4555
        %v4588 = vadd.f32 %v4490, %v4556
        %v4589 = vadd.f32 %v4491, %v4557
        %v4590 = vadd.f32 %v4492, %v4558
        %v4591 = vadd.f32 %v4493, %v4559
        %v4592 = vadd.f32 %v4494, %v4560
        %v4593 = vadd.f32 %v4495, %v4561
        %v4594 = vadd.f32 %v4496, %v4562
        %v4595 = vadd.f32 %v4497, %v4563
        %v4596 = vadd.f32 %v4498, %v4564
        %v4597 = vadd.f32 %v4499, %v4565
        %v4598 = vadd.f32 %v4500, %v4566
        %v4599 = vadd.f32 %v4501, %v4567
        %v4600 = vadd.f32 %v4502, %v4568
        %v4601 = vadd.f32 %v4503, %v4569
        %v4602 = vadd.f32 %v4504, %v4570
        %v4603 = vadd.f32 %v4505, %v4571
        %v4604 = vadd.f32 %v4506, %v4572
        %v4605 = vadd.f32 %v4507, %v4573
        %v4606 = vadd.f32 %v4508, %v4574
        %v4607 = vadd.f32 %v4509, %v4575
        %v4608 = vadd.f32 %v4510, %v4576
        %v4609 = vadd.f32 %v4511, %v4577
        %v4610 = vadd.f32 %v4512, %v4578
        %v4611 = vadd.f32 %v4513, %v4579
        %v4612 = vadd.f32 %v4514, %v4580
        %v4613 = vadd.f32 %v4515, %v4581
        %v4614 = vadd.f32 %v4516, %v4582
        %v4615 = vadd.f32 %v4517, %v4583
        %v4616 = vadd.f32 %v4518, %v4584
        %v4617 = vadd.f32 %v4519, %v4585
        %v4618 = vld [vmem:[%s6 + $0x21] sm:$0x1]
        %v4619 = vld [vmem:[%s4128 + $0x5] sm:$0xff]
        %v4620 = vld [vmem:[%s4128 + $0xd] sm:$0xff]
        %v4621 = vld [vmem:[%s4128 + $0x1d] sm:$0xff]
        %v4622 = vld [vmem:[%s4128 + $0x25] sm:$0xff]
        %v4623 = vld [vmem:[%s4128 + $0x35] sm:$0xff]
        %v4624 = vld [vmem:[%s4128 + $0x3d] sm:$0xff]
        %v4625 = vld [vmem:[%s4128 + $0x4d] sm:$0xff]
        %v4626 = vld [vmem:[%s4128 + $0x55] sm:$0xff]
        %v4627 = vld [vmem:[%s4128 + $0x65] sm:$0xff]
        %v4628 = vld [vmem:[%s4128 + $0x6d] sm:$0xff]
        %v4629 = vld [vmem:[%s4128 + $0x7d] sm:$0xff]
        %v4630 = vld [vmem:[%s4128 + $0x85] sm:$0xff]
        %v4631 = vld [vmem:[%s4128 + $0x95] sm:$0xff]
        %v4632 = vld [vmem:[%s4128 + $0x9d] sm:$0xff]
        %v4633 = vld [vmem:[%s4128 + $0xad] sm:$0xff]
        %v4634 = vld [vmem:[%s4128 + $0xb5] sm:$0xff]
        %v4635 = vld [vmem:[%s4128 + $0xc5] sm:$0xff]
        %v4636 = vld [vmem:[%s4128 + $0xcd] sm:$0xff]
        %v4637 = vld [vmem:[%s4128 + $0xdd] sm:$0xff]
        %v4638 = vld [vmem:[%s4128 + $0xe5] sm:$0xff]
        %v4639 = vld [vmem:[%s4128 + $0xf5] sm:$0xff]
        %v4640 = vld [vmem:[%s4128 + $0xfd] sm:$0xff]
        %v4641 = vld [vmem:[%s4128 + $0x10d] sm:$0xff]
        %v4642 = vld [vmem:[%s4128 + $0x115] sm:$0xff]
        %v4643 = vld [vmem:[%s4128 + $0x125] sm:$0xff]
        %v4644 = vld [vmem:[%s4128 + $0x12d] sm:$0xff]
        %v4645 = vld [vmem:[%s4128 + $0x13d] sm:$0xff]
        %v4646 = vld [vmem:[%s4128 + $0x145] sm:$0xff]
        %v4647 = vld [vmem:[%s4128 + $0x155] sm:$0xff]
        %v4648 = vld [vmem:[%s4128 + $0x15d] sm:$0xff]
        %v4649 = vld [vmem:[%s4128 + $0x16d] sm:$0xff]
        %v4650 = vld [vmem:[%s4128 + $0x175] sm:$0xff]
        %v4651 = vperm.slane %v4618, 0
        %v4652 = vmul.f32 %v4619, %v4651
        %v4653 = vmul.f32 %v4620, %v4651
        %v4654 = vmul.f32 %v4621, %v4651
        %v4655 = vmul.f32 %v4622, %v4651
        %v4656 = vmul.f32 %v4623, %v4651
        %v4657 = vmul.f32 %v4624, %v4651
        %v4658 = vmul.f32 %v4625, %v4651
        %v4659 = vmul.f32 %v4626, %v4651
        %v4660 = vmul.f32 %v4627, %v4651
        %v4661 = vmul.f32 %v4628, %v4651
        %v4662 = vmul.f32 %v4629, %v4651
        %v4663 = vmul.f32 %v4630, %v4651
        %v4664 = vmul.f32 %v4631, %v4651
        %v4665 = vmul.f32 %v4632, %v4651
        %v4666 = vmul.f32 %v4633, %v4651
        %v4667 = vmul.f32 %v4634, %v4651
        %v4668 = vmul.f32 %v4635, %v4651
        %v4669 = vmul.f32 %v4636, %v4651
        %v4670 = vmul.f32 %v4637, %v4651
        %v4671 = vmul.f32 %v4638, %v4651
        %v4672 = vmul.f32 %v4639, %v4651
        %v4673 = vmul.f32 %v4640, %v4651
        %v4674 = vmul.f32 %v4641, %v4651
        %v4675 = vmul.f32 %v4642, %v4651
        %v4676 = vmul.f32 %v4643, %v4651
        %v4677 = vmul.f32 %v4644, %v4651
        %v4678 = vmul.f32 %v4645, %v4651
        %v4679 = vmul.f32 %v4646, %v4651
        %v4680 = vmul.f32 %v4647, %v4651
        %v4681 = vmul.f32 %v4648, %v4651
        %v4682 = vmul.f32 %v4649, %v4651
        %v4683 = vmul.f32 %v4650, %v4651
        %v4684 = vadd.f32 %v4586, %v4652
        %v4685 = vadd.f32 %v4587, %v4653
        %v4686 = vadd.f32 %v4588, %v4654
        %v4687 = vadd.f32 %v4589, %v4655
        %v4688 = vadd.f32 %v4590, %v4656
        %v4689 = vadd.f32 %v4591, %v4657
        %v4690 = vadd.f32 %v4592, %v4658
        %v4691 = vadd.f32 %v4593, %v4659
        %v4692 = vadd.f32 %v4594, %v4660
        %v4693 = vadd.f32 %v4595, %v4661
        %v4694 = vadd.f32 %v4596, %v4662
        %v4695 = vadd.f32 %v4597, %v4663
        %v4696 = vadd.f32 %v4598, %v4664
        %v4697 = vadd.f32 %v4599, %v4665
        %v4698 = vadd.f32 %v4600, %v4666
        %v4699 = vadd.f32 %v4601, %v4667
        %v4700 = vadd.f32 %v4602, %v4668
        %v4701 = vadd.f32 %v4603, %v4669
        %v4702 = vadd.f32 %v4604, %v4670
        %v4703 = vadd.f32 %v4605, %v4671
        %v4704 = vadd.f32 %v4606, %v4672
        %v4705 = vadd.f32 %v4607, %v4673
        %v4706 = vadd.f32 %v4608, %v4674
        %v4707 = vadd.f32 %v4609, %v4675
        %v4708 = vadd.f32 %v4610, %v4676
        %v4709 = vadd.f32 %v4611, %v4677
        %v4710 = vadd.f32 %v4612, %v4678
        %v4711 = vadd.f32 %v4613, %v4679
        %v4712 = vadd.f32 %v4614, %v4680
        %v4713 = vadd.f32 %v4615, %v4681
        %v4714 = vadd.f32 %v4616, %v4682
        %v4715 = vadd.f32 %v4617, %v4683
        %v4716 = vld [vmem:[%s6 + $0x22] sm:$0x1]
        %v4717 = vld [vmem:[%s4128 + $0x6] sm:$0xff]
        %v4718 = vld [vmem:[%s4128 + $0xe] sm:$0xff]
        %v4719 = vld [vmem:[%s4128 + $0x1e] sm:$0xff]
        %v4720 = vld [vmem:[%s4128 + $0x26] sm:$0xff]
        %v4721 = vld [vmem:[%s4128 + $0x36] sm:$0xff]
        %v4722 = vld [vmem:[%s4128 + $0x3e] sm:$0xff]
        %v4723 = vld [vmem:[%s4128 + $0x4e] sm:$0xff]
        %v4724 = vld [vmem:[%s4128 + $0x56] sm:$0xff]
        %v4725 = vld [vmem:[%s4128 + $0x66] sm:$0xff]
        %v4726 = vld [vmem:[%s4128 + $0x6e] sm:$0xff]
        %v4727 = vld [vmem:[%s4128 + $0x7e] sm:$0xff]
        %v4728 = vld [vmem:[%s4128 + $0x86] sm:$0xff]
        %v4729 = vld [vmem:[%s4128 + $0x96] sm:$0xff]
        %v4730 = vld [vmem:[%s4128 + $0x9e] sm:$0xff]
        %v4731 = vld [vmem:[%s4128 + $0xae] sm:$0xff]
        %v4732 = vld [vmem:[%s4128 + $0xb6] sm:$0xff]
        %v4733 = vld [vmem:[%s4128 + $0xc6] sm:$0xff]
        %v4734 = vld [vmem:[%s4128 + $0xce] sm:$0xff]
        %v4735 = vld [vmem:[%s4128 + $0xde] sm:$0xff]
        %v4736 = vld [vmem:[%s4128 + $0xe6] sm:$0xff]
        %v4737 = vld [vmem:[%s4128 + $0xf6] sm:$0xff]
        %v4738 = vld [vmem:[%s4128 + $0xfe] sm:$0xff]
        %v4739 = vld [vmem:[%s4128 + $0x10e] sm:$0xff]
        %v4740 = vld [vmem:[%s4128 + $0x116] sm:$0xff]
        %v4741 = vld [vmem:[%s4128 + $0x126] sm:$0xff]
        %v4742 = vld [vmem:[%s4128 + $0x12e] sm:$0xff]
        %v4743 = vld [vmem:[%s4128 + $0x13e] sm:$0xff]
        %v4744 = vld [vmem:[%s4128 + $0x146] sm:$0xff]
        %v4745 = vld [vmem:[%s4128 + $0x156] sm:$0xff]
        %v4746 = vld [vmem:[%s4128 + $0x15e] sm:$0xff]
        %v4747 = vld [vmem:[%s4128 + $0x16e] sm:$0xff]
        %v4748 = vld [vmem:[%s4128 + $0x176] sm:$0xff]
        %v4749 = vperm.slane %v4716, 0
        %v4750 = vmul.f32 %v4717, %v4749
        %v4751 = vmul.f32 %v4718, %v4749
        %v4752 = vmul.f32 %v4719, %v4749
        %v4753 = vmul.f32 %v4720, %v4749
        %v4754 = vmul.f32 %v4721, %v4749
        %v4755 = vmul.f32 %v4722, %v4749
        %v4756 = vmul.f32 %v4723, %v4749
        %v4757 = vmul.f32 %v4724, %v4749
        %v4758 = vmul.f32 %v4725, %v4749
        %v4759 = vmul.f32 %v4726, %v4749
        %v4760 = vmul.f32 %v4727, %v4749
        %v4761 = vmul.f32 %v4728, %v4749
        %v4762 = vmul.f32 %v4729, %v4749
        %v4763 = vmul.f32 %v4730, %v4749
        %v4764 = vmul.f32 %v4731, %v4749
        %v4765 = vmul.f32 %v4732, %v4749
        %v4766 = vmul.f32 %v4733, %v4749
        %v4767 = vmul.f32 %v4734, %v4749
        %v4768 = vmul.f32 %v4735, %v4749
        %v4769 = vmul.f32 %v4736, %v4749
        %v4770 = vmul.f32 %v4737, %v4749
        %v4771 = vmul.f32 %v4738, %v4749
        %v4772 = vmul.f32 %v4739, %v4749
        %v4773 = vmul.f32 %v4740, %v4749
        %v4774 = vmul.f32 %v4741, %v4749
        %v4775 = vmul.f32 %v4742, %v4749
        %v4776 = vmul.f32 %v4743, %v4749
        %v4777 = vmul.f32 %v4744, %v4749
        %v4778 = vmul.f32 %v4745, %v4749
        %v4779 = vmul.f32 %v4746, %v4749
        %v4780 = vmul.f32 %v4747, %v4749
        %v4781 = vmul.f32 %v4748, %v4749
        %v4782 = vadd.f32 %v4684, %v4750
        %v4783 = vadd.f32 %v4685, %v4751
        %v4784 = vadd.f32 %v4686, %v4752
        %v4785 = vadd.f32 %v4687, %v4753
        %v4786 = vadd.f32 %v4688, %v4754
        %v4787 = vadd.f32 %v4689, %v4755
        %v4788 = vadd.f32 %v4690, %v4756
        %v4789 = vadd.f32 %v4691, %v4757
        %v4790 = vadd.f32 %v4692, %v4758
        %v4791 = vadd.f32 %v4693, %v4759
        %v4792 = vadd.f32 %v4694, %v4760
        %v4793 = vadd.f32 %v4695, %v4761
        %v4794 = vadd.f32 %v4696, %v4762
        %v4795 = vadd.f32 %v4697, %v4763
        %v4796 = vadd.f32 %v4698, %v4764
        %v4797 = vadd.f32 %v4699, %v4765
        %v4798 = vadd.f32 %v4700, %v4766
        %v4799 = vadd.f32 %v4701, %v4767
        %v4800 = vadd.f32 %v4702, %v4768
        %v4801 = vadd.f32 %v4703, %v4769
        %v4802 = vadd.f32 %v4704, %v4770
        %v4803 = vadd.f32 %v4705, %v4771
        %v4804 = vadd.f32 %v4706, %v4772
        %v4805 = vadd.f32 %v4707, %v4773
        %v4806 = vadd.f32 %v4708, %v4774
        %v4807 = vadd.f32 %v4709, %v4775
        %v4808 = vadd.f32 %v4710, %v4776
        %v4809 = vadd.f32 %v4711, %v4777
        %v4810 = vadd.f32 %v4712, %v4778
        %v4811 = vadd.f32 %v4713, %v4779
        %v4812 = vadd.f32 %v4714, %v4780
        %v4813 = vadd.f32 %v4715, %v4781
        %v4814 = vld [vmem:[%s6 + $0x23] sm:$0x1]
        %s4815 = scalar_lea.vmem [#allocation2], 120
        %v4816 = vld [vmem:[%s4815] sm:$0xff]
        %v4817 = vld [vmem:[%s4815 + $0x8] sm:$0xff]
        %v4818 = vld [vmem:[%s4815 + $0x18] sm:$0xff]
        %v4819 = vld [vmem:[%s4815 + $0x20] sm:$0xff]
        %v4820 = vld [vmem:[%s4815 + $0x30] sm:$0xff]
        %v4821 = vld [vmem:[%s4815 + $0x38] sm:$0xff]
        %v4822 = vld [vmem:[%s4815 + $0x48] sm:$0xff]
        %v4823 = vld [vmem:[%s4815 + $0x50] sm:$0xff]
        %v4824 = vld [vmem:[%s4815 + $0x60] sm:$0xff]
        %v4825 = vld [vmem:[%s4815 + $0x68] sm:$0xff]
        %v4826 = vld [vmem:[%s4815 + $0x78] sm:$0xff]
        %v4827 = vld [vmem:[%s4815 + $0x80] sm:$0xff]
        %v4828 = vld [vmem:[%s4815 + $0x90] sm:$0xff]
        %v4829 = vld [vmem:[%s4815 + $0x98] sm:$0xff]
        %v4830 = vld [vmem:[%s4815 + $0xa8] sm:$0xff]
        %v4831 = vld [vmem:[%s4815 + $0xb0] sm:$0xff]
        %v4832 = vld [vmem:[%s4815 + $0xc0] sm:$0xff]
        %v4833 = vld [vmem:[%s4815 + $0xc8] sm:$0xff]
        %v4834 = vld [vmem:[%s4815 + $0xd8] sm:$0xff]
        %v4835 = vld [vmem:[%s4815 + $0xe0] sm:$0xff]
        %v4836 = vld [vmem:[%s4815 + $0xf0] sm:$0xff]
        %v4837 = vld [vmem:[%s4815 + $0xf8] sm:$0xff]
        %v4838 = vld [vmem:[%s4815 + $0x108] sm:$0xff]
        %v4839 = vld [vmem:[%s4815 + $0x110] sm:$0xff]
        %v4840 = vld [vmem:[%s4815 + $0x120] sm:$0xff]
        %v4841 = vld [vmem:[%s4815 + $0x128] sm:$0xff]
        %v4842 = vld [vmem:[%s4815 + $0x138] sm:$0xff]
        %v4843 = vld [vmem:[%s4815 + $0x140] sm:$0xff]
        %v4844 = vld [vmem:[%s4815 + $0x150] sm:$0xff]
        %v4845 = vld [vmem:[%s4815 + $0x158] sm:$0xff]
        %v4846 = vld [vmem:[%s4815 + $0x168] sm:$0xff]
        %v4847 = vld [vmem:[%s4815 + $0x170] sm:$0xff]
        %v4848 = vperm.slane %v4814, 0
        %v4849 = vmul.f32 %v4816, %v4848
        %v4850 = vmul.f32 %v4817, %v4848
        %v4851 = vmul.f32 %v4818, %v4848
        %v4852 = vmul.f32 %v4819, %v4848
        %v4853 = vmul.f32 %v4820, %v4848
        %v4854 = vmul.f32 %v4821, %v4848
        %v4855 = vmul.f32 %v4822, %v4848
        %v4856 = vmul.f32 %v4823, %v4848
        %v4857 = vmul.f32 %v4824, %v4848
        %v4858 = vmul.f32 %v4825, %v4848
        %v4859 = vmul.f32 %v4826, %v4848
        %v4860 = vmul.f32 %v4827, %v4848
        %v4861 = vmul.f32 %v4828, %v4848
        %v4862 = vmul.f32 %v4829, %v4848
        %v4863 = vmul.f32 %v4830, %v4848
        %v4864 = vmul.f32 %v4831, %v4848
        %v4865 = vmul.f32 %v4832, %v4848
        %v4866 = vmul.f32 %v4833, %v4848
        %v4867 = vmul.f32 %v4834, %v4848
        %v4868 = vmul.f32 %v4835, %v4848
        %v4869 = vmul.f32 %v4836, %v4848
        %v4870 = vmul.f32 %v4837, %v4848
        %v4871 = vmul.f32 %v4838, %v4848
        %v4872 = vmul.f32 %v4839, %v4848
        %v4873 = vmul.f32 %v4840, %v4848
        %v4874 = vmul.f32 %v4841, %v4848
        %v4875 = vmul.f32 %v4842, %v4848
        %v4876 = vmul.f32 %v4843, %v4848
        %v4877 = vmul.f32 %v4844, %v4848
        %v4878 = vmul.f32 %v4845, %v4848
        %v4879 = vmul.f32 %v4846, %v4848
        %v4880 = vmul.f32 %v4847, %v4848
        %v4881 = vadd.f32 %v4782, %v4849
        %v4882 = vadd.f32 %v4783, %v4850
        %v4883 = vadd.f32 %v4784, %v4851
        %v4884 = vadd.f32 %v4785, %v4852
        %v4885 = vadd.f32 %v4786, %v4853
        %v4886 = vadd.f32 %v4787, %v4854
        %v4887 = vadd.f32 %v4788, %v4855
        %v4888 = vadd.f32 %v4789, %v4856
        %v4889 = vadd.f32 %v4790, %v4857
        %v4890 = vadd.f32 %v4791, %v4858
        %v4891 = vadd.f32 %v4792, %v4859
        %v4892 = vadd.f32 %v4793, %v4860
        %v4893 = vadd.f32 %v4794, %v4861
        %v4894 = vadd.f32 %v4795, %v4862
        %v4895 = vadd.f32 %v4796, %v4863
        %v4896 = vadd.f32 %v4797, %v4864
        %v4897 = vadd.f32 %v4798, %v4865
        %v4898 = vadd.f32 %v4799, %v4866
        %v4899 = vadd.f32 %v4800, %v4867
        %v4900 = vadd.f32 %v4801, %v4868
        %v4901 = vadd.f32 %v4802, %v4869
        %v4902 = vadd.f32 %v4803, %v4870
        %v4903 = vadd.f32 %v4804, %v4871
        %v4904 = vadd.f32 %v4805, %v4872
        %v4905 = vadd.f32 %v4806, %v4873
        %v4906 = vadd.f32 %v4807, %v4874
        %v4907 = vadd.f32 %v4808, %v4875
        %v4908 = vadd.f32 %v4809, %v4876
        %v4909 = vadd.f32 %v4810, %v4877
        %v4910 = vadd.f32 %v4811, %v4878
        %v4911 = vadd.f32 %v4812, %v4879
        %v4912 = vadd.f32 %v4813, %v4880
        %v4913 = vld [vmem:[%s6 + $0x24] sm:$0x1]
        %v4914 = vld [vmem:[%s4815 + $0x1] sm:$0xff]
        %v4915 = vld [vmem:[%s4815 + $0x9] sm:$0xff]
        %v4916 = vld [vmem:[%s4815 + $0x19] sm:$0xff]
        %v4917 = vld [vmem:[%s4815 + $0x21] sm:$0xff]
        %v4918 = vld [vmem:[%s4815 + $0x31] sm:$0xff]
        %v4919 = vld [vmem:[%s4815 + $0x39] sm:$0xff]
        %v4920 = vld [vmem:[%s4815 + $0x49] sm:$0xff]
        %v4921 = vld [vmem:[%s4815 + $0x51] sm:$0xff]
        %v4922 = vld [vmem:[%s4815 + $0x61] sm:$0xff]
        %v4923 = vld [vmem:[%s4815 + $0x69] sm:$0xff]
        %v4924 = vld [vmem:[%s4815 + $0x79] sm:$0xff]
        %v4925 = vld [vmem:[%s4815 + $0x81] sm:$0xff]
        %v4926 = vld [vmem:[%s4815 + $0x91] sm:$0xff]
        %v4927 = vld [vmem:[%s4815 + $0x99] sm:$0xff]
        %v4928 = vld [vmem:[%s4815 + $0xa9] sm:$0xff]
        %v4929 = vld [vmem:[%s4815 + $0xb1] sm:$0xff]
        %v4930 = vld [vmem:[%s4815 + $0xc1] sm:$0xff]
        %v4931 = vld [vmem:[%s4815 + $0xc9] sm:$0xff]
        %v4932 = vld [vmem:[%s4815 + $0xd9] sm:$0xff]
        %v4933 = vld [vmem:[%s4815 + $0xe1] sm:$0xff]
        %v4934 = vld [vmem:[%s4815 + $0xf1] sm:$0xff]
        %v4935 = vld [vmem:[%s4815 + $0xf9] sm:$0xff]
        %v4936 = vld [vmem:[%s4815 + $0x109] sm:$0xff]
        %v4937 = vld [vmem:[%s4815 + $0x111] sm:$0xff]
        %v4938 = vld [vmem:[%s4815 + $0x121] sm:$0xff]
        %v4939 = vld [vmem:[%s4815 + $0x129] sm:$0xff]
        %v4940 = vld [vmem:[%s4815 + $0x139] sm:$0xff]
        %v4941 = vld [vmem:[%s4815 + $0x141] sm:$0xff]
        %v4942 = vld [vmem:[%s4815 + $0x151] sm:$0xff]
        %v4943 = vld [vmem:[%s4815 + $0x159] sm:$0xff]
        %v4944 = vld [vmem:[%s4815 + $0x169] sm:$0xff]
        %v4945 = vld [vmem:[%s4815 + $0x171] sm:$0xff]
        %v4946 = vperm.slane %v4913, 0
        %v4947 = vmul.f32 %v4914, %v4946
        %v4948 = vmul.f32 %v4915, %v4946
        %v4949 = vmul.f32 %v4916, %v4946
        %v4950 = vmul.f32 %v4917, %v4946
        %v4951 = vmul.f32 %v4918, %v4946
        %v4952 = vmul.f32 %v4919, %v4946
        %v4953 = vmul.f32 %v4920, %v4946
        %v4954 = vmul.f32 %v4921, %v4946
        %v4955 = vmul.f32 %v4922, %v4946
        %v4956 = vmul.f32 %v4923, %v4946
        %v4957 = vmul.f32 %v4924, %v4946
        %v4958 = vmul.f32 %v4925, %v4946
        %v4959 = vmul.f32 %v4926, %v4946
        %v4960 = vmul.f32 %v4927, %v4946
        %v4961 = vmul.f32 %v4928, %v4946
        %v4962 = vmul.f32 %v4929, %v4946
        %v4963 = vmul.f32 %v4930, %v4946
        %v4964 = vmul.f32 %v4931, %v4946
        %v4965 = vmul.f32 %v4932, %v4946
        %v4966 = vmul.f32 %v4933, %v4946
        %v4967 = vmul.f32 %v4934, %v4946
        %v4968 = vmul.f32 %v4935, %v4946
        %v4969 = vmul.f32 %v4936, %v4946
        %v4970 = vmul.f32 %v4937, %v4946
        %v4971 = vmul.f32 %v4938, %v4946
        %v4972 = vmul.f32 %v4939, %v4946
        %v4973 = vmul.f32 %v4940, %v4946
        %v4974 = vmul.f32 %v4941, %v4946
        %v4975 = vmul.f32 %v4942, %v4946
        %v4976 = vmul.f32 %v4943, %v4946
        %v4977 = vmul.f32 %v4944, %v4946
        %v4978 = vmul.f32 %v4945, %v4946
        %v4979 = vadd.f32 %v4881, %v4947
        %v4980 = vadd.f32 %v4882, %v4948
        %v4981 = vadd.f32 %v4883, %v4949
        %v4982 = vadd.f32 %v4884, %v4950
        %v4983 = vadd.f32 %v4885, %v4951
        %v4984 = vadd.f32 %v4886, %v4952
        %v4985 = vadd.f32 %v4887, %v4953
        %v4986 = vadd.f32 %v4888, %v4954
        %v4987 = vadd.f32 %v4889, %v4955
        %v4988 = vadd.f32 %v4890, %v4956
        %v4989 = vadd.f32 %v4891, %v4957
        %v4990 = vadd.f32 %v4892, %v4958
        %v4991 = vadd.f32 %v4893, %v4959
        %v4992 = vadd.f32 %v4894, %v4960
        %v4993 = vadd.f32 %v4895, %v4961
        %v4994 = vadd.f32 %v4896, %v4962
        %v4995 = vadd.f32 %v4897, %v4963
        %v4996 = vadd.f32 %v4898, %v4964
        %v4997 = vadd.f32 %v4899, %v4965
        %v4998 = vadd.f32 %v4900, %v4966
        %v4999 = vadd.f32 %v4901, %v4967
        %v5000 = vadd.f32 %v4902, %v4968
        %v5001 = vadd.f32 %v4903, %v4969
        %v5002 = vadd.f32 %v4904, %v4970
        %v5003 = vadd.f32 %v4905, %v4971
        %v5004 = vadd.f32 %v4906, %v4972
        %v5005 = vadd.f32 %v4907, %v4973
        %v5006 = vadd.f32 %v4908, %v4974
        %v5007 = vadd.f32 %v4909, %v4975
        %v5008 = vadd.f32 %v4910, %v4976
        %v5009 = vadd.f32 %v4911, %v4977
        %v5010 = vadd.f32 %v4912, %v4978
        %v5011 = vld [vmem:[%s6 + $0x25] sm:$0x1]
        %v5012 = vld [vmem:[%s4815 + $0x2] sm:$0xff]
        %v5013 = vld [vmem:[%s4815 + $0xa] sm:$0xff]
        %v5014 = vld [vmem:[%s4815 + $0x1a] sm:$0xff]
        %v5015 = vld [vmem:[%s4815 + $0x22] sm:$0xff]
        %v5016 = vld [vmem:[%s4815 + $0x32] sm:$0xff]
        %v5017 = vld [vmem:[%s4815 + $0x3a] sm:$0xff]
        %v5018 = vld [vmem:[%s4815 + $0x4a] sm:$0xff]
        %v5019 = vld [vmem:[%s4815 + $0x52] sm:$0xff]
        %v5020 = vld [vmem:[%s4815 + $0x62] sm:$0xff]
        %v5021 = vld [vmem:[%s4815 + $0x6a] sm:$0xff]
        %v5022 = vld [vmem:[%s4815 + $0x7a] sm:$0xff]
        %v5023 = vld [vmem:[%s4815 + $0x82] sm:$0xff]
        %v5024 = vld [vmem:[%s4815 + $0x92] sm:$0xff]
        %v5025 = vld [vmem:[%s4815 + $0x9a] sm:$0xff]
        %v5026 = vld [vmem:[%s4815 + $0xaa] sm:$0xff]
        %v5027 = vld [vmem:[%s4815 + $0xb2] sm:$0xff]
        %v5028 = vld [vmem:[%s4815 + $0xc2] sm:$0xff]
        %v5029 = vld [vmem:[%s4815 + $0xca] sm:$0xff]
        %v5030 = vld [vmem:[%s4815 + $0xda] sm:$0xff]
        %v5031 = vld [vmem:[%s4815 + $0xe2] sm:$0xff]
        %v5032 = vld [vmem:[%s4815 + $0xf2] sm:$0xff]
        %v5033 = vld [vmem:[%s4815 + $0xfa] sm:$0xff]
        %v5034 = vld [vmem:[%s4815 + $0x10a] sm:$0xff]
        %v5035 = vld [vmem:[%s4815 + $0x112] sm:$0xff]
        %v5036 = vld [vmem:[%s4815 + $0x122] sm:$0xff]
        %v5037 = vld [vmem:[%s4815 + $0x12a] sm:$0xff]
        %v5038 = vld [vmem:[%s4815 + $0x13a] sm:$0xff]
        %v5039 = vld [vmem:[%s4815 + $0x142] sm:$0xff]
        %v5040 = vld [vmem:[%s4815 + $0x152] sm:$0xff]
        %v5041 = vld [vmem:[%s4815 + $0x15a] sm:$0xff]
        %v5042 = vld [vmem:[%s4815 + $0x16a] sm:$0xff]
        %v5043 = vld [vmem:[%s4815 + $0x172] sm:$0xff]
        %v5044 = vperm.slane %v5011, 0
        %v5045 = vmul.f32 %v5012, %v5044
        %v5046 = vmul.f32 %v5013, %v5044
        %v5047 = vmul.f32 %v5014, %v5044
        %v5048 = vmul.f32 %v5015, %v5044
        %v5049 = vmul.f32 %v5016, %v5044
        %v5050 = vmul.f32 %v5017, %v5044
        %v5051 = vmul.f32 %v5018, %v5044
        %v5052 = vmul.f32 %v5019, %v5044
        %v5053 = vmul.f32 %v5020, %v5044
        %v5054 = vmul.f32 %v5021, %v5044
        %v5055 = vmul.f32 %v5022, %v5044
        %v5056 = vmul.f32 %v5023, %v5044
        %v5057 = vmul.f32 %v5024, %v5044
        %v5058 = vmul.f32 %v5025, %v5044
        %v5059 = vmul.f32 %v5026, %v5044
        %v5060 = vmul.f32 %v5027, %v5044
        %v5061 = vmul.f32 %v5028, %v5044
        %v5062 = vmul.f32 %v5029, %v5044
        %v5063 = vmul.f32 %v5030, %v5044
        %v5064 = vmul.f32 %v5031, %v5044
        %v5065 = vmul.f32 %v5032, %v5044
        %v5066 = vmul.f32 %v5033, %v5044
        %v5067 = vmul.f32 %v5034, %v5044
        %v5068 = vmul.f32 %v5035, %v5044
        %v5069 = vmul.f32 %v5036, %v5044
        %v5070 = vmul.f32 %v5037, %v5044
        %v5071 = vmul.f32 %v5038, %v5044
        %v5072 = vmul.f32 %v5039, %v5044
        %v5073 = vmul.f32 %v5040, %v5044
        %v5074 = vmul.f32 %v5041, %v5044
        %v5075 = vmul.f32 %v5042, %v5044
        %v5076 = vmul.f32 %v5043, %v5044
        %v5077 = vadd.f32 %v4979, %v5045
        %v5078 = vadd.f32 %v4980, %v5046
        %v5079 = vadd.f32 %v4981, %v5047
        %v5080 = vadd.f32 %v4982, %v5048
        %v5081 = vadd.f32 %v4983, %v5049
        %v5082 = vadd.f32 %v4984, %v5050
        %v5083 = vadd.f32 %v4985, %v5051
        %v5084 = vadd.f32 %v4986, %v5052
        %v5085 = vadd.f32 %v4987, %v5053
        %v5086 = vadd.f32 %v4988, %v5054
        %v5087 = vadd.f32 %v4989, %v5055
        %v5088 = vadd.f32 %v4990, %v5056
        %v5089 = vadd.f32 %v4991, %v5057
        %v5090 = vadd.f32 %v4992, %v5058
        %v5091 = vadd.f32 %v4993, %v5059
        %v5092 = vadd.f32 %v4994, %v5060
        %v5093 = vadd.f32 %v4995, %v5061
        %v5094 = vadd.f32 %v4996, %v5062
        %v5095 = vadd.f32 %v4997, %v5063
        %v5096 = vadd.f32 %v4998, %v5064
        %v5097 = vadd.f32 %v4999, %v5065
        %v5098 = vadd.f32 %v5000, %v5066
        %v5099 = vadd.f32 %v5001, %v5067
        %v5100 = vadd.f32 %v5002, %v5068
        %v5101 = vadd.f32 %v5003, %v5069
        %v5102 = vadd.f32 %v5004, %v5070
        %v5103 = vadd.f32 %v5005, %v5071
        %v5104 = vadd.f32 %v5006, %v5072
        %v5105 = vadd.f32 %v5007, %v5073
        %v5106 = vadd.f32 %v5008, %v5074
        %v5107 = vadd.f32 %v5009, %v5075
        %v5108 = vadd.f32 %v5010, %v5076
        %v5109 = vld [vmem:[%s6 + $0x26] sm:$0x1]
        %v5110 = vld [vmem:[%s4815 + $0x3] sm:$0xff]
        %v5111 = vld [vmem:[%s4815 + $0xb] sm:$0xff]
        %v5112 = vld [vmem:[%s4815 + $0x1b] sm:$0xff]
        %v5113 = vld [vmem:[%s4815 + $0x23] sm:$0xff]
        %v5114 = vld [vmem:[%s4815 + $0x33] sm:$0xff]
        %v5115 = vld [vmem:[%s4815 + $0x3b] sm:$0xff]
        %v5116 = vld [vmem:[%s4815 + $0x4b] sm:$0xff]
        %v5117 = vld [vmem:[%s4815 + $0x53] sm:$0xff]
        %v5118 = vld [vmem:[%s4815 + $0x63] sm:$0xff]
        %v5119 = vld [vmem:[%s4815 + $0x6b] sm:$0xff]
        %v5120 = vld [vmem:[%s4815 + $0x7b] sm:$0xff]
        %v5121 = vld [vmem:[%s4815 + $0x83] sm:$0xff]
        %v5122 = vld [vmem:[%s4815 + $0x93] sm:$0xff]
        %v5123 = vld [vmem:[%s4815 + $0x9b] sm:$0xff]
        %v5124 = vld [vmem:[%s4815 + $0xab] sm:$0xff]
        %v5125 = vld [vmem:[%s4815 + $0xb3] sm:$0xff]
        %v5126 = vld [vmem:[%s4815 + $0xc3] sm:$0xff]
        %v5127 = vld [vmem:[%s4815 + $0xcb] sm:$0xff]
        %v5128 = vld [vmem:[%s4815 + $0xdb] sm:$0xff]
        %v5129 = vld [vmem:[%s4815 + $0xe3] sm:$0xff]
        %v5130 = vld [vmem:[%s4815 + $0xf3] sm:$0xff]
        %v5131 = vld [vmem:[%s4815 + $0xfb] sm:$0xff]
        %v5132 = vld [vmem:[%s4815 + $0x10b] sm:$0xff]
        %v5133 = vld [vmem:[%s4815 + $0x113] sm:$0xff]
        %v5134 = vld [vmem:[%s4815 + $0x123] sm:$0xff]
        %v5135 = vld [vmem:[%s4815 + $0x12b] sm:$0xff]
        %v5136 = vld [vmem:[%s4815 + $0x13b] sm:$0xff]
        %v5137 = vld [vmem:[%s4815 + $0x143] sm:$0xff]
        %v5138 = vld [vmem:[%s4815 + $0x153] sm:$0xff]
        %v5139 = vld [vmem:[%s4815 + $0x15b] sm:$0xff]
        %v5140 = vld [vmem:[%s4815 + $0x16b] sm:$0xff]
        %v5141 = vld [vmem:[%s4815 + $0x173] sm:$0xff]
        %v5142 = vperm.slane %v5109, 0
        %v5143 = vmul.f32 %v5110, %v5142
        %v5144 = vmul.f32 %v5111, %v5142
        %v5145 = vmul.f32 %v5112, %v5142
        %v5146 = vmul.f32 %v5113, %v5142
        %v5147 = vmul.f32 %v5114, %v5142
        %v5148 = vmul.f32 %v5115, %v5142
        %v5149 = vmul.f32 %v5116, %v5142
        %v5150 = vmul.f32 %v5117, %v5142
        %v5151 = vmul.f32 %v5118, %v5142
        %v5152 = vmul.f32 %v5119, %v5142
        %v5153 = vmul.f32 %v5120, %v5142
        %v5154 = vmul.f32 %v5121, %v5142
        %v5155 = vmul.f32 %v5122, %v5142
        %v5156 = vmul.f32 %v5123, %v5142
        %v5157 = vmul.f32 %v5124, %v5142
        %v5158 = vmul.f32 %v5125, %v5142
        %v5159 = vmul.f32 %v5126, %v5142
        %v5160 = vmul.f32 %v5127, %v5142
        %v5161 = vmul.f32 %v5128, %v5142
        %v5162 = vmul.f32 %v5129, %v5142
        %v5163 = vmul.f32 %v5130, %v5142
        %v5164 = vmul.f32 %v5131, %v5142
        %v5165 = vmul.f32 %v5132, %v5142
        %v5166 = vmul.f32 %v5133, %v5142
        %v5167 = vmul.f32 %v5134, %v5142
        %v5168 = vmul.f32 %v5135, %v5142
        %v5169 = vmul.f32 %v5136, %v5142
        %v5170 = vmul.f32 %v5137, %v5142
        %v5171 = vmul.f32 %v5138, %v5142
        %v5172 = vmul.f32 %v5139, %v5142
        %v5173 = vmul.f32 %v5140, %v5142
        %v5174 = vmul.f32 %v5141, %v5142
        %v5175 = vadd.f32 %v5077, %v5143
        %v5176 = vadd.f32 %v5078, %v5144
        %v5177 = vadd.f32 %v5079, %v5145
        %v5178 = vadd.f32 %v5080, %v5146
        %v5179 = vadd.f32 %v5081, %v5147
        %v5180 = vadd.f32 %v5082, %v5148
        %v5181 = vadd.f32 %v5083, %v5149
        %v5182 = vadd.f32 %v5084, %v5150
        %v5183 = vadd.f32 %v5085, %v5151
        %v5184 = vadd.f32 %v5086, %v5152
        %v5185 = vadd.f32 %v5087, %v5153
        %v5186 = vadd.f32 %v5088, %v5154
        %v5187 = vadd.f32 %v5089, %v5155
        %v5188 = vadd.f32 %v5090, %v5156
        %v5189 = vadd.f32 %v5091, %v5157
        %v5190 = vadd.f32 %v5092, %v5158
        %v5191 = vadd.f32 %v5093, %v5159
        %v5192 = vadd.f32 %v5094, %v5160
        %v5193 = vadd.f32 %v5095, %v5161
        %v5194 = vadd.f32 %v5096, %v5162
        %v5195 = vadd.f32 %v5097, %v5163
        %v5196 = vadd.f32 %v5098, %v5164
        %v5197 = vadd.f32 %v5099, %v5165
        %v5198 = vadd.f32 %v5100, %v5166
        %v5199 = vadd.f32 %v5101, %v5167
        %v5200 = vadd.f32 %v5102, %v5168
        %v5201 = vadd.f32 %v5103, %v5169
        %v5202 = vadd.f32 %v5104, %v5170
        %v5203 = vadd.f32 %v5105, %v5171
        %v5204 = vadd.f32 %v5106, %v5172
        %v5205 = vadd.f32 %v5107, %v5173
        %v5206 = vadd.f32 %v5108, %v5174
        %v5207 = vld [vmem:[%s6 + $0x27] sm:$0x1]
        %v5208 = vld [vmem:[%s4815 + $0x4] sm:$0xff]
        %v5209 = vld [vmem:[%s4815 + $0xc] sm:$0xff]
        %v5210 = vld [vmem:[%s4815 + $0x1c] sm:$0xff]
        %v5211 = vld [vmem:[%s4815 + $0x24] sm:$0xff]
        %v5212 = vld [vmem:[%s4815 + $0x34] sm:$0xff]
        %v5213 = vld [vmem:[%s4815 + $0x3c] sm:$0xff]
        %v5214 = vld [vmem:[%s4815 + $0x4c] sm:$0xff]
        %v5215 = vld [vmem:[%s4815 + $0x54] sm:$0xff]
        %v5216 = vld [vmem:[%s4815 + $0x64] sm:$0xff]
        %v5217 = vld [vmem:[%s4815 + $0x6c] sm:$0xff]
        %v5218 = vld [vmem:[%s4815 + $0x7c] sm:$0xff]
        %v5219 = vld [vmem:[%s4815 + $0x84] sm:$0xff]
        %v5220 = vld [vmem:[%s4815 + $0x94] sm:$0xff]
        %v5221 = vld [vmem:[%s4815 + $0x9c] sm:$0xff]
        %v5222 = vld [vmem:[%s4815 + $0xac] sm:$0xff]
        %v5223 = vld [vmem:[%s4815 + $0xb4] sm:$0xff]
        %v5224 = vld [vmem:[%s4815 + $0xc4] sm:$0xff]
        %v5225 = vld [vmem:[%s4815 + $0xcc] sm:$0xff]
        %v5226 = vld [vmem:[%s4815 + $0xdc] sm:$0xff]
        %v5227 = vld [vmem:[%s4815 + $0xe4] sm:$0xff]
        %v5228 = vld [vmem:[%s4815 + $0xf4] sm:$0xff]
        %v5229 = vld [vmem:[%s4815 + $0xfc] sm:$0xff]
        %v5230 = vld [vmem:[%s4815 + $0x10c] sm:$0xff]
        %v5231 = vld [vmem:[%s4815 + $0x114] sm:$0xff]
        %v5232 = vld [vmem:[%s4815 + $0x124] sm:$0xff]
        %v5233 = vld [vmem:[%s4815 + $0x12c] sm:$0xff]
        %v5234 = vld [vmem:[%s4815 + $0x13c] sm:$0xff]
        %v5235 = vld [vmem:[%s4815 + $0x144] sm:$0xff]
        %v5236 = vld [vmem:[%s4815 + $0x154] sm:$0xff]
        %v5237 = vld [vmem:[%s4815 + $0x15c] sm:$0xff]
        %v5238 = vld [vmem:[%s4815 + $0x16c] sm:$0xff]
        %v5239 = vld [vmem:[%s4815 + $0x174] sm:$0xff]
        %v5240 = vperm.slane %v5207, 0
        %v5241 = vmul.f32 %v5208, %v5240
        %v5242 = vmul.f32 %v5209, %v5240
        %v5243 = vmul.f32 %v5210, %v5240
        %v5244 = vmul.f32 %v5211, %v5240
        %v5245 = vmul.f32 %v5212, %v5240
        %v5246 = vmul.f32 %v5213, %v5240
        %v5247 = vmul.f32 %v5214, %v5240
        %v5248 = vmul.f32 %v5215, %v5240
        %v5249 = vmul.f32 %v5216, %v5240
        %v5250 = vmul.f32 %v5217, %v5240
        %v5251 = vmul.f32 %v5218, %v5240
        %v5252 = vmul.f32 %v5219, %v5240
        %v5253 = vmul.f32 %v5220, %v5240
        %v5254 = vmul.f32 %v5221, %v5240
        %v5255 = vmul.f32 %v5222, %v5240
        %v5256 = vmul.f32 %v5223, %v5240
        %v5257 = vmul.f32 %v5224, %v5240
        %v5258 = vmul.f32 %v5225, %v5240
        %v5259 = vmul.f32 %v5226, %v5240
        %v5260 = vmul.f32 %v5227, %v5240
        %v5261 = vmul.f32 %v5228, %v5240
        %v5262 = vmul.f32 %v5229, %v5240
        %v5263 = vmul.f32 %v5230, %v5240
        %v5264 = vmul.f32 %v5231, %v5240
        %v5265 = vmul.f32 %v5232, %v5240
        %v5266 = vmul.f32 %v5233, %v5240
        %v5267 = vmul.f32 %v5234, %v5240
        %v5268 = vmul.f32 %v5235, %v5240
        %v5269 = vmul.f32 %v5236, %v5240
        %v5270 = vmul.f32 %v5237, %v5240
        %v5271 = vmul.f32 %v5238, %v5240
        %v5272 = vmul.f32 %v5239, %v5240
        %v5273 = vadd.f32 %v5175, %v5241
        %v5274 = vadd.f32 %v5176, %v5242
        %v5275 = vadd.f32 %v5177, %v5243
        %v5276 = vadd.f32 %v5178, %v5244
        %v5277 = vadd.f32 %v5179, %v5245
        %v5278 = vadd.f32 %v5180, %v5246
        %v5279 = vadd.f32 %v5181, %v5247
        %v5280 = vadd.f32 %v5182, %v5248
        %v5281 = vadd.f32 %v5183, %v5249
        %v5282 = vadd.f32 %v5184, %v5250
        %v5283 = vadd.f32 %v5185, %v5251
        %v5284 = vadd.f32 %v5186, %v5252
        %v5285 = vadd.f32 %v5187, %v5253
        %v5286 = vadd.f32 %v5188, %v5254
        %v5287 = vadd.f32 %v5189, %v5255
        %v5288 = vadd.f32 %v5190, %v5256
        %v5289 = vadd.f32 %v5191, %v5257
        %v5290 = vadd.f32 %v5192, %v5258
        %v5291 = vadd.f32 %v5193, %v5259
        %v5292 = vadd.f32 %v5194, %v5260
        %v5293 = vadd.f32 %v5195, %v5261
        %v5294 = vadd.f32 %v5196, %v5262
        %v5295 = vadd.f32 %v5197, %v5263
        %v5296 = vadd.f32 %v5198, %v5264
        %v5297 = vadd.f32 %v5199, %v5265
        %v5298 = vadd.f32 %v5200, %v5266
        %v5299 = vadd.f32 %v5201, %v5267
        %v5300 = vadd.f32 %v5202, %v5268
        %v5301 = vadd.f32 %v5203, %v5269
        %v5302 = vadd.f32 %v5204, %v5270
        %v5303 = vadd.f32 %v5205, %v5271
        %v5304 = vadd.f32 %v5206, %v5272
        %v5305 = vld [vmem:[%s6 + $0x28] sm:$0x1]
        %v5306 = vld [vmem:[%s4815 + $0x5] sm:$0xff]
        %v5307 = vld [vmem:[%s4815 + $0xd] sm:$0xff]
        %v5308 = vld [vmem:[%s4815 + $0x1d] sm:$0xff]
        %v5309 = vld [vmem:[%s4815 + $0x25] sm:$0xff]
        %v5310 = vld [vmem:[%s4815 + $0x35] sm:$0xff]
        %v5311 = vld [vmem:[%s4815 + $0x3d] sm:$0xff]
        %v5312 = vld [vmem:[%s4815 + $0x4d] sm:$0xff]
        %v5313 = vld [vmem:[%s4815 + $0x55] sm:$0xff]
        %v5314 = vld [vmem:[%s4815 + $0x65] sm:$0xff]
        %v5315 = vld [vmem:[%s4815 + $0x6d] sm:$0xff]
        %v5316 = vld [vmem:[%s4815 + $0x7d] sm:$0xff]
        %v5317 = vld [vmem:[%s4815 + $0x85] sm:$0xff]
        %v5318 = vld [vmem:[%s4815 + $0x95] sm:$0xff]
        %v5319 = vld [vmem:[%s4815 + $0x9d] sm:$0xff]
        %v5320 = vld [vmem:[%s4815 + $0xad] sm:$0xff]
        %v5321 = vld [vmem:[%s4815 + $0xb5] sm:$0xff]
        %v5322 = vld [vmem:[%s4815 + $0xc5] sm:$0xff]
        %v5323 = vld [vmem:[%s4815 + $0xcd] sm:$0xff]
        %v5324 = vld [vmem:[%s4815 + $0xdd] sm:$0xff]
        %v5325 = vld [vmem:[%s4815 + $0xe5] sm:$0xff]
        %v5326 = vld [vmem:[%s4815 + $0xf5] sm:$0xff]
        %v5327 = vld [vmem:[%s4815 + $0xfd] sm:$0xff]
        %v5328 = vld [vmem:[%s4815 + $0x10d] sm:$0xff]
        %v5329 = vld [vmem:[%s4815 + $0x115] sm:$0xff]
        %v5330 = vld [vmem:[%s4815 + $0x125] sm:$0xff]
        %v5331 = vld [vmem:[%s4815 + $0x12d] sm:$0xff]
        %v5332 = vld [vmem:[%s4815 + $0x13d] sm:$0xff]
        %v5333 = vld [vmem:[%s4815 + $0x145] sm:$0xff]
        %v5334 = vld [vmem:[%s4815 + $0x155] sm:$0xff]
        %v5335 = vld [vmem:[%s4815 + $0x15d] sm:$0xff]
        %v5336 = vld [vmem:[%s4815 + $0x16d] sm:$0xff]
        %v5337 = vld [vmem:[%s4815 + $0x175] sm:$0xff]
        %v5338 = vperm.slane %v5305, 0
        %v5339 = vmul.f32 %v5306, %v5338
        %v5340 = vmul.f32 %v5307, %v5338
        %v5341 = vmul.f32 %v5308, %v5338
        %v5342 = vmul.f32 %v5309, %v5338
        %v5343 = vmul.f32 %v5310, %v5338
        %v5344 = vmul.f32 %v5311, %v5338
        %v5345 = vmul.f32 %v5312, %v5338
        %v5346 = vmul.f32 %v5313, %v5338
        %v5347 = vmul.f32 %v5314, %v5338
        %v5348 = vmul.f32 %v5315, %v5338
        %v5349 = vmul.f32 %v5316, %v5338
        %v5350 = vmul.f32 %v5317, %v5338
        %v5351 = vmul.f32 %v5318, %v5338
        %v5352 = vmul.f32 %v5319, %v5338
        %v5353 = vmul.f32 %v5320, %v5338
        %v5354 = vmul.f32 %v5321, %v5338
        %v5355 = vmul.f32 %v5322, %v5338
        %v5356 = vmul.f32 %v5323, %v5338
        %v5357 = vmul.f32 %v5324, %v5338
        %v5358 = vmul.f32 %v5325, %v5338
        %v5359 = vmul.f32 %v5326, %v5338
        %v5360 = vmul.f32 %v5327, %v5338
        %v5361 = vmul.f32 %v5328, %v5338
        %v5362 = vmul.f32 %v5329, %v5338
        %v5363 = vmul.f32 %v5330, %v5338
        %v5364 = vmul.f32 %v5331, %v5338
        %v5365 = vmul.f32 %v5332, %v5338
        %v5366 = vmul.f32 %v5333, %v5338
        %v5367 = vmul.f32 %v5334, %v5338
        %v5368 = vmul.f32 %v5335, %v5338
        %v5369 = vmul.f32 %v5336, %v5338
        %v5370 = vmul.f32 %v5337, %v5338
        %v5371 = vadd.f32 %v5273, %v5339
        %v5372 = vadd.f32 %v5274, %v5340
        %v5373 = vadd.f32 %v5275, %v5341
        %v5374 = vadd.f32 %v5276, %v5342
        %v5375 = vadd.f32 %v5277, %v5343
        %v5376 = vadd.f32 %v5278, %v5344
        %v5377 = vadd.f32 %v5279, %v5345
        %v5378 = vadd.f32 %v5280, %v5346
        %v5379 = vadd.f32 %v5281, %v5347
        %v5380 = vadd.f32 %v5282, %v5348
        %v5381 = vadd.f32 %v5283, %v5349
        %v5382 = vadd.f32 %v5284, %v5350
        %v5383 = vadd.f32 %v5285, %v5351
        %v5384 = vadd.f32 %v5286, %v5352
        %v5385 = vadd.f32 %v5287, %v5353
        %v5386 = vadd.f32 %v5288, %v5354
        %v5387 = vadd.f32 %v5289, %v5355
        %v5388 = vadd.f32 %v5290, %v5356
        %v5389 = vadd.f32 %v5291, %v5357
        %v5390 = vadd.f32 %v5292, %v5358
        %v5391 = vadd.f32 %v5293, %v5359
        %v5392 = vadd.f32 %v5294, %v5360
        %v5393 = vadd.f32 %v5295, %v5361
        %v5394 = vadd.f32 %v5296, %v5362
        %v5395 = vadd.f32 %v5297, %v5363
        %v5396 = vadd.f32 %v5298, %v5364
        %v5397 = vadd.f32 %v5299, %v5365
        %v5398 = vadd.f32 %v5300, %v5366
        %v5399 = vadd.f32 %v5301, %v5367
        %v5400 = vadd.f32 %v5302, %v5368
        %v5401 = vadd.f32 %v5303, %v5369
        %v5402 = vadd.f32 %v5304, %v5370
        %v5403 = vld [vmem:[%s6 + $0x29] sm:$0x1]
        %v5404 = vld [vmem:[%s4815 + $0x6] sm:$0xff]
        %v5405 = vld [vmem:[%s4815 + $0xe] sm:$0xff]
        %v5406 = vld [vmem:[%s4815 + $0x1e] sm:$0xff]
        %v5407 = vld [vmem:[%s4815 + $0x26] sm:$0xff]
        %v5408 = vld [vmem:[%s4815 + $0x36] sm:$0xff]
        %v5409 = vld [vmem:[%s4815 + $0x3e] sm:$0xff]
        %v5410 = vld [vmem:[%s4815 + $0x4e] sm:$0xff]
        %v5411 = vld [vmem:[%s4815 + $0x56] sm:$0xff]
        %v5412 = vld [vmem:[%s4815 + $0x66] sm:$0xff]
        %v5413 = vld [vmem:[%s4815 + $0x6e] sm:$0xff]
        %v5414 = vld [vmem:[%s4815 + $0x7e] sm:$0xff]
        %v5415 = vld [vmem:[%s4815 + $0x86] sm:$0xff]
        %v5416 = vld [vmem:[%s4815 + $0x96] sm:$0xff]
        %v5417 = vld [vmem:[%s4815 + $0x9e] sm:$0xff]
        %v5418 = vld [vmem:[%s4815 + $0xae] sm:$0xff]
        %v5419 = vld [vmem:[%s4815 + $0xb6] sm:$0xff]
        %v5420 = vld [vmem:[%s4815 + $0xc6] sm:$0xff]
        %v5421 = vld [vmem:[%s4815 + $0xce] sm:$0xff]
        %v5422 = vld [vmem:[%s4815 + $0xde] sm:$0xff]
        %v5423 = vld [vmem:[%s4815 + $0xe6] sm:$0xff]
        %v5424 = vld [vmem:[%s4815 + $0xf6] sm:$0xff]
        %v5425 = vld [vmem:[%s4815 + $0xfe] sm:$0xff]
        %v5426 = vld [vmem:[%s4815 + $0x10e] sm:$0xff]
        %v5427 = vld [vmem:[%s4815 + $0x116] sm:$0xff]
        %v5428 = vld [vmem:[%s4815 + $0x126] sm:$0xff]
        %v5429 = vld [vmem:[%s4815 + $0x12e] sm:$0xff]
        %v5430 = vld [vmem:[%s4815 + $0x13e] sm:$0xff]
        %v5431 = vld [vmem:[%s4815 + $0x146] sm:$0xff]
        %v5432 = vld [vmem:[%s4815 + $0x156] sm:$0xff]
        %v5433 = vld [vmem:[%s4815 + $0x15e] sm:$0xff]
        %v5434 = vld [vmem:[%s4815 + $0x16e] sm:$0xff]
        %v5435 = vld [vmem:[%s4815 + $0x176] sm:$0xff]
        %v5436 = vperm.slane %v5403, 0
        %v5437 = vmul.f32 %v5404, %v5436
        %v5438 = vmul.f32 %v5405, %v5436
        %v5439 = vmul.f32 %v5406, %v5436
        %v5440 = vmul.f32 %v5407, %v5436
        %v5441 = vmul.f32 %v5408, %v5436
        %v5442 = vmul.f32 %v5409, %v5436
        %v5443 = vmul.f32 %v5410, %v5436
        %v5444 = vmul.f32 %v5411, %v5436
        %v5445 = vmul.f32 %v5412, %v5436
        %v5446 = vmul.f32 %v5413, %v5436
        %v5447 = vmul.f32 %v5414, %v5436
        %v5448 = vmul.f32 %v5415, %v5436
        %v5449 = vmul.f32 %v5416, %v5436
        %v5450 = vmul.f32 %v5417, %v5436
        %v5451 = vmul.f32 %v5418, %v5436
        %v5452 = vmul.f32 %v5419, %v5436
        %v5453 = vmul.f32 %v5420, %v5436
        %v5454 = vmul.f32 %v5421, %v5436
        %v5455 = vmul.f32 %v5422, %v5436
        %v5456 = vmul.f32 %v5423, %v5436
        %v5457 = vmul.f32 %v5424, %v5436
        %v5458 = vmul.f32 %v5425, %v5436
        %v5459 = vmul.f32 %v5426, %v5436
        %v5460 = vmul.f32 %v5427, %v5436
        %v5461 = vmul.f32 %v5428, %v5436
        %v5462 = vmul.f32 %v5429, %v5436
        %v5463 = vmul.f32 %v5430, %v5436
        %v5464 = vmul.f32 %v5431, %v5436
        %v5465 = vmul.f32 %v5432, %v5436
        %v5466 = vmul.f32 %v5433, %v5436
        %v5467 = vmul.f32 %v5434, %v5436
        %v5468 = vmul.f32 %v5435, %v5436
        %v5469 = vadd.f32 %v5371, %v5437
        %v5470 = vadd.f32 %v5372, %v5438
        %v5471 = vadd.f32 %v5373, %v5439
        %v5472 = vadd.f32 %v5374, %v5440
        %v5473 = vadd.f32 %v5375, %v5441
        %v5474 = vadd.f32 %v5376, %v5442
        %v5475 = vadd.f32 %v5377, %v5443
        %v5476 = vadd.f32 %v5378, %v5444
        %v5477 = vadd.f32 %v5379, %v5445
        %v5478 = vadd.f32 %v5380, %v5446
        %v5479 = vadd.f32 %v5381, %v5447
        %v5480 = vadd.f32 %v5382, %v5448
        %v5481 = vadd.f32 %v5383, %v5449
        %v5482 = vadd.f32 %v5384, %v5450
        %v5483 = vadd.f32 %v5385, %v5451
        %v5484 = vadd.f32 %v5386, %v5452
        %v5485 = vadd.f32 %v5387, %v5453
        %v5486 = vadd.f32 %v5388, %v5454
        %v5487 = vadd.f32 %v5389, %v5455
        %v5488 = vadd.f32 %v5390, %v5456
        %v5489 = vadd.f32 %v5391, %v5457
        %v5490 = vadd.f32 %v5392, %v5458
        %v5491 = vadd.f32 %v5393, %v5459
        %v5492 = vadd.f32 %v5394, %v5460
        %v5493 = vadd.f32 %v5395, %v5461
        %v5494 = vadd.f32 %v5396, %v5462
        %v5495 = vadd.f32 %v5397, %v5463
        %v5496 = vadd.f32 %v5398, %v5464
        %v5497 = vadd.f32 %v5399, %v5465
        %v5498 = vadd.f32 %v5400, %v5466
        %v5499 = vadd.f32 %v5401, %v5467
        %v5500 = vadd.f32 %v5402, %v5468
        %v5501 = vld [vmem:[%s6 + $0x2a] sm:$0x1]
        %s5502 = scalar_lea.vmem [#allocation2], 144
        %v5503 = vld [vmem:[%s5502] sm:$0xff]
        %v5504 = vld [vmem:[%s5502 + $0x8] sm:$0xff]
        %v5505 = vld [vmem:[%s5502 + $0x18] sm:$0xff]
        %v5506 = vld [vmem:[%s5502 + $0x20] sm:$0xff]
        %v5507 = vld [vmem:[%s5502 + $0x30] sm:$0xff]
        %v5508 = vld [vmem:[%s5502 + $0x38] sm:$0xff]
        %v5509 = vld [vmem:[%s5502 + $0x48] sm:$0xff]
        %v5510 = vld [vmem:[%s5502 + $0x50] sm:$0xff]
        %v5511 = vld [vmem:[%s5502 + $0x60] sm:$0xff]
        %v5512 = vld [vmem:[%s5502 + $0x68] sm:$0xff]
        %v5513 = vld [vmem:[%s5502 + $0x78] sm:$0xff]
        %v5514 = vld [vmem:[%s5502 + $0x80] sm:$0xff]
        %v5515 = vld [vmem:[%s5502 + $0x90] sm:$0xff]
        %v5516 = vld [vmem:[%s5502 + $0x98] sm:$0xff]
        %v5517 = vld [vmem:[%s5502 + $0xa8] sm:$0xff]
        %v5518 = vld [vmem:[%s5502 + $0xb0] sm:$0xff]
        %v5519 = vld [vmem:[%s5502 + $0xc0] sm:$0xff]
        %v5520 = vld [vmem:[%s5502 + $0xc8] sm:$0xff]
        %v5521 = vld [vmem:[%s5502 + $0xd8] sm:$0xff]
        %v5522 = vld [vmem:[%s5502 + $0xe0] sm:$0xff]
        %v5523 = vld [vmem:[%s5502 + $0xf0] sm:$0xff]
        %v5524 = vld [vmem:[%s5502 + $0xf8] sm:$0xff]
        %v5525 = vld [vmem:[%s5502 + $0x108] sm:$0xff]
        %v5526 = vld [vmem:[%s5502 + $0x110] sm:$0xff]
        %v5527 = vld [vmem:[%s5502 + $0x120] sm:$0xff]
        %v5528 = vld [vmem:[%s5502 + $0x128] sm:$0xff]
        %v5529 = vld [vmem:[%s5502 + $0x138] sm:$0xff]
        %v5530 = vld [vmem:[%s5502 + $0x140] sm:$0xff]
        %v5531 = vld [vmem:[%s5502 + $0x150] sm:$0xff]
        %v5532 = vld [vmem:[%s5502 + $0x158] sm:$0xff]
        %v5533 = vld [vmem:[%s5502 + $0x168] sm:$0xff]
        %v5534 = vld [vmem:[%s5502 + $0x170] sm:$0xff]
        %v5535 = vperm.slane %v5501, 0
        %v5536 = vmul.f32 %v5503, %v5535
        %v5537 = vmul.f32 %v5504, %v5535
        %v5538 = vmul.f32 %v5505, %v5535
        %v5539 = vmul.f32 %v5506, %v5535
        %v5540 = vmul.f32 %v5507, %v5535
        %v5541 = vmul.f32 %v5508, %v5535
        %v5542 = vmul.f32 %v5509, %v5535
        %v5543 = vmul.f32 %v5510, %v5535
        %v5544 = vmul.f32 %v5511, %v5535
        %v5545 = vmul.f32 %v5512, %v5535
        %v5546 = vmul.f32 %v5513, %v5535
        %v5547 = vmul.f32 %v5514, %v5535
        %v5548 = vmul.f32 %v5515, %v5535
        %v5549 = vmul.f32 %v5516, %v5535
        %v5550 = vmul.f32 %v5517, %v5535
        %v5551 = vmul.f32 %v5518, %v5535
        %v5552 = vmul.f32 %v5519, %v5535
        %v5553 = vmul.f32 %v5520, %v5535
        %v5554 = vmul.f32 %v5521, %v5535
        %v5555 = vmul.f32 %v5522, %v5535
        %v5556 = vmul.f32 %v5523, %v5535
        %v5557 = vmul.f32 %v5524, %v5535
        %v5558 = vmul.f32 %v5525, %v5535
        %v5559 = vmul.f32 %v5526, %v5535
        %v5560 = vmul.f32 %v5527, %v5535
        %v5561 = vmul.f32 %v5528, %v5535
        %v5562 = vmul.f32 %v5529, %v5535
        %v5563 = vmul.f32 %v5530, %v5535
        %v5564 = vmul.f32 %v5531, %v5535
        %v5565 = vmul.f32 %v5532, %v5535
        %v5566 = vmul.f32 %v5533, %v5535
        %v5567 = vmul.f32 %v5534, %v5535
        %v5568 = vadd.f32 %v5469, %v5536
        %v5569 = vadd.f32 %v5470, %v5537
        %v5570 = vadd.f32 %v5471, %v5538
        %v5571 = vadd.f32 %v5472, %v5539
        %v5572 = vadd.f32 %v5473, %v5540
        %v5573 = vadd.f32 %v5474, %v5541
        %v5574 = vadd.f32 %v5475, %v5542
        %v5575 = vadd.f32 %v5476, %v5543
        %v5576 = vadd.f32 %v5477, %v5544
        %v5577 = vadd.f32 %v5478, %v5545
        %v5578 = vadd.f32 %v5479, %v5546
        %v5579 = vadd.f32 %v5480, %v5547
        %v5580 = vadd.f32 %v5481, %v5548
        %v5581 = vadd.f32 %v5482, %v5549
        %v5582 = vadd.f32 %v5483, %v5550
        %v5583 = vadd.f32 %v5484, %v5551
        %v5584 = vadd.f32 %v5485, %v5552
        %v5585 = vadd.f32 %v5486, %v5553
        %v5586 = vadd.f32 %v5487, %v5554
        %v5587 = vadd.f32 %v5488, %v5555
        %v5588 = vadd.f32 %v5489, %v5556
        %v5589 = vadd.f32 %v5490, %v5557
        %v5590 = vadd.f32 %v5491, %v5558
        %v5591 = vadd.f32 %v5492, %v5559
        %v5592 = vadd.f32 %v5493, %v5560
        %v5593 = vadd.f32 %v5494, %v5561
        %v5594 = vadd.f32 %v5495, %v5562
        %v5595 = vadd.f32 %v5496, %v5563
        %v5596 = vadd.f32 %v5497, %v5564
        %v5597 = vadd.f32 %v5498, %v5565
        %v5598 = vadd.f32 %v5499, %v5566
        %v5599 = vadd.f32 %v5500, %v5567
        %v5600 = vld [vmem:[%s6 + $0x2b] sm:$0x1]
        %v5601 = vld [vmem:[%s5502 + $0x1] sm:$0xff]
        %v5602 = vld [vmem:[%s5502 + $0x9] sm:$0xff]
        %v5603 = vld [vmem:[%s5502 + $0x19] sm:$0xff]
        %v5604 = vld [vmem:[%s5502 + $0x21] sm:$0xff]
        %v5605 = vld [vmem:[%s5502 + $0x31] sm:$0xff]
        %v5606 = vld [vmem:[%s5502 + $0x39] sm:$0xff]
        %v5607 = vld [vmem:[%s5502 + $0x49] sm:$0xff]
        %v5608 = vld [vmem:[%s5502 + $0x51] sm:$0xff]
        %v5609 = vld [vmem:[%s5502 + $0x61] sm:$0xff]
        %v5610 = vld [vmem:[%s5502 + $0x69] sm:$0xff]
        %v5611 = vld [vmem:[%s5502 + $0x79] sm:$0xff]
        %v5612 = vld [vmem:[%s5502 + $0x81] sm:$0xff]
        %v5613 = vld [vmem:[%s5502 + $0x91] sm:$0xff]
        %v5614 = vld [vmem:[%s5502 + $0x99] sm:$0xff]
        %v5615 = vld [vmem:[%s5502 + $0xa9] sm:$0xff]
        %v5616 = vld [vmem:[%s5502 + $0xb1] sm:$0xff]
        %v5617 = vld [vmem:[%s5502 + $0xc1] sm:$0xff]
        %v5618 = vld [vmem:[%s5502 + $0xc9] sm:$0xff]
        %v5619 = vld [vmem:[%s5502 + $0xd9] sm:$0xff]
        %v5620 = vld [vmem:[%s5502 + $0xe1] sm:$0xff]
        %v5621 = vld [vmem:[%s5502 + $0xf1] sm:$0xff]
        %v5622 = vld [vmem:[%s5502 + $0xf9] sm:$0xff]
        %v5623 = vld [vmem:[%s5502 + $0x109] sm:$0xff]
        %v5624 = vld [vmem:[%s5502 + $0x111] sm:$0xff]
        %v5625 = vld [vmem:[%s5502 + $0x121] sm:$0xff]
        %v5626 = vld [vmem:[%s5502 + $0x129] sm:$0xff]
        %v5627 = vld [vmem:[%s5502 + $0x139] sm:$0xff]
        %v5628 = vld [vmem:[%s5502 + $0x141] sm:$0xff]
        %v5629 = vld [vmem:[%s5502 + $0x151] sm:$0xff]
        %v5630 = vld [vmem:[%s5502 + $0x159] sm:$0xff]
        %v5631 = vld [vmem:[%s5502 + $0x169] sm:$0xff]
        %v5632 = vld [vmem:[%s5502 + $0x171] sm:$0xff]
        %v5633 = vperm.slane %v5600, 0
        %v5634 = vmul.f32 %v5601, %v5633
        %v5635 = vmul.f32 %v5602, %v5633
        %v5636 = vmul.f32 %v5603, %v5633
        %v5637 = vmul.f32 %v5604, %v5633
        %v5638 = vmul.f32 %v5605, %v5633
        %v5639 = vmul.f32 %v5606, %v5633
        %v5640 = vmul.f32 %v5607, %v5633
        %v5641 = vmul.f32 %v5608, %v5633
        %v5642 = vmul.f32 %v5609, %v5633
        %v5643 = vmul.f32 %v5610, %v5633
        %v5644 = vmul.f32 %v5611, %v5633
        %v5645 = vmul.f32 %v5612, %v5633
        %v5646 = vmul.f32 %v5613, %v5633
        %v5647 = vmul.f32 %v5614, %v5633
        %v5648 = vmul.f32 %v5615, %v5633
        %v5649 = vmul.f32 %v5616, %v5633
        %v5650 = vmul.f32 %v5617, %v5633
        %v5651 = vmul.f32 %v5618, %v5633
        %v5652 = vmul.f32 %v5619, %v5633
        %v5653 = vmul.f32 %v5620, %v5633
        %v5654 = vmul.f32 %v5621, %v5633
        %v5655 = vmul.f32 %v5622, %v5633
        %v5656 = vmul.f32 %v5623, %v5633
        %v5657 = vmul.f32 %v5624, %v5633
        %v5658 = vmul.f32 %v5625, %v5633
        %v5659 = vmul.f32 %v5626, %v5633
        %v5660 = vmul.f32 %v5627, %v5633
        %v5661 = vmul.f32 %v5628, %v5633
        %v5662 = vmul.f32 %v5629, %v5633
        %v5663 = vmul.f32 %v5630, %v5633
        %v5664 = vmul.f32 %v5631, %v5633
        %v5665 = vmul.f32 %v5632, %v5633
        %v5666 = vadd.f32 %v5568, %v5634
        %v5667 = vadd.f32 %v5569, %v5635
        %v5668 = vadd.f32 %v5570, %v5636
        %v5669 = vadd.f32 %v5571, %v5637
        %v5670 = vadd.f32 %v5572, %v5638
        %v5671 = vadd.f32 %v5573, %v5639
        %v5672 = vadd.f32 %v5574, %v5640
        %v5673 = vadd.f32 %v5575, %v5641
        %v5674 = vadd.f32 %v5576, %v5642
        %v5675 = vadd.f32 %v5577, %v5643
        %v5676 = vadd.f32 %v5578, %v5644
        %v5677 = vadd.f32 %v5579, %v5645
        %v5678 = vadd.f32 %v5580, %v5646
        %v5679 = vadd.f32 %v5581, %v5647
        %v5680 = vadd.f32 %v5582, %v5648
        %v5681 = vadd.f32 %v5583, %v5649
        %v5682 = vadd.f32 %v5584, %v5650
        %v5683 = vadd.f32 %v5585, %v5651
        %v5684 = vadd.f32 %v5586, %v5652
        %v5685 = vadd.f32 %v5587, %v5653
        %v5686 = vadd.f32 %v5588, %v5654
        %v5687 = vadd.f32 %v5589, %v5655
        %v5688 = vadd.f32 %v5590, %v5656
        %v5689 = vadd.f32 %v5591, %v5657
        %v5690 = vadd.f32 %v5592, %v5658
        %v5691 = vadd.f32 %v5593, %v5659
        %v5692 = vadd.f32 %v5594, %v5660
        %v5693 = vadd.f32 %v5595, %v5661
        %v5694 = vadd.f32 %v5596, %v5662
        %v5695 = vadd.f32 %v5597, %v5663
        %v5696 = vadd.f32 %v5598, %v5664
        %v5697 = vadd.f32 %v5599, %v5665
        %v5698 = vld [vmem:[%s6 + $0x2c] sm:$0x1]
        %v5699 = vld [vmem:[%s5502 + $0x2] sm:$0xff]
        %v5700 = vld [vmem:[%s5502 + $0xa] sm:$0xff]
        %v5701 = vld [vmem:[%s5502 + $0x1a] sm:$0xff]
        %v5702 = vld [vmem:[%s5502 + $0x22] sm:$0xff]
        %v5703 = vld [vmem:[%s5502 + $0x32] sm:$0xff]
        %v5704 = vld [vmem:[%s5502 + $0x3a] sm:$0xff]
        %v5705 = vld [vmem:[%s5502 + $0x4a] sm:$0xff]
        %v5706 = vld [vmem:[%s5502 + $0x52] sm:$0xff]
        %v5707 = vld [vmem:[%s5502 + $0x62] sm:$0xff]
        %v5708 = vld [vmem:[%s5502 + $0x6a] sm:$0xff]
        %v5709 = vld [vmem:[%s5502 + $0x7a] sm:$0xff]
        %v5710 = vld [vmem:[%s5502 + $0x82] sm:$0xff]
        %v5711 = vld [vmem:[%s5502 + $0x92] sm:$0xff]
        %v5712 = vld [vmem:[%s5502 + $0x9a] sm:$0xff]
        %v5713 = vld [vmem:[%s5502 + $0xaa] sm:$0xff]
        %v5714 = vld [vmem:[%s5502 + $0xb2] sm:$0xff]
        %v5715 = vld [vmem:[%s5502 + $0xc2] sm:$0xff]
        %v5716 = vld [vmem:[%s5502 + $0xca] sm:$0xff]
        %v5717 = vld [vmem:[%s5502 + $0xda] sm:$0xff]
        %v5718 = vld [vmem:[%s5502 + $0xe2] sm:$0xff]
        %v5719 = vld [vmem:[%s5502 + $0xf2] sm:$0xff]
        %v5720 = vld [vmem:[%s5502 + $0xfa] sm:$0xff]
        %v5721 = vld [vmem:[%s5502 + $0x10a] sm:$0xff]
        %v5722 = vld [vmem:[%s5502 + $0x112] sm:$0xff]
        %v5723 = vld [vmem:[%s5502 + $0x122] sm:$0xff]
        %v5724 = vld [vmem:[%s5502 + $0x12a] sm:$0xff]
        %v5725 = vld [vmem:[%s5502 + $0x13a] sm:$0xff]
        %v5726 = vld [vmem:[%s5502 + $0x142] sm:$0xff]
        %v5727 = vld [vmem:[%s5502 + $0x152] sm:$0xff]
        %v5728 = vld [vmem:[%s5502 + $0x15a] sm:$0xff]
        %v5729 = vld [vmem:[%s5502 + $0x16a] sm:$0xff]
        %v5730 = vld [vmem:[%s5502 + $0x172] sm:$0xff]
        %v5731 = vperm.slane %v5698, 0
        %v5732 = vmul.f32 %v5699, %v5731
        %v5733 = vmul.f32 %v5700, %v5731
        %v5734 = vmul.f32 %v5701, %v5731
        %v5735 = vmul.f32 %v5702, %v5731
        %v5736 = vmul.f32 %v5703, %v5731
        %v5737 = vmul.f32 %v5704, %v5731
        %v5738 = vmul.f32 %v5705, %v5731
        %v5739 = vmul.f32 %v5706, %v5731
        %v5740 = vmul.f32 %v5707, %v5731
        %v5741 = vmul.f32 %v5708, %v5731
        %v5742 = vmul.f32 %v5709, %v5731
        %v5743 = vmul.f32 %v5710, %v5731
        %v5744 = vmul.f32 %v5711, %v5731
        %v5745 = vmul.f32 %v5712, %v5731
        %v5746 = vmul.f32 %v5713, %v5731
        %v5747 = vmul.f32 %v5714, %v5731
        %v5748 = vmul.f32 %v5715, %v5731
        %v5749 = vmul.f32 %v5716, %v5731
        %v5750 = vmul.f32 %v5717, %v5731
        %v5751 = vmul.f32 %v5718, %v5731
        %v5752 = vmul.f32 %v5719, %v5731
        %v5753 = vmul.f32 %v5720, %v5731
        %v5754 = vmul.f32 %v5721, %v5731
        %v5755 = vmul.f32 %v5722, %v5731
        %v5756 = vmul.f32 %v5723, %v5731
        %v5757 = vmul.f32 %v5724, %v5731
        %v5758 = vmul.f32 %v5725, %v5731
        %v5759 = vmul.f32 %v5726, %v5731
        %v5760 = vmul.f32 %v5727, %v5731
        %v5761 = vmul.f32 %v5728, %v5731
        %v5762 = vmul.f32 %v5729, %v5731
        %v5763 = vmul.f32 %v5730, %v5731
        %v5764 = vadd.f32 %v5666, %v5732
        %v5765 = vadd.f32 %v5667, %v5733
        %v5766 = vadd.f32 %v5668, %v5734
        %v5767 = vadd.f32 %v5669, %v5735
        %v5768 = vadd.f32 %v5670, %v5736
        %v5769 = vadd.f32 %v5671, %v5737
        %v5770 = vadd.f32 %v5672, %v5738
        %v5771 = vadd.f32 %v5673, %v5739
        %v5772 = vadd.f32 %v5674, %v5740
        %v5773 = vadd.f32 %v5675, %v5741
        %v5774 = vadd.f32 %v5676, %v5742
        %v5775 = vadd.f32 %v5677, %v5743
        %v5776 = vadd.f32 %v5678, %v5744
        %v5777 = vadd.f32 %v5679, %v5745
        %v5778 = vadd.f32 %v5680, %v5746
        %v5779 = vadd.f32 %v5681, %v5747
        %v5780 = vadd.f32 %v5682, %v5748
        %v5781 = vadd.f32 %v5683, %v5749
        %v5782 = vadd.f32 %v5684, %v5750
        %v5783 = vadd.f32 %v5685, %v5751
        %v5784 = vadd.f32 %v5686, %v5752
        %v5785 = vadd.f32 %v5687, %v5753
        %v5786 = vadd.f32 %v5688, %v5754
        %v5787 = vadd.f32 %v5689, %v5755
        %v5788 = vadd.f32 %v5690, %v5756
        %v5789 = vadd.f32 %v5691, %v5757
        %v5790 = vadd.f32 %v5692, %v5758
        %v5791 = vadd.f32 %v5693, %v5759
        %v5792 = vadd.f32 %v5694, %v5760
        %v5793 = vadd.f32 %v5695, %v5761
        %v5794 = vadd.f32 %v5696, %v5762
        %v5795 = vadd.f32 %v5697, %v5763
        %v5796 = vld [vmem:[%s6 + $0x2d] sm:$0x1]
        %v5797 = vld [vmem:[%s5502 + $0x3] sm:$0xff]
        %v5798 = vld [vmem:[%s5502 + $0xb] sm:$0xff]
        %v5799 = vld [vmem:[%s5502 + $0x1b] sm:$0xff]
        %v5800 = vld [vmem:[%s5502 + $0x23] sm:$0xff]
        %v5801 = vld [vmem:[%s5502 + $0x33] sm:$0xff]
        %v5802 = vld [vmem:[%s5502 + $0x3b] sm:$0xff]
        %v5803 = vld [vmem:[%s5502 + $0x4b] sm:$0xff]
        %v5804 = vld [vmem:[%s5502 + $0x53] sm:$0xff]
        %v5805 = vld [vmem:[%s5502 + $0x63] sm:$0xff]
        %v5806 = vld [vmem:[%s5502 + $0x6b] sm:$0xff]
        %v5807 = vld [vmem:[%s5502 + $0x7b] sm:$0xff]
        %v5808 = vld [vmem:[%s5502 + $0x83] sm:$0xff]
        %v5809 = vld [vmem:[%s5502 + $0x93] sm:$0xff]
        %v5810 = vld [vmem:[%s5502 + $0x9b] sm:$0xff]
        %v5811 = vld [vmem:[%s5502 + $0xab] sm:$0xff]
        %v5812 = vld [vmem:[%s5502 + $0xb3] sm:$0xff]
        %v5813 = vld [vmem:[%s5502 + $0xc3] sm:$0xff]
        %v5814 = vld [vmem:[%s5502 + $0xcb] sm:$0xff]
        %v5815 = vld [vmem:[%s5502 + $0xdb] sm:$0xff]
        %v5816 = vld [vmem:[%s5502 + $0xe3] sm:$0xff]
        %v5817 = vld [vmem:[%s5502 + $0xf3] sm:$0xff]
        %v5818 = vld [vmem:[%s5502 + $0xfb] sm:$0xff]
        %v5819 = vld [vmem:[%s5502 + $0x10b] sm:$0xff]
        %v5820 = vld [vmem:[%s5502 + $0x113] sm:$0xff]
        %v5821 = vld [vmem:[%s5502 + $0x123] sm:$0xff]
        %v5822 = vld [vmem:[%s5502 + $0x12b] sm:$0xff]
        %v5823 = vld [vmem:[%s5502 + $0x13b] sm:$0xff]
        %v5824 = vld [vmem:[%s5502 + $0x143] sm:$0xff]
        %v5825 = vld [vmem:[%s5502 + $0x153] sm:$0xff]
        %v5826 = vld [vmem:[%s5502 + $0x15b] sm:$0xff]
        %v5827 = vld [vmem:[%s5502 + $0x16b] sm:$0xff]
        %v5828 = vld [vmem:[%s5502 + $0x173] sm:$0xff]
        %v5829 = vperm.slane %v5796, 0
        %v5830 = vmul.f32 %v5797, %v5829
        %v5831 = vmul.f32 %v5798, %v5829
        %v5832 = vmul.f32 %v5799, %v5829
        %v5833 = vmul.f32 %v5800, %v5829
        %v5834 = vmul.f32 %v5801, %v5829
        %v5835 = vmul.f32 %v5802, %v5829
        %v5836 = vmul.f32 %v5803, %v5829
        %v5837 = vmul.f32 %v5804, %v5829
        %v5838 = vmul.f32 %v5805, %v5829
        %v5839 = vmul.f32 %v5806, %v5829
        %v5840 = vmul.f32 %v5807, %v5829
        %v5841 = vmul.f32 %v5808, %v5829
        %v5842 = vmul.f32 %v5809, %v5829
        %v5843 = vmul.f32 %v5810, %v5829
        %v5844 = vmul.f32 %v5811, %v5829
        %v5845 = vmul.f32 %v5812, %v5829
        %v5846 = vmul.f32 %v5813, %v5829
        %v5847 = vmul.f32 %v5814, %v5829
        %v5848 = vmul.f32 %v5815, %v5829
        %v5849 = vmul.f32 %v5816, %v5829
        %v5850 = vmul.f32 %v5817, %v5829
        %v5851 = vmul.f32 %v5818, %v5829
        %v5852 = vmul.f32 %v5819, %v5829
        %v5853 = vmul.f32 %v5820, %v5829
        %v5854 = vmul.f32 %v5821, %v5829
        %v5855 = vmul.f32 %v5822, %v5829
        %v5856 = vmul.f32 %v5823, %v5829
        %v5857 = vmul.f32 %v5824, %v5829
        %v5858 = vmul.f32 %v5825, %v5829
        %v5859 = vmul.f32 %v5826, %v5829
        %v5860 = vmul.f32 %v5827, %v5829
        %v5861 = vmul.f32 %v5828, %v5829
        %v5862 = vadd.f32 %v5764, %v5830
        %v5863 = vadd.f32 %v5765, %v5831
        %v5864 = vadd.f32 %v5766, %v5832
        %v5865 = vadd.f32 %v5767, %v5833
        %v5866 = vadd.f32 %v5768, %v5834
        %v5867 = vadd.f32 %v5769, %v5835
        %v5868 = vadd.f32 %v5770, %v5836
        %v5869 = vadd.f32 %v5771, %v5837
        %v5870 = vadd.f32 %v5772, %v5838
        %v5871 = vadd.f32 %v5773, %v5839
        %v5872 = vadd.f32 %v5774, %v5840
        %v5873 = vadd.f32 %v5775, %v5841
        %v5874 = vadd.f32 %v5776, %v5842
        %v5875 = vadd.f32 %v5777, %v5843
        %v5876 = vadd.f32 %v5778, %v5844
        %v5877 = vadd.f32 %v5779, %v5845
        %v5878 = vadd.f32 %v5780, %v5846
        %v5879 = vadd.f32 %v5781, %v5847
        %v5880 = vadd.f32 %v5782, %v5848
        %v5881 = vadd.f32 %v5783, %v5849
        %v5882 = vadd.f32 %v5784, %v5850
        %v5883 = vadd.f32 %v5785, %v5851
        %v5884 = vadd.f32 %v5786, %v5852
        %v5885 = vadd.f32 %v5787, %v5853
        %v5886 = vadd.f32 %v5788, %v5854
        %v5887 = vadd.f32 %v5789, %v5855
        %v5888 = vadd.f32 %v5790, %v5856
        %v5889 = vadd.f32 %v5791, %v5857
        %v5890 = vadd.f32 %v5792, %v5858
        %v5891 = vadd.f32 %v5793, %v5859
        %v5892 = vadd.f32 %v5794, %v5860
        %v5893 = vadd.f32 %v5795, %v5861
        %v5894 = vld [vmem:[%s6 + $0x2e] sm:$0x1]
        %v5895 = vld [vmem:[%s5502 + $0x4] sm:$0xff]
        %v5896 = vld [vmem:[%s5502 + $0xc] sm:$0xff]
        %v5897 = vld [vmem:[%s5502 + $0x1c] sm:$0xff]
        %v5898 = vld [vmem:[%s5502 + $0x24] sm:$0xff]
        %v5899 = vld [vmem:[%s5502 + $0x34] sm:$0xff]
        %v5900 = vld [vmem:[%s5502 + $0x3c] sm:$0xff]
        %v5901 = vld [vmem:[%s5502 + $0x4c] sm:$0xff]
        %v5902 = vld [vmem:[%s5502 + $0x54] sm:$0xff]
        %v5903 = vld [vmem:[%s5502 + $0x64] sm:$0xff]
        %v5904 = vld [vmem:[%s5502 + $0x6c] sm:$0xff]
        %v5905 = vld [vmem:[%s5502 + $0x7c] sm:$0xff]
        %v5906 = vld [vmem:[%s5502 + $0x84] sm:$0xff]
        %v5907 = vld [vmem:[%s5502 + $0x94] sm:$0xff]
        %v5908 = vld [vmem:[%s5502 + $0x9c] sm:$0xff]
        %v5909 = vld [vmem:[%s5502 + $0xac] sm:$0xff]
        %v5910 = vld [vmem:[%s5502 + $0xb4] sm:$0xff]
        %v5911 = vld [vmem:[%s5502 + $0xc4] sm:$0xff]
        %v5912 = vld [vmem:[%s5502 + $0xcc] sm:$0xff]
        %v5913 = vld [vmem:[%s5502 + $0xdc] sm:$0xff]
        %v5914 = vld [vmem:[%s5502 + $0xe4] sm:$0xff]
        %v5915 = vld [vmem:[%s5502 + $0xf4] sm:$0xff]
        %v5916 = vld [vmem:[%s5502 + $0xfc] sm:$0xff]
        %v5917 = vld [vmem:[%s5502 + $0x10c] sm:$0xff]
        %v5918 = vld [vmem:[%s5502 + $0x114] sm:$0xff]
        %v5919 = vld [vmem:[%s5502 + $0x124] sm:$0xff]
        %v5920 = vld [vmem:[%s5502 + $0x12c] sm:$0xff]
        %v5921 = vld [vmem:[%s5502 + $0x13c] sm:$0xff]
        %v5922 = vld [vmem:[%s5502 + $0x144] sm:$0xff]
        %v5923 = vld [vmem:[%s5502 + $0x154] sm:$0xff]
        %v5924 = vld [vmem:[%s5502 + $0x15c] sm:$0xff]
        %v5925 = vld [vmem:[%s5502 + $0x16c] sm:$0xff]
        %v5926 = vld [vmem:[%s5502 + $0x174] sm:$0xff]
        %v5927 = vperm.slane %v5894, 0
        %v5928 = vmul.f32 %v5895, %v5927
        %v5929 = vmul.f32 %v5896, %v5927
        %v5930 = vmul.f32 %v5897, %v5927
        %v5931 = vmul.f32 %v5898, %v5927
        %v5932 = vmul.f32 %v5899, %v5927
        %v5933 = vmul.f32 %v5900, %v5927
        %v5934 = vmul.f32 %v5901, %v5927
        %v5935 = vmul.f32 %v5902, %v5927
        %v5936 = vmul.f32 %v5903, %v5927
        %v5937 = vmul.f32 %v5904, %v5927
        %v5938 = vmul.f32 %v5905, %v5927
        %v5939 = vmul.f32 %v5906, %v5927
        %v5940 = vmul.f32 %v5907, %v5927
        %v5941 = vmul.f32 %v5908, %v5927
        %v5942 = vmul.f32 %v5909, %v5927
        %v5943 = vmul.f32 %v5910, %v5927
        %v5944 = vmul.f32 %v5911, %v5927
        %v5945 = vmul.f32 %v5912, %v5927
        %v5946 = vmul.f32 %v5913, %v5927
        %v5947 = vmul.f32 %v5914, %v5927
        %v5948 = vmul.f32 %v5915, %v5927
        %v5949 = vmul.f32 %v5916, %v5927
        %v5950 = vmul.f32 %v5917, %v5927
        %v5951 = vmul.f32 %v5918, %v5927
        %v5952 = vmul.f32 %v5919, %v5927
        %v5953 = vmul.f32 %v5920, %v5927
        %v5954 = vmul.f32 %v5921, %v5927
        %v5955 = vmul.f32 %v5922, %v5927
        %v5956 = vmul.f32 %v5923, %v5927
        %v5957 = vmul.f32 %v5924, %v5927
        %v5958 = vmul.f32 %v5925, %v5927
        %v5959 = vmul.f32 %v5926, %v5927
        %v5960 = vadd.f32 %v5862, %v5928
        %v5961 = vadd.f32 %v5863, %v5929
        %v5962 = vadd.f32 %v5864, %v5930
        %v5963 = vadd.f32 %v5865, %v5931
        %v5964 = vadd.f32 %v5866, %v5932
        %v5965 = vadd.f32 %v5867, %v5933
        %v5966 = vadd.f32 %v5868, %v5934
        %v5967 = vadd.f32 %v5869, %v5935
        %v5968 = vadd.f32 %v5870, %v5936
        %v5969 = vadd.f32 %v5871, %v5937
        %v5970 = vadd.f32 %v5872, %v5938
        %v5971 = vadd.f32 %v5873, %v5939
        %v5972 = vadd.f32 %v5874, %v5940
        %v5973 = vadd.f32 %v5875, %v5941
        %v5974 = vadd.f32 %v5876, %v5942
        %v5975 = vadd.f32 %v5877, %v5943
        %v5976 = vadd.f32 %v5878, %v5944
        %v5977 = vadd.f32 %v5879, %v5945
        %v5978 = vadd.f32 %v5880, %v5946
        %v5979 = vadd.f32 %v5881, %v5947
        %v5980 = vadd.f32 %v5882, %v5948
        %v5981 = vadd.f32 %v5883, %v5949
        %v5982 = vadd.f32 %v5884, %v5950
        %v5983 = vadd.f32 %v5885, %v5951
        %v5984 = vadd.f32 %v5886, %v5952
        %v5985 = vadd.f32 %v5887, %v5953
        %v5986 = vadd.f32 %v5888, %v5954
        %v5987 = vadd.f32 %v5889, %v5955
        %v5988 = vadd.f32 %v5890, %v5956
        %v5989 = vadd.f32 %v5891, %v5957
        %v5990 = vadd.f32 %v5892, %v5958
        %v5991 = vadd.f32 %v5893, %v5959
        %v5992 = vld [vmem:[%s6 + $0x2f] sm:$0x1]
        %v5993 = vld [vmem:[%s5502 + $0x5] sm:$0xff]
        %v5994 = vld [vmem:[%s5502 + $0xd] sm:$0xff]
        %v5995 = vld [vmem:[%s5502 + $0x1d] sm:$0xff]
        %v5996 = vld [vmem:[%s5502 + $0x25] sm:$0xff]
        %v5997 = vld [vmem:[%s5502 + $0x35] sm:$0xff]
        %v5998 = vld [vmem:[%s5502 + $0x3d] sm:$0xff]
        %v5999 = vld [vmem:[%s5502 + $0x4d] sm:$0xff]
        %v6000 = vld [vmem:[%s5502 + $0x55] sm:$0xff]
        %v6001 = vld [vmem:[%s5502 + $0x65] sm:$0xff]
        %v6002 = vld [vmem:[%s5502 + $0x6d] sm:$0xff]
        %v6003 = vld [vmem:[%s5502 + $0x7d] sm:$0xff]
        %v6004 = vld [vmem:[%s5502 + $0x85] sm:$0xff]
        %v6005 = vld [vmem:[%s5502 + $0x95] sm:$0xff]
        %v6006 = vld [vmem:[%s5502 + $0x9d] sm:$0xff]
        %v6007 = vld [vmem:[%s5502 + $0xad] sm:$0xff]
        %v6008 = vld [vmem:[%s5502 + $0xb5] sm:$0xff]
        %v6009 = vld [vmem:[%s5502 + $0xc5] sm:$0xff]
        %v6010 = vld [vmem:[%s5502 + $0xcd] sm:$0xff]
        %v6011 = vld [vmem:[%s5502 + $0xdd] sm:$0xff]
        %v6012 = vld [vmem:[%s5502 + $0xe5] sm:$0xff]
        %v6013 = vld [vmem:[%s5502 + $0xf5] sm:$0xff]
        %v6014 = vld [vmem:[%s5502 + $0xfd] sm:$0xff]
        %v6015 = vld [vmem:[%s5502 + $0x10d] sm:$0xff]
        %v6016 = vld [vmem:[%s5502 + $0x115] sm:$0xff]
        %v6017 = vld [vmem:[%s5502 + $0x125] sm:$0xff]
        %v6018 = vld [vmem:[%s5502 + $0x12d] sm:$0xff]
        %v6019 = vld [vmem:[%s5502 + $0x13d] sm:$0xff]
        %v6020 = vld [vmem:[%s5502 + $0x145] sm:$0xff]
        %v6021 = vld [vmem:[%s5502 + $0x155] sm:$0xff]
        %v6022 = vld [vmem:[%s5502 + $0x15d] sm:$0xff]
        %v6023 = vld [vmem:[%s5502 + $0x16d] sm:$0xff]
        %v6024 = vld [vmem:[%s5502 + $0x175] sm:$0xff]
        %v6025 = vperm.slane %v5992, 0
        %v6026 = vmul.f32 %v5993, %v6025
        %v6027 = vmul.f32 %v5994, %v6025
        %v6028 = vmul.f32 %v5995, %v6025
        %v6029 = vmul.f32 %v5996, %v6025
        %v6030 = vmul.f32 %v5997, %v6025
        %v6031 = vmul.f32 %v5998, %v6025
        %v6032 = vmul.f32 %v5999, %v6025
        %v6033 = vmul.f32 %v6000, %v6025
        %v6034 = vmul.f32 %v6001, %v6025
        %v6035 = vmul.f32 %v6002, %v6025
        %v6036 = vmul.f32 %v6003, %v6025
        %v6037 = vmul.f32 %v6004, %v6025
        %v6038 = vmul.f32 %v6005, %v6025
        %v6039 = vmul.f32 %v6006, %v6025
        %v6040 = vmul.f32 %v6007, %v6025
        %v6041 = vmul.f32 %v6008, %v6025
        %v6042 = vmul.f32 %v6009, %v6025
        %v6043 = vmul.f32 %v6010, %v6025
        %v6044 = vmul.f32 %v6011, %v6025
        %v6045 = vmul.f32 %v6012, %v6025
        %v6046 = vmul.f32 %v6013, %v6025
        %v6047 = vmul.f32 %v6014, %v6025
        %v6048 = vmul.f32 %v6015, %v6025
        %v6049 = vmul.f32 %v6016, %v6025
        %v6050 = vmul.f32 %v6017, %v6025
        %v6051 = vmul.f32 %v6018, %v6025
        %v6052 = vmul.f32 %v6019, %v6025
        %v6053 = vmul.f32 %v6020, %v6025
        %v6054 = vmul.f32 %v6021, %v6025
        %v6055 = vmul.f32 %v6022, %v6025
        %v6056 = vmul.f32 %v6023, %v6025
        %v6057 = vmul.f32 %v6024, %v6025
        %v6058 = vadd.f32 %v5960, %v6026
        %v6059 = vadd.f32 %v5961, %v6027
        %v6060 = vadd.f32 %v5962, %v6028
        %v6061 = vadd.f32 %v5963, %v6029
        %v6062 = vadd.f32 %v5964, %v6030
        %v6063 = vadd.f32 %v5965, %v6031
        %v6064 = vadd.f32 %v5966, %v6032
        %v6065 = vadd.f32 %v5967, %v6033
        %v6066 = vadd.f32 %v5968, %v6034
        %v6067 = vadd.f32 %v5969, %v6035
        %v6068 = vadd.f32 %v5970, %v6036
        %v6069 = vadd.f32 %v5971, %v6037
        %v6070 = vadd.f32 %v5972, %v6038
        %v6071 = vadd.f32 %v5973, %v6039
        %v6072 = vadd.f32 %v5974, %v6040
        %v6073 = vadd.f32 %v5975, %v6041
        %v6074 = vadd.f32 %v5976, %v6042
        %v6075 = vadd.f32 %v5977, %v6043
        %v6076 = vadd.f32 %v5978, %v6044
        %v6077 = vadd.f32 %v5979, %v6045
        %v6078 = vadd.f32 %v5980, %v6046
        %v6079 = vadd.f32 %v5981, %v6047
        %v6080 = vadd.f32 %v5982, %v6048
        %v6081 = vadd.f32 %v5983, %v6049
        %v6082 = vadd.f32 %v5984, %v6050
        %v6083 = vadd.f32 %v5985, %v6051
        %v6084 = vadd.f32 %v5986, %v6052
        %v6085 = vadd.f32 %v5987, %v6053
        %v6086 = vadd.f32 %v5988, %v6054
        %v6087 = vadd.f32 %v5989, %v6055
        %v6088 = vadd.f32 %v5990, %v6056
        %v6089 = vadd.f32 %v5991, %v6057
        %v6090 = vld [vmem:[%s6 + $0x30] sm:$0x1]
        %v6091 = vld [vmem:[%s5502 + $0x6] sm:$0xff]
        %v6092 = vld [vmem:[%s5502 + $0xe] sm:$0xff]
        %v6093 = vld [vmem:[%s5502 + $0x1e] sm:$0xff]
        %v6094 = vld [vmem:[%s5502 + $0x26] sm:$0xff]
        %v6095 = vld [vmem:[%s5502 + $0x36] sm:$0xff]
        %v6096 = vld [vmem:[%s5502 + $0x3e] sm:$0xff]
        %v6097 = vld [vmem:[%s5502 + $0x4e] sm:$0xff]
        %v6098 = vld [vmem:[%s5502 + $0x56] sm:$0xff]
        %v6099 = vld [vmem:[%s5502 + $0x66] sm:$0xff]
        %v6100 = vld [vmem:[%s5502 + $0x6e] sm:$0xff]
        %v6101 = vld [vmem:[%s5502 + $0x7e] sm:$0xff]
        %v6102 = vld [vmem:[%s5502 + $0x86] sm:$0xff]
        %v6103 = vld [vmem:[%s5502 + $0x96] sm:$0xff]
        %v6104 = vld [vmem:[%s5502 + $0x9e] sm:$0xff]
        %v6105 = vld [vmem:[%s5502 + $0xae] sm:$0xff]
        %v6106 = vld [vmem:[%s5502 + $0xb6] sm:$0xff]
        %v6107 = vld [vmem:[%s5502 + $0xc6] sm:$0xff]
        %v6108 = vld [vmem:[%s5502 + $0xce] sm:$0xff]
        %v6109 = vld [vmem:[%s5502 + $0xde] sm:$0xff]
        %v6110 = vld [vmem:[%s5502 + $0xe6] sm:$0xff]
        %v6111 = vld [vmem:[%s5502 + $0xf6] sm:$0xff]
        %v6112 = vld [vmem:[%s5502 + $0xfe] sm:$0xff]
        %v6113 = vld [vmem:[%s5502 + $0x10e] sm:$0xff]
        %v6114 = vld [vmem:[%s5502 + $0x116] sm:$0xff]
        %v6115 = vld [vmem:[%s5502 + $0x126] sm:$0xff]
        %v6116 = vld [vmem:[%s5502 + $0x12e] sm:$0xff]
        %v6117 = vld [vmem:[%s5502 + $0x13e] sm:$0xff]
        %v6118 = vld [vmem:[%s5502 + $0x146] sm:$0xff]
        %v6119 = vld [vmem:[%s5502 + $0x156] sm:$0xff]
        %v6120 = vld [vmem:[%s5502 + $0x15e] sm:$0xff]
        %v6121 = vld [vmem:[%s5502 + $0x16e] sm:$0xff]
        %v6122 = vld [vmem:[%s5502 + $0x176] sm:$0xff]
        %v6123 = vperm.slane %v6090, 0
        %v6124 = vmul.f32 %v6091, %v6123
        %v6125 = vmul.f32 %v6092, %v6123
        %v6126 = vmul.f32 %v6093, %v6123
        %v6127 = vmul.f32 %v6094, %v6123
        %v6128 = vmul.f32 %v6095, %v6123
        %v6129 = vmul.f32 %v6096, %v6123
        %v6130 = vmul.f32 %v6097, %v6123
        %v6131 = vmul.f32 %v6098, %v6123
        %v6132 = vmul.f32 %v6099, %v6123
        %v6133 = vmul.f32 %v6100, %v6123
        %v6134 = vmul.f32 %v6101, %v6123
        %v6135 = vmul.f32 %v6102, %v6123
        %v6136 = vmul.f32 %v6103, %v6123
        %v6137 = vmul.f32 %v6104, %v6123
        %v6138 = vmul.f32 %v6105, %v6123
        %v6139 = vmul.f32 %v6106, %v6123
        %v6140 = vmul.f32 %v6107, %v6123
        %v6141 = vmul.f32 %v6108, %v6123
        %v6142 = vmul.f32 %v6109, %v6123
        %v6143 = vmul.f32 %v6110, %v6123
        %v6144 = vmul.f32 %v6111, %v6123
        %v6145 = vmul.f32 %v6112, %v6123
        %v6146 = vmul.f32 %v6113, %v6123
        %v6147 = vmul.f32 %v6114, %v6123
        %v6148 = vmul.f32 %v6115, %v6123
        %v6149 = vmul.f32 %v6116, %v6123
        %v6150 = vmul.f32 %v6117, %v6123
        %v6151 = vmul.f32 %v6118, %v6123
        %v6152 = vmul.f32 %v6119, %v6123
        %v6153 = vmul.f32 %v6120, %v6123
        %v6154 = vmul.f32 %v6121, %v6123
        %v6155 = vmul.f32 %v6122, %v6123
        %v6156 = vadd.f32 %v6058, %v6124
        %v6157 = vadd.f32 %v6059, %v6125
        %v6158 = vadd.f32 %v6060, %v6126
        %v6159 = vadd.f32 %v6061, %v6127
        %v6160 = vadd.f32 %v6062, %v6128
        %v6161 = vadd.f32 %v6063, %v6129
        %v6162 = vadd.f32 %v6064, %v6130
        %v6163 = vadd.f32 %v6065, %v6131
        %v6164 = vadd.f32 %v6066, %v6132
        %v6165 = vadd.f32 %v6067, %v6133
        %v6166 = vadd.f32 %v6068, %v6134
        %v6167 = vadd.f32 %v6069, %v6135
        %v6168 = vadd.f32 %v6070, %v6136
        %v6169 = vadd.f32 %v6071, %v6137
        %v6170 = vadd.f32 %v6072, %v6138
        %v6171 = vadd.f32 %v6073, %v6139
        %v6172 = vadd.f32 %v6074, %v6140
        %v6173 = vadd.f32 %v6075, %v6141
        %v6174 = vadd.f32 %v6076, %v6142
        %v6175 = vadd.f32 %v6077, %v6143
        %v6176 = vadd.f32 %v6078, %v6144
        %v6177 = vadd.f32 %v6079, %v6145
        %v6178 = vadd.f32 %v6080, %v6146
        %v6179 = vadd.f32 %v6081, %v6147
        %v6180 = vadd.f32 %v6082, %v6148
        %v6181 = vadd.f32 %v6083, %v6149
        %v6182 = vadd.f32 %v6084, %v6150
        %v6183 = vadd.f32 %v6085, %v6151
        %v6184 = vadd.f32 %v6086, %v6152
        %v6185 = vadd.f32 %v6087, %v6153
        %v6186 = vadd.f32 %v6088, %v6154
        %v6187 = vadd.f32 %v6089, %v6155
        %v6188 = vsel %vm1280, %v6156, 0.0
        %6189 = vadd.xlane.f32.xlu0 %v6188
        %v6190 = vpop.xlane.xlu0 %6189
        %v6191 = vsel %vm1280, %v6157, 0.0
        %6192 = vadd.xlane.f32.xlu0 %v6191
        %v6193 = vpop.xlane.xlu0 %6192
        %v6194 = vsel %vm1280, %v6158, 0.0
        %6195 = vadd.xlane.f32.xlu0 %v6194
        %v6196 = vpop.xlane.xlu0 %6195
        %v6197 = vsel %vm1280, %v6159, 0.0
        %6198 = vadd.xlane.f32.xlu0 %v6197
        %v6199 = vpop.xlane.xlu0 %6198
        %v6200 = vsel %vm1280, %v6160, 0.0
        %6201 = vadd.xlane.f32.xlu0 %v6200
        %v6202 = vpop.xlane.xlu0 %6201
        %v6203 = vsel %vm1280, %v6161, 0.0
        %6204 = vadd.xlane.f32.xlu0 %v6203
        %v6205 = vpop.xlane.xlu0 %6204
        %v6206 = vsel %vm1280, %v6162, 0.0
        %6207 = vadd.xlane.f32.xlu0 %v6206
        %v6208 = vpop.xlane.xlu0 %6207
        %v6209 = vsel %vm1280, %v6163, 0.0
        %6210 = vadd.xlane.f32.xlu0 %v6209
        %v6211 = vpop.xlane.xlu0 %6210
        %v6212 = vsel %vm1280, %v6164, 0.0
        %6213 = vadd.xlane.f32.xlu0 %v6212
        %v6214 = vpop.xlane.xlu0 %6213
        %v6215 = vsel %vm1280, %v6165, 0.0
        %6216 = vadd.xlane.f32.xlu0 %v6215
        %v6217 = vpop.xlane.xlu0 %6216
        %v6218 = vsel %vm1280, %v6166, 0.0
        %6219 = vadd.xlane.f32.xlu0 %v6218
        %v6220 = vpop.xlane.xlu0 %6219
        %v6221 = vsel %vm1280, %v6167, 0.0
        %6222 = vadd.xlane.f32.xlu0 %v6221
        %v6223 = vpop.xlane.xlu0 %6222
        %v6224 = vsel %vm1280, %v6168, 0.0
        %6225 = vadd.xlane.f32.xlu0 %v6224
        %v6226 = vpop.xlane.xlu0 %6225
        %v6227 = vsel %vm1280, %v6169, 0.0
        %6228 = vadd.xlane.f32.xlu0 %v6227
        %v6229 = vpop.xlane.xlu0 %6228
        %v6230 = vsel %vm1280, %v6170, 0.0
        %6231 = vadd.xlane.f32.xlu0 %v6230
        %v6232 = vpop.xlane.xlu0 %6231
        %v6233 = vsel %vm1280, %v6171, 0.0
        %6234 = vadd.xlane.f32.xlu0 %v6233
        %v6235 = vpop.xlane.xlu0 %6234
        %v6236 = vsel %vm1280, %v6172, 0.0
        %6237 = vadd.xlane.f32.xlu0 %v6236
        %v6238 = vpop.xlane.xlu0 %6237
        %v6239 = vsel %vm1280, %v6173, 0.0
        %6240 = vadd.xlane.f32.xlu0 %v6239
        %v6241 = vpop.xlane.xlu0 %6240
        %v6242 = vsel %vm1280, %v6174, 0.0
        %6243 = vadd.xlane.f32.xlu0 %v6242
        %v6244 = vpop.xlane.xlu0 %6243
        %v6245 = vsel %vm1280, %v6175, 0.0
        %6246 = vadd.xlane.f32.xlu0 %v6245
        %v6247 = vpop.xlane.xlu0 %6246
        %v6248 = vsel %vm1280, %v6176, 0.0
        %6249 = vadd.xlane.f32.xlu0 %v6248
        %v6250 = vpop.xlane.xlu0 %6249
        %v6251 = vsel %vm1280, %v6177, 0.0
        %6252 = vadd.xlane.f32.xlu0 %v6251
        %v6253 = vpop.xlane.xlu0 %6252
        %v6254 = vsel %vm1280, %v6178, 0.0
        %6255 = vadd.xlane.f32.xlu0 %v6254
        %v6256 = vpop.xlane.xlu0 %6255
        %v6257 = vsel %vm1280, %v6179, 0.0
        %6258 = vadd.xlane.f32.xlu0 %v6257
        %v6259 = vpop.xlane.xlu0 %6258
        %v6260 = vsel %vm1280, %v6180, 0.0
        %6261 = vadd.xlane.f32.xlu0 %v6260
        %v6262 = vpop.xlane.xlu0 %6261
        %v6263 = vsel %vm1280, %v6181, 0.0
        %6264 = vadd.xlane.f32.xlu0 %v6263
        %v6265 = vpop.xlane.xlu0 %6264
        %v6266 = vsel %vm1280, %v6182, 0.0
        %6267 = vadd.xlane.f32.xlu0 %v6266
        %v6268 = vpop.xlane.xlu0 %6267
        %v6269 = vsel %vm1280, %v6183, 0.0
        %6270 = vadd.xlane.f32.xlu0 %v6269
        %v6271 = vpop.xlane.xlu0 %6270
        %v6272 = vsel %vm1280, %v6184, 0.0
        %6273 = vadd.xlane.f32.xlu0 %v6272
        %v6274 = vpop.xlane.xlu0 %6273
        %v6275 = vsel %vm1280, %v6185, 0.0
        %6276 = vadd.xlane.f32.xlu0 %v6275
        %v6277 = vpop.xlane.xlu0 %6276
        %v6278 = vsel %vm1280, %v6186, 0.0
        %6279 = vadd.xlane.f32.xlu0 %v6278
        %v6280 = vpop.xlane.xlu0 %6279
        %v6281 = vsel %vm1280, %v6187, 0.0
        %6282 = vadd.xlane.f32.xlu0 %v6281
        %v6283 = vpop.xlane.xlu0 %6282
        %v6284 = vld [vmem:[#allocation3] sm:$0x1]
        %v6286 = vperm.slane %v6284, 0
        %v6288 = vadd.f32 %v6190, %v6286
        %v6289 = vadd.f32 %v6193, %v6286
        %v6290 = vadd.f32 %v6196, %v6286
        %v6291 = vadd.f32 %v6199, %v6286
        %v6292 = vadd.f32 %v6202, %v6286
        %v6293 = vadd.f32 %v6205, %v6286
        %v6294 = vadd.f32 %v6208, %v6286
        %v6295 = vadd.f32 %v6211, %v6286
        %v6296 = vadd.f32 %v6214, %v6286
        %v6297 = vadd.f32 %v6217, %v6286
        %v6298 = vadd.f32 %v6220, %v6286
        %v6299 = vadd.f32 %v6223, %v6286
        %v6300 = vadd.f32 %v6226, %v6286
        %v6301 = vadd.f32 %v6229, %v6286
        %v6302 = vadd.f32 %v6232, %v6286
        %v6303 = vadd.f32 %v6235, %v6286
        %v6304 = vadd.f32 %v6238, %v6286
        %v6305 = vadd.f32 %v6241, %v6286
        %v6306 = vadd.f32 %v6244, %v6286
        %v6307 = vadd.f32 %v6247, %v6286
        %v6308 = vadd.f32 %v6250, %v6286
        %v6309 = vadd.f32 %v6253, %v6286
        %v6310 = vadd.f32 %v6256, %v6286
        %v6311 = vadd.f32 %v6259, %v6286
        %v6312 = vadd.f32 %v6262, %v6286
        %v6313 = vadd.f32 %v6265, %v6286
        %v6314 = vadd.f32 %v6268, %v6286
        %v6315 = vadd.f32 %v6271, %v6286
        %v6316 = vadd.f32 %v6274, %v6286
        %v6317 = vadd.f32 %v6277, %v6286
        %v6318 = vadd.f32 %v6280, %v6286
        %v6319 = vadd.f32 %v6283, %v6286
        %v6320 = vsub.f32 0.0, %v6288
        %v6321 = vsub.f32 0.0, %v6289
        %v6322 = vsub.f32 0.0, %v6290
        %v6323 = vsub.f32 0.0, %v6291
        %v6324 = vsub.f32 0.0, %v6292
        %v6325 = vsub.f32 0.0, %v6293
        %v6326 = vsub.f32 0.0, %v6294
        %v6327 = vsub.f32 0.0, %v6295
        %v6328 = vsub.f32 0.0, %v6296
        %v6329 = vsub.f32 0.0, %v6297
        %v6330 = vsub.f32 0.0, %v6298
        %v6331 = vsub.f32 0.0, %v6299
        %v6332 = vsub.f32 0.0, %v6300
        %v6333 = vsub.f32 0.0, %v6301
        %v6334 = vsub.f32 0.0, %v6302
        %v6335 = vsub.f32 0.0, %v6303
        %v6336 = vsub.f32 0.0, %v6304
        %v6337 = vsub.f32 0.0, %v6305
        %v6338 = vsub.f32 0.0, %v6306
        %v6339 = vsub.f32 0.0, %v6307
        %v6340 = vsub.f32 0.0, %v6308
        %v6341 = vsub.f32 0.0, %v6309
        %v6342 = vsub.f32 0.0, %v6310
        %v6343 = vsub.f32 0.0, %v6311
        %v6344 = vsub.f32 0.0, %v6312
        %v6345 = vsub.f32 0.0, %v6313
        %v6346 = vsub.f32 0.0, %v6314
        %v6347 = vsub.f32 0.0, %v6315
        %v6348 = vsub.f32 0.0, %v6316
        %v6349 = vsub.f32 0.0, %v6317
        %v6350 = vsub.f32 0.0, %v6318
        %v6351 = vsub.f32 0.0, %v6319
        %v6352 = vmul.f32 %v6320, 1.442695
        %v6353 = vpow.pop %v6352
        %v6354 = vmul.f32 %v6321, 1.442695
        %v6355 = vpow.pop %v6354
        %v6356 = vmul.f32 %v6322, 1.442695
        %v6357 = vpow.pop %v6356
        %v6358 = vmul.f32 %v6323, 1.442695
        %v6359 = vpow.pop %v6358
        %v6360 = vmul.f32 %v6324, 1.442695
        %v6361 = vpow.pop %v6360
        %v6362 = vmul.f32 %v6325, 1.442695
        %v6363 = vpow.pop %v6362
        %v6364 = vmul.f32 %v6326, 1.442695
        %v6365 = vpow.pop %v6364
        %v6366 = vmul.f32 %v6327, 1.442695
        %v6367 = vpow.pop %v6366
        %v6368 = vmul.f32 %v6328, 1.442695
        %v6369 = vpow.pop %v6368
        %v6370 = vmul.f32 %v6329, 1.442695
        %v6371 = vpow.pop %v6370
        %v6372 = vmul.f32 %v6330, 1.442695
        %v6373 = vpow.pop %v6372
        %v6374 = vmul.f32 %v6331, 1.442695
        %v6375 = vpow.pop %v6374
        %v6376 = vmul.f32 %v6332, 1.442695
        %v6377 = vpow.pop %v6376
        %v6378 = vmul.f32 %v6333, 1.442695
        %v6379 = vpow.pop %v6378
        %v6380 = vmul.f32 %v6334, 1.442695
        %v6381 = vpow.pop %v6380
        %v6382 = vmul.f32 %v6335, 1.442695
        %v6383 = vpow.pop %v6382
        %v6384 = vmul.f32 %v6336, 1.442695
        %v6385 = vpow.pop %v6384
        %v6386 = vmul.f32 %v6337, 1.442695
        %v6387 = vpow.pop %v6386
        %v6388 = vmul.f32 %v6338, 1.442695
        %v6389 = vpow.pop %v6388
        %v6390 = vmul.f32 %v6339, 1.442695
        %v6391 = vpow.pop %v6390
        %v6392 = vmul.f32 %v6340, 1.442695
        %v6393 = vpow.pop %v6392
        %v6394 = vmul.f32 %v6341, 1.442695
        %v6395 = vpow.pop %v6394
        %v6396 = vmul.f32 %v6342, 1.442695
        %v6397 = vpow.pop %v6396
        %v6398 = vmul.f32 %v6343, 1.442695
        %v6399 = vpow.pop %v6398
        %v6400 = vmul.f32 %v6344, 1.442695
        %v6401 = vpow.pop %v6400
        %v6402 = vmul.f32 %v6345, 1.442695
        %v6403 = vpow.pop %v6402
        %v6404 = vmul.f32 %v6346, 1.442695
        %v6405 = vpow.pop %v6404
        %v6406 = vmul.f32 %v6347, 1.442695
        %v6407 = vpow.pop %v6406
        %v6408 = vmul.f32 %v6348, 1.442695
        %v6409 = vpow.pop %v6408
        %v6410 = vmul.f32 %v6349, 1.442695
        %v6411 = vpow.pop %v6410
        %v6412 = vmul.f32 %v6350, 1.442695
        %v6413 = vpow.pop %v6412
        %v6414 = vmul.f32 %v6351, 1.442695
        %v6415 = vpow.pop %v6414
        %v6416 = vadd.f32 %v6353, 1.0
        %v6417 = vadd.f32 %v6355, 1.0
        %v6418 = vadd.f32 %v6357, 1.0
        %v6419 = vadd.f32 %v6359, 1.0
        %v6420 = vadd.f32 %v6361, 1.0
        %v6421 = vadd.f32 %v6363, 1.0
        %v6422 = vadd.f32 %v6365, 1.0
        %v6423 = vadd.f32 %v6367, 1.0
        %v6424 = vadd.f32 %v6369, 1.0
        %v6425 = vadd.f32 %v6371, 1.0
        %v6426 = vadd.f32 %v6373, 1.0
        %v6427 = vadd.f32 %v6375, 1.0
        %v6428 = vadd.f32 %v6377, 1.0
        %v6429 = vadd.f32 %v6379, 1.0
        %v6430 = vadd.f32 %v6381, 1.0
        %v6431 = vadd.f32 %v6383, 1.0
        %v6432 = vadd.f32 %v6385, 1.0
        %v6433 = vadd.f32 %v6387, 1.0
        %v6434 = vadd.f32 %v6389, 1.0
        %v6435 = vadd.f32 %v6391, 1.0
        %v6436 = vadd.f32 %v6393, 1.0
        %v6437 = vadd.f32 %v6395, 1.0
        %v6438 = vadd.f32 %v6397, 1.0
        %v6439 = vadd.f32 %v6399, 1.0
        %v6440 = vadd.f32 %v6401, 1.0
        %v6441 = vadd.f32 %v6403, 1.0
        %v6442 = vadd.f32 %v6405, 1.0
        %v6443 = vadd.f32 %v6407, 1.0
        %v6444 = vadd.f32 %v6409, 1.0
        %v6445 = vadd.f32 %v6411, 1.0
        %v6446 = vadd.f32 %v6413, 1.0
        %v6447 = vadd.f32 %v6415, 1.0
        %v6448 = vrcp.pop %v6416
        %v6449 = vmul.f32 %v6416, %v6448
        %v6450 = vsub.f32 1.0, %v6449
        %v6451 = vmul.f32 %v6448, %v6450
        %v6452 = vadd.f32 %v6448, %v6451
        %vm6453 = vweird.f32 %v6416
        %vm6454 = vweird.f32 %v6448
        %vm6455 = vmor %vm6453, %vm6454
        %v6456 = vsel %vm6455, %v6448, %v6452
        %v6457 = vand.u32 2147483647, %v6416
        %vm6458 = vcmp.eq.f32.partialorder %v6457, 8.507059e+37
        %v6459 = vand.u32 %v6416, 2147483648
        %v6460 = vor.u32 1.1754944e-38, %v6459
        %v6461 = vsel %vm6458, %v6460, %v6456
        %v6462 = vmul.f32 1.0, %v6461
        %v6463 = vrcp.pop %v6417
        %v6464 = vmul.f32 %v6417, %v6463
        %v6465 = vsub.f32 1.0, %v6464
        %v6466 = vmul.f32 %v6463, %v6465
        %v6467 = vadd.f32 %v6463, %v6466
        %vm6468 = vweird.f32 %v6417
        %vm6469 = vweird.f32 %v6463
        %vm6470 = vmor %vm6468, %vm6469
        %v6471 = vsel %vm6470, %v6463, %v6467
        %v6472 = vand.u32 2147483647, %v6417
        %vm6473 = vcmp.eq.f32.partialorder %v6472, 8.507059e+37
        %v6474 = vand.u32 %v6417, 2147483648
        %v6475 = vor.u32 1.1754944e-38, %v6474
        %v6476 = vsel %vm6473, %v6475, %v6471
        %v6477 = vmul.f32 1.0, %v6476
        %v6478 = vrcp.pop %v6418
        %v6479 = vmul.f32 %v6418, %v6478
        %v6480 = vsub.f32 1.0, %v6479
        %v6481 = vmul.f32 %v6478, %v6480
        %v6482 = vadd.f32 %v6478, %v6481
        %vm6483 = vweird.f32 %v6418
        %vm6484 = vweird.f32 %v6478
        %vm6485 = vmor %vm6483, %vm6484
        %v6486 = vsel %vm6485, %v6478, %v6482
        %v6487 = vand.u32 2147483647, %v6418
        %vm6488 = vcmp.eq.f32.partialorder %v6487, 8.507059e+37
        %v6489 = vand.u32 %v6418, 2147483648
        %v6490 = vor.u32 1.1754944e-38, %v6489
        %v6491 = vsel %vm6488, %v6490, %v6486
        %v6492 = vmul.f32 1.0, %v6491
        %v6493 = vrcp.pop %v6419
        %v6494 = vmul.f32 %v6419, %v6493
        %v6495 = vsub.f32 1.0, %v6494
        %v6496 = vmul.f32 %v6493, %v6495
        %v6497 = vadd.f32 %v6493, %v6496
        %vm6498 = vweird.f32 %v6419
        %vm6499 = vweird.f32 %v6493
        %vm6500 = vmor %vm6498, %vm6499
        %v6501 = vsel %vm6500, %v6493, %v6497
        %v6502 = vand.u32 2147483647, %v6419
        %vm6503 = vcmp.eq.f32.partialorder %v6502, 8.507059e+37
        %v6504 = vand.u32 %v6419, 2147483648
        %v6505 = vor.u32 1.1754944e-38, %v6504
        %v6506 = vsel %vm6503, %v6505, %v6501
        %v6507 = vmul.f32 1.0, %v6506
        %v6508 = vrcp.pop %v6420
        %v6509 = vmul.f32 %v6420, %v6508
        %v6510 = vsub.f32 1.0, %v6509
        %v6511 = vmul.f32 %v6508, %v6510
        %v6512 = vadd.f32 %v6508, %v6511
        %vm6513 = vweird.f32 %v6420
        %vm6514 = vweird.f32 %v6508
        %vm6515 = vmor %vm6513, %vm6514
        %v6516 = vsel %vm6515, %v6508, %v6512
        %v6517 = vand.u32 2147483647, %v6420
        %vm6518 = vcmp.eq.f32.partialorder %v6517, 8.507059e+37
        %v6519 = vand.u32 %v6420, 2147483648
        %v6520 = vor.u32 1.1754944e-38, %v6519
        %v6521 = vsel %vm6518, %v6520, %v6516
        %v6522 = vmul.f32 1.0, %v6521
        %v6523 = vrcp.pop %v6421
        %v6524 = vmul.f32 %v6421, %v6523
        %v6525 = vsub.f32 1.0, %v6524
        %v6526 = vmul.f32 %v6523, %v6525
        %v6527 = vadd.f32 %v6523, %v6526
        %vm6528 = vweird.f32 %v6421
        %vm6529 = vweird.f32 %v6523
        %vm6530 = vmor %vm6528, %vm6529
        %v6531 = vsel %vm6530, %v6523, %v6527
        %v6532 = vand.u32 2147483647, %v6421
        %vm6533 = vcmp.eq.f32.partialorder %v6532, 8.507059e+37
        %v6534 = vand.u32 %v6421, 2147483648
        %v6535 = vor.u32 1.1754944e-38, %v6534
        %v6536 = vsel %vm6533, %v6535, %v6531
        %v6537 = vmul.f32 1.0, %v6536
        %v6538 = vrcp.pop %v6422
        %v6539 = vmul.f32 %v6422, %v6538
        %v6540 = vsub.f32 1.0, %v6539
        %v6541 = vmul.f32 %v6538, %v6540
        %v6542 = vadd.f32 %v6538, %v6541
        %vm6543 = vweird.f32 %v6422
        %vm6544 = vweird.f32 %v6538
        %vm6545 = vmor %vm6543, %vm6544
        %v6546 = vsel %vm6545, %v6538, %v6542
        %v6547 = vand.u32 2147483647, %v6422
        %vm6548 = vcmp.eq.f32.partialorder %v6547, 8.507059e+37
        %v6549 = vand.u32 %v6422, 2147483648
        %v6550 = vor.u32 1.1754944e-38, %v6549
        %v6551 = vsel %vm6548, %v6550, %v6546
        %v6552 = vmul.f32 1.0, %v6551
        %v6553 = vrcp.pop %v6423
        %v6554 = vmul.f32 %v6423, %v6553
        %v6555 = vsub.f32 1.0, %v6554
        %v6556 = vmul.f32 %v6553, %v6555
        %v6557 = vadd.f32 %v6553, %v6556
        %vm6558 = vweird.f32 %v6423
        %vm6559 = vweird.f32 %v6553
        %vm6560 = vmor %vm6558, %vm6559
        %v6561 = vsel %vm6560, %v6553, %v6557
        %v6562 = vand.u32 2147483647, %v6423
        %vm6563 = vcmp.eq.f32.partialorder %v6562, 8.507059e+37
        %v6564 = vand.u32 %v6423, 2147483648
        %v6565 = vor.u32 1.1754944e-38, %v6564
        %v6566 = vsel %vm6563, %v6565, %v6561
        %v6567 = vmul.f32 1.0, %v6566
        %v6568 = vrcp.pop %v6424
        %v6569 = vmul.f32 %v6424, %v6568
        %v6570 = vsub.f32 1.0, %v6569
        %v6571 = vmul.f32 %v6568, %v6570
        %v6572 = vadd.f32 %v6568, %v6571
        %vm6573 = vweird.f32 %v6424
        %vm6574 = vweird.f32 %v6568
        %vm6575 = vmor %vm6573, %vm6574
        %v6576 = vsel %vm6575, %v6568, %v6572
        %v6577 = vand.u32 2147483647, %v6424
        %vm6578 = vcmp.eq.f32.partialorder %v6577, 8.507059e+37
        %v6579 = vand.u32 %v6424, 2147483648
        %v6580 = vor.u32 1.1754944e-38, %v6579
        %v6581 = vsel %vm6578, %v6580, %v6576
        %v6582 = vmul.f32 1.0, %v6581
        %v6583 = vrcp.pop %v6425
        %v6584 = vmul.f32 %v6425, %v6583
        %v6585 = vsub.f32 1.0, %v6584
        %v6586 = vmul.f32 %v6583, %v6585
        %v6587 = vadd.f32 %v6583, %v6586
        %vm6588 = vweird.f32 %v6425
        %vm6589 = vweird.f32 %v6583
        %vm6590 = vmor %vm6588, %vm6589
        %v6591 = vsel %vm6590, %v6583, %v6587
        %v6592 = vand.u32 2147483647, %v6425
        %vm6593 = vcmp.eq.f32.partialorder %v6592, 8.507059e+37
        %v6594 = vand.u32 %v6425, 2147483648
        %v6595 = vor.u32 1.1754944e-38, %v6594
        %v6596 = vsel %vm6593, %v6595, %v6591
        %v6597 = vmul.f32 1.0, %v6596
        %v6598 = vrcp.pop %v6426
        %v6599 = vmul.f32 %v6426, %v6598
        %v6600 = vsub.f32 1.0, %v6599
        %v6601 = vmul.f32 %v6598, %v6600
        %v6602 = vadd.f32 %v6598, %v6601
        %vm6603 = vweird.f32 %v6426
        %vm6604 = vweird.f32 %v6598
        %vm6605 = vmor %vm6603, %vm6604
        %v6606 = vsel %vm6605, %v6598, %v6602
        %v6607 = vand.u32 2147483647, %v6426
        %vm6608 = vcmp.eq.f32.partialorder %v6607, 8.507059e+37
        %v6609 = vand.u32 %v6426, 2147483648
        %v6610 = vor.u32 1.1754944e-38, %v6609
        %v6611 = vsel %vm6608, %v6610, %v6606
        %v6612 = vmul.f32 1.0, %v6611
        %v6613 = vrcp.pop %v6427
        %v6614 = vmul.f32 %v6427, %v6613
        %v6615 = vsub.f32 1.0, %v6614
        %v6616 = vmul.f32 %v6613, %v6615
        %v6617 = vadd.f32 %v6613, %v6616
        %vm6618 = vweird.f32 %v6427
        %vm6619 = vweird.f32 %v6613
        %vm6620 = vmor %vm6618, %vm6619
        %v6621 = vsel %vm6620, %v6613, %v6617
        %v6622 = vand.u32 2147483647, %v6427
        %vm6623 = vcmp.eq.f32.partialorder %v6622, 8.507059e+37
        %v6624 = vand.u32 %v6427, 2147483648
        %v6625 = vor.u32 1.1754944e-38, %v6624
        %v6626 = vsel %vm6623, %v6625, %v6621
        %v6627 = vmul.f32 1.0, %v6626
        %v6628 = vrcp.pop %v6428
        %v6629 = vmul.f32 %v6428, %v6628
        %v6630 = vsub.f32 1.0, %v6629
        %v6631 = vmul.f32 %v6628, %v6630
        %v6632 = vadd.f32 %v6628, %v6631
        %vm6633 = vweird.f32 %v6428
        %vm6634 = vweird.f32 %v6628
        %vm6635 = vmor %vm6633, %vm6634
        %v6636 = vsel %vm6635, %v6628, %v6632
        %v6637 = vand.u32 2147483647, %v6428
        %vm6638 = vcmp.eq.f32.partialorder %v6637, 8.507059e+37
        %v6639 = vand.u32 %v6428, 2147483648
        %v6640 = vor.u32 1.1754944e-38, %v6639
        %v6641 = vsel %vm6638, %v6640, %v6636
        %v6642 = vmul.f32 1.0, %v6641
        %v6643 = vrcp.pop %v6429
        %v6644 = vmul.f32 %v6429, %v6643
        %v6645 = vsub.f32 1.0, %v6644
        %v6646 = vmul.f32 %v6643, %v6645
        %v6647 = vadd.f32 %v6643, %v6646
        %vm6648 = vweird.f32 %v6429
        %vm6649 = vweird.f32 %v6643
        %vm6650 = vmor %vm6648, %vm6649
        %v6651 = vsel %vm6650, %v6643, %v6647
        %v6652 = vand.u32 2147483647, %v6429
        %vm6653 = vcmp.eq.f32.partialorder %v6652, 8.507059e+37
        %v6654 = vand.u32 %v6429, 2147483648
        %v6655 = vor.u32 1.1754944e-38, %v6654
        %v6656 = vsel %vm6653, %v6655, %v6651
        %v6657 = vmul.f32 1.0, %v6656
        %v6658 = vrcp.pop %v6430
        %v6659 = vmul.f32 %v6430, %v6658
        %v6660 = vsub.f32 1.0, %v6659
        %v6661 = vmul.f32 %v6658, %v6660
        %v6662 = vadd.f32 %v6658, %v6661
        %vm6663 = vweird.f32 %v6430
        %vm6664 = vweird.f32 %v6658
        %vm6665 = vmor %vm6663, %vm6664
        %v6666 = vsel %vm6665, %v6658, %v6662
        %v6667 = vand.u32 2147483647, %v6430
        %vm6668 = vcmp.eq.f32.partialorder %v6667, 8.507059e+37
        %v6669 = vand.u32 %v6430, 2147483648
        %v6670 = vor.u32 1.1754944e-38, %v6669
        %v6671 = vsel %vm6668, %v6670, %v6666
        %v6672 = vmul.f32 1.0, %v6671
        %v6673 = vrcp.pop %v6431
        %v6674 = vmul.f32 %v6431, %v6673
        %v6675 = vsub.f32 1.0, %v6674
        %v6676 = vmul.f32 %v6673, %v6675
        %v6677 = vadd.f32 %v6673, %v6676
        %vm6678 = vweird.f32 %v6431
        %vm6679 = vweird.f32 %v6673
        %vm6680 = vmor %vm6678, %vm6679
        %v6681 = vsel %vm6680, %v6673, %v6677
        %v6682 = vand.u32 2147483647, %v6431
        %vm6683 = vcmp.eq.f32.partialorder %v6682, 8.507059e+37
        %v6684 = vand.u32 %v6431, 2147483648
        %v6685 = vor.u32 1.1754944e-38, %v6684
        %v6686 = vsel %vm6683, %v6685, %v6681
        %v6687 = vmul.f32 1.0, %v6686
        %v6688 = vrcp.pop %v6432
        %v6689 = vmul.f32 %v6432, %v6688
        %v6690 = vsub.f32 1.0, %v6689
        %v6691 = vmul.f32 %v6688, %v6690
        %v6692 = vadd.f32 %v6688, %v6691
        %vm6693 = vweird.f32 %v6432
        %vm6694 = vweird.f32 %v6688
        %vm6695 = vmor %vm6693, %vm6694
        %v6696 = vsel %vm6695, %v6688, %v6692
        %v6697 = vand.u32 2147483647, %v6432
        %vm6698 = vcmp.eq.f32.partialorder %v6697, 8.507059e+37
        %v6699 = vand.u32 %v6432, 2147483648
        %v6700 = vor.u32 1.1754944e-38, %v6699
        %v6701 = vsel %vm6698, %v6700, %v6696
        %v6702 = vmul.f32 1.0, %v6701
        %v6703 = vrcp.pop %v6433
        %v6704 = vmul.f32 %v6433, %v6703
        %v6705 = vsub.f32 1.0, %v6704
        %v6706 = vmul.f32 %v6703, %v6705
        %v6707 = vadd.f32 %v6703, %v6706
        %vm6708 = vweird.f32 %v6433
        %vm6709 = vweird.f32 %v6703
        %vm6710 = vmor %vm6708, %vm6709
        %v6711 = vsel %vm6710, %v6703, %v6707
        %v6712 = vand.u32 2147483647, %v6433
        %vm6713 = vcmp.eq.f32.partialorder %v6712, 8.507059e+37
        %v6714 = vand.u32 %v6433, 2147483648
        %v6715 = vor.u32 1.1754944e-38, %v6714
        %v6716 = vsel %vm6713, %v6715, %v6711
        %v6717 = vmul.f32 1.0, %v6716
        %v6718 = vrcp.pop %v6434
        %v6719 = vmul.f32 %v6434, %v6718
        %v6720 = vsub.f32 1.0, %v6719
        %v6721 = vmul.f32 %v6718, %v6720
        %v6722 = vadd.f32 %v6718, %v6721
        %vm6723 = vweird.f32 %v6434
        %vm6724 = vweird.f32 %v6718
        %vm6725 = vmor %vm6723, %vm6724
        %v6726 = vsel %vm6725, %v6718, %v6722
        %v6727 = vand.u32 2147483647, %v6434
        %vm6728 = vcmp.eq.f32.partialorder %v6727, 8.507059e+37
        %v6729 = vand.u32 %v6434, 2147483648
        %v6730 = vor.u32 1.1754944e-38, %v6729
        %v6731 = vsel %vm6728, %v6730, %v6726
        %v6732 = vmul.f32 1.0, %v6731
        %v6733 = vrcp.pop %v6435
        %v6734 = vmul.f32 %v6435, %v6733
        %v6735 = vsub.f32 1.0, %v6734
        %v6736 = vmul.f32 %v6733, %v6735
        %v6737 = vadd.f32 %v6733, %v6736
        %vm6738 = vweird.f32 %v6435
        %vm6739 = vweird.f32 %v6733
        %vm6740 = vmor %vm6738, %vm6739
        %v6741 = vsel %vm6740, %v6733, %v6737
        %v6742 = vand.u32 2147483647, %v6435
        %vm6743 = vcmp.eq.f32.partialorder %v6742, 8.507059e+37
        %v6744 = vand.u32 %v6435, 2147483648
        %v6745 = vor.u32 1.1754944e-38, %v6744
        %v6746 = vsel %vm6743, %v6745, %v6741
        %v6747 = vmul.f32 1.0, %v6746
        %v6748 = vrcp.pop %v6436
        %v6749 = vmul.f32 %v6436, %v6748
        %v6750 = vsub.f32 1.0, %v6749
        %v6751 = vmul.f32 %v6748, %v6750
        %v6752 = vadd.f32 %v6748, %v6751
        %vm6753 = vweird.f32 %v6436
        %vm6754 = vweird.f32 %v6748
        %vm6755 = vmor %vm6753, %vm6754
        %v6756 = vsel %vm6755, %v6748, %v6752
        %v6757 = vand.u32 2147483647, %v6436
        %vm6758 = vcmp.eq.f32.partialorder %v6757, 8.507059e+37
        %v6759 = vand.u32 %v6436, 2147483648
        %v6760 = vor.u32 1.1754944e-38, %v6759
        %v6761 = vsel %vm6758, %v6760, %v6756
        %v6762 = vmul.f32 1.0, %v6761
        %v6763 = vrcp.pop %v6437
        %v6764 = vmul.f32 %v6437, %v6763
        %v6765 = vsub.f32 1.0, %v6764
        %v6766 = vmul.f32 %v6763, %v6765
        %v6767 = vadd.f32 %v6763, %v6766
        %vm6768 = vweird.f32 %v6437
        %vm6769 = vweird.f32 %v6763
        %vm6770 = vmor %vm6768, %vm6769
        %v6771 = vsel %vm6770, %v6763, %v6767
        %v6772 = vand.u32 2147483647, %v6437
        %vm6773 = vcmp.eq.f32.partialorder %v6772, 8.507059e+37
        %v6774 = vand.u32 %v6437, 2147483648
        %v6775 = vor.u32 1.1754944e-38, %v6774
        %v6776 = vsel %vm6773, %v6775, %v6771
        %v6777 = vmul.f32 1.0, %v6776
        %v6778 = vrcp.pop %v6438
        %v6779 = vmul.f32 %v6438, %v6778
        %v6780 = vsub.f32 1.0, %v6779
        %v6781 = vmul.f32 %v6778, %v6780
        %v6782 = vadd.f32 %v6778, %v6781
        %vm6783 = vweird.f32 %v6438
        %vm6784 = vweird.f32 %v6778
        %vm6785 = vmor %vm6783, %vm6784
        %v6786 = vsel %vm6785, %v6778, %v6782
        %v6787 = vand.u32 2147483647, %v6438
        %vm6788 = vcmp.eq.f32.partialorder %v6787, 8.507059e+37
        %v6789 = vand.u32 %v6438, 2147483648
        %v6790 = vor.u32 1.1754944e-38, %v6789
        %v6791 = vsel %vm6788, %v6790, %v6786
        %v6792 = vmul.f32 1.0, %v6791
        %v6793 = vrcp.pop %v6439
        %v6794 = vmul.f32 %v6439, %v6793
        %v6795 = vsub.f32 1.0, %v6794
        %v6796 = vmul.f32 %v6793, %v6795
        %v6797 = vadd.f32 %v6793, %v6796
        %vm6798 = vweird.f32 %v6439
        %vm6799 = vweird.f32 %v6793
        %vm6800 = vmor %vm6798, %vm6799
        %v6801 = vsel %vm6800, %v6793, %v6797
        %v6802 = vand.u32 2147483647, %v6439
        %vm6803 = vcmp.eq.f32.partialorder %v6802, 8.507059e+37
        %v6804 = vand.u32 %v6439, 2147483648
        %v6805 = vor.u32 1.1754944e-38, %v6804
        %v6806 = vsel %vm6803, %v6805, %v6801
        %v6807 = vmul.f32 1.0, %v6806
        %v6808 = vrcp.pop %v6440
        %v6809 = vmul.f32 %v6440, %v6808
        %v6810 = vsub.f32 1.0, %v6809
        %v6811 = vmul.f32 %v6808, %v6810
        %v6812 = vadd.f32 %v6808, %v6811
        %vm6813 = vweird.f32 %v6440
        %vm6814 = vweird.f32 %v6808
        %vm6815 = vmor %vm6813, %vm6814
        %v6816 = vsel %vm6815, %v6808, %v6812
        %v6817 = vand.u32 2147483647, %v6440
        %vm6818 = vcmp.eq.f32.partialorder %v6817, 8.507059e+37
        %v6819 = vand.u32 %v6440, 2147483648
        %v6820 = vor.u32 1.1754944e-38, %v6819
        %v6821 = vsel %vm6818, %v6820, %v6816
        %v6822 = vmul.f32 1.0, %v6821
        %v6823 = vrcp.pop %v6441
        %v6824 = vmul.f32 %v6441, %v6823
        %v6825 = vsub.f32 1.0, %v6824
        %v6826 = vmul.f32 %v6823, %v6825
        %v6827 = vadd.f32 %v6823, %v6826
        %vm6828 = vweird.f32 %v6441
        %vm6829 = vweird.f32 %v6823
        %vm6830 = vmor %vm6828, %vm6829
        %v6831 = vsel %vm6830, %v6823, %v6827
        %v6832 = vand.u32 2147483647, %v6441
        %vm6833 = vcmp.eq.f32.partialorder %v6832, 8.507059e+37
        %v6834 = vand.u32 %v6441, 2147483648
        %v6835 = vor.u32 1.1754944e-38, %v6834
        %v6836 = vsel %vm6833, %v6835, %v6831
        %v6837 = vmul.f32 1.0, %v6836
        %v6838 = vrcp.pop %v6442
        %v6839 = vmul.f32 %v6442, %v6838
        %v6840 = vsub.f32 1.0, %v6839
        %v6841 = vmul.f32 %v6838, %v6840
        %v6842 = vadd.f32 %v6838, %v6841
        %vm6843 = vweird.f32 %v6442
        %vm6844 = vweird.f32 %v6838
        %vm6845 = vmor %vm6843, %vm6844
        %v6846 = vsel %vm6845, %v6838, %v6842
        %v6847 = vand.u32 2147483647, %v6442
        %vm6848 = vcmp.eq.f32.partialorder %v6847, 8.507059e+37
        %v6849 = vand.u32 %v6442, 2147483648
        %v6850 = vor.u32 1.1754944e-38, %v6849
        %v6851 = vsel %vm6848, %v6850, %v6846
        %v6852 = vmul.f32 1.0, %v6851
        %v6853 = vrcp.pop %v6443
        %v6854 = vmul.f32 %v6443, %v6853
        %v6855 = vsub.f32 1.0, %v6854
        %v6856 = vmul.f32 %v6853, %v6855
        %v6857 = vadd.f32 %v6853, %v6856
        %vm6858 = vweird.f32 %v6443
        %vm6859 = vweird.f32 %v6853
        %vm6860 = vmor %vm6858, %vm6859
        %v6861 = vsel %vm6860, %v6853, %v6857
        %v6862 = vand.u32 2147483647, %v6443
        %vm6863 = vcmp.eq.f32.partialorder %v6862, 8.507059e+37
        %v6864 = vand.u32 %v6443, 2147483648
        %v6865 = vor.u32 1.1754944e-38, %v6864
        %v6866 = vsel %vm6863, %v6865, %v6861
        %v6867 = vmul.f32 1.0, %v6866
        %v6868 = vrcp.pop %v6444
        %v6869 = vmul.f32 %v6444, %v6868
        %v6870 = vsub.f32 1.0, %v6869
        %v6871 = vmul.f32 %v6868, %v6870
        %v6872 = vadd.f32 %v6868, %v6871
        %vm6873 = vweird.f32 %v6444
        %vm6874 = vweird.f32 %v6868
        %vm6875 = vmor %vm6873, %vm6874
        %v6876 = vsel %vm6875, %v6868, %v6872
        %v6877 = vand.u32 2147483647, %v6444
        %vm6878 = vcmp.eq.f32.partialorder %v6877, 8.507059e+37
        %v6879 = vand.u32 %v6444, 2147483648
        %v6880 = vor.u32 1.1754944e-38, %v6879
        %v6881 = vsel %vm6878, %v6880, %v6876
        %v6882 = vmul.f32 1.0, %v6881
        %v6883 = vrcp.pop %v6445
        %v6884 = vmul.f32 %v6445, %v6883
        %v6885 = vsub.f32 1.0, %v6884
        %v6886 = vmul.f32 %v6883, %v6885
        %v6887 = vadd.f32 %v6883, %v6886
        %vm6888 = vweird.f32 %v6445
        %vm6889 = vweird.f32 %v6883
        %vm6890 = vmor %vm6888, %vm6889
        %v6891 = vsel %vm6890, %v6883, %v6887
        %v6892 = vand.u32 2147483647, %v6445
        %vm6893 = vcmp.eq.f32.partialorder %v6892, 8.507059e+37
        %v6894 = vand.u32 %v6445, 2147483648
        %v6895 = vor.u32 1.1754944e-38, %v6894
        %v6896 = vsel %vm6893, %v6895, %v6891
        %v6897 = vmul.f32 1.0, %v6896
        %v6898 = vrcp.pop %v6446
        %v6899 = vmul.f32 %v6446, %v6898
        %v6900 = vsub.f32 1.0, %v6899
        %v6901 = vmul.f32 %v6898, %v6900
        %v6902 = vadd.f32 %v6898, %v6901
        %vm6903 = vweird.f32 %v6446
        %vm6904 = vweird.f32 %v6898
        %vm6905 = vmor %vm6903, %vm6904
        %v6906 = vsel %vm6905, %v6898, %v6902
        %v6907 = vand.u32 2147483647, %v6446
        %vm6908 = vcmp.eq.f32.partialorder %v6907, 8.507059e+37
        %v6909 = vand.u32 %v6446, 2147483648
        %v6910 = vor.u32 1.1754944e-38, %v6909
        %v6911 = vsel %vm6908, %v6910, %v6906
        %v6912 = vmul.f32 1.0, %v6911
        %v6913 = vrcp.pop %v6447
        %v6914 = vmul.f32 %v6447, %v6913
        %v6915 = vsub.f32 1.0, %v6914
        %v6916 = vmul.f32 %v6913, %v6915
        %v6917 = vadd.f32 %v6913, %v6916
        %vm6918 = vweird.f32 %v6447
        %vm6919 = vweird.f32 %v6913
        %vm6920 = vmor %vm6918, %vm6919
        %v6921 = vsel %vm6920, %v6913, %v6917
        %v6922 = vand.u32 2147483647, %v6447
        %vm6923 = vcmp.eq.f32.partialorder %v6922, 8.507059e+37
        %v6924 = vand.u32 %v6447, 2147483648
        %v6925 = vor.u32 1.1754944e-38, %v6924
        %v6926 = vsel %vm6923, %v6925, %v6921
        %v6927 = vmul.f32 1.0, %v6926
        %6929 = vset.pattern.permute.xlu0 0
        %6930 = vperm.xlu0 %6929, %v6462
        %v6931 = vpop.permute.xlu0 %6930
        %6934 = vset.pattern.permute.xlu0 0
        %6935 = vperm.xlu0 %6934, %v6477
        %v6936 = vpop.permute.xlu0 %6935
        %6939 = vset.pattern.permute.xlu0 0
        %6940 = vperm.xlu0 %6939, %v6492
        %v6941 = vpop.permute.xlu0 %6940
        %6944 = vset.pattern.permute.xlu0 0
        %6945 = vperm.xlu0 %6944, %v6507
        %v6946 = vpop.permute.xlu0 %6945
        %6949 = vset.pattern.permute.xlu0 0
        %6950 = vperm.xlu0 %6949, %v6522
        %v6951 = vpop.permute.xlu0 %6950
        %6954 = vset.pattern.permute.xlu0 0
        %6955 = vperm.xlu0 %6954, %v6537
        %v6956 = vpop.permute.xlu0 %6955
        %6959 = vset.pattern.permute.xlu0 0
        %6960 = vperm.xlu0 %6959, %v6552
        %v6961 = vpop.permute.xlu0 %6960
        %6964 = vset.pattern.permute.xlu0 0
        %6965 = vperm.xlu0 %6964, %v6567
        %v6966 = vpop.permute.xlu0 %6965
        %6969 = vset.pattern.permute.xlu0 0
        %6970 = vperm.xlu0 %6969, %v6582
        %v6971 = vpop.permute.xlu0 %6970
        %6974 = vset.pattern.permute.xlu0 0
        %6975 = vperm.xlu0 %6974, %v6597
        %v6976 = vpop.permute.xlu0 %6975
        %6979 = vset.pattern.permute.xlu0 0
        %6980 = vperm.xlu0 %6979, %v6612
        %v6981 = vpop.permute.xlu0 %6980
        %6984 = vset.pattern.permute.xlu0 0
        %6985 = vperm.xlu0 %6984, %v6627
        %v6986 = vpop.permute.xlu0 %6985
        %6989 = vset.pattern.permute.xlu0 0
        %6990 = vperm.xlu0 %6989, %v6642
        %v6991 = vpop.permute.xlu0 %6990
        %6994 = vset.pattern.permute.xlu0 0
        %6995 = vperm.xlu0 %6994, %v6657
        %v6996 = vpop.permute.xlu0 %6995
        %6999 = vset.pattern.permute.xlu0 0
        %7000 = vperm.xlu0 %6999, %v6672
        %v7001 = vpop.permute.xlu0 %7000
        %7004 = vset.pattern.permute.xlu0 0
        %7005 = vperm.xlu0 %7004, %v6687
        %v7006 = vpop.permute.xlu0 %7005
        %7009 = vset.pattern.permute.xlu0 0
        %7010 = vperm.xlu0 %7009, %v6702
        %v7011 = vpop.permute.xlu0 %7010
        %7014 = vset.pattern.permute.xlu0 0
        %7015 = vperm.xlu0 %7014, %v6717
        %v7016 = vpop.permute.xlu0 %7015
        %7019 = vset.pattern.permute.xlu0 0
        %7020 = vperm.xlu0 %7019, %v6732
        %v7021 = vpop.permute.xlu0 %7020
        %7024 = vset.pattern.permute.xlu0 0
        %7025 = vperm.xlu0 %7024, %v6747
        %v7026 = vpop.permute.xlu0 %7025
        %7029 = vset.pattern.permute.xlu0 0
        %7030 = vperm.xlu0 %7029, %v6762
        %v7031 = vpop.permute.xlu0 %7030
        %7034 = vset.pattern.permute.xlu0 0
        %7035 = vperm.xlu0 %7034, %v6777
        %v7036 = vpop.permute.xlu0 %7035
        %7039 = vset.pattern.permute.xlu0 0
        %7040 = vperm.xlu0 %7039, %v6792
        %v7041 = vpop.permute.xlu0 %7040
        %7044 = vset.pattern.permute.xlu0 0
        %7045 = vperm.xlu0 %7044, %v6807
        %v7046 = vpop.permute.xlu0 %7045
        %7049 = vset.pattern.permute.xlu0 0
        %7050 = vperm.xlu0 %7049, %v6822
        %v7051 = vpop.permute.xlu0 %7050
        %7054 = vset.pattern.permute.xlu0 0
        %7055 = vperm.xlu0 %7054, %v6837
        %v7056 = vpop.permute.xlu0 %7055
        %7059 = vset.pattern.permute.xlu0 0
        %7060 = vperm.xlu0 %7059, %v6852
        %v7061 = vpop.permute.xlu0 %7060
        %7064 = vset.pattern.permute.xlu0 0
        %7065 = vperm.xlu0 %7064, %v6867
        %v7066 = vpop.permute.xlu0 %7065
        %7069 = vset.pattern.permute.xlu0 0
        %7070 = vperm.xlu0 %7069, %v6882
        %v7071 = vpop.permute.xlu0 %7070
        %7074 = vset.pattern.permute.xlu0 0
        %7075 = vperm.xlu0 %7074, %v6897
        %v7076 = vpop.permute.xlu0 %7075
        %7079 = vset.pattern.permute.xlu0 0
        %7080 = vperm.xlu0 %7079, %v6912
        %v7081 = vpop.permute.xlu0 %7080
        %7084 = vset.pattern.permute.xlu0 0
        %7085 = vperm.xlu0 %7084, %v6927
        %v7086 = vpop.permute.xlu0 %7085
        %v7088 = vmul.f32 %v619, %v6931
        %v7089 = vmul.f32 %v620, %v6936
        %v7090 = vmul.f32 %v621, %v6941
        %v7091 = vmul.f32 %v622, %v6946
        %v7092 = vmul.f32 %v623, %v6951
        %v7093 = vmul.f32 %v624, %v6956
        %v7094 = vmul.f32 %v625, %v6961
        %v7095 = vmul.f32 %v626, %v6966
        %v7096 = vmul.f32 %v627, %v6971
        %v7097 = vmul.f32 %v628, %v6976
        %v7098 = vmul.f32 %v629, %v6981
        %v7099 = vmul.f32 %v630, %v6986
        %v7100 = vmul.f32 %v631, %v6991
        %v7101 = vmul.f32 %v632, %v6996
        %v7102 = vmul.f32 %v633, %v7001
        %v7103 = vmul.f32 %v634, %v7006
        %v7104 = vmul.f32 %v635, %v7011
        %v7105 = vmul.f32 %v636, %v7016
        %v7106 = vmul.f32 %v637, %v7021
        %v7107 = vmul.f32 %v638, %v7026
        %v7108 = vmul.f32 %v639, %v7031
        %v7109 = vmul.f32 %v640, %v7036
        %v7110 = vmul.f32 %v641, %v7041
        %v7111 = vmul.f32 %v642, %v7046
        %v7112 = vmul.f32 %v643, %v7051
        %v7113 = vmul.f32 %v644, %v7056
        %v7114 = vmul.f32 %v645, %v7061
        %v7115 = vmul.f32 %v646, %v7066
        %v7116 = vmul.f32 %v647, %v7071
        %v7117 = vmul.f32 %v648, %v7076
        %v7118 = vmul.f32 %v649, %v7081
        %v7119 = vmul.f32 %v650, %v7086
        %7120 = vst.msk [vmem:[%s315] sm:$0xff] %vm651, %v7088
        %7121 = vst.msk [vmem:[%s315 + $0x8] sm:$0xff] %vm651, %v7089
        %7122 = vst.msk [vmem:[%s315 + $0x10] sm:$0xff] %vm651, %v7090
        %7123 = vst.msk [vmem:[%s315 + $0x18] sm:$0xff] %vm651, %v7091
        %7124 = vst.msk [vmem:[%s315 + $0x20] sm:$0xff] %vm651, %v7092
        %7125 = vst.msk [vmem:[%s315 + $0x28] sm:$0xff] %vm651, %v7093
        %7126 = vst.msk [vmem:[%s315 + $0x30] sm:$0xff] %vm651, %v7094
        %7127 = vst.msk [vmem:[%s315 + $0x38] sm:$0xff] %vm651, %v7095
        %7128 = vst.msk [vmem:[%s315 + $0x40] sm:$0xff] %vm651, %v7096
        %7129 = vst.msk [vmem:[%s315 + $0x48] sm:$0xff] %vm651, %v7097
        %7130 = vst.msk [vmem:[%s315 + $0x50] sm:$0xff] %vm651, %v7098
        %7131 = vst.msk [vmem:[%s315 + $0x58] sm:$0xff] %vm651, %v7099
        %7132 = vst.msk [vmem:[%s315 + $0x60] sm:$0xff] %vm651, %v7100
        %7133 = vst.msk [vmem:[%s315 + $0x68] sm:$0xff] %vm651, %v7101
        %7134 = vst.msk [vmem:[%s315 + $0x70] sm:$0xff] %vm651, %v7102
        %7135 = vst.msk [vmem:[%s315 + $0x78] sm:$0xff] %vm651, %v7103
        %7136 = vst.msk [vmem:[%s315 + $0x80] sm:$0xff] %vm651, %v7104
        %7137 = vst.msk [vmem:[%s315 + $0x88] sm:$0xff] %vm651, %v7105
        %7138 = vst.msk [vmem:[%s315 + $0x90] sm:$0xff] %vm651, %v7106
        %7139 = vst.msk [vmem:[%s315 + $0x98] sm:$0xff] %vm651, %v7107
        %7140 = vst.msk [vmem:[%s315 + $0xa0] sm:$0xff] %vm651, %v7108
        %7141 = vst.msk [vmem:[%s315 + $0xa8] sm:$0xff] %vm651, %v7109
        %7142 = vst.msk [vmem:[%s315 + $0xb0] sm:$0xff] %vm651, %v7110
        %7143 = vst.msk [vmem:[%s315 + $0xb8] sm:$0xff] %vm651, %v7111
        %7144 = vst.msk [vmem:[%s315 + $0xc0] sm:$0xff] %vm651, %v7112
        %7145 = vst.msk [vmem:[%s315 + $0xc8] sm:$0xff] %vm651, %v7113
        %7146 = vst.msk [vmem:[%s315 + $0xd0] sm:$0xff] %vm651, %v7114
        %7147 = vst.msk [vmem:[%s315 + $0xd8] sm:$0xff] %vm651, %v7115
        %7148 = vst.msk [vmem:[%s315 + $0xe0] sm:$0xff] %vm651, %v7116
        %7149 = vst.msk [vmem:[%s315 + $0xe8] sm:$0xff] %vm651, %v7117
        %7150 = vst.msk [vmem:[%s315 + $0xf0] sm:$0xff] %vm651, %v7118
        %7151 = vst.msk [vmem:[%s315 + $0xf8] sm:$0xff] %vm651, %v7119
        %s7152 = sand.u32 %s210, 1
        %s7153 = scalar_lea.sflag [#allocation5], %s7152
        %s7154 = sand.u32 %s210, 1
        %s7155 = smul.addr %s7154, 256
        %s7156 = scalar_lea.vmem [#allocation4], %s7155
        // Predicated region
        $region53: #{cbam_pyr_attention.1} parent=51 // pred_check
          %p7157 = pneg %p220
        $region54: #{cbam_pyr_attention.1} parent=51 // pred_check_branch
          %7159 = sbr.rel (%p7157) target = $region56
        $region55: #{cbam_pyr_attention.1} parent=51 // pred_region
          %7161 = vsyncadd %s7153, 0
          %s7162 = smul.addr %s24, 32
          %s7163 = smul.addr %s7162, 8
          %s7164 = scalar_lea.hbm %s8, %s7163
          %s7165 = sshll.u32 %s7156, 4
          %s7166 = int_to_ptr.vmem [resolvable:$true] %s7165
          %s7167 = sshll.u32 %s7164, 4
          %s7168 = int_to_ptr.hbm [resolvable:$true] %s7167
          %7173 = dma.vmem_to_hbm [thread:$0]  %s7166, 4096, %s7168, %s7153, 128, 128, 8
        $region56: #{cbam_pyr_attention.1} parent=51 // pred_fallthru
          _
      $region52: #{cbam_pyr_attention.1} parent=5 // pred_fallthru
        _
      %p7174 = scmp.le.s32.totalorder 2, %s19
      // Predicated region
      $region57: #{cbam_pyr_attention.1} parent=5 // pred_check
        %p7175 = pneg %p7174
      $region58: #{cbam_pyr_attention.1} parent=5 // pred_check_branch
        %7177 = sbr.rel (%p7175) target = $region60
      $region59: #{cbam_pyr_attention.1} parent=5 // pred_region
        %s7178 = ssub.s32 %s19, 2
        // Predicated region
        $region61: #{cbam_pyr_attention.1} parent=59 // pred_check
          %p7179 = pneg %p226
        $region62: #{cbam_pyr_attention.1} parent=59 // pred_check_branch
          %7181 = sbr.rel (%p7179) target = $region64
        $region63: #{cbam_pyr_attention.1} parent=59 // pred_region
          %s7182 = sand.u32 %s211, 1
          %s7183 = scalar_lea.sflag [#allocation5], %s7182
          %s7184 = sand.u32 %s211, 1
          %s7185 = smul.addr %s7184, 256
          %s7186 = scalar_lea.vmem [#allocation4], %s7185
          %7188 = dma.done %s7183, 4096
        $region64: #{cbam_pyr_attention.1} parent=59 // pred_fallthru
          _
      $region60: #{cbam_pyr_attention.1} parent=5 // pred_fallthru
        _
    $region6: #{cbam_pyr_attention.1} parent=1 // loop_footer
      %s23 = sadd.s32 1, %s19
    $region7: #{cbam_pyr_attention.1} parent=1 // loop_footer_branch
      %18 = sbr.rel target = $region3
    $region8: #{cbam_pyr_attention.1} parent=1 // loop_exit
      _
    %7189 = vsyncpa [#allocation5], 1
    %s7190 = scalar_lea.sflag [#allocation5], 1
    %7191 = vsyncpa %s7190, 1

</llo_original>
